<compile_context>
chip_gen: v7x
topology: tpu7x:2x2x1
jax: 0.10.0
libtpu: 0.0.40
codegen_flags: <defaults>
</compile_context>

<pallas_src>
import functools

import jax
import jax.numpy as jnp
from jax.experimental import pallas as pl
from jax.experimental.pallas import tpu as pltpu


_TILE_VMEM_BUDGET = 36 * 2**20          # raw block budget used when picking TH
_VMEM_LIMIT_CAP = 48 * 2**20            # never request more than this (v7x = 64 MiB)
_VMEM_LIMIT_FLOOR = 8 * 2**20


def _round_up(x, m):
    return ((x + m - 1) // m) * m


def _sublane_tile(dtype):
    return {1: 32, 2: 16, 4: 8}.get(jnp.dtype(dtype).itemsize, 8)


def _vmem_tile_bytes(shape, dtype):
    """VMEM footprint of one buffer after (sublane, lane) tiling padding."""
    s = list(shape)
    s[-1] = _round_up(s[-1], 128)
    if len(s) >= 2:
        s[-2] = _round_up(s[-2], _sublane_tile(dtype))
    n = 1
    for d in s:
        n *= d
    return n * jnp.dtype(dtype).itemsize


def _block_vmem_bytes(th, *, H, W, Cin, Cout_mxu, Cout_out, x_dtype, op_dtype,
                      patch):
    """Conservative (double-buffered) padded VMEM need for one configuration."""
    m = th * W
    total = 2 * _vmem_tile_bytes((1, H + 2, W + 2, Cin), x_dtype)     # image
    total += 2 * _vmem_tile_bytes((1, th, W, Cout_out), x_dtype)      # out tile
    total += 2 * _vmem_tile_bytes((1, Cout_mxu), jnp.float32)         # bias
    if patch:
        total += 2 * _vmem_tile_bytes((9 * Cin, Cout_mxu), op_dtype)  # weights
        total += _vmem_tile_bytes((m, 9 * Cin), op_dtype)             # patch
    else:
        total += 2 * _vmem_tile_bytes((9, Cin, Cout_mxu), op_dtype)   # weights
        total += _vmem_tile_bytes((m, Cout_mxu), jnp.float32)         # f32 acc
    return total


def _pick_row_tile(H, W, m_target, fits):
    """Largest TH dividing H with TH*W <= m_target (prefer TH*W % 8 == 0)."""
    divs = [t for t in range(1, H + 1) if H % t == 0]
    cands = [t for t in divs if t * W <= m_target] or [divs[0]]
    aligned = [t for t in cands if (t * W) % 8 == 0]
    if aligned and 2 * max(aligned) >= max(cands):
        cands = aligned
    for th in sorted(cands, reverse=True):
        if fits(th):
            return th
    return min(cands)


def _conv_block_kernel(x_ref, w_ref, b_ref, o_ref, scratch_ref, *, TH, W, Cin,
                       Cout_mxu, Cout_out, neg_slope, op_dtype,
                       use_patch_scratch):
    # x_ref:       (1, H+2, W+2, Cin)  zero-padded NHWC image (resident per n)
    # w_ref:       (9*Cin, Cout_mxu) [im2col]  or  (9, Cin, Cout_mxu) [per-tap]
    # b_ref:       (1, Cout_mxu)     f32 bias (zero-padded along Cout)
    # o_ref:       (1, TH, W, Cout_out) one output row tile
    # scratch_ref: (TH*W, 9*Cin) op_dtype patch  or  (TH*W, Cout_mxu) f32 acc
    r = pl.program_id(1)
    row0 = pl.multiple_of(r * TH, TH)
    M = TH * W

    if use_patch_scratch:
        # Aligned Cin: build the im2col operand once (lane-aligned stores since
        # Cin % 128 == 0), then a single MXU matmul with K = 9*Cin.
        for t in range(9):
            dy, dx = divmod(t, 3)
            win = x_ref[0, pl.ds(row0 + dy, TH), dx:dx + W, :]      # (TH, W, Cin)
            scratch_ref[:, t * Cin:(t + 1) * Cin] = (
                win.reshape(M, Cin).astype(scratch_ref.dtype))
        acc = jnp.dot(scratch_ref[...], w_ref[...],
                      preferred_element_type=jnp.float32)
    else:
        # Small / unaligned Cin: no patch scratch (avoids masked lane-partial
        # tap stores); 9 per-tap dots accumulate into an f32 VMEM accumulator.
        for t in range(9):
            dy, dx = divmod(t, 3)
            win = x_ref[0, pl.ds(row0 + dy, TH), dx:dx + W, :]      # (TH, W, Cin)
            part = jnp.dot(win.reshape(M, Cin).astype(op_dtype), w_ref[t],
                           preferred_element_type=jnp.float32)
            if t == 0:
                scratch_ref[...] = part
            else:
                scratch_ref[...] += part
        acc = scratch_ref[...]

    acc = acc + b_ref[...]
    acc = jnp.maximum(acc, neg_slope * acc)            # LeakyReLU(0.2)
    if Cout_out != Cout_mxu:
        acc = acc[:, :Cout_out]                        # drop MXU lane padding
    o_ref[0] = acc.reshape(TH, W, Cout_out).astype(o_ref.dtype)


def _conv_block_once(x_nchw, weight, bias, *, neg_slope, op_dtype,
                     single_buffer_invariants, force_legacy, m_target=512):
    N, Cin, H, W = x_nchw.shape
    Cout = weight.shape[0]
    x_dtype = x_nchw.dtype

    Cout_mxu = _round_up(Cout, 128)                    # lane-dense matmul N
    use_patch_scratch = force_legacy or (Cin % 128 == 0)
    dense_out = force_legacy or Cout > 64
    Cout_out = Cout_mxu if dense_out else Cout         # real Cout for small Cout

    def fits(th):
        return _block_vmem_bytes(
            th, H=H, W=W, Cin=Cin, Cout_mxu=Cout_mxu, Cout_out=Cout_out,
            x_dtype=x_dtype, op_dtype=op_dtype,
            patch=use_patch_scratch) <= _TILE_VMEM_BUDGET

    TH = _pick_row_tile(H, W, m_target, fits)
    M = TH * W

    # Layout glue (NCHW -> NHWC + zero halo).  TODO(perf): the halo could be
    # materialized in-kernel (zeroed VMEM halo / masked edge tiles) to avoid the
    # padded-copy HBM traffic; for very large images a halo-slab manual DMA
    # (memory_space=pl.ANY + make_async_copy) replaces the resident image.
    x_nhwc = jnp.transpose(x_nchw, (0, 2, 3, 1))
    x_pad = jnp.pad(x_nhwc, ((0, 0), (1, 1), (1, 1), (0, 0)))

    # (Cout, Cin, 3, 3) -> (ky, kx, ci, co) -> (9, Cin, Cout) -> pad Cout, cast.
    w_tap = jnp.transpose(weight, (2, 3, 1, 0)).reshape(9, Cin, Cout)
    w_tap = jnp.pad(w_tap, ((0, 0), (0, 0), (0, Cout_mxu - Cout))).astype(op_dtype)
    if use_patch_scratch:
        w_arg = w_tap.reshape(9 * Cin, Cout_mxu)
        w_block = (9 * Cin, Cout_mxu)
        w_index = lambda n, r: (0, 0)
        scratch = pltpu.VMEM((M, 9 * Cin), op_dtype)
    else:
        w_arg = w_tap
        w_block = (9, Cin, Cout_mxu)
        w_index = lambda n, r: (0, 0, 0)
        scratch = pltpu.VMEM((M, Cout_mxu), jnp.float32)
    b_arg = jnp.pad(bias.reshape(1, Cout).astype(jnp.float32),
                    ((0, 0), (0, Cout_mxu - Cout)))

    kernel = functools.partial(
        _conv_block_kernel, TH=TH, W=W, Cin=Cin, Cout_mxu=Cout_mxu,
        Cout_out=Cout_out, neg_slope=neg_slope, op_dtype=op_dtype,
        use_patch_scratch=use_patch_scratch)

    vmem_blocks = _block_vmem_bytes(
        TH, H=H, W=W, Cin=Cin, Cout_mxu=Cout_mxu, Cout_out=Cout_out,
        x_dtype=x_dtype, op_dtype=op_dtype, patch=use_patch_scratch)
    vmem_limit = int(min(_VMEM_LIMIT_CAP,
                         max(_VMEM_LIMIT_FLOOR,
                             int(1.25 * vmem_blocks) + 2 * 2**20)))

    # Grid-invariant weight/bias blocks don't need double buffering.
    inv = {"pipeline_mode": pl.Buffered(1)} if single_buffer_invariants else {}

    out_nhwc = pl.pallas_call(
        kernel,
        out_shape=jax.ShapeDtypeStruct((N, H, W, Cout_out), x_dtype),
        grid_spec=pltpu.PrefetchScalarGridSpec(
            num_scalar_prefetch=0,
            grid=(N, H // TH),
            in_specs=[
                pl.BlockSpec((1, H + 2, W + 2, Cin), lambda n, r: (n, 0, 0, 0)),
                pl.BlockSpec(w_block, w_index, **inv),
                pl.BlockSpec((1, Cout_mxu), lambda n, r: (0, 0), **inv),
            ],
            out_specs=pl.BlockSpec((1, TH, W, Cout_out),
                                   lambda n, r: (n, r, 0, 0)),
            scratch_shapes=[scratch],
        ),
        compiler_params=pltpu.CompilerParams(
            dimension_semantics=("parallel", "parallel"),
            vmem_limit_bytes=vmem_limit),
    )(x_pad, w_arg, b_arg)

    if Cout_out != Cout:
        out_nhwc = out_nhwc[..., :Cout]
    return jnp.transpose(out_nhwc, (0, 3, 1, 2))       # back to NCHW


def conv_block_pallas(x_nchw, weight, bias, *, neg_slope=0.2):
    """x: (N, Cin, H, W); weight: (Cout, Cin, 3, 3); bias: (Cout,).
    Returns (N, Cout, H, W) — same semantics as the PyTorch ConvBlock forward."""
    attempts = (
        # Preferred: bf16 MXU operands, single-buffered invariant blocks.
        dict(op_dtype=jnp.bfloat16, single_buffer_invariants=True,
             force_legacy=False),
        # Same without pipeline_mode (in case Buffered(1) is unsupported here).
        dict(op_dtype=jnp.bfloat16, single_buffer_invariants=False,
             force_legacy=False),
        # Safety net: configuration already proven on hardware (f32 operands,
        # im2col scratch path, padded lane-dense output, default buffering).
        dict(op_dtype=jnp.float32, single_buffer_invariants=False,
             force_legacy=True),
    )
    last_err = None
    for cfg in attempts:
        try:
            return _conv_block_once(x_nchw, weight, bias,
                                    neg_slope=neg_slope, **cfg)
        except Exception as e:          # fall through to the next configuration
            last_err = e
    raise last_err


def _reference(x_nchw, weight, bias, neg_slope=0.2):
    out = jax.lax.conv_general_dilated(
        x_nchw, weight, window_strides=(1, 1), padding=((1, 1), (1, 1)),
        dimension_numbers=("NCHW", "OIHW", "NCHW"))
    out = out + bias[None, :, None, None]
    return jnp.where(out >= 0, out, neg_slope * out)


if __name__ == "__main__":
    key = jax.random.PRNGKey(0)
    kx, kw, kb = jax.random.split(key, 3)

    N, Cin, Cout, H, W = 2, 4, 8, 16, 16
    x = jax.random.normal(kx, (N, Cin, H, W), dtype=jnp.float32)
    # Deterministic synthetic parameters (shapes match nn.Conv2d(Cin, Cout, 3, 1, 1)).
    weight = 0.1 * jax.random.normal(kw, (Cout, Cin, 3, 3), dtype=jnp.float32)
    bias = 0.1 * jax.random.normal(kb, (Cout,), dtype=jnp.float32)

    out = conv_block_pallas(x, weight, bias)
    out = jax.block_until_ready(out)

    ref = _reference(x, weight, bias)
    assert out.shape == (N, Cout, H, W)
    # bf16 MXU operands with f32 accumulation -> relaxed tolerance vs f32 ref.
    assert jnp.allclose(out, ref, atol=5e-2, rtol=5e-2), \
        f"mismatch vs reference conv (max abs err {float(jnp.max(jnp.abs(out - ref)))})"

    print("KERNEL_OK")
</pallas_src>

<mosaic_0001>
module attributes {stable_mosaic.version = 11 : i64} {
  func.func @_conv_block_kernel(%arg0: i32, %arg1: i32, %arg2: memref<1x18x18x4xf32, #tpu.memory_space<vmem>>, %arg3: memref<9x4x128xbf16, #tpu.memory_space<vmem>>, %arg4: memref<1x128xf32, #tpu.memory_space<vmem>>, %arg5: memref<1x16x16x8xf32, #tpu.memory_space<vmem>>, %arg6: memref<256x128xf32, #tpu.memory_space<vmem>>) attributes {dimension_semantics = [#tpu.dimension_semantics<parallel>, #tpu.dimension_semantics<parallel>], iteration_bounds = array<i64: 2, 1>, scalar_prefetch = 0 : i64, scratch_operands = 1 : i64, tpu.core_type = #tpu.core_type<tc>, window_params = [{transform_indices = @transform_0, window_bounds = array<i64: 1, 18, 18, 4>}, {pipeline_mode = #tpu.pipeline_mode<synchronous>, transform_indices = @transform_1, window_bounds = array<i64: 9, 4, 128>}, {pipeline_mode = #tpu.pipeline_mode<synchronous>, transform_indices = @transform_2, window_bounds = array<i64: 1, 128>}, {transform_indices = @transform_3, window_bounds = array<i64: 1, 16, 16, 8>}]} {
    %c16_i32 = arith.constant 16 : i32
    %0 = arith.muli %arg1, %c16_i32 : i32
    %1 = tpu.assume_multiple %0, 16 : i32
    %c0_i32 = arith.constant 0 : i32
    %2 = arith.addi %1, %c0_i32 : i32
    %c0 = arith.constant 0 : index
    %3 = arith.index_cast %2 : i32 to index
    %c0_0 = arith.constant 0 : index
    %c0_1 = arith.constant 0 : index
    %4 = vector.load %arg2[%c0, %3, %c0_0, %c0_1] : memref<1x18x18x4xf32, #tpu.memory_space<vmem>>, vector<1x16x16x4xf32>
    %5 = vector.shape_cast %4 : vector<1x16x16x4xf32> to vector<16x16x4xf32>
    %6 = vector.shape_cast %5 : vector<16x16x4xf32> to vector<256x4xf32>
    %7 = arith.truncf %6 : vector<256x4xf32> to vector<256x4xbf16>
    %c0_2 = arith.constant 0 : index
    %c0_3 = arith.constant 0 : index
    %c0_4 = arith.constant 0 : index
    %8 = vector.load %arg3[%c0_2, %c0_3, %c0_4] : memref<9x4x128xbf16, #tpu.memory_space<vmem>>, vector<1x4x128xbf16>
    %9 = vector.shape_cast %8 : vector<1x4x128xbf16> to vector<4x128xbf16>
    %cst = arith.constant dense<0.000000e+00> : vector<256x128xf32>
    %10 = tpu.matmul %7, %9, %cst {dimension_numbers = #tpu.dot_dimension_numbers<[1], [0], [0], [1], [0, 0, 1, 1], [], []>} : vector<256x4xbf16>, vector<4x128xbf16>, vector<256x128xf32> -> vector<256x128xf32>
    %c0_5 = arith.constant 0 : index
    %c0_6 = arith.constant 0 : index
    %11 = vector.load %arg6[%c0_5, %c0_6] : memref<256x128xf32, #tpu.memory_space<vmem>>, vector<256x128xf32>
    tpu.vector_store %arg6[%c0_5, %c0_6], %10 {strides = array<i32>} : memref<256x128xf32, #tpu.memory_space<vmem>>, vector<256x128xf32>,
    %c0_i32_7 = arith.constant 0 : i32
    %12 = arith.addi %1, %c0_i32_7 : i32
    %c0_8 = arith.constant 0 : index
    %13 = arith.index_cast %12 : i32 to index
    %c1 = arith.constant 1 : index
    %c0_9 = arith.constant 0 : index
    %14 = vector.load %arg2[%c0_8, %13, %c1, %c0_9] : memref<1x18x18x4xf32, #tpu.memory_space<vmem>>, vector<1x16x16x4xf32>
    %15 = vector.shape_cast %14 : vector<1x16x16x4xf32> to vector<16x16x4xf32>
    %16 = vector.shape_cast %15 : vector<16x16x4xf32> to vector<256x4xf32>
    %17 = arith.truncf %16 : vector<256x4xf32> to vector<256x4xbf16>
    %c1_10 = arith.constant 1 : index
    %c0_11 = arith.constant 0 : index
    %c0_12 = arith.constant 0 : index
    %18 = vector.load %arg3[%c1_10, %c0_11, %c0_12] : memref<9x4x128xbf16, #tpu.memory_space<vmem>>, vector<1x4x128xbf16>
    %19 = vector.shape_cast %18 : vector<1x4x128xbf16> to vector<4x128xbf16>
    %cst_13 = arith.constant dense<0.000000e+00> : vector<256x128xf32>
    %20 = tpu.matmul %17, %19, %cst_13 {dimension_numbers = #tpu.dot_dimension_numbers<[1], [0], [0], [1], [0, 0, 1, 1], [], []>} : vector<256x4xbf16>, vector<4x128xbf16>, vector<256x128xf32> -> vector<256x128xf32>
    %c0_14 = arith.constant 0 : index
    %c0_15 = arith.constant 0 : index
    %21 = vector.load %arg6[%c0_14, %c0_15] : memref<256x128xf32, #tpu.memory_space<vmem>>, vector<256x128xf32>
    %22 = arith.addf %21, %20 : vector<256x128xf32>
    %c0_16 = arith.constant 0 : index
    %c0_17 = arith.constant 0 : index
    %23 = vector.load %arg6[%c0_16, %c0_17] : memref<256x128xf32, #tpu.memory_space<vmem>>, vector<256x128xf32>
    tpu.vector_store %arg6[%c0_16, %c0_17], %22 {strides = array<i32>} : memref<256x128xf32, #tpu.memory_space<vmem>>, vector<256x128xf32>,
    %c0_i32_18 = arith.constant 0 : i32
    %24 = arith.addi %1, %c0_i32_18 : i32
    %c0_19 = arith.constant 0 : index
    %25 = arith.index_cast %24 : i32 to index
    %c2 = arith.constant 2 : index
    %c0_20 = arith.constant 0 : index
    %26 = vector.load %arg2[%c0_19, %25, %c2, %c0_20] : memref<1x18x18x4xf32, #tpu.memory_space<vmem>>, vector<1x16x16x4xf32>
    %27 = vector.shape_cast %26 : vector<1x16x16x4xf32> to vector<16x16x4xf32>
    %28 = vector.shape_cast %27 : vector<16x16x4xf32> to vector<256x4xf32>
    %29 = arith.truncf %28 : vector<256x4xf32> to vector<256x4xbf16>
    %c2_21 = arith.constant 2 : index
    %c0_22 = arith.constant 0 : index
    %c0_23 = arith.constant 0 : index
    %30 = vector.load %arg3[%c2_21, %c0_22, %c0_23] : memref<9x4x128xbf16, #tpu.memory_space<vmem>>, vector<1x4x128xbf16>
    %31 = vector.shape_cast %30 : vector<1x4x128xbf16> to vector<4x128xbf16>
    %cst_24 = arith.constant dense<0.000000e+00> : vector<256x128xf32>
    %32 = tpu.matmul %29, %31, %cst_24 {dimension_numbers = #tpu.dot_dimension_numbers<[1], [0], [0], [1], [0, 0, 1, 1], [], []>} : vector<256x4xbf16>, vector<4x128xbf16>, vector<256x128xf32> -> vector<256x128xf32>
    %c0_25 = arith.constant 0 : index
    %c0_26 = arith.constant 0 : index
    %33 = vector.load %arg6[%c0_25, %c0_26] : memref<256x128xf32, #tpu.memory_space<vmem>>, vector<256x128xf32>
    %34 = arith.addf %33, %32 : vector<256x128xf32>
    %c0_27 = arith.constant 0 : index
    %c0_28 = arith.constant 0 : index
    %35 = vector.load %arg6[%c0_27, %c0_28] : memref<256x128xf32, #tpu.memory_space<vmem>>, vector<256x128xf32>
    tpu.vector_store %arg6[%c0_27, %c0_28], %34 {strides = array<i32>} : memref<256x128xf32, #tpu.memory_space<vmem>>, vector<256x128xf32>,
    %c1_i32 = arith.constant 1 : i32
    %36 = arith.addi %1, %c1_i32 : i32
    %c0_29 = arith.constant 0 : index
    %37 = arith.index_cast %36 : i32 to index
    %c0_30 = arith.constant 0 : index
    %c0_31 = arith.constant 0 : index
    %38 = vector.load %arg2[%c0_29, %37, %c0_30, %c0_31] : memref<1x18x18x4xf32, #tpu.memory_space<vmem>>, vector<1x16x16x4xf32>
    %39 = vector.shape_cast %38 : vector<1x16x16x4xf32> to vector<16x16x4xf32>
    %40 = vector.shape_cast %39 : vector<16x16x4xf32> to vector<256x4xf32>
    %41 = arith.truncf %40 : vector<256x4xf32> to vector<256x4xbf16>
    %c3 = arith.constant 3 : index
    %c0_32 = arith.constant 0 : index
    %c0_33 = arith.constant 0 : index
    %42 = vector.load %arg3[%c3, %c0_32, %c0_33] : memref<9x4x128xbf16, #tpu.memory_space<vmem>>, vector<1x4x128xbf16>
    %43 = vector.shape_cast %42 : vector<1x4x128xbf16> to vector<4x128xbf16>
    %cst_34 = arith.constant dense<0.000000e+00> : vector<256x128xf32>
    %44 = tpu.matmul %41, %43, %cst_34 {dimension_numbers = #tpu.dot_dimension_numbers<[1], [0], [0], [1], [0, 0, 1, 1], [], []>} : vector<256x4xbf16>, vector<4x128xbf16>, vector<256x128xf32> -> vector<256x128xf32>
    %c0_35 = arith.constant 0 : index
    %c0_36 = arith.constant 0 : index
    %45 = vector.load %arg6[%c0_35, %c0_36] : memref<256x128xf32, #tpu.memory_space<vmem>>, vector<256x128xf32>
    %46 = arith.addf %45, %44 : vector<256x128xf32>
    %c0_37 = arith.constant 0 : index
    %c0_38 = arith.constant 0 : index
    %47 = vector.load %arg6[%c0_37, %c0_38] : memref<256x128xf32, #tpu.memory_space<vmem>>, vector<256x128xf32>
    tpu.vector_store %arg6[%c0_37, %c0_38], %46 {strides = array<i32>} : memref<256x128xf32, #tpu.memory_space<vmem>>, vector<256x128xf32>,
    %c1_i32_39 = arith.constant 1 : i32
    %48 = arith.addi %1, %c1_i32_39 : i32
    %c0_40 = arith.constant 0 : index
    %49 = arith.index_cast %48 : i32 to index
    %c1_41 = arith.constant 1 : index
    %c0_42 = arith.constant 0 : index
    %50 = vector.load %arg2[%c0_40, %49, %c1_41, %c0_42] : memref<1x18x18x4xf32, #tpu.memory_space<vmem>>, vector<1x16x16x4xf32>
    %51 = vector.shape_cast %50 : vector<1x16x16x4xf32> to vector<16x16x4xf32>
    %52 = vector.shape_cast %51 : vector<16x16x4xf32> to vector<256x4xf32>
    %53 = arith.truncf %52 : vector<256x4xf32> to vector<256x4xbf16>
    %c4 = arith.constant 4 : index
    %c0_43 = arith.constant 0 : index
    %c0_44 = arith.constant 0 : index
    %54 = vector.load %arg3[%c4, %c0_43, %c0_44] : memref<9x4x128xbf16, #tpu.memory_space<vmem>>, vector<1x4x128xbf16>
    %55 = vector.shape_cast %54 : vector<1x4x128xbf16> to vector<4x128xbf16>
    %cst_45 = arith.constant dense<0.000000e+00> : vector<256x128xf32>
    %56 = tpu.matmul %53, %55, %cst_45 {dimension_numbers = #tpu.dot_dimension_numbers<[1], [0], [0], [1], [0, 0, 1, 1], [], []>} : vector<256x4xbf16>, vector<4x128xbf16>, vector<256x128xf32> -> vector<256x128xf32>
    %c0_46 = arith.constant 0 : index
    %c0_47 = arith.constant 0 : index
    %57 = vector.load %arg6[%c0_46, %c0_47] : memref<256x128xf32, #tpu.memory_space<vmem>>, vector<256x128xf32>
    %58 = arith.addf %57, %56 : vector<256x128xf32>
    %c0_48 = arith.constant 0 : index
    %c0_49 = arith.constant 0 : index
    %59 = vector.load %arg6[%c0_48, %c0_49] : memref<256x128xf32, #tpu.memory_space<vmem>>, vector<256x128xf32>
    tpu.vector_store %arg6[%c0_48, %c0_49], %58 {strides = array<i32>} : memref<256x128xf32, #tpu.memory_space<vmem>>, vector<256x128xf32>,
    %c1_i32_50 = arith.constant 1 : i32
    %60 = arith.addi %1, %c1_i32_50 : i32
    %c0_51 = arith.constant 0 : index
    %61 = arith.index_cast %60 : i32 to index
    %c2_52 = arith.constant 2 : index
    %c0_53 = arith.constant 0 : index
    %62 = vector.load %arg2[%c0_51, %61, %c2_52, %c0_53] : memref<1x18x18x4xf32, #tpu.memory_space<vmem>>, vector<1x16x16x4xf32>
    %63 = vector.shape_cast %62 : vector<1x16x16x4xf32> to vector<16x16x4xf32>
    %64 = vector.shape_cast %63 : vector<16x16x4xf32> to vector<256x4xf32>
    %65 = arith.truncf %64 : vector<256x4xf32> to vector<256x4xbf16>
    %c5 = arith.constant 5 : index
    %c0_54 = arith.constant 0 : index
    %c0_55 = arith.constant 0 : index
    %66 = vector.load %arg3[%c5, %c0_54, %c0_55] : memref<9x4x128xbf16, #tpu.memory_space<vmem>>, vector<1x4x128xbf16>
    %67 = vector.shape_cast %66 : vector<1x4x128xbf16> to vector<4x128xbf16>
    %cst_56 = arith.constant dense<0.000000e+00> : vector<256x128xf32>
    %68 = tpu.matmul %65, %67, %cst_56 {dimension_numbers = #tpu.dot_dimension_numbers<[1], [0], [0], [1], [0, 0, 1, 1], [], []>} : vector<256x4xbf16>, vector<4x128xbf16>, vector<256x128xf32> -> vector<256x128xf32>
    %c0_57 = arith.constant 0 : index
    %c0_58 = arith.constant 0 : index
    %69 = vector.load %arg6[%c0_57, %c0_58] : memref<256x128xf32, #tpu.memory_space<vmem>>, vector<256x128xf32>
    %70 = arith.addf %69, %68 : vector<256x128xf32>
    %c0_59 = arith.constant 0 : index
    %c0_60 = arith.constant 0 : index
    %71 = vector.load %arg6[%c0_59, %c0_60] : memref<256x128xf32, #tpu.memory_space<vmem>>, vector<256x128xf32>
    tpu.vector_store %arg6[%c0_59, %c0_60], %70 {strides = array<i32>} : memref<256x128xf32, #tpu.memory_space<vmem>>, vector<256x128xf32>,
    %c2_i32 = arith.constant 2 : i32
    %72 = arith.addi %1, %c2_i32 : i32
    %c0_61 = arith.constant 0 : index
    %73 = arith.index_cast %72 : i32 to index
    %c0_62 = arith.constant 0 : index
    %c0_63 = arith.constant 0 : index
    %74 = vector.load %arg2[%c0_61, %73, %c0_62, %c0_63] : memref<1x18x18x4xf32, #tpu.memory_space<vmem>>, vector<1x16x16x4xf32>
    %75 = vector.shape_cast %74 : vector<1x16x16x4xf32> to vector<16x16x4xf32>
    %76 = vector.shape_cast %75 : vector<16x16x4xf32> to vector<256x4xf32>
    %77 = arith.truncf %76 : vector<256x4xf32> to vector<256x4xbf16>
    %c6 = arith.constant 6 : index
    %c0_64 = arith.constant 0 : index
    %c0_65 = arith.constant 0 : index
    %78 = vector.load %arg3[%c6, %c0_64, %c0_65] : memref<9x4x128xbf16, #tpu.memory_space<vmem>>, vector<1x4x128xbf16>
    %79 = vector.shape_cast %78 : vector<1x4x128xbf16> to vector<4x128xbf16>
    %cst_66 = arith.constant dense<0.000000e+00> : vector<256x128xf32>
    %80 = tpu.matmul %77, %79, %cst_66 {dimension_numbers = #tpu.dot_dimension_numbers<[1], [0], [0], [1], [0, 0, 1, 1], [], []>} : vector<256x4xbf16>, vector<4x128xbf16>, vector<256x128xf32> -> vector<256x128xf32>
    %c0_67 = arith.constant 0 : index
    %c0_68 = arith.constant 0 : index
    %81 = vector.load %arg6[%c0_67, %c0_68] : memref<256x128xf32, #tpu.memory_space<vmem>>, vector<256x128xf32>
    %82 = arith.addf %81, %80 : vector<256x128xf32>
    %c0_69 = arith.constant 0 : index
    %c0_70 = arith.constant 0 : index
    %83 = vector.load %arg6[%c0_69, %c0_70] : memref<256x128xf32, #tpu.memory_space<vmem>>, vector<256x128xf32>
    tpu.vector_store %arg6[%c0_69, %c0_70], %82 {strides = array<i32>} : memref<256x128xf32, #tpu.memory_space<vmem>>, vector<256x128xf32>,
    %c2_i32_71 = arith.constant 2 : i32
    %84 = arith.addi %1, %c2_i32_71 : i32
    %c0_72 = arith.constant 0 : index
    %85 = arith.index_cast %84 : i32 to index
    %c1_73 = arith.constant 1 : index
    %c0_74 = arith.constant 0 : index
    %86 = vector.load %arg2[%c0_72, %85, %c1_73, %c0_74] : memref<1x18x18x4xf32, #tpu.memory_space<vmem>>, vector<1x16x16x4xf32>
    %87 = vector.shape_cast %86 : vector<1x16x16x4xf32> to vector<16x16x4xf32>
    %88 = vector.shape_cast %87 : vector<16x16x4xf32> to vector<256x4xf32>
    %89 = arith.truncf %88 : vector<256x4xf32> to vector<256x4xbf16>
    %c7 = arith.constant 7 : index
    %c0_75 = arith.constant 0 : index
    %c0_76 = arith.constant 0 : index
    %90 = vector.load %arg3[%c7, %c0_75, %c0_76] : memref<9x4x128xbf16, #tpu.memory_space<vmem>>, vector<1x4x128xbf16>
    %91 = vector.shape_cast %90 : vector<1x4x128xbf16> to vector<4x128xbf16>
    %cst_77 = arith.constant dense<0.000000e+00> : vector<256x128xf32>
    %92 = tpu.matmul %89, %91, %cst_77 {dimension_numbers = #tpu.dot_dimension_numbers<[1], [0], [0], [1], [0, 0, 1, 1], [], []>} : vector<256x4xbf16>, vector<4x128xbf16>, vector<256x128xf32> -> vector<256x128xf32>
    %c0_78 = arith.constant 0 : index
    %c0_79 = arith.constant 0 : index
    %93 = vector.load %arg6[%c0_78, %c0_79] : memref<256x128xf32, #tpu.memory_space<vmem>>, vector<256x128xf32>
    %94 = arith.addf %93, %92 : vector<256x128xf32>
    %c0_80 = arith.constant 0 : index
    %c0_81 = arith.constant 0 : index
    %95 = vector.load %arg6[%c0_80, %c0_81] : memref<256x128xf32, #tpu.memory_space<vmem>>, vector<256x128xf32>
    tpu.vector_store %arg6[%c0_80, %c0_81], %94 {strides = array<i32>} : memref<256x128xf32, #tpu.memory_space<vmem>>, vector<256x128xf32>,
    %c2_i32_82 = arith.constant 2 : i32
    %96 = arith.addi %1, %c2_i32_82 : i32
    %c0_83 = arith.constant 0 : index
    %97 = arith.index_cast %96 : i32 to index
    %c2_84 = arith.constant 2 : index
    %c0_85 = arith.constant 0 : index
    %98 = vector.load %arg2[%c0_83, %97, %c2_84, %c0_85] : memref<1x18x18x4xf32, #tpu.memory_space<vmem>>, vector<1x16x16x4xf32>
    %99 = vector.shape_cast %98 : vector<1x16x16x4xf32> to vector<16x16x4xf32>
    %100 = vector.shape_cast %99 : vector<16x16x4xf32> to vector<256x4xf32>
    %101 = arith.truncf %100 : vector<256x4xf32> to vector<256x4xbf16>
    %c8 = arith.constant 8 : index
    %c0_86 = arith.constant 0 : index
    %c0_87 = arith.constant 0 : index
    %102 = vector.load %arg3[%c8, %c0_86, %c0_87] : memref<9x4x128xbf16, #tpu.memory_space<vmem>>, vector<1x4x128xbf16>
    %103 = vector.shape_cast %102 : vector<1x4x128xbf16> to vector<4x128xbf16>
    %cst_88 = arith.constant dense<0.000000e+00> : vector<256x128xf32>
    %104 = tpu.matmul %101, %103, %cst_88 {dimension_numbers = #tpu.dot_dimension_numbers<[1], [0], [0], [1], [0, 0, 1, 1], [], []>} : vector<256x4xbf16>, vector<4x128xbf16>, vector<256x128xf32> -> vector<256x128xf32>
    %c0_89 = arith.constant 0 : index
    %c0_90 = arith.constant 0 : index
    %105 = vector.load %arg6[%c0_89, %c0_90] : memref<256x128xf32, #tpu.memory_space<vmem>>, vector<256x128xf32>
    %106 = arith.addf %105, %104 : vector<256x128xf32>
    %c0_91 = arith.constant 0 : index
    %c0_92 = arith.constant 0 : index
    %107 = vector.load %arg6[%c0_91, %c0_92] : memref<256x128xf32, #tpu.memory_space<vmem>>, vector<256x128xf32>
    tpu.vector_store %arg6[%c0_91, %c0_92], %106 {strides = array<i32>} : memref<256x128xf32, #tpu.memory_space<vmem>>, vector<256x128xf32>,
    %c0_93 = arith.constant 0 : index
    %c0_94 = arith.constant 0 : index
    %108 = vector.load %arg6[%c0_93, %c0_94] : memref<256x128xf32, #tpu.memory_space<vmem>>, vector<256x128xf32>
    %c0_95 = arith.constant 0 : index
    %c0_96 = arith.constant 0 : index
    %109 = vector.load %arg4[%c0_95, %c0_96] : memref<1x128xf32, #tpu.memory_space<vmem>>, vector<1x128xf32>
    %110 = vector.broadcast %109 : vector<1x128xf32> to vector<256x128xf32>
    %111 = arith.addf %108, %110 : vector<256x128xf32>
    %cst_97 = arith.constant 2.000000e-01 : f32
    %112 = vector.broadcast %cst_97 : f32 to vector<256x128xf32>
    %113 = arith.mulf %112, %111 : vector<256x128xf32>
    %114 = arith.maximumf %111, %113 : vector<256x128xf32>
    %115 = vector.extract_strided_slice %114 {offsets = [0, 0], sizes = [256, 8], strides = [1, 1]} : vector<256x128xf32> to vector<256x8xf32>
    %116 = vector.shape_cast %115 : vector<256x8xf32> to vector<16x16x8xf32>
    %c0_98 = arith.constant 0 : index
    %c0_99 = arith.constant 0 : index
    %c0_100 = arith.constant 0 : index
    %c0_101 = arith.constant 0 : index
    %117 = vector.load %arg5[%c0_98, %c0_99, %c0_100, %c0_101] : memref<1x16x16x8xf32, #tpu.memory_space<vmem>>, vector<1x16x16x8xf32>
    %118 = vector.shape_cast %117 : vector<1x16x16x8xf32> to vector<16x16x8xf32>
    %119 = vector.shape_cast %116 : vector<16x16x8xf32> to vector<1x16x16x8xf32>
    tpu.vector_store %arg5[%c0_98, %c0_99, %c0_100, %c0_101], %119 {strides = array<i32>} : memref<1x16x16x8xf32, #tpu.memory_space<vmem>>, vector<1x16x16x8xf32>,
    return
  }
  func.func @transform_0(%arg0: i32, %arg1: i32) -> (i32, i32, i32, i32) {
    %c0_i32 = arith.constant 0 : i32
    %c0_i32_0 = arith.constant 0 : i32
    %c0_i32_1 = arith.constant 0 : i32
    %c0_i32_2 = arith.constant 0 : i32
    return %arg0, %c0_i32, %c0_i32_0, %c0_i32_1 : i32, i32, i32, i32
  }
  func.func @transform_1(%arg0: i32, %arg1: i32) -> (i32, i32, i32) {
    %c0_i32 = arith.constant 0 : i32
    %c0_i32_0 = arith.constant 0 : i32
    %c0_i32_1 = arith.constant 0 : i32
    %c0_i32_2 = arith.constant 0 : i32
    return %c0_i32, %c0_i32_0, %c0_i32_1 : i32, i32, i32
  }
  func.func @transform_2(%arg0: i32, %arg1: i32) -> (i32, i32) {
    %c0_i32 = arith.constant 0 : i32
    %c0_i32_0 = arith.constant 0 : i32
    %c0_i32_1 = arith.constant 0 : i32
    return %c0_i32, %c0_i32_0 : i32, i32
  }
  func.func @transform_3(%arg0: i32, %arg1: i32) -> (i32, i32, i32, i32) {
    %c0_i32 = arith.constant 0 : i32
    %c0_i32_0 = arith.constant 0 : i32
    %c0_i32_1 = arith.constant 0 : i32
    return %arg0, %arg1, %c0_i32, %c0_i32_0 : i32, i32, i32, i32
  }
}

module attributes {stable_mosaic.version = 11 : i64} {
  func.func @_conv_block_kernel(%arg0: i32, %arg1: i32, %arg2: memref<1x18x18x4xf32, #tpu.memory_space<vmem>>, %arg3: memref<9x4x128xbf16, #tpu.memory_space<vmem>>, %arg4: memref<1x128xf32, #tpu.memory_space<vmem>>, %arg5: memref<1x16x16x8xf32, #tpu.memory_space<vmem>>, %arg6: memref<256x128xf32, #tpu.memory_space<vmem>>) attributes {dimension_semantics = [#tpu.dimension_semantics<parallel>, #tpu.dimension_semantics<parallel>], iteration_bounds = array<i64: 2, 1>, scalar_prefetch = 0 : i64, scratch_operands = 1 : i64, tpu.core_type = #tpu.core_type<tc>, window_params = [{transform_indices = @transform_0, window_bounds = array<i64: 1, 18, 18, 4>}, {pipeline_mode = #tpu.pipeline_mode<synchronous>, transform_indices = @transform_1, window_bounds = array<i64: 9, 4, 128>}, {pipeline_mode = #tpu.pipeline_mode<synchronous>, transform_indices = @transform_2, window_bounds = array<i64: 1, 128>}, {transform_indices = @transform_3, window_bounds = array<i64: 1, 16, 16, 8>}]} {
    %c16_i32 = arith.constant 16 : i32
    %0 = arith.muli %arg1, %c16_i32 : i32
    %1 = tpu.assume_multiple %0, 16 : i32
    %c0_i32 = arith.constant 0 : i32
    %2 = arith.addi %1, %c0_i32 : i32
    %c0 = arith.constant 0 : index
    %3 = arith.index_cast %2 : i32 to index
    %c0_0 = arith.constant 0 : index
    %c0_1 = arith.constant 0 : index
    %4 = vector.load %arg2[%c0, %3, %c0_0, %c0_1] : memref<1x18x18x4xf32, #tpu.memory_space<vmem>>, vector<1x16x16x4xf32>
    %5 = vector.shape_cast %4 : vector<1x16x16x4xf32> to vector<16x16x4xf32>
    %6 = vector.shape_cast %5 : vector<16x16x4xf32> to vector<256x4xf32>
    %7 = arith.truncf %6 : vector<256x4xf32> to vector<256x4xbf16>
    %c0_2 = arith.constant 0 : index
    %c0_3 = arith.constant 0 : index
    %c0_4 = arith.constant 0 : index
    %8 = vector.load %arg3[%c0_2, %c0_3, %c0_4] : memref<9x4x128xbf16, #tpu.memory_space<vmem>>, vector<1x4x128xbf16>
    %9 = vector.shape_cast %8 : vector<1x4x128xbf16> to vector<4x128xbf16>
    %cst = arith.constant dense<0.000000e+00> : vector<256x128xf32>
    %10 = tpu.matmul %7, %9, %cst {dimension_numbers = #tpu.dot_dimension_numbers<[1], [0], [0], [1], [0, 0, 1, 1], [], []>} : vector<256x4xbf16>, vector<4x128xbf16>, vector<256x128xf32> -> vector<256x128xf32>
    %c0_5 = arith.constant 0 : index
    %c0_6 = arith.constant 0 : index
    %11 = vector.load %arg6[%c0_5, %c0_6] : memref<256x128xf32, #tpu.memory_space<vmem>>, vector<256x128xf32>
    tpu.vector_store %arg6[%c0_5, %c0_6], %10 {strides = array<i32>} : memref<256x128xf32, #tpu.memory_space<vmem>>, vector<256x128xf32>,
    %c0_i32_7 = arith.constant 0 : i32
    %12 = arith.addi %1, %c0_i32_7 : i32
    %c0_8 = arith.constant 0 : index
    %13 = arith.index_cast %12 : i32 to index
    %c1 = arith.constant 1 : index
    %c0_9 = arith.constant 0 : index
    %14 = vector.load %arg2[%c0_8, %13, %c1, %c0_9] : memref<1x18x18x4xf32, #tpu.memory_space<vmem>>, vector<1x16x16x4xf32>
    %15 = vector.shape_cast %14 : vector<1x16x16x4xf32> to vector<16x16x4xf32>
    %16 = vector.shape_cast %15 : vector<16x16x4xf32> to vector<256x4xf32>
    %17 = arith.truncf %16 : vector<256x4xf32> to vector<256x4xbf16>
    %c1_10 = arith.constant 1 : index
    %c0_11 = arith.constant 0 : index
    %c0_12 = arith.constant 0 : index
    %18 = vector.load %arg3[%c1_10, %c0_11, %c0_12] : memref<9x4x128xbf16, #tpu.memory_space<vmem>>, vector<1x4x128xbf16>
    %19 = vector.shape_cast %18 : vector<1x4x128xbf16> to vector<4x128xbf16>
    %cst_13 = arith.constant dense<0.000000e+00> : vector<256x128xf32>
    %20 = tpu.matmul %17, %19, %cst_13 {dimension_numbers = #tpu.dot_dimension_numbers<[1], [0], [0], [1], [0, 0, 1, 1], [], []>} : vector<256x4xbf16>, vector<4x128xbf16>, vector<256x128xf32> -> vector<256x128xf32>
    %c0_14 = arith.constant 0 : index
    %c0_15 = arith.constant 0 : index
    %21 = vector.load %arg6[%c0_14, %c0_15] : memref<256x128xf32, #tpu.memory_space<vmem>>, vector<256x128xf32>
    %22 = arith.addf %21, %20 : vector<256x128xf32>
    %c0_16 = arith.constant 0 : index
    %c0_17 = arith.constant 0 : index
    %23 = vector.load %arg6[%c0_16, %c0_17] : memref<256x128xf32, #tpu.memory_space<vmem>>, vector<256x128xf32>
    tpu.vector_store %arg6[%c0_16, %c0_17], %22 {strides = array<i32>} : memref<256x128xf32, #tpu.memory_space<vmem>>, vector<256x128xf32>,
    %c0_i32_18 = arith.constant 0 : i32
    %24 = arith.addi %1, %c0_i32_18 : i32
    %c0_19 = arith.constant 0 : index
    %25 = arith.index_cast %24 : i32 to index
    %c2 = arith.constant 2 : index
    %c0_20 = arith.constant 0 : index
    %26 = vector.load %arg2[%c0_19, %25, %c2, %c0_20] : memref<1x18x18x4xf32, #tpu.memory_space<vmem>>, vector<1x16x16x4xf32>
    %27 = vector.shape_cast %26 : vector<1x16x16x4xf32> to vector<16x16x4xf32>
    %28 = vector.shape_cast %27 : vector<16x16x4xf32> to vector<256x4xf32>
    %29 = arith.truncf %28 : vector<256x4xf32> to vector<256x4xbf16>
    %c2_21 = arith.constant 2 : index
    %c0_22 = arith.constant 0 : index
    %c0_23 = arith.constant 0 : index
    %30 = vector.load %arg3[%c2_21, %c0_22, %c0_23] : memref<9x4x128xbf16, #tpu.memory_space<vmem>>, vector<1x4x128xbf16>
    %31 = vector.shape_cast %30 : vector<1x4x128xbf16> to vector<4x128xbf16>
    %cst_24 = arith.constant dense<0.000000e+00> : vector<256x128xf32>
    %32 = tpu.matmul %29, %31, %cst_24 {dimension_numbers = #tpu.dot_dimension_numbers<[1], [0], [0], [1], [0, 0, 1, 1], [], []>} : vector<256x4xbf16>, vector<4x128xbf16>, vector<256x128xf32> -> vector<256x128xf32>
    %c0_25 = arith.constant 0 : index
    %c0_26 = arith.constant 0 : index
    %33 = vector.load %arg6[%c0_25, %c0_26] : memref<256x128xf32, #tpu.memory_space<vmem>>, vector<256x128xf32>
    %34 = arith.addf %33, %32 : vector<256x128xf32>
    %c0_27 = arith.constant 0 : index
    %c0_28 = arith.constant 0 : index
    %35 = vector.load %arg6[%c0_27, %c0_28] : memref<256x128xf32, #tpu.memory_space<vmem>>, vector<256x128xf32>
    tpu.vector_store %arg6[%c0_27, %c0_28], %34 {strides = array<i32>} : memref<256x128xf32, #tpu.memory_space<vmem>>, vector<256x128xf32>,
    %c1_i32 = arith.constant 1 : i32
    %36 = arith.addi %1, %c1_i32 : i32
    %c0_29 = arith.constant 0 : index
    %37 = arith.index_cast %36 : i32 to index
    %c0_30 = arith.constant 0 : index
    %c0_31 = arith.constant 0 : index
    %38 = vector.load %arg2[%c0_29, %37, %c0_30, %c0_31] : memref<1x18x18x4xf32, #tpu.memory_space<vmem>>, vector<1x16x16x4xf32>
    %39 = vector.shape_cast %38 : vector<1x16x16x4xf32> to vector<16x16x4xf32>
    %40 = vector.shape_cast %39 : vector<16x16x4xf32> to vector<256x4xf32>
    %41 = arith.truncf %40 : vector<256x4xf32> to vector<256x4xbf16>
    %c3 = arith.constant 3 : index
    %c0_32 = arith.constant 0 : index
    %c0_33 = arith.constant 0 : index
    %42 = vector.load %arg3[%c3, %c0_32, %c0_33] : memref<9x4x128xbf16, #tpu.memory_space<vmem>>, vector<1x4x128xbf16>
    %43 = vector.shape_cast %42 : vector<1x4x128xbf16> to vector<4x128xbf16>
    %cst_34 = arith.constant dense<0.000000e+00> : vector<256x128xf32>
    %44 = tpu.matmul %41, %43, %cst_34 {dimension_numbers = #tpu.dot_dimension_numbers<[1], [0], [0], [1], [0, 0, 1, 1], [], []>} : vector<256x4xbf16>, vector<4x128xbf16>, vector<256x128xf32> -> vector<256x128xf32>
    %c0_35 = arith.constant 0 : index
    %c0_36 = arith.constant 0 : index
    %45 = vector.load %arg6[%c0_35, %c0_36] : memref<256x128xf32, #tpu.memory_space<vmem>>, vector<256x128xf32>
    %46 = arith.addf %45, %44 : vector<256x128xf32>
    %c0_37 = arith.constant 0 : index
    %c0_38 = arith.constant 0 : index
    %47 = vector.load %arg6[%c0_37, %c0_38] : memref<256x128xf32, #tpu.memory_space<vmem>>, vector<256x128xf32>
    tpu.vector_store %arg6[%c0_37, %c0_38], %46 {strides = array<i32>} : memref<256x128xf32, #tpu.memory_space<vmem>>, vector<256x128xf32>,
    %c1_i32_39 = arith.constant 1 : i32
    %48 = arith.addi %1, %c1_i32_39 : i32
    %c0_40 = arith.constant 0 : index
    %49 = arith.index_cast %48 : i32 to index
    %c1_41 = arith.constant 1 : index
    %c0_42 = arith.constant 0 : index
    %50 = vector.load %arg2[%c0_40, %49, %c1_41, %c0_42] : memref<1x18x18x4xf32, #tpu.memory_space<vmem>>, vector<1x16x16x4xf32>
    %51 = vector.shape_cast %50 : vector<1x16x16x4xf32> to vector<16x16x4xf32>
    %52 = vector.shape_cast %51 : vector<16x16x4xf32> to vector<256x4xf32>
    %53 = arith.truncf %52 : vector<256x4xf32> to vector<256x4xbf16>
    %c4 = arith.constant 4 : index
    %c0_43 = arith.constant 0 : index
    %c0_44 = arith.constant 0 : index
    %54 = vector.load %arg3[%c4, %c0_43, %c0_44] : memref<9x4x128xbf16, #tpu.memory_space<vmem>>, vector<1x4x128xbf16>
    %55 = vector.shape_cast %54 : vector<1x4x128xbf16> to vector<4x128xbf16>
    %cst_45 = arith.constant dense<0.000000e+00> : vector<256x128xf32>
    %56 = tpu.matmul %53, %55, %cst_45 {dimension_numbers = #tpu.dot_dimension_numbers<[1], [0], [0], [1], [0, 0, 1, 1], [], []>} : vector<256x4xbf16>, vector<4x128xbf16>, vector<256x128xf32> -> vector<256x128xf32>
    %c0_46 = arith.constant 0 : index
    %c0_47 = arith.constant 0 : index
    %57 = vector.load %arg6[%c0_46, %c0_47] : memref<256x128xf32, #tpu.memory_space<vmem>>, vector<256x128xf32>
    %58 = arith.addf %57, %56 : vector<256x128xf32>
    %c0_48 = arith.constant 0 : index
    %c0_49 = arith.constant 0 : index
    %59 = vector.load %arg6[%c0_48, %c0_49] : memref<256x128xf32, #tpu.memory_space<vmem>>, vector<256x128xf32>
    tpu.vector_store %arg6[%c0_48, %c0_49], %58 {strides = array<i32>} : memref<256x128xf32, #tpu.memory_space<vmem>>, vector<256x128xf32>,
    %c1_i32_50 = arith.constant 1 : i32
    %60 = arith.addi %1, %c1_i32_50 : i32
    %c0_51 = arith.constant 0 : index
    %61 = arith.index_cast %60 : i32 to index
    %c2_52 = arith.constant 2 : index
    %c0_53 = arith.constant 0 : index
    %62 = vector.load %arg2[%c0_51, %61, %c2_52, %c0_53] : memref<1x18x18x4xf32, #tpu.memory_space<vmem>>, vector<1x16x16x4xf32>
    %63 = vector.shape_cast %62 : vector<1x16x16x4xf32> to vector<16x16x4xf32>
    %64 = vector.shape_cast %63 : vector<16x16x4xf32> to vector<256x4xf32>
    %65 = arith.truncf %64 : vector<256x4xf32> to vector<256x4xbf16>
    %c5 = arith.constant 5 : index
    %c0_54 = arith.constant 0 : index
    %c0_55 = arith.constant 0 : index
    %66 = vector.load %arg3[%c5, %c0_54, %c0_55] : memref<9x4x128xbf16, #tpu.memory_space<vmem>>, vector<1x4x128xbf16>
    %67 = vector.shape_cast %66 : vector<1x4x128xbf16> to vector<4x128xbf16>
    %cst_56 = arith.constant dense<0.000000e+00> : vector<256x128xf32>
    %68 = tpu.matmul %65, %67, %cst_56 {dimension_numbers = #tpu.dot_dimension_numbers<[1], [0], [0], [1], [0, 0, 1, 1], [], []>} : vector<256x4xbf16>, vector<4x128xbf16>, vector<256x128xf32> -> vector<256x128xf32>
    %c0_57 = arith.constant 0 : index
    %c0_58 = arith.constant 0 : index
    %69 = vector.load %arg6[%c0_57, %c0_58] : memref<256x128xf32, #tpu.memory_space<vmem>>, vector<256x128xf32>
    %70 = arith.addf %69, %68 : vector<256x128xf32>
    %c0_59 = arith.constant 0 : index
    %c0_60 = arith.constant 0 : index
    %71 = vector.load %arg6[%c0_59, %c0_60] : memref<256x128xf32, #tpu.memory_space<vmem>>, vector<256x128xf32>
    tpu.vector_store %arg6[%c0_59, %c0_60], %70 {strides = array<i32>} : memref<256x128xf32, #tpu.memory_space<vmem>>, vector<256x128xf32>,
    %c2_i32 = arith.constant 2 : i32
    %72 = arith.addi %1, %c2_i32 : i32
    %c0_61 = arith.constant 0 : index
    %73 = arith.index_cast %72 : i32 to index
    %c0_62 = arith.constant 0 : index
    %c0_63 = arith.constant 0 : index
    %74 = vector.load %arg2[%c0_61, %73, %c0_62, %c0_63] : memref<1x18x18x4xf32, #tpu.memory_space<vmem>>, vector<1x16x16x4xf32>
    %75 = vector.shape_cast %74 : vector<1x16x16x4xf32> to vector<16x16x4xf32>
    %76 = vector.shape_cast %75 : vector<16x16x4xf32> to vector<256x4xf32>
    %77 = arith.truncf %76 : vector<256x4xf32> to vector<256x4xbf16>
    %c6 = arith.constant 6 : index
    %c0_64 = arith.constant 0 : index
    %c0_65 = arith.constant 0 : index
    %78 = vector.load %arg3[%c6, %c0_64, %c0_65] : memref<9x4x128xbf16, #tpu.memory_space<vmem>>, vector<1x4x128xbf16>
    %79 = vector.shape_cast %78 : vector<1x4x128xbf16> to vector<4x128xbf16>
    %cst_66 = arith.constant dense<0.000000e+00> : vector<256x128xf32>
    %80 = tpu.matmul %77, %79, %cst_66 {dimension_numbers = #tpu.dot_dimension_numbers<[1], [0], [0], [1], [0, 0, 1, 1], [], []>} : vector<256x4xbf16>, vector<4x128xbf16>, vector<256x128xf32> -> vector<256x128xf32>
    %c0_67 = arith.constant 0 : index
    %c0_68 = arith.constant 0 : index
    %81 = vector.load %arg6[%c0_67, %c0_68] : memref<256x128xf32, #tpu.memory_space<vmem>>, vector<256x128xf32>
    %82 = arith.addf %81, %80 : vector<256x128xf32>
    %c0_69 = arith.constant 0 : index
    %c0_70 = arith.constant 0 : index
    %83 = vector.load %arg6[%c0_69, %c0_70] : memref<256x128xf32, #tpu.memory_space<vmem>>, vector<256x128xf32>
    tpu.vector_store %arg6[%c0_69, %c0_70], %82 {strides = array<i32>} : memref<256x128xf32, #tpu.memory_space<vmem>>, vector<256x128xf32>,
    %c2_i32_71 = arith.constant 2 : i32
    %84 = arith.addi %1, %c2_i32_71 : i32
    %c0_72 = arith.constant 0 : index
    %85 = arith.index_cast %84 : i32 to index
    %c1_73 = arith.constant 1 : index
    %c0_74 = arith.constant 0 : index
    %86 = vector.load %arg2[%c0_72, %85, %c1_73, %c0_74] : memref<1x18x18x4xf32, #tpu.memory_space<vmem>>, vector<1x16x16x4xf32>
    %87 = vector.shape_cast %86 : vector<1x16x16x4xf32> to vector<16x16x4xf32>
    %88 = vector.shape_cast %87 : vector<16x16x4xf32> to vector<256x4xf32>
    %89 = arith.truncf %88 : vector<256x4xf32> to vector<256x4xbf16>
    %c7 = arith.constant 7 : index
    %c0_75 = arith.constant 0 : index
    %c0_76 = arith.constant 0 : index
    %90 = vector.load %arg3[%c7, %c0_75, %c0_76] : memref<9x4x128xbf16, #tpu.memory_space<vmem>>, vector<1x4x128xbf16>
    %91 = vector.shape_cast %90 : vector<1x4x128xbf16> to vector<4x128xbf16>
    %cst_77 = arith.constant dense<0.000000e+00> : vector<256x128xf32>
    %92 = tpu.matmul %89, %91, %cst_77 {dimension_numbers = #tpu.dot_dimension_numbers<[1], [0], [0], [1], [0, 0, 1, 1], [], []>} : vector<256x4xbf16>, vector<4x128xbf16>, vector<256x128xf32> -> vector<256x128xf32>
    %c0_78 = arith.constant 0 : index
    %c0_79 = arith.constant 0 : index
    %93 = vector.load %arg6[%c0_78, %c0_79] : memref<256x128xf32, #tpu.memory_space<vmem>>, vector<256x128xf32>
    %94 = arith.addf %93, %92 : vector<256x128xf32>
    %c0_80 = arith.constant 0 : index
    %c0_81 = arith.constant 0 : index
    %95 = vector.load %arg6[%c0_80, %c0_81] : memref<256x128xf32, #tpu.memory_space<vmem>>, vector<256x128xf32>
    tpu.vector_store %arg6[%c0_80, %c0_81], %94 {strides = array<i32>} : memref<256x128xf32, #tpu.memory_space<vmem>>, vector<256x128xf32>,
    %c2_i32_82 = arith.constant 2 : i32
    %96 = arith.addi %1, %c2_i32_82 : i32
    %c0_83 = arith.constant 0 : index
    %97 = arith.index_cast %96 : i32 to index
    %c2_84 = arith.constant 2 : index
    %c0_85 = arith.constant 0 : index
    %98 = vector.load %arg2[%c0_83, %97, %c2_84, %c0_85] : memref<1x18x18x4xf32, #tpu.memory_space<vmem>>, vector<1x16x16x4xf32>
    %99 = vector.shape_cast %98 : vector<1x16x16x4xf32> to vector<16x16x4xf32>
    %100 = vector.shape_cast %99 : vector<16x16x4xf32> to vector<256x4xf32>
    %101 = arith.truncf %100 : vector<256x4xf32> to vector<256x4xbf16>
    %c8 = arith.constant 8 : index
    %c0_86 = arith.constant 0 : index
    %c0_87 = arith.constant 0 : index
    %102 = vector.load %arg3[%c8, %c0_86, %c0_87] : memref<9x4x128xbf16, #tpu.memory_space<vmem>>, vector<1x4x128xbf16>
    %103 = vector.shape_cast %102 : vector<1x4x128xbf16> to vector<4x128xbf16>
    %cst_88 = arith.constant dense<0.000000e+00> : vector<256x128xf32>
    %104 = tpu.matmul %101, %103, %cst_88 {dimension_numbers = #tpu.dot_dimension_numbers<[1], [0], [0], [1], [0, 0, 1, 1], [], []>} : vector<256x4xbf16>, vector<4x128xbf16>, vector<256x128xf32> -> vector<256x128xf32>
    %c0_89 = arith.constant 0 : index
    %c0_90 = arith.constant 0 : index
    %105 = vector.load %arg6[%c0_89, %c0_90] : memref<256x128xf32, #tpu.memory_space<vmem>>, vector<256x128xf32>
    %106 = arith.addf %105, %104 : vector<256x128xf32>
    %c0_91 = arith.constant 0 : index
    %c0_92 = arith.constant 0 : index
    %107 = vector.load %arg6[%c0_91, %c0_92] : memref<256x128xf32, #tpu.memory_space<vmem>>, vector<256x128xf32>
    tpu.vector_store %arg6[%c0_91, %c0_92], %106 {strides = array<i32>} : memref<256x128xf32, #tpu.memory_space<vmem>>, vector<256x128xf32>,
    %c0_93 = arith.constant 0 : index
    %c0_94 = arith.constant 0 : index
    %108 = vector.load %arg6[%c0_93, %c0_94] : memref<256x128xf32, #tpu.memory_space<vmem>>, vector<256x128xf32>
    %c0_95 = arith.constant 0 : index
    %c0_96 = arith.constant 0 : index
    %109 = vector.load %arg4[%c0_95, %c0_96] : memref<1x128xf32, #tpu.memory_space<vmem>>, vector<1x128xf32>
    %110 = vector.broadcast %109 : vector<1x128xf32> to vector<256x128xf32>
    %111 = arith.addf %108, %110 : vector<256x128xf32>
    %cst_97 = arith.constant 2.000000e-01 : f32
    %112 = vector.broadcast %cst_97 : f32 to vector<256x128xf32>
    %113 = arith.mulf %112, %111 : vector<256x128xf32>
    %114 = arith.maximumf %111, %113 : vector<256x128xf32>
    %115 = vector.extract_strided_slice %114 {offsets = [0, 0], sizes = [256, 8], strides = [1, 1]} : vector<256x128xf32> to vector<256x8xf32>
    %116 = vector.shape_cast %115 : vector<256x8xf32> to vector<16x16x8xf32>
    %c0_98 = arith.constant 0 : index
    %c0_99 = arith.constant 0 : index
    %c0_100 = arith.constant 0 : index
    %c0_101 = arith.constant 0 : index
    %117 = vector.load %arg5[%c0_98, %c0_99, %c0_100, %c0_101] : memref<1x16x16x8xf32, #tpu.memory_space<vmem>>, vector<1x16x16x8xf32>
    %118 = vector.shape_cast %117 : vector<1x16x16x8xf32> to vector<16x16x8xf32>
    %119 = vector.shape_cast %116 : vector<16x16x8xf32> to vector<1x16x16x8xf32>
    tpu.vector_store %arg5[%c0_98, %c0_99, %c0_100, %c0_101], %119 {strides = array<i32>} : memref<1x16x16x8xf32, #tpu.memory_space<vmem>>, vector<1x16x16x8xf32>,
    return
  }
  func.func @transform_0(%arg0: i32, %arg1: i32) -> (i32, i32, i32, i32) {
    %c0_i32 = arith.constant 0 : i32
    %c0_i32_0 = arith.constant 0 : i32
    %c0_i32_1 = arith.constant 0 : i32
    %c0_i32_2 = arith.constant 0 : i32
    return %arg0, %c0_i32, %c0_i32_0, %c0_i32_1 : i32, i32, i32, i32
  }
  func.func @transform_1(%arg0: i32, %arg1: i32) -> (i32, i32, i32) {
    %c0_i32 = arith.constant 0 : i32
    %c0_i32_0 = arith.constant 0 : i32
    %c0_i32_1 = arith.constant 0 : i32
    %c0_i32_2 = arith.constant 0 : i32
    return %c0_i32, %c0_i32_0, %c0_i32_1 : i32, i32, i32
  }
  func.func @transform_2(%arg0: i32, %arg1: i32) -> (i32, i32) {
    %c0_i32 = arith.constant 0 : i32
    %c0_i32_0 = arith.constant 0 : i32
    %c0_i32_1 = arith.constant 0 : i32
    return %c0_i32, %c0_i32_0 : i32, i32
  }
  func.func @transform_3(%arg0: i32, %arg1: i32) -> (i32, i32, i32, i32) {
    %c0_i32 = arith.constant 0 : i32
    %c0_i32_0 = arith.constant 0 : i32
    %c0_i32_1 = arith.constant 0 : i32
    return %arg0, %arg1, %c0_i32, %c0_i32_0 : i32, i32, i32, i32
  }
}

module attributes {stable_mosaic.version = 11 : i64} {
  func.func @_conv_block_kernel(%arg0: i32, %arg1: i32, %arg2: memref<1x18x18x4xf32, #tpu.memory_space<vmem>>, %arg3: memref<36x128xf32, #tpu.memory_space<vmem>>, %arg4: memref<1x128xf32, #tpu.memory_space<vmem>>, %arg5: memref<1x16x16x128xf32, #tpu.memory_space<vmem>>, %arg6: memref<256x36xf32, #tpu.memory_space<vmem>>) attributes {dimension_semantics = [#tpu.dimension_semantics<parallel>, #tpu.dimension_semantics<parallel>], iteration_bounds = array<i64: 2, 1>, scalar_prefetch = 0 : i64, scratch_operands = 1 : i64, tpu.core_type = #tpu.core_type<tc>, window_params = [{transform_indices = @transform_0, window_bounds = array<i64: 1, 18, 18, 4>}, {pipeline_mode = #tpu.pipeline_mode<synchronous>, transform_indices = @transform_1, window_bounds = array<i64: 36, 128>}, {pipeline_mode = #tpu.pipeline_mode<synchronous>, transform_indices = @transform_2, window_bounds = array<i64: 1, 128>}, {transform_indices = @transform_3, window_bounds = array<i64: 1, 16, 16, 128>}]} {
    %c16_i32 = arith.constant 16 : i32
    %0 = arith.muli %arg1, %c16_i32 : i32
    %1 = tpu.assume_multiple %0, 16 : i32
    %c0_i32 = arith.constant 0 : i32
    %2 = arith.addi %1, %c0_i32 : i32
    %c0 = arith.constant 0 : index
    %3 = arith.index_cast %2 : i32 to index
    %c0_0 = arith.constant 0 : index
    %c0_1 = arith.constant 0 : index
    %4 = vector.load %arg2[%c0, %3, %c0_0, %c0_1] : memref<1x18x18x4xf32, #tpu.memory_space<vmem>>, vector<1x16x16x4xf32>
    %5 = vector.shape_cast %4 : vector<1x16x16x4xf32> to vector<16x16x4xf32>
    %6 = vector.shape_cast %5 : vector<16x16x4xf32> to vector<256x4xf32>
    %c0_2 = arith.constant 0 : index
    %c0_3 = arith.constant 0 : index
    %7 = vector.load %arg6[%c0_2, %c0_3] : memref<256x36xf32, #tpu.memory_space<vmem>>, vector<256x4xf32>
    tpu.vector_store %arg6[%c0_2, %c0_3], %6 {strides = array<i32>} : memref<256x36xf32, #tpu.memory_space<vmem>>, vector<256x4xf32>,
    %c0_i32_4 = arith.constant 0 : i32
    %8 = arith.addi %1, %c0_i32_4 : i32
    %c0_5 = arith.constant 0 : index
    %9 = arith.index_cast %8 : i32 to index
    %c1 = arith.constant 1 : index
    %c0_6 = arith.constant 0 : index
    %10 = vector.load %arg2[%c0_5, %9, %c1, %c0_6] : memref<1x18x18x4xf32, #tpu.memory_space<vmem>>, vector<1x16x16x4xf32>
    %11 = vector.shape_cast %10 : vector<1x16x16x4xf32> to vector<16x16x4xf32>
    %12 = vector.shape_cast %11 : vector<16x16x4xf32> to vector<256x4xf32>
    %c0_7 = arith.constant 0 : index
    %c4 = arith.constant 4 : index
    %13 = vector.load %arg6[%c0_7, %c4] : memref<256x36xf32, #tpu.memory_space<vmem>>, vector<256x4xf32>
    tpu.vector_store %arg6[%c0_7, %c4], %12 {strides = array<i32>} : memref<256x36xf32, #tpu.memory_space<vmem>>, vector<256x4xf32>,
    %c0_i32_8 = arith.constant 0 : i32
    %14 = arith.addi %1, %c0_i32_8 : i32
    %c0_9 = arith.constant 0 : index
    %15 = arith.index_cast %14 : i32 to index
    %c2 = arith.constant 2 : index
    %c0_10 = arith.constant 0 : index
    %16 = vector.load %arg2[%c0_9, %15, %c2, %c0_10] : memref<1x18x18x4xf32, #tpu.memory_space<vmem>>, vector<1x16x16x4xf32>
    %17 = vector.shape_cast %16 : vector<1x16x16x4xf32> to vector<16x16x4xf32>
    %18 = vector.shape_cast %17 : vector<16x16x4xf32> to vector<256x4xf32>
    %c0_11 = arith.constant 0 : index
    %c8 = arith.constant 8 : index
    %19 = vector.load %arg6[%c0_11, %c8] : memref<256x36xf32, #tpu.memory_space<vmem>>, vector<256x4xf32>
    tpu.vector_store %arg6[%c0_11, %c8], %18 {strides = array<i32>} : memref<256x36xf32, #tpu.memory_space<vmem>>, vector<256x4xf32>,
    %c1_i32 = arith.constant 1 : i32
    %20 = arith.addi %1, %c1_i32 : i32
    %c0_12 = arith.constant 0 : index
    %21 = arith.index_cast %20 : i32 to index
    %c0_13 = arith.constant 0 : index
    %c0_14 = arith.constant 0 : index
    %22 = vector.load %arg2[%c0_12, %21, %c0_13, %c0_14] : memref<1x18x18x4xf32, #tpu.memory_space<vmem>>, vector<1x16x16x4xf32>
    %23 = vector.shape_cast %22 : vector<1x16x16x4xf32> to vector<16x16x4xf32>
    %24 = vector.shape_cast %23 : vector<16x16x4xf32> to vector<256x4xf32>
    %c0_15 = arith.constant 0 : index
    %c12 = arith.constant 12 : index
    %25 = vector.load %arg6[%c0_15, %c12] : memref<256x36xf32, #tpu.memory_space<vmem>>, vector<256x4xf32>
    tpu.vector_store %arg6[%c0_15, %c12], %24 {strides = array<i32>} : memref<256x36xf32, #tpu.memory_space<vmem>>, vector<256x4xf32>,
    %c1_i32_16 = arith.constant 1 : i32
    %26 = arith.addi %1, %c1_i32_16 : i32
    %c0_17 = arith.constant 0 : index
    %27 = arith.index_cast %26 : i32 to index
    %c1_18 = arith.constant 1 : index
    %c0_19 = arith.constant 0 : index
    %28 = vector.load %arg2[%c0_17, %27, %c1_18, %c0_19] : memref<1x18x18x4xf32, #tpu.memory_space<vmem>>, vector<1x16x16x4xf32>
    %29 = vector.shape_cast %28 : vector<1x16x16x4xf32> to vector<16x16x4xf32>
    %30 = vector.shape_cast %29 : vector<16x16x4xf32> to vector<256x4xf32>
    %c0_20 = arith.constant 0 : index
    %c16 = arith.constant 16 : index
    %31 = vector.load %arg6[%c0_20, %c16] : memref<256x36xf32, #tpu.memory_space<vmem>>, vector<256x4xf32>
    tpu.vector_store %arg6[%c0_20, %c16], %30 {strides = array<i32>} : memref<256x36xf32, #tpu.memory_space<vmem>>, vector<256x4xf32>,
    %c1_i32_21 = arith.constant 1 : i32
    %32 = arith.addi %1, %c1_i32_21 : i32
    %c0_22 = arith.constant 0 : index
    %33 = arith.index_cast %32 : i32 to index
    %c2_23 = arith.constant 2 : index
    %c0_24 = arith.constant 0 : index
    %34 = vector.load %arg2[%c0_22, %33, %c2_23, %c0_24] : memref<1x18x18x4xf32, #tpu.memory_space<vmem>>, vector<1x16x16x4xf32>
    %35 = vector.shape_cast %34 : vector<1x16x16x4xf32> to vector<16x16x4xf32>
    %36 = vector.shape_cast %35 : vector<16x16x4xf32> to vector<256x4xf32>
    %c0_25 = arith.constant 0 : index
    %c20 = arith.constant 20 : index
    %37 = vector.load %arg6[%c0_25, %c20] : memref<256x36xf32, #tpu.memory_space<vmem>>, vector<256x4xf32>
    tpu.vector_store %arg6[%c0_25, %c20], %36 {strides = array<i32>} : memref<256x36xf32, #tpu.memory_space<vmem>>, vector<256x4xf32>,
    %c2_i32 = arith.constant 2 : i32
    %38 = arith.addi %1, %c2_i32 : i32
    %c0_26 = arith.constant 0 : index
    %39 = arith.index_cast %38 : i32 to index
    %c0_27 = arith.constant 0 : index
    %c0_28 = arith.constant 0 : index
    %40 = vector.load %arg2[%c0_26, %39, %c0_27, %c0_28] : memref<1x18x18x4xf32, #tpu.memory_space<vmem>>, vector<1x16x16x4xf32>
    %41 = vector.shape_cast %40 : vector<1x16x16x4xf32> to vector<16x16x4xf32>
    %42 = vector.shape_cast %41 : vector<16x16x4xf32> to vector<256x4xf32>
    %c0_29 = arith.constant 0 : index
    %c24 = arith.constant 24 : index
    %43 = vector.load %arg6[%c0_29, %c24] : memref<256x36xf32, #tpu.memory_space<vmem>>, vector<256x4xf32>
    tpu.vector_store %arg6[%c0_29, %c24], %42 {strides = array<i32>} : memref<256x36xf32, #tpu.memory_space<vmem>>, vector<256x4xf32>,
    %c2_i32_30 = arith.constant 2 : i32
    %44 = arith.addi %1, %c2_i32_30 : i32
    %c0_31 = arith.constant 0 : index
    %45 = arith.index_cast %44 : i32 to index
    %c1_32 = arith.constant 1 : index
    %c0_33 = arith.constant 0 : index
    %46 = vector.load %arg2[%c0_31, %45, %c1_32, %c0_33] : memref<1x18x18x4xf32, #tpu.memory_space<vmem>>, vector<1x16x16x4xf32>
    %47 = vector.shape_cast %46 : vector<1x16x16x4xf32> to vector<16x16x4xf32>
    %48 = vector.shape_cast %47 : vector<16x16x4xf32> to vector<256x4xf32>
    %c0_34 = arith.constant 0 : index
    %c28 = arith.constant 28 : index
    %49 = vector.load %arg6[%c0_34, %c28] : memref<256x36xf32, #tpu.memory_space<vmem>>, vector<256x4xf32>
    tpu.vector_store %arg6[%c0_34, %c28], %48 {strides = array<i32>} : memref<256x36xf32, #tpu.memory_space<vmem>>, vector<256x4xf32>,
    %c2_i32_35 = arith.constant 2 : i32
    %50 = arith.addi %1, %c2_i32_35 : i32
    %c0_36 = arith.constant 0 : index
    %51 = arith.index_cast %50 : i32 to index
    %c2_37 = arith.constant 2 : index
    %c0_38 = arith.constant 0 : index
    %52 = vector.load %arg2[%c0_36, %51, %c2_37, %c0_38] : memref<1x18x18x4xf32, #tpu.memory_space<vmem>>, vector<1x16x16x4xf32>
    %53 = vector.shape_cast %52 : vector<1x16x16x4xf32> to vector<16x16x4xf32>
    %54 = vector.shape_cast %53 : vector<16x16x4xf32> to vector<256x4xf32>
    %c0_39 = arith.constant 0 : index
    %c32 = arith.constant 32 : index
    %55 = vector.load %arg6[%c0_39, %c32] : memref<256x36xf32, #tpu.memory_space<vmem>>, vector<256x4xf32>
    tpu.vector_store %arg6[%c0_39, %c32], %54 {strides = array<i32>} : memref<256x36xf32, #tpu.memory_space<vmem>>, vector<256x4xf32>,
    %c0_40 = arith.constant 0 : index
    %c0_41 = arith.constant 0 : index
    %56 = vector.load %arg6[%c0_40, %c0_41] : memref<256x36xf32, #tpu.memory_space<vmem>>, vector<256x36xf32>
    %c0_42 = arith.constant 0 : index
    %c0_43 = arith.constant 0 : index
    %57 = vector.load %arg3[%c0_42, %c0_43] : memref<36x128xf32, #tpu.memory_space<vmem>>, vector<36x128xf32>
    %cst = arith.constant dense<0.000000e+00> : vector<256x128xf32>
    %58 = tpu.matmul %56, %57, %cst {dimension_numbers = #tpu.dot_dimension_numbers<[1], [0], [0], [1], [0, 0, 1, 1], [], []>} : vector<256x36xf32>, vector<36x128xf32>, vector<256x128xf32> -> vector<256x128xf32>
    %c0_44 = arith.constant 0 : index
    %c0_45 = arith.constant 0 : index
    %59 = vector.load %arg4[%c0_44, %c0_45] : memref<1x128xf32, #tpu.memory_space<vmem>>, vector<1x128xf32>
    %60 = vector.broadcast %59 : vector<1x128xf32> to vector<256x128xf32>
    %61 = arith.addf %58, %60 : vector<256x128xf32>
    %cst_46 = arith.constant 2.000000e-01 : f32
    %62 = vector.broadcast %cst_46 : f32 to vector<256x128xf32>
    %63 = arith.mulf %62, %61 : vector<256x128xf32>
    %64 = arith.maximumf %61, %63 : vector<256x128xf32>
    %65 = vector.shape_cast %64 : vector<256x128xf32> to vector<16x16x128xf32>
    %c0_47 = arith.constant 0 : index
    %c0_48 = arith.constant 0 : index
    %c0_49 = arith.constant 0 : index
    %c0_50 = arith.constant 0 : index
    %66 = vector.load %arg5[%c0_47, %c0_48, %c0_49, %c0_50] : memref<1x16x16x128xf32, #tpu.memory_space<vmem>>, vector<1x16x16x128xf32>
    %67 = vector.shape_cast %66 : vector<1x16x16x128xf32> to vector<16x16x128xf32>
    %68 = vector.shape_cast %65 : vector<16x16x128xf32> to vector<1x16x16x128xf32>
    tpu.vector_store %arg5[%c0_47, %c0_48, %c0_49, %c0_50], %68 {strides = array<i32>} : memref<1x16x16x128xf32, #tpu.memory_space<vmem>>, vector<1x16x16x128xf32>,
    return
  }
  func.func @transform_0(%arg0: i32, %arg1: i32) -> (i32, i32, i32, i32) {
    %c0_i32 = arith.constant 0 : i32
    %c0_i32_0 = arith.constant 0 : i32
    %c0_i32_1 = arith.constant 0 : i32
    %c0_i32_2 = arith.constant 0 : i32
    return %arg0, %c0_i32, %c0_i32_0, %c0_i32_1 : i32, i32, i32, i32
  }
  func.func @transform_1(%arg0: i32, %arg1: i32) -> (i32, i32) {
    %c0_i32 = arith.constant 0 : i32
    %c0_i32_0 = arith.constant 0 : i32
    %c0_i32_1 = arith.constant 0 : i32
    return %c0_i32, %c0_i32_0 : i32, i32
  }
  func.func @transform_2(%arg0: i32, %arg1: i32) -> (i32, i32) {
    %c0_i32 = arith.constant 0 : i32
    %c0_i32_0 = arith.constant 0 : i32
    %c0_i32_1 = arith.constant 0 : i32
    return %c0_i32, %c0_i32_0 : i32, i32
  }
  func.func @transform_3(%arg0: i32, %arg1: i32) -> (i32, i32, i32, i32) {
    %c0_i32 = arith.constant 0 : i32
    %c0_i32_0 = arith.constant 0 : i32
    %c0_i32_1 = arith.constant 0 : i32
    return %arg0, %arg1, %c0_i32, %c0_i32_0 : i32, i32, i32, i32
  }
}

</mosaic_0001>

<llo_original>
// kernel: tpu_custom_call.1
$region0: #{tpu_custom_call.1}
  #allocation0 [shape = 'u32[]', space=smem, size = 0x4, offset = 0x4, fixed_abs, tag = 'smem constant byte address 0x4 - core index']
  #allocation1 [shape = 'u32[144,128]{1,0:T(1,128)}', space=vmem, size = 0x12000, scoped, tag = 'internal scratch']
  #allocation2 [shape = 'f32[256,128]{1,0:T(8,128)}', space=vmem, size = 0x20000, scoped, tag = 'scratch operand']
  %s0 = inlined_call_operand.vmem [shape: f32[2,18,18,4], index: 0, kind: input, shape index: {}]
  %s1 = inlined_call_operand.vmem [shape: bf16[9,4,128], index: 1, kind: input, shape index: {}]
  %s2 = inlined_call_operand.vmem [shape: f32[1,128], index: 2, kind: input, shape index: {}]
  %s3 = inlined_call_operand.vmem [shape: f32[2,16,16,8], index: 3, kind: output, shape index: {}]
  %s4 = sld [smem:[#allocation0]]
  $region45: #{tpu_custom_call.1} parent=0
    _
  %s6 = ssub.s32 1, %s4
  %s7 = scalar_select 0, %s6, %s4
  loop: start=0, step=1, limit=4
  $region2: #{tpu_custom_call.1} parent=0 // loop_pre_header
    _
  $region3: #{tpu_custom_call.1} parent=0 // loop_header
    %s9 = sphi 0, %s13
    %p10 = scmp.ge.s32.totalorder %s9, 4
    %s16 = sphi 0, %s28
    %s17 = sphi 0, %s24
    %s18 = sphi 0, %s16
    %s19 = sphi 0, %s17
    %s20 = sphi 0, %s18
    %s21 = sphi 0, %s19
    %s31 = sphi 0, %s33
    %s34 = sphi 0, %s31
    %s35 = sphi 0, %s34
    %s51 = sphi 0, %s35
    %s55 = sphi 0, %s55
    %s57 = sphi 0, %s55
    %s58 = sphi 0, %s57
    %s72 = sphi 0, %s58
    %s76 = sphi 0, %s76
    %s78 = sphi 0, %s76
    %s79 = sphi 0, %s78
    %s93 = sphi 0, %s79
    %s101 = sphi 0, %s103
    %s104 = sphi 0, %s101
    %s105 = sphi 0, %s104
    %s121 = sphi 0, %s105
  $region4: #{tpu_custom_call.1} parent=0 // loop_header_branch
    %12 = sbr.rel (%p10) target = $region8
  $region5: #{tpu_custom_call.1} parent=0 // loop_body
    %s14 = ssub.s32 %s9, 1
    %s15 = ssub.s32 %s9, 2
    %s22 = sadd.s32 1, %s17
    %p23 = scmp.ge.s32.totalorder %s22, 1
    %s24 = scalar_select %p23, 0, %s22
    %s25 = sadd.s32 1, %s16
    %s26 = scalar_select %p23, %s25, %s16
    %p27 = scmp.ge.s32.totalorder %s26, 2
    %s28 = scalar_select %p27, 0, %s26
    %s29 = ssub.s32 %s16, %s28
    %p30 = scmp.eq.s32.totalorder %s29, 0
    %s32 = sadd.s32 %s31, 1
    %s33 = scalar_select %p30, %s31, %s32
    %p36 = pneg %p30
    %p37 = scmp.eq.s32.totalorder %s9, 1
    %p38 = por %p36, %p37
    %p39 = scmp.ne.s32.totalorder %s31, %s34
    %p40 = scmp.eq.s32.totalorder %s9, 0
    %p41 = por %p39, %p40
    %p42 = scmp.ne.s32.totalorder %s31, %s34
    %p43 = scmp.eq.s32.totalorder %s14, 1
    %p44 = por %p42, %p43
    %p45 = scmp.ne.s32.totalorder %s34, %s35
    %p46 = scmp.eq.s32.totalorder %s14, 0
    %p47 = por %p45, %p46
    %p48 = scmp.ne.s32.totalorder %s34, %s35
    %p49 = scmp.eq.s32.totalorder %s15, 1
    %p50 = por %p48, %p49
    %p52 = scmp.ne.s32.totalorder %s35, %s51
    %p53 = scmp.eq.s32.totalorder %s15, 0
    %p54 = por %p52, %p53
    %s56 = sadd.s32 %s55, 1
    %p59 = scmp.eq.s32.totalorder %s9, 1
    %p60 = scmp.ne.s32.totalorder %s55, %s57
    %p61 = scmp.eq.s32.totalorder %s9, 0
    %p62 = por %p60, %p61
    %p63 = scmp.ne.s32.totalorder %s55, %s57
    %p64 = scmp.eq.s32.totalorder %s14, 1
    %p65 = por %p63, %p64
    %p66 = scmp.ne.s32.totalorder %s57, %s58
    %p67 = scmp.eq.s32.totalorder %s14, 0
    %p68 = por %p66, %p67
    %p69 = scmp.ne.s32.totalorder %s57, %s58
    %p70 = scmp.eq.s32.totalorder %s15, 1
    %p71 = por %p69, %p70
    %p73 = scmp.ne.s32.totalorder %s58, %s72
    %p74 = scmp.eq.s32.totalorder %s15, 0
    %p75 = por %p73, %p74
    %s77 = sadd.s32 %s76, 1
    %p80 = scmp.eq.s32.totalorder %s9, 1
    %p81 = scmp.ne.s32.totalorder %s76, %s78
    %p82 = scmp.eq.s32.totalorder %s9, 0
    %p83 = por %p81, %p82
    %p84 = scmp.ne.s32.totalorder %s76, %s78
    %p85 = scmp.eq.s32.totalorder %s14, 1
    %p86 = por %p84, %p85
    %p87 = scmp.ne.s32.totalorder %s78, %s79
    %p88 = scmp.eq.s32.totalorder %s14, 0
    %p89 = por %p87, %p88
    %p90 = scmp.ne.s32.totalorder %s78, %s79
    %p91 = scmp.eq.s32.totalorder %s15, 1
    %p92 = por %p90, %p91
    %p94 = scmp.ne.s32.totalorder %s79, %s93
    %p95 = scmp.eq.s32.totalorder %s15, 0
    %p96 = por %p94, %p95
    %s97 = ssub.s32 %s16, %s28
    %s98 = ssub.s32 %s17, %s24
    %s99 = sor.u32 %s97, %s98
    %p100 = scmp.eq.s32.totalorder %s99, 0
    %s102 = sadd.s32 %s101, 1
    %s103 = scalar_select %p100, %s101, %s102
    %p106 = pneg %p100
    %p107 = scmp.eq.s32.totalorder %s9, 1
    %p108 = por %p106, %p107
    %p109 = scmp.ne.s32.totalorder %s101, %s104
    %p110 = scmp.eq.s32.totalorder %s9, 0
    %p111 = por %p109, %p110
    %p112 = scmp.ne.s32.totalorder %s101, %s104
    %p113 = scmp.eq.s32.totalorder %s14, 1
    %p114 = por %p112, %p113
    %p115 = scmp.ne.s32.totalorder %s104, %s105
    %p116 = scmp.eq.s32.totalorder %s14, 0
    %p117 = por %p115, %p116
    %p118 = scmp.ne.s32.totalorder %s104, %s105
    %p119 = scmp.eq.s32.totalorder %s15, 1
    %p120 = por %p118, %p119
    %p122 = scmp.ne.s32.totalorder %s105, %s121
    %p123 = scmp.eq.s32.totalorder %s15, 0
    %p124 = por %p122, %p123
    %p125 = scmp.le.s32.totalorder 1, %s9
    %p126 = scmp.lt.s32.totalorder %s9, 3
    %p127 = pnand %p125, %p126
    %p128 = pneg %p127
    // Predicated region
    $region9: #{tpu_custom_call.1} parent=5 // pred_check
      _
    $region10: #{tpu_custom_call.1} parent=5 // pred_check_branch
      %130 = sbr.rel (%p127) target = $region12
    $region11: #{tpu_custom_call.1} parent=5 // pred_region
      %s131 = ssub.s32 %s9, 1
      // Predicated region
      $region13: #{tpu_custom_call.1} parent=11 // pred_check
        %p132 = pneg %p68
      $region14: #{tpu_custom_call.1} parent=11 // pred_check_branch
        %134 = sbr.rel (%p132) target = $region16
      $region15: #{tpu_custom_call.1} parent=11 // pred_region
        _
      $region16: #{tpu_custom_call.1} parent=11 // pred_fallthru
        _
      // Predicated region
      $region17: #{tpu_custom_call.1} parent=11 // pred_check
        %p135 = pneg %p89
      $region18: #{tpu_custom_call.1} parent=11 // pred_check_branch
        %137 = sbr.rel (%p135) target = $region20
      $region19: #{tpu_custom_call.1} parent=11 // pred_region
        _
      $region20: #{tpu_custom_call.1} parent=11 // pred_fallthru
        _
    $region12: #{tpu_custom_call.1} parent=5 // pred_fallthru
      _
    %p138 = scmp.lt.s32.totalorder %s9, 2
    // Predicated region
    $region21: #{tpu_custom_call.1} parent=5 // pred_check
      %p139 = pneg %p138
    $region22: #{tpu_custom_call.1} parent=5 // pred_check_branch
      %141 = sbr.rel (%p139) target = $region24
    $region23: #{tpu_custom_call.1} parent=5 // pred_region
      // Predicated region
      $region25: #{tpu_custom_call.1} parent=23 // pred_check
        %p142 = pneg %p41
      $region26: #{tpu_custom_call.1} parent=23 // pred_check_branch
        %144 = sbr.rel (%p142) target = $region28
      $region27: #{tpu_custom_call.1} parent=23 // pred_region
        %p145 = scmp.lt.s32.totalorder %s16, 1
        %s146 = scalar_select %p145, %s16, 1
        %s147 = smul.addr %s146, 54
        %s148 = smul.addr %s147, 8
        %s149 = scalar_lea.vmem %s0, %s148
      $region28: #{tpu_custom_call.1} parent=23 // pred_fallthru
        _
    $region24: #{tpu_custom_call.1} parent=5 // pred_fallthru
      _
    %p150 = scmp.le.s32.totalorder 1, %s9
    %p151 = scmp.lt.s32.totalorder %s9, 3
    %p152 = pnand %p150, %p151
    %p153 = pneg %p152
    // Predicated region
    $region29: #{tpu_custom_call.1} parent=5 // pred_check
      _
    $region30: #{tpu_custom_call.1} parent=5 // pred_check_branch
      %155 = sbr.rel (%p152) target = $region32
    $region31: #{tpu_custom_call.1} parent=5 // pred_region
      %s156 = ssub.s32 %s9, 1
      %p157 = scmp.lt.s32.totalorder %s18, 1
      %s158 = scalar_select %p157, %s18, 1
      %s159 = smul.addr %s158, 54
      %s160 = smul.addr %s159, 8
      %s161 = scalar_lea.vmem %s0, %s160
      %p162 = pneg %p47
      %p163 = pneg %p44
      %p164 = pneg %p68
      %p165 = pneg %p65
      %p166 = pneg %p89
      %p167 = pneg %p86
      %p168 = pneg %p117
      %p169 = pneg %p114
      %s170 = smul.u32 16, %s19
      %p171 = scmp.lt.s32.totalorder %s18, 1
      %s172 = scalar_select %p171, %s18, 1
      %p173 = scmp.lt.s32.totalorder %s170, 15
      %s174 = scalar_select %p173, %s170, 15
      %s175 = smul.addr %s174, 2
      %s176 = smul.addr %s172, 32
      %s177 = sadd.s32 %s175, %s176
      %s178 = smul.addr %s177, 8
      %s179 = scalar_lea.vmem %s3, %s178
      %p180 = scmp.lt.s32.totalorder %s18, 1
      %s181 = scalar_select %p180, %s18, 1
      %s182 = smul.addr %s181, 54
      %s183 = smul.addr %s182, 8
      %s184 = scalar_lea.vmem %s0, %s183
      %s185 = smul.u32 16, %s19
      %p186 = scmp.lt.s32.totalorder %s18, 1
      %s187 = scalar_select %p186, %s18, 1
      %p188 = scmp.lt.s32.totalorder %s185, 15
      %s189 = scalar_select %p188, %s185, 15
      %s190 = smul.addr %s189, 2
      %s191 = smul.addr %s187, 32
      %s192 = sadd.s32 %s190, %s191
      %s193 = smul.addr %s192, 8
      %s194 = scalar_lea.vmem %s3, %s193
      %s195 = smul.u32 16, %s19
      %s197 = smul.u32 %s19, 16
      %s198 = smul.u32 %s197, 24
      %s199 = scalar_lea.vmem %s184, %s198
      %v200 = vld [vmem:[%s199] sm:$0xff]
      %v201 = vld [vmem:[%s199 + $0x8] sm:$0xff]
      %v202 = vld [vmem:[%s199 + $0x18] sm:$0xff]
      %v203 = vld [vmem:[%s199 + $0x20] sm:$0xff]
      %v204 = vld [vmem:[%s199 + $0x30] sm:$0xff]
      %v205 = vld [vmem:[%s199 + $0x38] sm:$0xff]
      %v206 = vld [vmem:[%s199 + $0x48] sm:$0xff]
      %v207 = vld [vmem:[%s199 + $0x50] sm:$0xff]
      %v208 = vld [vmem:[%s199 + $0x60] sm:$0xff]
      %v209 = vld [vmem:[%s199 + $0x68] sm:$0xff]
      %v210 = vld [vmem:[%s199 + $0x78] sm:$0xff]
      %v211 = vld [vmem:[%s199 + $0x80] sm:$0xff]
      %v212 = vld [vmem:[%s199 + $0x90] sm:$0xff]
      %v213 = vld [vmem:[%s199 + $0x98] sm:$0xff]
      %v214 = vld [vmem:[%s199 + $0xa8] sm:$0xff]
      %v215 = vld [vmem:[%s199 + $0xb0] sm:$0xff]
      %v216 = vld [vmem:[%s199 + $0xc0] sm:$0xff]
      %v217 = vld [vmem:[%s199 + $0xc8] sm:$0xff]
      %v218 = vld [vmem:[%s199 + $0xd8] sm:$0xff]
      %v219 = vld [vmem:[%s199 + $0xe0] sm:$0xff]
      %v220 = vld [vmem:[%s199 + $0xf0] sm:$0xff]
      %v221 = vld [vmem:[%s199 + $0xf8] sm:$0xff]
      %v222 = vld [vmem:[%s199 + $0x108] sm:$0xff]
      %v223 = vld [vmem:[%s199 + $0x110] sm:$0xff]
      %v224 = vld [vmem:[%s199 + $0x120] sm:$0xff]
      %v225 = vld [vmem:[%s199 + $0x128] sm:$0xff]
      %v226 = vld [vmem:[%s199 + $0x138] sm:$0xff]
      %v227 = vld [vmem:[%s199 + $0x140] sm:$0xff]
      %v228 = vld [vmem:[%s199 + $0x150] sm:$0xff]
      %v229 = vld [vmem:[%s199 + $0x158] sm:$0xff]
      %v230 = vld [vmem:[%s199 + $0x168] sm:$0xff]
      %v231 = vld [vmem:[%s199 + $0x170] sm:$0xff]
      %v232 = vpack.c.bf16 %v201, %v200
      %v233 = vpack.c.bf16 %v203, %v202
      %v234 = vpack.c.bf16 %v205, %v204
      %v235 = vpack.c.bf16 %v207, %v206
      %v236 = vpack.c.bf16 %v209, %v208
      %v237 = vpack.c.bf16 %v211, %v210
      %v238 = vpack.c.bf16 %v213, %v212
      %v239 = vpack.c.bf16 %v215, %v214
      %v240 = vpack.c.bf16 %v217, %v216
      %v241 = vpack.c.bf16 %v219, %v218
      %v242 = vpack.c.bf16 %v221, %v220
      %v243 = vpack.c.bf16 %v223, %v222
      %v244 = vpack.c.bf16 %v225, %v224
      %v245 = vpack.c.bf16 %v227, %v226
      %v246 = vpack.c.bf16 %v229, %v228
      %v247 = vpack.c.bf16 %v231, %v230
      %v248 = vld [vmem:[%s1] sm:$0x3]
      %vm249 = vcmask 31744
      %v251 = vsel %vm249, %v232, 0
      %v254 = vsel %vm249, %v233, 0
      %v257 = vsel %vm249, %v234, 0
      %v260 = vsel %vm249, %v235, 0
      %v263 = vsel %vm249, %v236, 0
      %v266 = vsel %vm249, %v237, 0
      %v269 = vsel %vm249, %v238, 0
      %v272 = vsel %vm249, %v239, 0
      %v275 = vsel %vm249, %v240, 0
      %v278 = vsel %vm249, %v241, 0
      %v281 = vsel %vm249, %v242, 0
      %v284 = vsel %vm249, %v243, 0
      %v287 = vsel %vm249, %v244, 0
      %v290 = vsel %vm249, %v245, 0
      %v293 = vsel %vm249, %v246, 0
      %v296 = vsel %vm249, %v247, 0
      %vm298 = vcmask 1041408
      %v300 = vsel %vm298, %v248, 0
      %302 = vmatprep.subr.bf16.mxu0 0
      %303 = vmatpush1.bf16.msra.mxu0 %v300
      %304 = vmatprep.subr.bf16.mxu0 0
      %305 = vmatpush1.bf16.msra.mxu0 0
      %306 = vmatprep.subr.bf16.mxu0 0
      %307 = vmatpush1.bf16.msra.mxu0 0
      %308 = vmatprep.subr.bf16.mxu0 0
      %309 = vmatpush1.bf16.msra.mxu0 0
      %310 = vmatprep.subr.bf16.mxu0 0
      %311 = vmatpush1.bf16.msra.mxu0 0
      %312 = vmatprep.subr.bf16.mxu0 0
      %313 = vmatpush1.bf16.msra.mxu0 0
      %314 = vmatprep.subr.bf16.mxu0 0
      %315 = vmatpush1.bf16.msra.mxu0 0
      %316 = vmatprep.subr.bf16.mxu0 0
      %317 = vmatpush1.bf16.msra.mxu0 0
      %318 = vmatprep.subr.bf16.mxu0 0
      %319 = vmatpush1.bf16.msra.mxu0 0
      %320 = vmatprep.subr.bf16.mxu0 0
      %321 = vmatpush1.bf16.msra.mxu0 0
      %322 = vmatprep.subr.bf16.mxu0 0
      %323 = vmatpush1.bf16.msra.mxu0 0
      %324 = vmatprep.subr.bf16.mxu0 0
      %325 = vmatpush1.bf16.msra.mxu0 0
      %326 = vmatprep.subr.bf16.mxu0 0
      %327 = vmatpush1.bf16.msra.mxu0 0
      %328 = vmatprep.subr.bf16.mxu0 0
      %329 = vmatpush1.bf16.msra.mxu0 0
      %330 = vmatprep.subr.bf16.mxu0 0
      %331 = vmatpush1.bf16.msra.mxu0 0
      %332 = vmatprep.subr.bf16.mxu0 0
      %333 = vmatpush1.bf16.msra.mxu0 0
      %334 = vmatprep.mubr.bf16.mxu0 0
      %335 = vmatmul.mubr.bf16.gmra.mrb[0].mxu0 %v251
      %v336 = vpop.f32.mrb[0].mxu0
      %v337 = vadd.f32 0.0, %v336
      %v338 = vpop.f32.mrb[0].mxu0
      %v339 = vpop.f32.mrb[0].mxu0
      %v340 = vadd.f32 0.0, %v339
      %v341 = vpop.f32.mrb[0].mxu0
      %342 = vmatprep.mubr.bf16.mxu0 0
      %343 = vmatmul.mubr.bf16.gmra.mrb[0].mxu0 %v254
      %v344 = vpop.f32.mrb[0].mxu0
      %v345 = vadd.f32 0.0, %v344
      %v346 = vpop.f32.mrb[0].mxu0
      %v347 = vpop.f32.mrb[0].mxu0
      %v348 = vadd.f32 0.0, %v347
      %v349 = vpop.f32.mrb[0].mxu0
      %350 = vmatprep.mubr.bf16.mxu0 0
      %351 = vmatmul.mubr.bf16.gmra.mrb[0].mxu0 %v257
      %v352 = vpop.f32.mrb[0].mxu0
      %v353 = vadd.f32 0.0, %v352
      %v354 = vpop.f32.mrb[0].mxu0
      %v355 = vpop.f32.mrb[0].mxu0
      %v356 = vadd.f32 0.0, %v355
      %v357 = vpop.f32.mrb[0].mxu0
      %358 = vmatprep.mubr.bf16.mxu0 0
      %359 = vmatmul.mubr.bf16.gmra.mrb[0].mxu0 %v260
      %v360 = vpop.f32.mrb[0].mxu0
      %v361 = vadd.f32 0.0, %v360
      %v362 = vpop.f32.mrb[0].mxu0
      %v363 = vpop.f32.mrb[0].mxu0
      %v364 = vadd.f32 0.0, %v363
      %v365 = vpop.f32.mrb[0].mxu0
      %366 = vmatprep.mubr.bf16.mxu0 0
      %367 = vmatmul.mubr.bf16.gmra.mrb[0].mxu0 %v263
      %v368 = vpop.f32.mrb[0].mxu0
      %v369 = vadd.f32 0.0, %v368
      %v370 = vpop.f32.mrb[0].mxu0
      %v371 = vpop.f32.mrb[0].mxu0
      %v372 = vadd.f32 0.0, %v371
      %v373 = vpop.f32.mrb[0].mxu0
      %374 = vmatprep.mubr.bf16.mxu0 0
      %375 = vmatmul.mubr.bf16.gmra.mrb[0].mxu0 %v266
      %v376 = vpop.f32.mrb[0].mxu0
      %v377 = vadd.f32 0.0, %v376
      %v378 = vpop.f32.mrb[0].mxu0
      %v379 = vpop.f32.mrb[0].mxu0
      %v380 = vadd.f32 0.0, %v379
      %v381 = vpop.f32.mrb[0].mxu0
      %382 = vmatprep.mubr.bf16.mxu0 0
      %383 = vmatmul.mubr.bf16.gmra.mrb[0].mxu0 %v269
      %v384 = vpop.f32.mrb[0].mxu0
      %v385 = vadd.f32 0.0, %v384
      %v386 = vpop.f32.mrb[0].mxu0
      %v387 = vpop.f32.mrb[0].mxu0
      %v388 = vadd.f32 0.0, %v387
      %v389 = vpop.f32.mrb[0].mxu0
      %390 = vmatprep.mubr.bf16.mxu0 0
      %391 = vmatmul.mubr.bf16.gmra.mrb[0].mxu0 %v272
      %v392 = vpop.f32.mrb[0].mxu0
      %v393 = vadd.f32 0.0, %v392
      %v394 = vpop.f32.mrb[0].mxu0
      %v395 = vpop.f32.mrb[0].mxu0
      %v396 = vadd.f32 0.0, %v395
      %v397 = vpop.f32.mrb[0].mxu0
      %398 = vmatprep.mubr.bf16.mxu0 0
      %399 = vmatmul.mubr.bf16.gmra.mrb[0].mxu0 %v275
      %v400 = vpop.f32.mrb[0].mxu0
      %v401 = vadd.f32 0.0, %v400
      %v402 = vpop.f32.mrb[0].mxu0
      %v403 = vpop.f32.mrb[0].mxu0
      %v404 = vadd.f32 0.0, %v403
      %v405 = vpop.f32.mrb[0].mxu0
      %406 = vmatprep.mubr.bf16.mxu0 0
      %407 = vmatmul.mubr.bf16.gmra.mrb[0].mxu0 %v278
      %v408 = vpop.f32.mrb[0].mxu0
      %v409 = vadd.f32 0.0, %v408
      %v410 = vpop.f32.mrb[0].mxu0
      %v411 = vpop.f32.mrb[0].mxu0
      %v412 = vadd.f32 0.0, %v411
      %v413 = vpop.f32.mrb[0].mxu0
      %414 = vmatprep.mubr.bf16.mxu0 0
      %415 = vmatmul.mubr.bf16.gmra.mrb[0].mxu0 %v281
      %v416 = vpop.f32.mrb[0].mxu0
      %v417 = vadd.f32 0.0, %v416
      %v418 = vpop.f32.mrb[0].mxu0
      %v419 = vpop.f32.mrb[0].mxu0
      %v420 = vadd.f32 0.0, %v419
      %v421 = vpop.f32.mrb[0].mxu0
      %422 = vmatprep.mubr.bf16.mxu0 0
      %423 = vmatmul.mubr.bf16.gmra.mrb[0].mxu0 %v284
      %v424 = vpop.f32.mrb[0].mxu0
      %v425 = vadd.f32 0.0, %v424
      %v426 = vpop.f32.mrb[0].mxu0
      %v427 = vpop.f32.mrb[0].mxu0
      %v428 = vadd.f32 0.0, %v427
      %v429 = vpop.f32.mrb[0].mxu0
      %430 = vmatprep.mubr.bf16.mxu0 0
      %431 = vmatmul.mubr.bf16.gmra.mrb[0].mxu0 %v287
      %v432 = vpop.f32.mrb[0].mxu0
      %v433 = vadd.f32 0.0, %v432
      %v434 = vpop.f32.mrb[0].mxu0
      %v435 = vpop.f32.mrb[0].mxu0
      %v436 = vadd.f32 0.0, %v435
      %v437 = vpop.f32.mrb[0].mxu0
      %438 = vmatprep.mubr.bf16.mxu0 0
      %439 = vmatmul.mubr.bf16.gmra.mrb[0].mxu0 %v290
      %v440 = vpop.f32.mrb[0].mxu0
      %v441 = vadd.f32 0.0, %v440
      %v442 = vpop.f32.mrb[0].mxu0
      %v443 = vpop.f32.mrb[0].mxu0
      %v444 = vadd.f32 0.0, %v443
      %v445 = vpop.f32.mrb[0].mxu0
      %446 = vmatprep.mubr.bf16.mxu0 0
      %447 = vmatmul.mubr.bf16.gmra.mrb[0].mxu0 %v293
      %v448 = vpop.f32.mrb[0].mxu0
      %v449 = vadd.f32 0.0, %v448
      %v450 = vpop.f32.mrb[0].mxu0
      %v451 = vpop.f32.mrb[0].mxu0
      %v452 = vadd.f32 0.0, %v451
      %v453 = vpop.f32.mrb[0].mxu0
      %454 = vmatprep.mubr.bf16.mxu0 0
      %455 = vmatmul.mubr.bf16.gmra.mrb[0].mxu0 %v296
      %v456 = vpop.f32.mrb[0].mxu0
      %v457 = vadd.f32 0.0, %v456
      %v458 = vpop.f32.mrb[0].mxu0
      %v459 = vpop.f32.mrb[0].mxu0
      %v460 = vadd.f32 0.0, %v459
      %v461 = vpop.f32.mrb[0].mxu0
      %462 = vdwg.mxu0
      %463 = vst [vmem:[#allocation2] sm:$0xff] %v337
      %464 = vst [vmem:[#allocation2 + $0x8] sm:$0xff] %v340
      %465 = vst [vmem:[#allocation2 + $0x10] sm:$0xff] %v345
      %466 = vst [vmem:[#allocation2 + $0x18] sm:$0xff] %v348
      %467 = vst [vmem:[#allocation2 + $0x20] sm:$0xff] %v353
      %468 = vst [vmem:[#allocation2 + $0x28] sm:$0xff] %v356
      %469 = vst [vmem:[#allocation2 + $0x30] sm:$0xff] %v361
      %470 = vst [vmem:[#allocation2 + $0x38] sm:$0xff] %v364
      %471 = vst [vmem:[#allocation2 + $0x40] sm:$0xff] %v369
      %472 = vst [vmem:[#allocation2 + $0x48] sm:$0xff] %v372
      %473 = vst [vmem:[#allocation2 + $0x50] sm:$0xff] %v377
      %474 = vst [vmem:[#allocation2 + $0x58] sm:$0xff] %v380
      %475 = vst [vmem:[#allocation2 + $0x60] sm:$0xff] %v385
      %476 = vst [vmem:[#allocation2 + $0x68] sm:$0xff] %v388
      %477 = vst [vmem:[#allocation2 + $0x70] sm:$0xff] %v393
      %478 = vst [vmem:[#allocation2 + $0x78] sm:$0xff] %v396
      %479 = vst [vmem:[#allocation2 + $0x80] sm:$0xff] %v401
      %480 = vst [vmem:[#allocation2 + $0x88] sm:$0xff] %v404
      %481 = vst [vmem:[#allocation2 + $0x90] sm:$0xff] %v409
      %482 = vst [vmem:[#allocation2 + $0x98] sm:$0xff] %v412
      %483 = vst [vmem:[#allocation2 + $0xa0] sm:$0xff] %v417
      %484 = vst [vmem:[#allocation2 + $0xa8] sm:$0xff] %v420
      %485 = vst [vmem:[#allocation2 + $0xb0] sm:$0xff] %v425
      %486 = vst [vmem:[#allocation2 + $0xb8] sm:$0xff] %v428
      %487 = vst [vmem:[#allocation2 + $0xc0] sm:$0xff] %v433
      %488 = vst [vmem:[#allocation2 + $0xc8] sm:$0xff] %v436
      %489 = vst [vmem:[#allocation2 + $0xd0] sm:$0xff] %v441
      %490 = vst [vmem:[#allocation2 + $0xd8] sm:$0xff] %v444
      %491 = vst [vmem:[#allocation2 + $0xe0] sm:$0xff] %v449
      %492 = vst [vmem:[#allocation2 + $0xe8] sm:$0xff] %v452
      %493 = vst [vmem:[#allocation2 + $0xf0] sm:$0xff] %v457
      %494 = vst [vmem:[#allocation2 + $0xf8] sm:$0xff] %v460
      %v495 = vld [vmem:[%s199 + $0x1] sm:$0xff]
      %v496 = vld [vmem:[%s199 + $0x9] sm:$0xff]
      %v497 = vld [vmem:[%s199 + $0x19] sm:$0xff]
      %v498 = vld [vmem:[%s199 + $0x21] sm:$0xff]
      %v499 = vld [vmem:[%s199 + $0x31] sm:$0xff]
      %v500 = vld [vmem:[%s199 + $0x39] sm:$0xff]
      %v501 = vld [vmem:[%s199 + $0x49] sm:$0xff]
      %v502 = vld [vmem:[%s199 + $0x51] sm:$0xff]
      %v503 = vld [vmem:[%s199 + $0x61] sm:$0xff]
      %v504 = vld [vmem:[%s199 + $0x69] sm:$0xff]
      %v505 = vld [vmem:[%s199 + $0x79] sm:$0xff]
      %v506 = vld [vmem:[%s199 + $0x81] sm:$0xff]
      %v507 = vld [vmem:[%s199 + $0x91] sm:$0xff]
      %v508 = vld [vmem:[%s199 + $0x99] sm:$0xff]
      %v509 = vld [vmem:[%s199 + $0xa9] sm:$0xff]
      %v510 = vld [vmem:[%s199 + $0xb1] sm:$0xff]
      %v511 = vld [vmem:[%s199 + $0xc1] sm:$0xff]
      %v512 = vld [vmem:[%s199 + $0xc9] sm:$0xff]
      %v513 = vld [vmem:[%s199 + $0xd9] sm:$0xff]
      %v514 = vld [vmem:[%s199 + $0xe1] sm:$0xff]
      %v515 = vld [vmem:[%s199 + $0xf1] sm:$0xff]
      %v516 = vld [vmem:[%s199 + $0xf9] sm:$0xff]
      %v517 = vld [vmem:[%s199 + $0x109] sm:$0xff]
      %v518 = vld [vmem:[%s199 + $0x111] sm:$0xff]
      %v519 = vld [vmem:[%s199 + $0x121] sm:$0xff]
      %v520 = vld [vmem:[%s199 + $0x129] sm:$0xff]
      %v521 = vld [vmem:[%s199 + $0x139] sm:$0xff]
      %v522 = vld [vmem:[%s199 + $0x141] sm:$0xff]
      %v523 = vld [vmem:[%s199 + $0x151] sm:$0xff]
      %v524 = vld [vmem:[%s199 + $0x159] sm:$0xff]
      %v525 = vld [vmem:[%s199 + $0x169] sm:$0xff]
      %v526 = vld [vmem:[%s199 + $0x171] sm:$0xff]
      %v527 = vpack.c.bf16 %v496, %v495
      %v528 = vpack.c.bf16 %v498, %v497
      %v529 = vpack.c.bf16 %v500, %v499
      %v530 = vpack.c.bf16 %v502, %v501
      %v531 = vpack.c.bf16 %v504, %v503
      %v532 = vpack.c.bf16 %v506, %v505
      %v533 = vpack.c.bf16 %v508, %v507
      %v534 = vpack.c.bf16 %v510, %v509
      %v535 = vpack.c.bf16 %v512, %v511
      %v536 = vpack.c.bf16 %v514, %v513
      %v537 = vpack.c.bf16 %v516, %v515
      %v538 = vpack.c.bf16 %v518, %v517
      %v539 = vpack.c.bf16 %v520, %v519
      %v540 = vpack.c.bf16 %v522, %v521
      %v541 = vpack.c.bf16 %v524, %v523
      %v542 = vpack.c.bf16 %v526, %v525
      %s543 = scalar_lea.vmem %s1, 2
      %v544 = vld [vmem:[%s543] sm:$0x3]
      %v546 = vsel %vm249, %v527, 0
      %v549 = vsel %vm249, %v528, 0
      %v552 = vsel %vm249, %v529, 0
      %v555 = vsel %vm249, %v530, 0
      %v558 = vsel %vm249, %v531, 0
      %v561 = vsel %vm249, %v532, 0
      %v564 = vsel %vm249, %v533, 0
      %v567 = vsel %vm249, %v534, 0
      %v570 = vsel %vm249, %v535, 0
      %v573 = vsel %vm249, %v536, 0
      %v576 = vsel %vm249, %v537, 0
      %v579 = vsel %vm249, %v538, 0
      %v582 = vsel %vm249, %v539, 0
      %v585 = vsel %vm249, %v540, 0
      %v588 = vsel %vm249, %v541, 0
      %v591 = vsel %vm249, %v542, 0
      %v594 = vsel %vm298, %v544, 0
      %596 = vmatprep.subr.bf16.mxu0 0
      %597 = vmatpush1.bf16.msra.mxu0 %v594
      %598 = vmatprep.subr.bf16.mxu0 0
      %599 = vmatpush1.bf16.msra.mxu0 0
      %600 = vmatprep.subr.bf16.mxu0 0
      %601 = vmatpush1.bf16.msra.mxu0 0
      %602 = vmatprep.subr.bf16.mxu0 0
      %603 = vmatpush1.bf16.msra.mxu0 0
      %604 = vmatprep.subr.bf16.mxu0 0
      %605 = vmatpush1.bf16.msra.mxu0 0
      %606 = vmatprep.subr.bf16.mxu0 0
      %607 = vmatpush1.bf16.msra.mxu0 0
      %608 = vmatprep.subr.bf16.mxu0 0
      %609 = vmatpush1.bf16.msra.mxu0 0
      %610 = vmatprep.subr.bf16.mxu0 0
      %611 = vmatpush1.bf16.msra.mxu0 0
      %612 = vmatprep.subr.bf16.mxu0 0
      %613 = vmatpush1.bf16.msra.mxu0 0
      %614 = vmatprep.subr.bf16.mxu0 0
      %615 = vmatpush1.bf16.msra.mxu0 0
      %616 = vmatprep.subr.bf16.mxu0 0
      %617 = vmatpush1.bf16.msra.mxu0 0
      %618 = vmatprep.subr.bf16.mxu0 0
      %619 = vmatpush1.bf16.msra.mxu0 0
      %620 = vmatprep.subr.bf16.mxu0 0
      %621 = vmatpush1.bf16.msra.mxu0 0
      %622 = vmatprep.subr.bf16.mxu0 0
      %623 = vmatpush1.bf16.msra.mxu0 0
      %624 = vmatprep.subr.bf16.mxu0 0
      %625 = vmatpush1.bf16.msra.mxu0 0
      %626 = vmatprep.subr.bf16.mxu0 0
      %627 = vmatpush1.bf16.msra.mxu0 0
      %628 = vmatprep.mubr.bf16.mxu0 0
      %629 = vmatmul.mubr.bf16.gmra.mrb[0].mxu0 %v546
      %v630 = vpop.f32.mrb[0].mxu0
      %v631 = vadd.f32 0.0, %v630
      %v632 = vpop.f32.mrb[0].mxu0
      %v633 = vpop.f32.mrb[0].mxu0
      %v634 = vadd.f32 0.0, %v633
      %v635 = vpop.f32.mrb[0].mxu0
      %636 = vmatprep.mubr.bf16.mxu0 0
      %637 = vmatmul.mubr.bf16.gmra.mrb[0].mxu0 %v549
      %v638 = vpop.f32.mrb[0].mxu0
      %v639 = vadd.f32 0.0, %v638
      %v640 = vpop.f32.mrb[0].mxu0
      %v641 = vpop.f32.mrb[0].mxu0
      %v642 = vadd.f32 0.0, %v641
      %v643 = vpop.f32.mrb[0].mxu0
      %644 = vmatprep.mubr.bf16.mxu0 0
      %645 = vmatmul.mubr.bf16.gmra.mrb[0].mxu0 %v552
      %v646 = vpop.f32.mrb[0].mxu0
      %v647 = vadd.f32 0.0, %v646
      %v648 = vpop.f32.mrb[0].mxu0
      %v649 = vpop.f32.mrb[0].mxu0
      %v650 = vadd.f32 0.0, %v649
      %v651 = vpop.f32.mrb[0].mxu0
      %652 = vmatprep.mubr.bf16.mxu0 0
      %653 = vmatmul.mubr.bf16.gmra.mrb[0].mxu0 %v555
      %v654 = vpop.f32.mrb[0].mxu0
      %v655 = vadd.f32 0.0, %v654
      %v656 = vpop.f32.mrb[0].mxu0
      %v657 = vpop.f32.mrb[0].mxu0
      %v658 = vadd.f32 0.0, %v657
      %v659 = vpop.f32.mrb[0].mxu0
      %660 = vmatprep.mubr.bf16.mxu0 0
      %661 = vmatmul.mubr.bf16.gmra.mrb[0].mxu0 %v558
      %v662 = vpop.f32.mrb[0].mxu0
      %v663 = vadd.f32 0.0, %v662
      %v664 = vpop.f32.mrb[0].mxu0
      %v665 = vpop.f32.mrb[0].mxu0
      %v666 = vadd.f32 0.0, %v665
      %v667 = vpop.f32.mrb[0].mxu0
      %668 = vmatprep.mubr.bf16.mxu0 0
      %669 = vmatmul.mubr.bf16.gmra.mrb[0].mxu0 %v561
      %v670 = vpop.f32.mrb[0].mxu0
      %v671 = vadd.f32 0.0, %v670
      %v672 = vpop.f32.mrb[0].mxu0
      %v673 = vpop.f32.mrb[0].mxu0
      %v674 = vadd.f32 0.0, %v673
      %v675 = vpop.f32.mrb[0].mxu0
      %676 = vmatprep.mubr.bf16.mxu0 0
      %677 = vmatmul.mubr.bf16.gmra.mrb[0].mxu0 %v564
      %v678 = vpop.f32.mrb[0].mxu0
      %v679 = vadd.f32 0.0, %v678
      %v680 = vpop.f32.mrb[0].mxu0
      %v681 = vpop.f32.mrb[0].mxu0
      %v682 = vadd.f32 0.0, %v681
      %v683 = vpop.f32.mrb[0].mxu0
      %684 = vmatprep.mubr.bf16.mxu0 0
      %685 = vmatmul.mubr.bf16.gmra.mrb[0].mxu0 %v567
      %v686 = vpop.f32.mrb[0].mxu0
      %v687 = vadd.f32 0.0, %v686
      %v688 = vpop.f32.mrb[0].mxu0
      %v689 = vpop.f32.mrb[0].mxu0
      %v690 = vadd.f32 0.0, %v689
      %v691 = vpop.f32.mrb[0].mxu0
      %692 = vmatprep.mubr.bf16.mxu0 0
      %693 = vmatmul.mubr.bf16.gmra.mrb[0].mxu0 %v570
      %v694 = vpop.f32.mrb[0].mxu0
      %v695 = vadd.f32 0.0, %v694
      %v696 = vpop.f32.mrb[0].mxu0
      %v697 = vpop.f32.mrb[0].mxu0
      %v698 = vadd.f32 0.0, %v697
      %v699 = vpop.f32.mrb[0].mxu0
      %700 = vmatprep.mubr.bf16.mxu0 0
      %701 = vmatmul.mubr.bf16.gmra.mrb[0].mxu0 %v573
      %v702 = vpop.f32.mrb[0].mxu0
      %v703 = vadd.f32 0.0, %v702
      %v704 = vpop.f32.mrb[0].mxu0
      %v705 = vpop.f32.mrb[0].mxu0
      %v706 = vadd.f32 0.0, %v705
      %v707 = vpop.f32.mrb[0].mxu0
      %708 = vmatprep.mubr.bf16.mxu0 0
      %709 = vmatmul.mubr.bf16.gmra.mrb[0].mxu0 %v576
      %v710 = vpop.f32.mrb[0].mxu0
      %v711 = vadd.f32 0.0, %v710
      %v712 = vpop.f32.mrb[0].mxu0
      %v713 = vpop.f32.mrb[0].mxu0
      %v714 = vadd.f32 0.0, %v713
      %v715 = vpop.f32.mrb[0].mxu0
      %716 = vmatprep.mubr.bf16.mxu0 0
      %717 = vmatmul.mubr.bf16.gmra.mrb[0].mxu0 %v579
      %v718 = vpop.f32.mrb[0].mxu0
      %v719 = vadd.f32 0.0, %v718
      %v720 = vpop.f32.mrb[0].mxu0
      %v721 = vpop.f32.mrb[0].mxu0
      %v722 = vadd.f32 0.0, %v721
      %v723 = vpop.f32.mrb[0].mxu0
      %724 = vmatprep.mubr.bf16.mxu0 0
      %725 = vmatmul.mubr.bf16.gmra.mrb[0].mxu0 %v582
      %v726 = vpop.f32.mrb[0].mxu0
      %v727 = vadd.f32 0.0, %v726
      %v728 = vpop.f32.mrb[0].mxu0
      %v729 = vpop.f32.mrb[0].mxu0
      %v730 = vadd.f32 0.0, %v729
      %v731 = vpop.f32.mrb[0].mxu0
      %732 = vmatprep.mubr.bf16.mxu0 0
      %733 = vmatmul.mubr.bf16.gmra.mrb[0].mxu0 %v585
      %v734 = vpop.f32.mrb[0].mxu0
      %v735 = vadd.f32 0.0, %v734
      %v736 = vpop.f32.mrb[0].mxu0
      %v737 = vpop.f32.mrb[0].mxu0
      %v738 = vadd.f32 0.0, %v737
      %v739 = vpop.f32.mrb[0].mxu0
      %740 = vmatprep.mubr.bf16.mxu0 0
      %741 = vmatmul.mubr.bf16.gmra.mrb[0].mxu0 %v588
      %v742 = vpop.f32.mrb[0].mxu0
      %v743 = vadd.f32 0.0, %v742
      %v744 = vpop.f32.mrb[0].mxu0
      %v745 = vpop.f32.mrb[0].mxu0
      %v746 = vadd.f32 0.0, %v745
      %v747 = vpop.f32.mrb[0].mxu0
      %748 = vmatprep.mubr.bf16.mxu0 0
      %749 = vmatmul.mubr.bf16.gmra.mrb[0].mxu0 %v591
      %v750 = vpop.f32.mrb[0].mxu0
      %v751 = vadd.f32 0.0, %v750
      %v752 = vpop.f32.mrb[0].mxu0
      %v753 = vpop.f32.mrb[0].mxu0
      %v754 = vadd.f32 0.0, %v753
      %v755 = vpop.f32.mrb[0].mxu0
      %756 = vdwg.mxu0
      %v757 = vld [vmem:[#allocation2] sm:$0xff]
      %v758 = vld [vmem:[#allocation2 + $0x8] sm:$0xff]
      %v759 = vld [vmem:[#allocation2 + $0x10] sm:$0xff]
      %v760 = vld [vmem:[#allocation2 + $0x18] sm:$0xff]
      %v761 = vld [vmem:[#allocation2 + $0x20] sm:$0xff]
      %v762 = vld [vmem:[#allocation2 + $0x28] sm:$0xff]
      %v763 = vld [vmem:[#allocation2 + $0x30] sm:$0xff]
      %v764 = vld [vmem:[#allocation2 + $0x38] sm:$0xff]
      %v765 = vld [vmem:[#allocation2 + $0x40] sm:$0xff]
      %v766 = vld [vmem:[#allocation2 + $0x48] sm:$0xff]
      %v767 = vld [vmem:[#allocation2 + $0x50] sm:$0xff]
      %v768 = vld [vmem:[#allocation2 + $0x58] sm:$0xff]
      %v769 = vld [vmem:[#allocation2 + $0x60] sm:$0xff]
      %v770 = vld [vmem:[#allocation2 + $0x68] sm:$0xff]
      %v771 = vld [vmem:[#allocation2 + $0x70] sm:$0xff]
      %v772 = vld [vmem:[#allocation2 + $0x78] sm:$0xff]
      %v773 = vld [vmem:[#allocation2 + $0x80] sm:$0xff]
      %v774 = vld [vmem:[#allocation2 + $0x88] sm:$0xff]
      %v775 = vld [vmem:[#allocation2 + $0x90] sm:$0xff]
      %v776 = vld [vmem:[#allocation2 + $0x98] sm:$0xff]
      %v777 = vld [vmem:[#allocation2 + $0xa0] sm:$0xff]
      %v778 = vld [vmem:[#allocation2 + $0xa8] sm:$0xff]
      %v779 = vld [vmem:[#allocation2 + $0xb0] sm:$0xff]
      %v780 = vld [vmem:[#allocation2 + $0xb8] sm:$0xff]
      %v781 = vld [vmem:[#allocation2 + $0xc0] sm:$0xff]
      %v782 = vld [vmem:[#allocation2 + $0xc8] sm:$0xff]
      %v783 = vld [vmem:[#allocation2 + $0xd0] sm:$0xff]
      %v784 = vld [vmem:[#allocation2 + $0xd8] sm:$0xff]
      %v785 = vld [vmem:[#allocation2 + $0xe0] sm:$0xff]
      %v786 = vld [vmem:[#allocation2 + $0xe8] sm:$0xff]
      %v787 = vld [vmem:[#allocation2 + $0xf0] sm:$0xff]
      %v788 = vld [vmem:[#allocation2 + $0xf8] sm:$0xff]
      %v789 = vadd.f32 %v757, %v631
      %v790 = vadd.f32 %v758, %v634
      %v791 = vadd.f32 %v759, %v639
      %v792 = vadd.f32 %v760, %v642
      %v793 = vadd.f32 %v761, %v647
      %v794 = vadd.f32 %v762, %v650
      %v795 = vadd.f32 %v763, %v655
      %v796 = vadd.f32 %v764, %v658
      %v797 = vadd.f32 %v765, %v663
      %v798 = vadd.f32 %v766, %v666
      %v799 = vadd.f32 %v767, %v671
      %v800 = vadd.f32 %v768, %v674
      %v801 = vadd.f32 %v769, %v679
      %v802 = vadd.f32 %v770, %v682
      %v803 = vadd.f32 %v771, %v687
      %v804 = vadd.f32 %v772, %v690
      %v805 = vadd.f32 %v773, %v695
      %v806 = vadd.f32 %v774, %v698
      %v807 = vadd.f32 %v775, %v703
      %v808 = vadd.f32 %v776, %v706
      %v809 = vadd.f32 %v777, %v711
      %v810 = vadd.f32 %v778, %v714
      %v811 = vadd.f32 %v779, %v719
      %v812 = vadd.f32 %v780, %v722
      %v813 = vadd.f32 %v781, %v727
      %v814 = vadd.f32 %v782, %v730
      %v815 = vadd.f32 %v783, %v735
      %v816 = vadd.f32 %v784, %v738
      %v817 = vadd.f32 %v785, %v743
      %v818 = vadd.f32 %v786, %v746
      %v819 = vadd.f32 %v787, %v751
      %v820 = vadd.f32 %v788, %v754
      %821 = vst [vmem:[#allocation2] sm:$0xff] %v789
      %822 = vst [vmem:[#allocation2 + $0x8] sm:$0xff] %v790
      %823 = vst [vmem:[#allocation2 + $0x10] sm:$0xff] %v791
      %824 = vst [vmem:[#allocation2 + $0x18] sm:$0xff] %v792
      %825 = vst [vmem:[#allocation2 + $0x20] sm:$0xff] %v793
      %826 = vst [vmem:[#allocation2 + $0x28] sm:$0xff] %v794
      %827 = vst [vmem:[#allocation2 + $0x30] sm:$0xff] %v795
      %828 = vst [vmem:[#allocation2 + $0x38] sm:$0xff] %v796
      %829 = vst [vmem:[#allocation2 + $0x40] sm:$0xff] %v797
      %830 = vst [vmem:[#allocation2 + $0x48] sm:$0xff] %v798
      %831 = vst [vmem:[#allocation2 + $0x50] sm:$0xff] %v799
      %832 = vst [vmem:[#allocation2 + $0x58] sm:$0xff] %v800
      %833 = vst [vmem:[#allocation2 + $0x60] sm:$0xff] %v801
      %834 = vst [vmem:[#allocation2 + $0x68] sm:$0xff] %v802
      %835 = vst [vmem:[#allocation2 + $0x70] sm:$0xff] %v803
      %836 = vst [vmem:[#allocation2 + $0x78] sm:$0xff] %v804
      %837 = vst [vmem:[#allocation2 + $0x80] sm:$0xff] %v805
      %838 = vst [vmem:[#allocation2 + $0x88] sm:$0xff] %v806
      %839 = vst [vmem:[#allocation2 + $0x90] sm:$0xff] %v807
      %840 = vst [vmem:[#allocation2 + $0x98] sm:$0xff] %v808
      %841 = vst [vmem:[#allocation2 + $0xa0] sm:$0xff] %v809
      %842 = vst [vmem:[#allocation2 + $0xa8] sm:$0xff] %v810
      %843 = vst [vmem:[#allocation2 + $0xb0] sm:$0xff] %v811
      %844 = vst [vmem:[#allocation2 + $0xb8] sm:$0xff] %v812
      %845 = vst [vmem:[#allocation2 + $0xc0] sm:$0xff] %v813
      %846 = vst [vmem:[#allocation2 + $0xc8] sm:$0xff] %v814
      %847 = vst [vmem:[#allocation2 + $0xd0] sm:$0xff] %v815
      %848 = vst [vmem:[#allocation2 + $0xd8] sm:$0xff] %v816
      %849 = vst [vmem:[#allocation2 + $0xe0] sm:$0xff] %v817
      %850 = vst [vmem:[#allocation2 + $0xe8] sm:$0xff] %v818
      %851 = vst [vmem:[#allocation2 + $0xf0] sm:$0xff] %v819
      %852 = vst [vmem:[#allocation2 + $0xf8] sm:$0xff] %v820
      %v853 = vld [vmem:[%s199 + $0x2] sm:$0xff]
      %v854 = vld [vmem:[%s199 + $0xa] sm:$0xff]
      %v855 = vld [vmem:[%s199 + $0x1a] sm:$0xff]
      %v856 = vld [vmem:[%s199 + $0x22] sm:$0xff]
      %v857 = vld [vmem:[%s199 + $0x32] sm:$0xff]
      %v858 = vld [vmem:[%s199 + $0x3a] sm:$0xff]
      %v859 = vld [vmem:[%s199 + $0x4a] sm:$0xff]
      %v860 = vld [vmem:[%s199 + $0x52] sm:$0xff]
      %v861 = vld [vmem:[%s199 + $0x62] sm:$0xff]
      %v862 = vld [vmem:[%s199 + $0x6a] sm:$0xff]
      %v863 = vld [vmem:[%s199 + $0x7a] sm:$0xff]
      %v864 = vld [vmem:[%s199 + $0x82] sm:$0xff]
      %v865 = vld [vmem:[%s199 + $0x92] sm:$0xff]
      %v866 = vld [vmem:[%s199 + $0x9a] sm:$0xff]
      %v867 = vld [vmem:[%s199 + $0xaa] sm:$0xff]
      %v868 = vld [vmem:[%s199 + $0xb2] sm:$0xff]
      %v869 = vld [vmem:[%s199 + $0xc2] sm:$0xff]
      %v870 = vld [vmem:[%s199 + $0xca] sm:$0xff]
      %v871 = vld [vmem:[%s199 + $0xda] sm:$0xff]
      %v872 = vld [vmem:[%s199 + $0xe2] sm:$0xff]
      %v873 = vld [vmem:[%s199 + $0xf2] sm:$0xff]
      %v874 = vld [vmem:[%s199 + $0xfa] sm:$0xff]
      %v875 = vld [vmem:[%s199 + $0x10a] sm:$0xff]
      %v876 = vld [vmem:[%s199 + $0x112] sm:$0xff]
      %v877 = vld [vmem:[%s199 + $0x122] sm:$0xff]
      %v878 = vld [vmem:[%s199 + $0x12a] sm:$0xff]
      %v879 = vld [vmem:[%s199 + $0x13a] sm:$0xff]
      %v880 = vld [vmem:[%s199 + $0x142] sm:$0xff]
      %v881 = vld [vmem:[%s199 + $0x152] sm:$0xff]
      %v882 = vld [vmem:[%s199 + $0x15a] sm:$0xff]
      %v883 = vld [vmem:[%s199 + $0x16a] sm:$0xff]
      %v884 = vld [vmem:[%s199 + $0x172] sm:$0xff]
      %v885 = vpack.c.bf16 %v854, %v853
      %v886 = vpack.c.bf16 %v856, %v855
      %v887 = vpack.c.bf16 %v858, %v857
      %v888 = vpack.c.bf16 %v860, %v859
      %v889 = vpack.c.bf16 %v862, %v861
      %v890 = vpack.c.bf16 %v864, %v863
      %v891 = vpack.c.bf16 %v866, %v865
      %v892 = vpack.c.bf16 %v868, %v867
      %v893 = vpack.c.bf16 %v870, %v869
      %v894 = vpack.c.bf16 %v872, %v871
      %v895 = vpack.c.bf16 %v874, %v873
      %v896 = vpack.c.bf16 %v876, %v875
      %v897 = vpack.c.bf16 %v878, %v877
      %v898 = vpack.c.bf16 %v880, %v879
      %v899 = vpack.c.bf16 %v882, %v881
      %v900 = vpack.c.bf16 %v884, %v883
      %s901 = scalar_lea.vmem %s1, 4
      %v902 = vld [vmem:[%s901] sm:$0x3]
      %v904 = vsel %vm249, %v885, 0
      %v907 = vsel %vm249, %v886, 0
      %v910 = vsel %vm249, %v887, 0
      %v913 = vsel %vm249, %v888, 0
      %v916 = vsel %vm249, %v889, 0
      %v919 = vsel %vm249, %v890, 0
      %v922 = vsel %vm249, %v891, 0
      %v925 = vsel %vm249, %v892, 0
      %v928 = vsel %vm249, %v893, 0
      %v931 = vsel %vm249, %v894, 0
      %v934 = vsel %vm249, %v895, 0
      %v937 = vsel %vm249, %v896, 0
      %v940 = vsel %vm249, %v897, 0
      %v943 = vsel %vm249, %v898, 0
      %v946 = vsel %vm249, %v899, 0
      %v949 = vsel %vm249, %v900, 0
      %v952 = vsel %vm298, %v902, 0
      %954 = vmatprep.subr.bf16.mxu0 0
      %955 = vmatpush1.bf16.msra.mxu0 %v952
      %956 = vmatprep.subr.bf16.mxu0 0
      %957 = vmatpush1.bf16.msra.mxu0 0
      %958 = vmatprep.subr.bf16.mxu0 0
      %959 = vmatpush1.bf16.msra.mxu0 0
      %960 = vmatprep.subr.bf16.mxu0 0
      %961 = vmatpush1.bf16.msra.mxu0 0
      %962 = vmatprep.subr.bf16.mxu0 0
      %963 = vmatpush1.bf16.msra.mxu0 0
      %964 = vmatprep.subr.bf16.mxu0 0
      %965 = vmatpush1.bf16.msra.mxu0 0
      %966 = vmatprep.subr.bf16.mxu0 0
      %967 = vmatpush1.bf16.msra.mxu0 0
      %968 = vmatprep.subr.bf16.mxu0 0
      %969 = vmatpush1.bf16.msra.mxu0 0
      %970 = vmatprep.subr.bf16.mxu0 0
      %971 = vmatpush1.bf16.msra.mxu0 0
      %972 = vmatprep.subr.bf16.mxu0 0
      %973 = vmatpush1.bf16.msra.mxu0 0
      %974 = vmatprep.subr.bf16.mxu0 0
      %975 = vmatpush1.bf16.msra.mxu0 0
      %976 = vmatprep.subr.bf16.mxu0 0
      %977 = vmatpush1.bf16.msra.mxu0 0
      %978 = vmatprep.subr.bf16.mxu0 0
      %979 = vmatpush1.bf16.msra.mxu0 0
      %980 = vmatprep.subr.bf16.mxu0 0
      %981 = vmatpush1.bf16.msra.mxu0 0
      %982 = vmatprep.subr.bf16.mxu0 0
      %983 = vmatpush1.bf16.msra.mxu0 0
      %984 = vmatprep.subr.bf16.mxu0 0
      %985 = vmatpush1.bf16.msra.mxu0 0
      %986 = vmatprep.mubr.bf16.mxu0 0
      %987 = vmatmul.mubr.bf16.gmra.mrb[0].mxu0 %v904
      %v988 = vpop.f32.mrb[0].mxu0
      %v989 = vadd.f32 0.0, %v988
      %v990 = vpop.f32.mrb[0].mxu0
      %v991 = vpop.f32.mrb[0].mxu0
      %v992 = vadd.f32 0.0, %v991
      %v993 = vpop.f32.mrb[0].mxu0
      %994 = vmatprep.mubr.bf16.mxu0 0
      %995 = vmatmul.mubr.bf16.gmra.mrb[0].mxu0 %v907
      %v996 = vpop.f32.mrb[0].mxu0
      %v997 = vadd.f32 0.0, %v996
      %v998 = vpop.f32.mrb[0].mxu0
      %v999 = vpop.f32.mrb[0].mxu0
      %v1000 = vadd.f32 0.0, %v999
      %v1001 = vpop.f32.mrb[0].mxu0
      %1002 = vmatprep.mubr.bf16.mxu0 0
      %1003 = vmatmul.mubr.bf16.gmra.mrb[0].mxu0 %v910
      %v1004 = vpop.f32.mrb[0].mxu0
      %v1005 = vadd.f32 0.0, %v1004
      %v1006 = vpop.f32.mrb[0].mxu0
      %v1007 = vpop.f32.mrb[0].mxu0
      %v1008 = vadd.f32 0.0, %v1007
      %v1009 = vpop.f32.mrb[0].mxu0
      %1010 = vmatprep.mubr.bf16.mxu0 0
      %1011 = vmatmul.mubr.bf16.gmra.mrb[0].mxu0 %v913
      %v1012 = vpop.f32.mrb[0].mxu0
      %v1013 = vadd.f32 0.0, %v1012
      %v1014 = vpop.f32.mrb[0].mxu0
      %v1015 = vpop.f32.mrb[0].mxu0
      %v1016 = vadd.f32 0.0, %v1015
      %v1017 = vpop.f32.mrb[0].mxu0
      %1018 = vmatprep.mubr.bf16.mxu0 0
      %1019 = vmatmul.mubr.bf16.gmra.mrb[0].mxu0 %v916
      %v1020 = vpop.f32.mrb[0].mxu0
      %v1021 = vadd.f32 0.0, %v1020
      %v1022 = vpop.f32.mrb[0].mxu0
      %v1023 = vpop.f32.mrb[0].mxu0
      %v1024 = vadd.f32 0.0, %v1023
      %v1025 = vpop.f32.mrb[0].mxu0
      %1026 = vmatprep.mubr.bf16.mxu0 0
      %1027 = vmatmul.mubr.bf16.gmra.mrb[0].mxu0 %v919
      %v1028 = vpop.f32.mrb[0].mxu0
      %v1029 = vadd.f32 0.0, %v1028
      %v1030 = vpop.f32.mrb[0].mxu0
      %v1031 = vpop.f32.mrb[0].mxu0
      %v1032 = vadd.f32 0.0, %v1031
      %v1033 = vpop.f32.mrb[0].mxu0
      %1034 = vmatprep.mubr.bf16.mxu0 0
      %1035 = vmatmul.mubr.bf16.gmra.mrb[0].mxu0 %v922
      %v1036 = vpop.f32.mrb[0].mxu0
      %v1037 = vadd.f32 0.0, %v1036
      %v1038 = vpop.f32.mrb[0].mxu0
      %v1039 = vpop.f32.mrb[0].mxu0
      %v1040 = vadd.f32 0.0, %v1039
      %v1041 = vpop.f32.mrb[0].mxu0
      %1042 = vmatprep.mubr.bf16.mxu0 0
      %1043 = vmatmul.mubr.bf16.gmra.mrb[0].mxu0 %v925
      %v1044 = vpop.f32.mrb[0].mxu0
      %v1045 = vadd.f32 0.0, %v1044
      %v1046 = vpop.f32.mrb[0].mxu0
      %v1047 = vpop.f32.mrb[0].mxu0
      %v1048 = vadd.f32 0.0, %v1047
      %v1049 = vpop.f32.mrb[0].mxu0
      %1050 = vmatprep.mubr.bf16.mxu0 0
      %1051 = vmatmul.mubr.bf16.gmra.mrb[0].mxu0 %v928
      %v1052 = vpop.f32.mrb[0].mxu0
      %v1053 = vadd.f32 0.0, %v1052
      %v1054 = vpop.f32.mrb[0].mxu0
      %v1055 = vpop.f32.mrb[0].mxu0
      %v1056 = vadd.f32 0.0, %v1055
      %v1057 = vpop.f32.mrb[0].mxu0
      %1058 = vmatprep.mubr.bf16.mxu0 0
      %1059 = vmatmul.mubr.bf16.gmra.mrb[0].mxu0 %v931
      %v1060 = vpop.f32.mrb[0].mxu0
      %v1061 = vadd.f32 0.0, %v1060
      %v1062 = vpop.f32.mrb[0].mxu0
      %v1063 = vpop.f32.mrb[0].mxu0
      %v1064 = vadd.f32 0.0, %v1063
      %v1065 = vpop.f32.mrb[0].mxu0
      %1066 = vmatprep.mubr.bf16.mxu0 0
      %1067 = vmatmul.mubr.bf16.gmra.mrb[0].mxu0 %v934
      %v1068 = vpop.f32.mrb[0].mxu0
      %v1069 = vadd.f32 0.0, %v1068
      %v1070 = vpop.f32.mrb[0].mxu0
      %v1071 = vpop.f32.mrb[0].mxu0
      %v1072 = vadd.f32 0.0, %v1071
      %v1073 = vpop.f32.mrb[0].mxu0
      %1074 = vmatprep.mubr.bf16.mxu0 0
      %1075 = vmatmul.mubr.bf16.gmra.mrb[0].mxu0 %v937
      %v1076 = vpop.f32.mrb[0].mxu0
      %v1077 = vadd.f32 0.0, %v1076
      %v1078 = vpop.f32.mrb[0].mxu0
      %v1079 = vpop.f32.mrb[0].mxu0
      %v1080 = vadd.f32 0.0, %v1079
      %v1081 = vpop.f32.mrb[0].mxu0
      %1082 = vmatprep.mubr.bf16.mxu0 0
      %1083 = vmatmul.mubr.bf16.gmra.mrb[0].mxu0 %v940
      %v1084 = vpop.f32.mrb[0].mxu0
      %v1085 = vadd.f32 0.0, %v1084
      %v1086 = vpop.f32.mrb[0].mxu0
      %v1087 = vpop.f32.mrb[0].mxu0
      %v1088 = vadd.f32 0.0, %v1087
      %v1089 = vpop.f32.mrb[0].mxu0
      %1090 = vmatprep.mubr.bf16.mxu0 0
      %1091 = vmatmul.mubr.bf16.gmra.mrb[0].mxu0 %v943
      %v1092 = vpop.f32.mrb[0].mxu0
      %v1093 = vadd.f32 0.0, %v1092
      %v1094 = vpop.f32.mrb[0].mxu0
      %v1095 = vpop.f32.mrb[0].mxu0
      %v1096 = vadd.f32 0.0, %v1095
      %v1097 = vpop.f32.mrb[0].mxu0
      %1098 = vmatprep.mubr.bf16.mxu0 0
      %1099 = vmatmul.mubr.bf16.gmra.mrb[0].mxu0 %v946
      %v1100 = vpop.f32.mrb[0].mxu0
      %v1101 = vadd.f32 0.0, %v1100
      %v1102 = vpop.f32.mrb[0].mxu0
      %v1103 = vpop.f32.mrb[0].mxu0
      %v1104 = vadd.f32 0.0, %v1103
      %v1105 = vpop.f32.mrb[0].mxu0
      %1106 = vmatprep.mubr.bf16.mxu0 0
      %1107 = vmatmul.mubr.bf16.gmra.mrb[0].mxu0 %v949
      %v1108 = vpop.f32.mrb[0].mxu0
      %v1109 = vadd.f32 0.0, %v1108
      %v1110 = vpop.f32.mrb[0].mxu0
      %v1111 = vpop.f32.mrb[0].mxu0
      %v1112 = vadd.f32 0.0, %v1111
      %v1113 = vpop.f32.mrb[0].mxu0
      %1114 = vdwg.mxu0
      %v1115 = vld [vmem:[#allocation2] sm:$0xff]
      %v1116 = vld [vmem:[#allocation2 + $0x8] sm:$0xff]
      %v1117 = vld [vmem:[#allocation2 + $0x10] sm:$0xff]
      %v1118 = vld [vmem:[#allocation2 + $0x18] sm:$0xff]
      %v1119 = vld [vmem:[#allocation2 + $0x20] sm:$0xff]
      %v1120 = vld [vmem:[#allocation2 + $0x28] sm:$0xff]
      %v1121 = vld [vmem:[#allocation2 + $0x30] sm:$0xff]
      %v1122 = vld [vmem:[#allocation2 + $0x38] sm:$0xff]
      %v1123 = vld [vmem:[#allocation2 + $0x40] sm:$0xff]
      %v1124 = vld [vmem:[#allocation2 + $0x48] sm:$0xff]
      %v1125 = vld [vmem:[#allocation2 + $0x50] sm:$0xff]
      %v1126 = vld [vmem:[#allocation2 + $0x58] sm:$0xff]
      %v1127 = vld [vmem:[#allocation2 + $0x60] sm:$0xff]
      %v1128 = vld [vmem:[#allocation2 + $0x68] sm:$0xff]
      %v1129 = vld [vmem:[#allocation2 + $0x70] sm:$0xff]
      %v1130 = vld [vmem:[#allocation2 + $0x78] sm:$0xff]
      %v1131 = vld [vmem:[#allocation2 + $0x80] sm:$0xff]
      %v1132 = vld [vmem:[#allocation2 + $0x88] sm:$0xff]
      %v1133 = vld [vmem:[#allocation2 + $0x90] sm:$0xff]
      %v1134 = vld [vmem:[#allocation2 + $0x98] sm:$0xff]
      %v1135 = vld [vmem:[#allocation2 + $0xa0] sm:$0xff]
      %v1136 = vld [vmem:[#allocation2 + $0xa8] sm:$0xff]
      %v1137 = vld [vmem:[#allocation2 + $0xb0] sm:$0xff]
      %v1138 = vld [vmem:[#allocation2 + $0xb8] sm:$0xff]
      %v1139 = vld [vmem:[#allocation2 + $0xc0] sm:$0xff]
      %v1140 = vld [vmem:[#allocation2 + $0xc8] sm:$0xff]
      %v1141 = vld [vmem:[#allocation2 + $0xd0] sm:$0xff]
      %v1142 = vld [vmem:[#allocation2 + $0xd8] sm:$0xff]
      %v1143 = vld [vmem:[#allocation2 + $0xe0] sm:$0xff]
      %v1144 = vld [vmem:[#allocation2 + $0xe8] sm:$0xff]
      %v1145 = vld [vmem:[#allocation2 + $0xf0] sm:$0xff]
      %v1146 = vld [vmem:[#allocation2 + $0xf8] sm:$0xff]
      %v1147 = vadd.f32 %v1115, %v989
      %v1148 = vadd.f32 %v1116, %v992
      %v1149 = vadd.f32 %v1117, %v997
      %v1150 = vadd.f32 %v1118, %v1000
      %v1151 = vadd.f32 %v1119, %v1005
      %v1152 = vadd.f32 %v1120, %v1008
      %v1153 = vadd.f32 %v1121, %v1013
      %v1154 = vadd.f32 %v1122, %v1016
      %v1155 = vadd.f32 %v1123, %v1021
      %v1156 = vadd.f32 %v1124, %v1024
      %v1157 = vadd.f32 %v1125, %v1029
      %v1158 = vadd.f32 %v1126, %v1032
      %v1159 = vadd.f32 %v1127, %v1037
      %v1160 = vadd.f32 %v1128, %v1040
      %v1161 = vadd.f32 %v1129, %v1045
      %v1162 = vadd.f32 %v1130, %v1048
      %v1163 = vadd.f32 %v1131, %v1053
      %v1164 = vadd.f32 %v1132, %v1056
      %v1165 = vadd.f32 %v1133, %v1061
      %v1166 = vadd.f32 %v1134, %v1064
      %v1167 = vadd.f32 %v1135, %v1069
      %v1168 = vadd.f32 %v1136, %v1072
      %v1169 = vadd.f32 %v1137, %v1077
      %v1170 = vadd.f32 %v1138, %v1080
      %v1171 = vadd.f32 %v1139, %v1085
      %v1172 = vadd.f32 %v1140, %v1088
      %v1173 = vadd.f32 %v1141, %v1093
      %v1174 = vadd.f32 %v1142, %v1096
      %v1175 = vadd.f32 %v1143, %v1101
      %v1176 = vadd.f32 %v1144, %v1104
      %v1177 = vadd.f32 %v1145, %v1109
      %v1178 = vadd.f32 %v1146, %v1112
      %1179 = vst [vmem:[#allocation2] sm:$0xff] %v1147
      %1180 = vst [vmem:[#allocation2 + $0x8] sm:$0xff] %v1148
      %1181 = vst [vmem:[#allocation2 + $0x10] sm:$0xff] %v1149
      %1182 = vst [vmem:[#allocation2 + $0x18] sm:$0xff] %v1150
      %1183 = vst [vmem:[#allocation2 + $0x20] sm:$0xff] %v1151
      %1184 = vst [vmem:[#allocation2 + $0x28] sm:$0xff] %v1152
      %1185 = vst [vmem:[#allocation2 + $0x30] sm:$0xff] %v1153
      %1186 = vst [vmem:[#allocation2 + $0x38] sm:$0xff] %v1154
      %1187 = vst [vmem:[#allocation2 + $0x40] sm:$0xff] %v1155
      %1188 = vst [vmem:[#allocation2 + $0x48] sm:$0xff] %v1156
      %1189 = vst [vmem:[#allocation2 + $0x50] sm:$0xff] %v1157
      %1190 = vst [vmem:[#allocation2 + $0x58] sm:$0xff] %v1158
      %1191 = vst [vmem:[#allocation2 + $0x60] sm:$0xff] %v1159
      %1192 = vst [vmem:[#allocation2 + $0x68] sm:$0xff] %v1160
      %1193 = vst [vmem:[#allocation2 + $0x70] sm:$0xff] %v1161
      %1194 = vst [vmem:[#allocation2 + $0x78] sm:$0xff] %v1162
      %1195 = vst [vmem:[#allocation2 + $0x80] sm:$0xff] %v1163
      %1196 = vst [vmem:[#allocation2 + $0x88] sm:$0xff] %v1164
      %1197 = vst [vmem:[#allocation2 + $0x90] sm:$0xff] %v1165
      %1198 = vst [vmem:[#allocation2 + $0x98] sm:$0xff] %v1166
      %1199 = vst [vmem:[#allocation2 + $0xa0] sm:$0xff] %v1167
      %1200 = vst [vmem:[#allocation2 + $0xa8] sm:$0xff] %v1168
      %1201 = vst [vmem:[#allocation2 + $0xb0] sm:$0xff] %v1169
      %1202 = vst [vmem:[#allocation2 + $0xb8] sm:$0xff] %v1170
      %1203 = vst [vmem:[#allocation2 + $0xc0] sm:$0xff] %v1171
      %1204 = vst [vmem:[#allocation2 + $0xc8] sm:$0xff] %v1172
      %1205 = vst [vmem:[#allocation2 + $0xd0] sm:$0xff] %v1173
      %1206 = vst [vmem:[#allocation2 + $0xd8] sm:$0xff] %v1174
      %1207 = vst [vmem:[#allocation2 + $0xe0] sm:$0xff] %v1175
      %1208 = vst [vmem:[#allocation2 + $0xe8] sm:$0xff] %v1176
      %1209 = vst [vmem:[#allocation2 + $0xf0] sm:$0xff] %v1177
      %1210 = vst [vmem:[#allocation2 + $0xf8] sm:$0xff] %v1178
      %s1211 = sadd.s32 %s197, 1
      %s1212 = smul.u32 %s1211, 24
      %s1213 = scalar_lea.vmem %s184, %s1212
      %v1214 = vld [vmem:[%s1213] sm:$0xff]
      %v1215 = vld [vmem:[%s1213 + $0x8] sm:$0xff]
      %v1216 = vld [vmem:[%s1213 + $0x18] sm:$0xff]
      %v1217 = vld [vmem:[%s1213 + $0x20] sm:$0xff]
      %v1218 = vld [vmem:[%s1213 + $0x30] sm:$0xff]
      %v1219 = vld [vmem:[%s1213 + $0x38] sm:$0xff]
      %v1220 = vld [vmem:[%s1213 + $0x48] sm:$0xff]
      %v1221 = vld [vmem:[%s1213 + $0x50] sm:$0xff]
      %v1222 = vld [vmem:[%s1213 + $0x60] sm:$0xff]
      %v1223 = vld [vmem:[%s1213 + $0x68] sm:$0xff]
      %v1224 = vld [vmem:[%s1213 + $0x78] sm:$0xff]
      %v1225 = vld [vmem:[%s1213 + $0x80] sm:$0xff]
      %v1226 = vld [vmem:[%s1213 + $0x90] sm:$0xff]
      %v1227 = vld [vmem:[%s1213 + $0x98] sm:$0xff]
      %v1228 = vld [vmem:[%s1213 + $0xa8] sm:$0xff]
      %v1229 = vld [vmem:[%s1213 + $0xb0] sm:$0xff]
      %v1230 = vld [vmem:[%s1213 + $0xc0] sm:$0xff]
      %v1231 = vld [vmem:[%s1213 + $0xc8] sm:$0xff]
      %v1232 = vld [vmem:[%s1213 + $0xd8] sm:$0xff]
      %v1233 = vld [vmem:[%s1213 + $0xe0] sm:$0xff]
      %v1234 = vld [vmem:[%s1213 + $0xf0] sm:$0xff]
      %v1235 = vld [vmem:[%s1213 + $0xf8] sm:$0xff]
      %v1236 = vld [vmem:[%s1213 + $0x108] sm:$0xff]
      %v1237 = vld [vmem:[%s1213 + $0x110] sm:$0xff]
      %v1238 = vld [vmem:[%s1213 + $0x120] sm:$0xff]
      %v1239 = vld [vmem:[%s1213 + $0x128] sm:$0xff]
      %v1240 = vld [vmem:[%s1213 + $0x138] sm:$0xff]
      %v1241 = vld [vmem:[%s1213 + $0x140] sm:$0xff]
      %v1242 = vld [vmem:[%s1213 + $0x150] sm:$0xff]
      %v1243 = vld [vmem:[%s1213 + $0x158] sm:$0xff]
      %v1244 = vld [vmem:[%s1213 + $0x168] sm:$0xff]
      %v1245 = vld [vmem:[%s1213 + $0x170] sm:$0xff]
      %v1246 = vpack.c.bf16 %v1215, %v1214
      %v1247 = vpack.c.bf16 %v1217, %v1216
      %v1248 = vpack.c.bf16 %v1219, %v1218
      %v1249 = vpack.c.bf16 %v1221, %v1220
      %v1250 = vpack.c.bf16 %v1223, %v1222
      %v1251 = vpack.c.bf16 %v1225, %v1224
      %v1252 = vpack.c.bf16 %v1227, %v1226
      %v1253 = vpack.c.bf16 %v1229, %v1228
      %v1254 = vpack.c.bf16 %v1231, %v1230
      %v1255 = vpack.c.bf16 %v1233, %v1232
      %v1256 = vpack.c.bf16 %v1235, %v1234
      %v1257 = vpack.c.bf16 %v1237, %v1236
      %v1258 = vpack.c.bf16 %v1239, %v1238
      %v1259 = vpack.c.bf16 %v1241, %v1240
      %v1260 = vpack.c.bf16 %v1243, %v1242
      %v1261 = vpack.c.bf16 %v1245, %v1244
      %s1262 = scalar_lea.vmem %s1, 6
      %v1263 = vld [vmem:[%s1262] sm:$0x3]
      %v1265 = vsel %vm249, %v1246, 0
      %v1268 = vsel %vm249, %v1247, 0
      %v1271 = vsel %vm249, %v1248, 0
      %v1274 = vsel %vm249, %v1249, 0
      %v1277 = vsel %vm249, %v1250, 0
      %v1280 = vsel %vm249, %v1251, 0
      %v1283 = vsel %vm249, %v1252, 0
      %v1286 = vsel %vm249, %v1253, 0
      %v1289 = vsel %vm249, %v1254, 0
      %v1292 = vsel %vm249, %v1255, 0
      %v1295 = vsel %vm249, %v1256, 0
      %v1298 = vsel %vm249, %v1257, 0
      %v1301 = vsel %vm249, %v1258, 0
      %v1304 = vsel %vm249, %v1259, 0
      %v1307 = vsel %vm249, %v1260, 0
      %v1310 = vsel %vm249, %v1261, 0
      %v1313 = vsel %vm298, %v1263, 0
      %1315 = vmatprep.subr.bf16.mxu0 0
      %1316 = vmatpush1.bf16.msra.mxu0 %v1313
      %1317 = vmatprep.subr.bf16.mxu0 0
      %1318 = vmatpush1.bf16.msra.mxu0 0
      %1319 = vmatprep.subr.bf16.mxu0 0
      %1320 = vmatpush1.bf16.msra.mxu0 0
      %1321 = vmatprep.subr.bf16.mxu0 0
      %1322 = vmatpush1.bf16.msra.mxu0 0
      %1323 = vmatprep.subr.bf16.mxu0 0
      %1324 = vmatpush1.bf16.msra.mxu0 0
      %1325 = vmatprep.subr.bf16.mxu0 0
      %1326 = vmatpush1.bf16.msra.mxu0 0
      %1327 = vmatprep.subr.bf16.mxu0 0
      %1328 = vmatpush1.bf16.msra.mxu0 0
      %1329 = vmatprep.subr.bf16.mxu0 0
      %1330 = vmatpush1.bf16.msra.mxu0 0
      %1331 = vmatprep.subr.bf16.mxu0 0
      %1332 = vmatpush1.bf16.msra.mxu0 0
      %1333 = vmatprep.subr.bf16.mxu0 0
      %1334 = vmatpush1.bf16.msra.mxu0 0
      %1335 = vmatprep.subr.bf16.mxu0 0
      %1336 = vmatpush1.bf16.msra.mxu0 0
      %1337 = vmatprep.subr.bf16.mxu0 0
      %1338 = vmatpush1.bf16.msra.mxu0 0
      %1339 = vmatprep.subr.bf16.mxu0 0
      %1340 = vmatpush1.bf16.msra.mxu0 0
      %1341 = vmatprep.subr.bf16.mxu0 0
      %1342 = vmatpush1.bf16.msra.mxu0 0
      %1343 = vmatprep.subr.bf16.mxu0 0
      %1344 = vmatpush1.bf16.msra.mxu0 0
      %1345 = vmatprep.subr.bf16.mxu0 0
      %1346 = vmatpush1.bf16.msra.mxu0 0
      %1347 = vmatprep.mubr.bf16.mxu0 0
      %1348 = vmatmul.mubr.bf16.gmra.mrb[0].mxu0 %v1265
      %v1349 = vpop.f32.mrb[0].mxu0
      %v1350 = vadd.f32 0.0, %v1349
      %v1351 = vpop.f32.mrb[0].mxu0
      %v1352 = vpop.f32.mrb[0].mxu0
      %v1353 = vadd.f32 0.0, %v1352
      %v1354 = vpop.f32.mrb[0].mxu0
      %1355 = vmatprep.mubr.bf16.mxu0 0
      %1356 = vmatmul.mubr.bf16.gmra.mrb[0].mxu0 %v1268
      %v1357 = vpop.f32.mrb[0].mxu0
      %v1358 = vadd.f32 0.0, %v1357
      %v1359 = vpop.f32.mrb[0].mxu0
      %v1360 = vpop.f32.mrb[0].mxu0
      %v1361 = vadd.f32 0.0, %v1360
      %v1362 = vpop.f32.mrb[0].mxu0
      %1363 = vmatprep.mubr.bf16.mxu0 0
      %1364 = vmatmul.mubr.bf16.gmra.mrb[0].mxu0 %v1271
      %v1365 = vpop.f32.mrb[0].mxu0
      %v1366 = vadd.f32 0.0, %v1365
      %v1367 = vpop.f32.mrb[0].mxu0
      %v1368 = vpop.f32.mrb[0].mxu0
      %v1369 = vadd.f32 0.0, %v1368
      %v1370 = vpop.f32.mrb[0].mxu0
      %1371 = vmatprep.mubr.bf16.mxu0 0
      %1372 = vmatmul.mubr.bf16.gmra.mrb[0].mxu0 %v1274
      %v1373 = vpop.f32.mrb[0].mxu0
      %v1374 = vadd.f32 0.0, %v1373
      %v1375 = vpop.f32.mrb[0].mxu0
      %v1376 = vpop.f32.mrb[0].mxu0
      %v1377 = vadd.f32 0.0, %v1376
      %v1378 = vpop.f32.mrb[0].mxu0
      %1379 = vmatprep.mubr.bf16.mxu0 0
      %1380 = vmatmul.mubr.bf16.gmra.mrb[0].mxu0 %v1277
      %v1381 = vpop.f32.mrb[0].mxu0
      %v1382 = vadd.f32 0.0, %v1381
      %v1383 = vpop.f32.mrb[0].mxu0
      %v1384 = vpop.f32.mrb[0].mxu0
      %v1385 = vadd.f32 0.0, %v1384
      %v1386 = vpop.f32.mrb[0].mxu0
      %1387 = vmatprep.mubr.bf16.mxu0 0
      %1388 = vmatmul.mubr.bf16.gmra.mrb[0].mxu0 %v1280
      %v1389 = vpop.f32.mrb[0].mxu0
      %v1390 = vadd.f32 0.0, %v1389
      %v1391 = vpop.f32.mrb[0].mxu0
      %v1392 = vpop.f32.mrb[0].mxu0
      %v1393 = vadd.f32 0.0, %v1392
      %v1394 = vpop.f32.mrb[0].mxu0
      %1395 = vmatprep.mubr.bf16.mxu0 0
      %1396 = vmatmul.mubr.bf16.gmra.mrb[0].mxu0 %v1283
      %v1397 = vpop.f32.mrb[0].mxu0
      %v1398 = vadd.f32 0.0, %v1397
      %v1399 = vpop.f32.mrb[0].mxu0
      %v1400 = vpop.f32.mrb[0].mxu0
      %v1401 = vadd.f32 0.0, %v1400
      %v1402 = vpop.f32.mrb[0].mxu0
      %1403 = vmatprep.mubr.bf16.mxu0 0
      %1404 = vmatmul.mubr.bf16.gmra.mrb[0].mxu0 %v1286
      %v1405 = vpop.f32.mrb[0].mxu0
      %v1406 = vadd.f32 0.0, %v1405
      %v1407 = vpop.f32.mrb[0].mxu0
      %v1408 = vpop.f32.mrb[0].mxu0
      %v1409 = vadd.f32 0.0, %v1408
      %v1410 = vpop.f32.mrb[0].mxu0
      %1411 = vmatprep.mubr.bf16.mxu0 0
      %1412 = vmatmul.mubr.bf16.gmra.mrb[0].mxu0 %v1289
      %v1413 = vpop.f32.mrb[0].mxu0
      %v1414 = vadd.f32 0.0, %v1413
      %v1415 = vpop.f32.mrb[0].mxu0
      %v1416 = vpop.f32.mrb[0].mxu0
      %v1417 = vadd.f32 0.0, %v1416
      %v1418 = vpop.f32.mrb[0].mxu0
      %1419 = vmatprep.mubr.bf16.mxu0 0
      %1420 = vmatmul.mubr.bf16.gmra.mrb[0].mxu0 %v1292
      %v1421 = vpop.f32.mrb[0].mxu0
      %v1422 = vadd.f32 0.0, %v1421
      %v1423 = vpop.f32.mrb[0].mxu0
      %v1424 = vpop.f32.mrb[0].mxu0
      %v1425 = vadd.f32 0.0, %v1424
      %v1426 = vpop.f32.mrb[0].mxu0
      %1427 = vmatprep.mubr.bf16.mxu0 0
      %1428 = vmatmul.mubr.bf16.gmra.mrb[0].mxu0 %v1295
      %v1429 = vpop.f32.mrb[0].mxu0
      %v1430 = vadd.f32 0.0, %v1429
      %v1431 = vpop.f32.mrb[0].mxu0
      %v1432 = vpop.f32.mrb[0].mxu0
      %v1433 = vadd.f32 0.0, %v1432
      %v1434 = vpop.f32.mrb[0].mxu0
      %1435 = vmatprep.mubr.bf16.mxu0 0
      %1436 = vmatmul.mubr.bf16.gmra.mrb[0].mxu0 %v1298
      %v1437 = vpop.f32.mrb[0].mxu0
      %v1438 = vadd.f32 0.0, %v1437
      %v1439 = vpop.f32.mrb[0].mxu0
      %v1440 = vpop.f32.mrb[0].mxu0
      %v1441 = vadd.f32 0.0, %v1440
      %v1442 = vpop.f32.mrb[0].mxu0
      %1443 = vmatprep.mubr.bf16.mxu0 0
      %1444 = vmatmul.mubr.bf16.gmra.mrb[0].mxu0 %v1301
      %v1445 = vpop.f32.mrb[0].mxu0
      %v1446 = vadd.f32 0.0, %v1445
      %v1447 = vpop.f32.mrb[0].mxu0
      %v1448 = vpop.f32.mrb[0].mxu0
      %v1449 = vadd.f32 0.0, %v1448
      %v1450 = vpop.f32.mrb[0].mxu0
      %1451 = vmatprep.mubr.bf16.mxu0 0
      %1452 = vmatmul.mubr.bf16.gmra.mrb[0].mxu0 %v1304
      %v1453 = vpop.f32.mrb[0].mxu0
      %v1454 = vadd.f32 0.0, %v1453
      %v1455 = vpop.f32.mrb[0].mxu0
      %v1456 = vpop.f32.mrb[0].mxu0
      %v1457 = vadd.f32 0.0, %v1456
      %v1458 = vpop.f32.mrb[0].mxu0
      %1459 = vmatprep.mubr.bf16.mxu0 0
      %1460 = vmatmul.mubr.bf16.gmra.mrb[0].mxu0 %v1307
      %v1461 = vpop.f32.mrb[0].mxu0
      %v1462 = vadd.f32 0.0, %v1461
      %v1463 = vpop.f32.mrb[0].mxu0
      %v1464 = vpop.f32.mrb[0].mxu0
      %v1465 = vadd.f32 0.0, %v1464
      %v1466 = vpop.f32.mrb[0].mxu0
      %1467 = vmatprep.mubr.bf16.mxu0 0
      %1468 = vmatmul.mubr.bf16.gmra.mrb[0].mxu0 %v1310
      %v1469 = vpop.f32.mrb[0].mxu0
      %v1470 = vadd.f32 0.0, %v1469
      %v1471 = vpop.f32.mrb[0].mxu0
      %v1472 = vpop.f32.mrb[0].mxu0
      %v1473 = vadd.f32 0.0, %v1472
      %v1474 = vpop.f32.mrb[0].mxu0
      %1475 = vdwg.mxu0
      %v1476 = vld [vmem:[#allocation2] sm:$0xff]
      %v1477 = vld [vmem:[#allocation2 + $0x8] sm:$0xff]
      %v1478 = vld [vmem:[#allocation2 + $0x10] sm:$0xff]
      %v1479 = vld [vmem:[#allocation2 + $0x18] sm:$0xff]
      %v1480 = vld [vmem:[#allocation2 + $0x20] sm:$0xff]
      %v1481 = vld [vmem:[#allocation2 + $0x28] sm:$0xff]
      %v1482 = vld [vmem:[#allocation2 + $0x30] sm:$0xff]
      %v1483 = vld [vmem:[#allocation2 + $0x38] sm:$0xff]
      %v1484 = vld [vmem:[#allocation2 + $0x40] sm:$0xff]
      %v1485 = vld [vmem:[#allocation2 + $0x48] sm:$0xff]
      %v1486 = vld [vmem:[#allocation2 + $0x50] sm:$0xff]
      %v1487 = vld [vmem:[#allocation2 + $0x58] sm:$0xff]
      %v1488 = vld [vmem:[#allocation2 + $0x60] sm:$0xff]
      %v1489 = vld [vmem:[#allocation2 + $0x68] sm:$0xff]
      %v1490 = vld [vmem:[#allocation2 + $0x70] sm:$0xff]
      %v1491 = vld [vmem:[#allocation2 + $0x78] sm:$0xff]
      %v1492 = vld [vmem:[#allocation2 + $0x80] sm:$0xff]
      %v1493 = vld [vmem:[#allocation2 + $0x88] sm:$0xff]
      %v1494 = vld [vmem:[#allocation2 + $0x90] sm:$0xff]
      %v1495 = vld [vmem:[#allocation2 + $0x98] sm:$0xff]
      %v1496 = vld [vmem:[#allocation2 + $0xa0] sm:$0xff]
      %v1497 = vld [vmem:[#allocation2 + $0xa8] sm:$0xff]
      %v1498 = vld [vmem:[#allocation2 + $0xb0] sm:$0xff]
      %v1499 = vld [vmem:[#allocation2 + $0xb8] sm:$0xff]
      %v1500 = vld [vmem:[#allocation2 + $0xc0] sm:$0xff]
      %v1501 = vld [vmem:[#allocation2 + $0xc8] sm:$0xff]
      %v1502 = vld [vmem:[#allocation2 + $0xd0] sm:$0xff]
      %v1503 = vld [vmem:[#allocation2 + $0xd8] sm:$0xff]
      %v1504 = vld [vmem:[#allocation2 + $0xe0] sm:$0xff]
      %v1505 = vld [vmem:[#allocation2 + $0xe8] sm:$0xff]
      %v1506 = vld [vmem:[#allocation2 + $0xf0] sm:$0xff]
      %v1507 = vld [vmem:[#allocation2 + $0xf8] sm:$0xff]
      %v1508 = vadd.f32 %v1476, %v1350
      %v1509 = vadd.f32 %v1477, %v1353
      %v1510 = vadd.f32 %v1478, %v1358
      %v1511 = vadd.f32 %v1479, %v1361
      %v1512 = vadd.f32 %v1480, %v1366
      %v1513 = vadd.f32 %v1481, %v1369
      %v1514 = vadd.f32 %v1482, %v1374
      %v1515 = vadd.f32 %v1483, %v1377
      %v1516 = vadd.f32 %v1484, %v1382
      %v1517 = vadd.f32 %v1485, %v1385
      %v1518 = vadd.f32 %v1486, %v1390
      %v1519 = vadd.f32 %v1487, %v1393
      %v1520 = vadd.f32 %v1488, %v1398
      %v1521 = vadd.f32 %v1489, %v1401
      %v1522 = vadd.f32 %v1490, %v1406
      %v1523 = vadd.f32 %v1491, %v1409
      %v1524 = vadd.f32 %v1492, %v1414
      %v1525 = vadd.f32 %v1493, %v1417
      %v1526 = vadd.f32 %v1494, %v1422
      %v1527 = vadd.f32 %v1495, %v1425
      %v1528 = vadd.f32 %v1496, %v1430
      %v1529 = vadd.f32 %v1497, %v1433
      %v1530 = vadd.f32 %v1498, %v1438
      %v1531 = vadd.f32 %v1499, %v1441
      %v1532 = vadd.f32 %v1500, %v1446
      %v1533 = vadd.f32 %v1501, %v1449
      %v1534 = vadd.f32 %v1502, %v1454
      %v1535 = vadd.f32 %v1503, %v1457
      %v1536 = vadd.f32 %v1504, %v1462
      %v1537 = vadd.f32 %v1505, %v1465
      %v1538 = vadd.f32 %v1506, %v1470
      %v1539 = vadd.f32 %v1507, %v1473
      %1540 = vst [vmem:[#allocation2] sm:$0xff] %v1508
      %1541 = vst [vmem:[#allocation2 + $0x8] sm:$0xff] %v1509
      %1542 = vst [vmem:[#allocation2 + $0x10] sm:$0xff] %v1510
      %1543 = vst [vmem:[#allocation2 + $0x18] sm:$0xff] %v1511
      %1544 = vst [vmem:[#allocation2 + $0x20] sm:$0xff] %v1512
      %1545 = vst [vmem:[#allocation2 + $0x28] sm:$0xff] %v1513
      %1546 = vst [vmem:[#allocation2 + $0x30] sm:$0xff] %v1514
      %1547 = vst [vmem:[#allocation2 + $0x38] sm:$0xff] %v1515
      %1548 = vst [vmem:[#allocation2 + $0x40] sm:$0xff] %v1516
      %1549 = vst [vmem:[#allocation2 + $0x48] sm:$0xff] %v1517
      %1550 = vst [vmem:[#allocation2 + $0x50] sm:$0xff] %v1518
      %1551 = vst [vmem:[#allocation2 + $0x58] sm:$0xff] %v1519
      %1552 = vst [vmem:[#allocation2 + $0x60] sm:$0xff] %v1520
      %1553 = vst [vmem:[#allocation2 + $0x68] sm:$0xff] %v1521
      %1554 = vst [vmem:[#allocation2 + $0x70] sm:$0xff] %v1522
      %1555 = vst [vmem:[#allocation2 + $0x78] sm:$0xff] %v1523
      %1556 = vst [vmem:[#allocation2 + $0x80] sm:$0xff] %v1524
      %1557 = vst [vmem:[#allocation2 + $0x88] sm:$0xff] %v1525
      %1558 = vst [vmem:[#allocation2 + $0x90] sm:$0xff] %v1526
      %1559 = vst [vmem:[#allocation2 + $0x98] sm:$0xff] %v1527
      %1560 = vst [vmem:[#allocation2 + $0xa0] sm:$0xff] %v1528
      %1561 = vst [vmem:[#allocation2 + $0xa8] sm:$0xff] %v1529
      %1562 = vst [vmem:[#allocation2 + $0xb0] sm:$0xff] %v1530
      %1563 = vst [vmem:[#allocation2 + $0xb8] sm:$0xff] %v1531
      %1564 = vst [vmem:[#allocation2 + $0xc0] sm:$0xff] %v1532
      %1565 = vst [vmem:[#allocation2 + $0xc8] sm:$0xff] %v1533
      %1566 = vst [vmem:[#allocation2 + $0xd0] sm:$0xff] %v1534
      %1567 = vst [vmem:[#allocation2 + $0xd8] sm:$0xff] %v1535
      %1568 = vst [vmem:[#allocation2 + $0xe0] sm:$0xff] %v1536
      %1569 = vst [vmem:[#allocation2 + $0xe8] sm:$0xff] %v1537
      %1570 = vst [vmem:[#allocation2 + $0xf0] sm:$0xff] %v1538
      %1571 = vst [vmem:[#allocation2 + $0xf8] sm:$0xff] %v1539
      %v1572 = vld [vmem:[%s1213 + $0x1] sm:$0xff]
      %v1573 = vld [vmem:[%s1213 + $0x9] sm:$0xff]
      %v1574 = vld [vmem:[%s1213 + $0x19] sm:$0xff]
      %v1575 = vld [vmem:[%s1213 + $0x21] sm:$0xff]
      %v1576 = vld [vmem:[%s1213 + $0x31] sm:$0xff]
      %v1577 = vld [vmem:[%s1213 + $0x39] sm:$0xff]
      %v1578 = vld [vmem:[%s1213 + $0x49] sm:$0xff]
      %v1579 = vld [vmem:[%s1213 + $0x51] sm:$0xff]
      %v1580 = vld [vmem:[%s1213 + $0x61] sm:$0xff]
      %v1581 = vld [vmem:[%s1213 + $0x69] sm:$0xff]
      %v1582 = vld [vmem:[%s1213 + $0x79] sm:$0xff]
      %v1583 = vld [vmem:[%s1213 + $0x81] sm:$0xff]
      %v1584 = vld [vmem:[%s1213 + $0x91] sm:$0xff]
      %v1585 = vld [vmem:[%s1213 + $0x99] sm:$0xff]
      %v1586 = vld [vmem:[%s1213 + $0xa9] sm:$0xff]
      %v1587 = vld [vmem:[%s1213 + $0xb1] sm:$0xff]
      %v1588 = vld [vmem:[%s1213 + $0xc1] sm:$0xff]
      %v1589 = vld [vmem:[%s1213 + $0xc9] sm:$0xff]
      %v1590 = vld [vmem:[%s1213 + $0xd9] sm:$0xff]
      %v1591 = vld [vmem:[%s1213 + $0xe1] sm:$0xff]
      %v1592 = vld [vmem:[%s1213 + $0xf1] sm:$0xff]
      %v1593 = vld [vmem:[%s1213 + $0xf9] sm:$0xff]
      %v1594 = vld [vmem:[%s1213 + $0x109] sm:$0xff]
      %v1595 = vld [vmem:[%s1213 + $0x111] sm:$0xff]
      %v1596 = vld [vmem:[%s1213 + $0x121] sm:$0xff]
      %v1597 = vld [vmem:[%s1213 + $0x129] sm:$0xff]
      %v1598 = vld [vmem:[%s1213 + $0x139] sm:$0xff]
      %v1599 = vld [vmem:[%s1213 + $0x141] sm:$0xff]
      %v1600 = vld [vmem:[%s1213 + $0x151] sm:$0xff]
      %v1601 = vld [vmem:[%s1213 + $0x159] sm:$0xff]
      %v1602 = vld [vmem:[%s1213 + $0x169] sm:$0xff]
      %v1603 = vld [vmem:[%s1213 + $0x171] sm:$0xff]
      %v1604 = vpack.c.bf16 %v1573, %v1572
      %v1605 = vpack.c.bf16 %v1575, %v1574
      %v1606 = vpack.c.bf16 %v1577, %v1576
      %v1607 = vpack.c.bf16 %v1579, %v1578
      %v1608 = vpack.c.bf16 %v1581, %v1580
      %v1609 = vpack.c.bf16 %v1583, %v1582
      %v1610 = vpack.c.bf16 %v1585, %v1584
      %v1611 = vpack.c.bf16 %v1587, %v1586
      %v1612 = vpack.c.bf16 %v1589, %v1588
      %v1613 = vpack.c.bf16 %v1591, %v1590
      %v1614 = vpack.c.bf16 %v1593, %v1592
      %v1615 = vpack.c.bf16 %v1595, %v1594
      %v1616 = vpack.c.bf16 %v1597, %v1596
      %v1617 = vpack.c.bf16 %v1599, %v1598
      %v1618 = vpack.c.bf16 %v1601, %v1600
      %v1619 = vpack.c.bf16 %v1603, %v1602
      %s1620 = scalar_lea.vmem %s1, 8
      %v1621 = vld [vmem:[%s1620] sm:$0x3]
      %v1623 = vsel %vm249, %v1604, 0
      %v1626 = vsel %vm249, %v1605, 0
      %v1629 = vsel %vm249, %v1606, 0
      %v1632 = vsel %vm249, %v1607, 0
      %v1635 = vsel %vm249, %v1608, 0
      %v1638 = vsel %vm249, %v1609, 0
      %v1641 = vsel %vm249, %v1610, 0
      %v1644 = vsel %vm249, %v1611, 0
      %v1647 = vsel %vm249, %v1612, 0
      %v1650 = vsel %vm249, %v1613, 0
      %v1653 = vsel %vm249, %v1614, 0
      %v1656 = vsel %vm249, %v1615, 0
      %v1659 = vsel %vm249, %v1616, 0
      %v1662 = vsel %vm249, %v1617, 0
      %v1665 = vsel %vm249, %v1618, 0
      %v1668 = vsel %vm249, %v1619, 0
      %v1671 = vsel %vm298, %v1621, 0
      %1673 = vmatprep.subr.bf16.mxu0 0
      %1674 = vmatpush1.bf16.msra.mxu0 %v1671
      %1675 = vmatprep.subr.bf16.mxu0 0
      %1676 = vmatpush1.bf16.msra.mxu0 0
      %1677 = vmatprep.subr.bf16.mxu0 0
      %1678 = vmatpush1.bf16.msra.mxu0 0
      %1679 = vmatprep.subr.bf16.mxu0 0
      %1680 = vmatpush1.bf16.msra.mxu0 0
      %1681 = vmatprep.subr.bf16.mxu0 0
      %1682 = vmatpush1.bf16.msra.mxu0 0
      %1683 = vmatprep.subr.bf16.mxu0 0
      %1684 = vmatpush1.bf16.msra.mxu0 0
      %1685 = vmatprep.subr.bf16.mxu0 0
      %1686 = vmatpush1.bf16.msra.mxu0 0
      %1687 = vmatprep.subr.bf16.mxu0 0
      %1688 = vmatpush1.bf16.msra.mxu0 0
      %1689 = vmatprep.subr.bf16.mxu0 0
      %1690 = vmatpush1.bf16.msra.mxu0 0
      %1691 = vmatprep.subr.bf16.mxu0 0
      %1692 = vmatpush1.bf16.msra.mxu0 0
      %1693 = vmatprep.subr.bf16.mxu0 0
      %1694 = vmatpush1.bf16.msra.mxu0 0
      %1695 = vmatprep.subr.bf16.mxu0 0
      %1696 = vmatpush1.bf16.msra.mxu0 0
      %1697 = vmatprep.subr.bf16.mxu0 0
      %1698 = vmatpush1.bf16.msra.mxu0 0
      %1699 = vmatprep.subr.bf16.mxu0 0
      %1700 = vmatpush1.bf16.msra.mxu0 0
      %1701 = vmatprep.subr.bf16.mxu0 0
      %1702 = vmatpush1.bf16.msra.mxu0 0
      %1703 = vmatprep.subr.bf16.mxu0 0
      %1704 = vmatpush1.bf16.msra.mxu0 0
      %1705 = vmatprep.mubr.bf16.mxu0 0
      %1706 = vmatmul.mubr.bf16.gmra.mrb[0].mxu0 %v1623
      %v1707 = vpop.f32.mrb[0].mxu0
      %v1708 = vadd.f32 0.0, %v1707
      %v1709 = vpop.f32.mrb[0].mxu0
      %v1710 = vpop.f32.mrb[0].mxu0
      %v1711 = vadd.f32 0.0, %v1710
      %v1712 = vpop.f32.mrb[0].mxu0
      %1713 = vmatprep.mubr.bf16.mxu0 0
      %1714 = vmatmul.mubr.bf16.gmra.mrb[0].mxu0 %v1626
      %v1715 = vpop.f32.mrb[0].mxu0
      %v1716 = vadd.f32 0.0, %v1715
      %v1717 = vpop.f32.mrb[0].mxu0
      %v1718 = vpop.f32.mrb[0].mxu0
      %v1719 = vadd.f32 0.0, %v1718
      %v1720 = vpop.f32.mrb[0].mxu0
      %1721 = vmatprep.mubr.bf16.mxu0 0
      %1722 = vmatmul.mubr.bf16.gmra.mrb[0].mxu0 %v1629
      %v1723 = vpop.f32.mrb[0].mxu0
      %v1724 = vadd.f32 0.0, %v1723
      %v1725 = vpop.f32.mrb[0].mxu0
      %v1726 = vpop.f32.mrb[0].mxu0
      %v1727 = vadd.f32 0.0, %v1726
      %v1728 = vpop.f32.mrb[0].mxu0
      %1729 = vmatprep.mubr.bf16.mxu0 0
      %1730 = vmatmul.mubr.bf16.gmra.mrb[0].mxu0 %v1632
      %v1731 = vpop.f32.mrb[0].mxu0
      %v1732 = vadd.f32 0.0, %v1731
      %v1733 = vpop.f32.mrb[0].mxu0
      %v1734 = vpop.f32.mrb[0].mxu0
      %v1735 = vadd.f32 0.0, %v1734
      %v1736 = vpop.f32.mrb[0].mxu0
      %1737 = vmatprep.mubr.bf16.mxu0 0
      %1738 = vmatmul.mubr.bf16.gmra.mrb[0].mxu0 %v1635
      %v1739 = vpop.f32.mrb[0].mxu0
      %v1740 = vadd.f32 0.0, %v1739
      %v1741 = vpop.f32.mrb[0].mxu0
      %v1742 = vpop.f32.mrb[0].mxu0
      %v1743 = vadd.f32 0.0, %v1742
      %v1744 = vpop.f32.mrb[0].mxu0
      %1745 = vmatprep.mubr.bf16.mxu0 0
      %1746 = vmatmul.mubr.bf16.gmra.mrb[0].mxu0 %v1638
      %v1747 = vpop.f32.mrb[0].mxu0
      %v1748 = vadd.f32 0.0, %v1747
      %v1749 = vpop.f32.mrb[0].mxu0
      %v1750 = vpop.f32.mrb[0].mxu0
      %v1751 = vadd.f32 0.0, %v1750
      %v1752 = vpop.f32.mrb[0].mxu0
      %1753 = vmatprep.mubr.bf16.mxu0 0
      %1754 = vmatmul.mubr.bf16.gmra.mrb[0].mxu0 %v1641
      %v1755 = vpop.f32.mrb[0].mxu0
      %v1756 = vadd.f32 0.0, %v1755
      %v1757 = vpop.f32.mrb[0].mxu0
      %v1758 = vpop.f32.mrb[0].mxu0
      %v1759 = vadd.f32 0.0, %v1758
      %v1760 = vpop.f32.mrb[0].mxu0
      %1761 = vmatprep.mubr.bf16.mxu0 0
      %1762 = vmatmul.mubr.bf16.gmra.mrb[0].mxu0 %v1644
      %v1763 = vpop.f32.mrb[0].mxu0
      %v1764 = vadd.f32 0.0, %v1763
      %v1765 = vpop.f32.mrb[0].mxu0
      %v1766 = vpop.f32.mrb[0].mxu0
      %v1767 = vadd.f32 0.0, %v1766
      %v1768 = vpop.f32.mrb[0].mxu0
      %1769 = vmatprep.mubr.bf16.mxu0 0
      %1770 = vmatmul.mubr.bf16.gmra.mrb[0].mxu0 %v1647
      %v1771 = vpop.f32.mrb[0].mxu0
      %v1772 = vadd.f32 0.0, %v1771
      %v1773 = vpop.f32.mrb[0].mxu0
      %v1774 = vpop.f32.mrb[0].mxu0
      %v1775 = vadd.f32 0.0, %v1774
      %v1776 = vpop.f32.mrb[0].mxu0
      %1777 = vmatprep.mubr.bf16.mxu0 0
      %1778 = vmatmul.mubr.bf16.gmra.mrb[0].mxu0 %v1650
      %v1779 = vpop.f32.mrb[0].mxu0
      %v1780 = vadd.f32 0.0, %v1779
      %v1781 = vpop.f32.mrb[0].mxu0
      %v1782 = vpop.f32.mrb[0].mxu0
      %v1783 = vadd.f32 0.0, %v1782
      %v1784 = vpop.f32.mrb[0].mxu0
      %1785 = vmatprep.mubr.bf16.mxu0 0
      %1786 = vmatmul.mubr.bf16.gmra.mrb[0].mxu0 %v1653
      %v1787 = vpop.f32.mrb[0].mxu0
      %v1788 = vadd.f32 0.0, %v1787
      %v1789 = vpop.f32.mrb[0].mxu0
      %v1790 = vpop.f32.mrb[0].mxu0
      %v1791 = vadd.f32 0.0, %v1790
      %v1792 = vpop.f32.mrb[0].mxu0
      %1793 = vmatprep.mubr.bf16.mxu0 0
      %1794 = vmatmul.mubr.bf16.gmra.mrb[0].mxu0 %v1656
      %v1795 = vpop.f32.mrb[0].mxu0
      %v1796 = vadd.f32 0.0, %v1795
      %v1797 = vpop.f32.mrb[0].mxu0
      %v1798 = vpop.f32.mrb[0].mxu0
      %v1799 = vadd.f32 0.0, %v1798
      %v1800 = vpop.f32.mrb[0].mxu0
      %1801 = vmatprep.mubr.bf16.mxu0 0
      %1802 = vmatmul.mubr.bf16.gmra.mrb[0].mxu0 %v1659
      %v1803 = vpop.f32.mrb[0].mxu0
      %v1804 = vadd.f32 0.0, %v1803
      %v1805 = vpop.f32.mrb[0].mxu0
      %v1806 = vpop.f32.mrb[0].mxu0
      %v1807 = vadd.f32 0.0, %v1806
      %v1808 = vpop.f32.mrb[0].mxu0
      %1809 = vmatprep.mubr.bf16.mxu0 0
      %1810 = vmatmul.mubr.bf16.gmra.mrb[0].mxu0 %v1662
      %v1811 = vpop.f32.mrb[0].mxu0
      %v1812 = vadd.f32 0.0, %v1811
      %v1813 = vpop.f32.mrb[0].mxu0
      %v1814 = vpop.f32.mrb[0].mxu0
      %v1815 = vadd.f32 0.0, %v1814
      %v1816 = vpop.f32.mrb[0].mxu0
      %1817 = vmatprep.mubr.bf16.mxu0 0
      %1818 = vmatmul.mubr.bf16.gmra.mrb[0].mxu0 %v1665
      %v1819 = vpop.f32.mrb[0].mxu0
      %v1820 = vadd.f32 0.0, %v1819
      %v1821 = vpop.f32.mrb[0].mxu0
      %v1822 = vpop.f32.mrb[0].mxu0
      %v1823 = vadd.f32 0.0, %v1822
      %v1824 = vpop.f32.mrb[0].mxu0
      %1825 = vmatprep.mubr.bf16.mxu0 0
      %1826 = vmatmul.mubr.bf16.gmra.mrb[0].mxu0 %v1668
      %v1827 = vpop.f32.mrb[0].mxu0
      %v1828 = vadd.f32 0.0, %v1827
      %v1829 = vpop.f32.mrb[0].mxu0
      %v1830 = vpop.f32.mrb[0].mxu0
      %v1831 = vadd.f32 0.0, %v1830
      %v1832 = vpop.f32.mrb[0].mxu0
      %1833 = vdwg.mxu0
      %v1834 = vld [vmem:[#allocation2] sm:$0xff]
      %v1835 = vld [vmem:[#allocation2 + $0x8] sm:$0xff]
      %v1836 = vld [vmem:[#allocation2 + $0x10] sm:$0xff]
      %v1837 = vld [vmem:[#allocation2 + $0x18] sm:$0xff]
      %v1838 = vld [vmem:[#allocation2 + $0x20] sm:$0xff]
      %v1839 = vld [vmem:[#allocation2 + $0x28] sm:$0xff]
      %v1840 = vld [vmem:[#allocation2 + $0x30] sm:$0xff]
      %v1841 = vld [vmem:[#allocation2 + $0x38] sm:$0xff]
      %v1842 = vld [vmem:[#allocation2 + $0x40] sm:$0xff]
      %v1843 = vld [vmem:[#allocation2 + $0x48] sm:$0xff]
      %v1844 = vld [vmem:[#allocation2 + $0x50] sm:$0xff]
      %v1845 = vld [vmem:[#allocation2 + $0x58] sm:$0xff]
      %v1846 = vld [vmem:[#allocation2 + $0x60] sm:$0xff]
      %v1847 = vld [vmem:[#allocation2 + $0x68] sm:$0xff]
      %v1848 = vld [vmem:[#allocation2 + $0x70] sm:$0xff]
      %v1849 = vld [vmem:[#allocation2 + $0x78] sm:$0xff]
      %v1850 = vld [vmem:[#allocation2 + $0x80] sm:$0xff]
      %v1851 = vld [vmem:[#allocation2 + $0x88] sm:$0xff]
      %v1852 = vld [vmem:[#allocation2 + $0x90] sm:$0xff]
      %v1853 = vld [vmem:[#allocation2 + $0x98] sm:$0xff]
      %v1854 = vld [vmem:[#allocation2 + $0xa0] sm:$0xff]
      %v1855 = vld [vmem:[#allocation2 + $0xa8] sm:$0xff]
      %v1856 = vld [vmem:[#allocation2 + $0xb0] sm:$0xff]
      %v1857 = vld [vmem:[#allocation2 + $0xb8] sm:$0xff]
      %v1858 = vld [vmem:[#allocation2 + $0xc0] sm:$0xff]
      %v1859 = vld [vmem:[#allocation2 + $0xc8] sm:$0xff]
      %v1860 = vld [vmem:[#allocation2 + $0xd0] sm:$0xff]
      %v1861 = vld [vmem:[#allocation2 + $0xd8] sm:$0xff]
      %v1862 = vld [vmem:[#allocation2 + $0xe0] sm:$0xff]
      %v1863 = vld [vmem:[#allocation2 + $0xe8] sm:$0xff]
      %v1864 = vld [vmem:[#allocation2 + $0xf0] sm:$0xff]
      %v1865 = vld [vmem:[#allocation2 + $0xf8] sm:$0xff]
      %v1866 = vadd.f32 %v1834, %v1708
      %v1867 = vadd.f32 %v1835, %v1711
      %v1868 = vadd.f32 %v1836, %v1716
      %v1869 = vadd.f32 %v1837, %v1719
      %v1870 = vadd.f32 %v1838, %v1724
      %v1871 = vadd.f32 %v1839, %v1727
      %v1872 = vadd.f32 %v1840, %v1732
      %v1873 = vadd.f32 %v1841, %v1735
      %v1874 = vadd.f32 %v1842, %v1740
      %v1875 = vadd.f32 %v1843, %v1743
      %v1876 = vadd.f32 %v1844, %v1748
      %v1877 = vadd.f32 %v1845, %v1751
      %v1878 = vadd.f32 %v1846, %v1756
      %v1879 = vadd.f32 %v1847, %v1759
      %v1880 = vadd.f32 %v1848, %v1764
      %v1881 = vadd.f32 %v1849, %v1767
      %v1882 = vadd.f32 %v1850, %v1772
      %v1883 = vadd.f32 %v1851, %v1775
      %v1884 = vadd.f32 %v1852, %v1780
      %v1885 = vadd.f32 %v1853, %v1783
      %v1886 = vadd.f32 %v1854, %v1788
      %v1887 = vadd.f32 %v1855, %v1791
      %v1888 = vadd.f32 %v1856, %v1796
      %v1889 = vadd.f32 %v1857, %v1799
      %v1890 = vadd.f32 %v1858, %v1804
      %v1891 = vadd.f32 %v1859, %v1807
      %v1892 = vadd.f32 %v1860, %v1812
      %v1893 = vadd.f32 %v1861, %v1815
      %v1894 = vadd.f32 %v1862, %v1820
      %v1895 = vadd.f32 %v1863, %v1823
      %v1896 = vadd.f32 %v1864, %v1828
      %v1897 = vadd.f32 %v1865, %v1831
      %1898 = vst [vmem:[#allocation2] sm:$0xff] %v1866
      %1899 = vst [vmem:[#allocation2 + $0x8] sm:$0xff] %v1867
      %1900 = vst [vmem:[#allocation2 + $0x10] sm:$0xff] %v1868
      %1901 = vst [vmem:[#allocation2 + $0x18] sm:$0xff] %v1869
      %1902 = vst [vmem:[#allocation2 + $0x20] sm:$0xff] %v1870
      %1903 = vst [vmem:[#allocation2 + $0x28] sm:$0xff] %v1871
      %1904 = vst [vmem:[#allocation2 + $0x30] sm:$0xff] %v1872
      %1905 = vst [vmem:[#allocation2 + $0x38] sm:$0xff] %v1873
      %1906 = vst [vmem:[#allocation2 + $0x40] sm:$0xff] %v1874
      %1907 = vst [vmem:[#allocation2 + $0x48] sm:$0xff] %v1875
      %1908 = vst [vmem:[#allocation2 + $0x50] sm:$0xff] %v1876
      %1909 = vst [vmem:[#allocation2 + $0x58] sm:$0xff] %v1877
      %1910 = vst [vmem:[#allocation2 + $0x60] sm:$0xff] %v1878
      %1911 = vst [vmem:[#allocation2 + $0x68] sm:$0xff] %v1879
      %1912 = vst [vmem:[#allocation2 + $0x70] sm:$0xff] %v1880
      %1913 = vst [vmem:[#allocation2 + $0x78] sm:$0xff] %v1881
      %1914 = vst [vmem:[#allocation2 + $0x80] sm:$0xff] %v1882
      %1915 = vst [vmem:[#allocation2 + $0x88] sm:$0xff] %v1883
      %1916 = vst [vmem:[#allocation2 + $0x90] sm:$0xff] %v1884
      %1917 = vst [vmem:[#allocation2 + $0x98] sm:$0xff] %v1885
      %1918 = vst [vmem:[#allocation2 + $0xa0] sm:$0xff] %v1886
      %1919 = vst [vmem:[#allocation2 + $0xa8] sm:$0xff] %v1887
      %1920 = vst [vmem:[#allocation2 + $0xb0] sm:$0xff] %v1888
      %1921 = vst [vmem:[#allocation2 + $0xb8] sm:$0xff] %v1889
      %1922 = vst [vmem:[#allocation2 + $0xc0] sm:$0xff] %v1890
      %1923 = vst [vmem:[#allocation2 + $0xc8] sm:$0xff] %v1891
      %1924 = vst [vmem:[#allocation2 + $0xd0] sm:$0xff] %v1892
      %1925 = vst [vmem:[#allocation2 + $0xd8] sm:$0xff] %v1893
      %1926 = vst [vmem:[#allocation2 + $0xe0] sm:$0xff] %v1894
      %1927 = vst [vmem:[#allocation2 + $0xe8] sm:$0xff] %v1895
      %1928 = vst [vmem:[#allocation2 + $0xf0] sm:$0xff] %v1896
      %1929 = vst [vmem:[#allocation2 + $0xf8] sm:$0xff] %v1897
      %v1930 = vld [vmem:[%s1213 + $0x2] sm:$0xff]
      %v1931 = vld [vmem:[%s1213 + $0xa] sm:$0xff]
      %v1932 = vld [vmem:[%s1213 + $0x1a] sm:$0xff]
      %v1933 = vld [vmem:[%s1213 + $0x22] sm:$0xff]
      %v1934 = vld [vmem:[%s1213 + $0x32] sm:$0xff]
      %v1935 = vld [vmem:[%s1213 + $0x3a] sm:$0xff]
      %v1936 = vld [vmem:[%s1213 + $0x4a] sm:$0xff]
      %v1937 = vld [vmem:[%s1213 + $0x52] sm:$0xff]
      %v1938 = vld [vmem:[%s1213 + $0x62] sm:$0xff]
      %v1939 = vld [vmem:[%s1213 + $0x6a] sm:$0xff]
      %v1940 = vld [vmem:[%s1213 + $0x7a] sm:$0xff]
      %v1941 = vld [vmem:[%s1213 + $0x82] sm:$0xff]
      %v1942 = vld [vmem:[%s1213 + $0x92] sm:$0xff]
      %v1943 = vld [vmem:[%s1213 + $0x9a] sm:$0xff]
      %v1944 = vld [vmem:[%s1213 + $0xaa] sm:$0xff]
      %v1945 = vld [vmem:[%s1213 + $0xb2] sm:$0xff]
      %v1946 = vld [vmem:[%s1213 + $0xc2] sm:$0xff]
      %v1947 = vld [vmem:[%s1213 + $0xca] sm:$0xff]
      %v1948 = vld [vmem:[%s1213 + $0xda] sm:$0xff]
      %v1949 = vld [vmem:[%s1213 + $0xe2] sm:$0xff]
      %v1950 = vld [vmem:[%s1213 + $0xf2] sm:$0xff]
      %v1951 = vld [vmem:[%s1213 + $0xfa] sm:$0xff]
      %v1952 = vld [vmem:[%s1213 + $0x10a] sm:$0xff]
      %v1953 = vld [vmem:[%s1213 + $0x112] sm:$0xff]
      %v1954 = vld [vmem:[%s1213 + $0x122] sm:$0xff]
      %v1955 = vld [vmem:[%s1213 + $0x12a] sm:$0xff]
      %v1956 = vld [vmem:[%s1213 + $0x13a] sm:$0xff]
      %v1957 = vld [vmem:[%s1213 + $0x142] sm:$0xff]
      %v1958 = vld [vmem:[%s1213 + $0x152] sm:$0xff]
      %v1959 = vld [vmem:[%s1213 + $0x15a] sm:$0xff]
      %v1960 = vld [vmem:[%s1213 + $0x16a] sm:$0xff]
      %v1961 = vld [vmem:[%s1213 + $0x172] sm:$0xff]
      %v1962 = vpack.c.bf16 %v1931, %v1930
      %v1963 = vpack.c.bf16 %v1933, %v1932
      %v1964 = vpack.c.bf16 %v1935, %v1934
      %v1965 = vpack.c.bf16 %v1937, %v1936
      %v1966 = vpack.c.bf16 %v1939, %v1938
      %v1967 = vpack.c.bf16 %v1941, %v1940
      %v1968 = vpack.c.bf16 %v1943, %v1942
      %v1969 = vpack.c.bf16 %v1945, %v1944
      %v1970 = vpack.c.bf16 %v1947, %v1946
      %v1971 = vpack.c.bf16 %v1949, %v1948
      %v1972 = vpack.c.bf16 %v1951, %v1950
      %v1973 = vpack.c.bf16 %v1953, %v1952
      %v1974 = vpack.c.bf16 %v1955, %v1954
      %v1975 = vpack.c.bf16 %v1957, %v1956
      %v1976 = vpack.c.bf16 %v1959, %v1958
      %v1977 = vpack.c.bf16 %v1961, %v1960
      %s1978 = scalar_lea.vmem %s1, 10
      %v1979 = vld [vmem:[%s1978] sm:$0x3]
      %v1981 = vsel %vm249, %v1962, 0
      %v1984 = vsel %vm249, %v1963, 0
      %v1987 = vsel %vm249, %v1964, 0
      %v1990 = vsel %vm249, %v1965, 0
      %v1993 = vsel %vm249, %v1966, 0
      %v1996 = vsel %vm249, %v1967, 0
      %v1999 = vsel %vm249, %v1968, 0
      %v2002 = vsel %vm249, %v1969, 0
      %v2005 = vsel %vm249, %v1970, 0
      %v2008 = vsel %vm249, %v1971, 0
      %v2011 = vsel %vm249, %v1972, 0
      %v2014 = vsel %vm249, %v1973, 0
      %v2017 = vsel %vm249, %v1974, 0
      %v2020 = vsel %vm249, %v1975, 0
      %v2023 = vsel %vm249, %v1976, 0
      %v2026 = vsel %vm249, %v1977, 0
      %v2029 = vsel %vm298, %v1979, 0
      %2031 = vmatprep.subr.bf16.mxu0 0
      %2032 = vmatpush1.bf16.msra.mxu0 %v2029
      %2033 = vmatprep.subr.bf16.mxu0 0
      %2034 = vmatpush1.bf16.msra.mxu0 0
      %2035 = vmatprep.subr.bf16.mxu0 0
      %2036 = vmatpush1.bf16.msra.mxu0 0
      %2037 = vmatprep.subr.bf16.mxu0 0
      %2038 = vmatpush1.bf16.msra.mxu0 0
      %2039 = vmatprep.subr.bf16.mxu0 0
      %2040 = vmatpush1.bf16.msra.mxu0 0
      %2041 = vmatprep.subr.bf16.mxu0 0
      %2042 = vmatpush1.bf16.msra.mxu0 0
      %2043 = vmatprep.subr.bf16.mxu0 0
      %2044 = vmatpush1.bf16.msra.mxu0 0
      %2045 = vmatprep.subr.bf16.mxu0 0
      %2046 = vmatpush1.bf16.msra.mxu0 0
      %2047 = vmatprep.subr.bf16.mxu0 0
      %2048 = vmatpush1.bf16.msra.mxu0 0
      %2049 = vmatprep.subr.bf16.mxu0 0
      %2050 = vmatpush1.bf16.msra.mxu0 0
      %2051 = vmatprep.subr.bf16.mxu0 0
      %2052 = vmatpush1.bf16.msra.mxu0 0
      %2053 = vmatprep.subr.bf16.mxu0 0
      %2054 = vmatpush1.bf16.msra.mxu0 0
      %2055 = vmatprep.subr.bf16.mxu0 0
      %2056 = vmatpush1.bf16.msra.mxu0 0
      %2057 = vmatprep.subr.bf16.mxu0 0
      %2058 = vmatpush1.bf16.msra.mxu0 0
      %2059 = vmatprep.subr.bf16.mxu0 0
      %2060 = vmatpush1.bf16.msra.mxu0 0
      %2061 = vmatprep.subr.bf16.mxu0 0
      %2062 = vmatpush1.bf16.msra.mxu0 0
      %2063 = vmatprep.mubr.bf16.mxu0 0
      %2064 = vmatmul.mubr.bf16.gmra.mrb[0].mxu0 %v1981
      %v2065 = vpop.f32.mrb[0].mxu0
      %v2066 = vadd.f32 0.0, %v2065
      %v2067 = vpop.f32.mrb[0].mxu0
      %v2068 = vpop.f32.mrb[0].mxu0
      %v2069 = vadd.f32 0.0, %v2068
      %v2070 = vpop.f32.mrb[0].mxu0
      %2071 = vmatprep.mubr.bf16.mxu0 0
      %2072 = vmatmul.mubr.bf16.gmra.mrb[0].mxu0 %v1984
      %v2073 = vpop.f32.mrb[0].mxu0
      %v2074 = vadd.f32 0.0, %v2073
      %v2075 = vpop.f32.mrb[0].mxu0
      %v2076 = vpop.f32.mrb[0].mxu0
      %v2077 = vadd.f32 0.0, %v2076
      %v2078 = vpop.f32.mrb[0].mxu0
      %2079 = vmatprep.mubr.bf16.mxu0 0
      %2080 = vmatmul.mubr.bf16.gmra.mrb[0].mxu0 %v1987
      %v2081 = vpop.f32.mrb[0].mxu0
      %v2082 = vadd.f32 0.0, %v2081
      %v2083 = vpop.f32.mrb[0].mxu0
      %v2084 = vpop.f32.mrb[0].mxu0
      %v2085 = vadd.f32 0.0, %v2084
      %v2086 = vpop.f32.mrb[0].mxu0
      %2087 = vmatprep.mubr.bf16.mxu0 0
      %2088 = vmatmul.mubr.bf16.gmra.mrb[0].mxu0 %v1990
      %v2089 = vpop.f32.mrb[0].mxu0
      %v2090 = vadd.f32 0.0, %v2089
      %v2091 = vpop.f32.mrb[0].mxu0
      %v2092 = vpop.f32.mrb[0].mxu0
      %v2093 = vadd.f32 0.0, %v2092
      %v2094 = vpop.f32.mrb[0].mxu0
      %2095 = vmatprep.mubr.bf16.mxu0 0
      %2096 = vmatmul.mubr.bf16.gmra.mrb[0].mxu0 %v1993
      %v2097 = vpop.f32.mrb[0].mxu0
      %v2098 = vadd.f32 0.0, %v2097
      %v2099 = vpop.f32.mrb[0].mxu0
      %v2100 = vpop.f32.mrb[0].mxu0
      %v2101 = vadd.f32 0.0, %v2100
      %v2102 = vpop.f32.mrb[0].mxu0
      %2103 = vmatprep.mubr.bf16.mxu0 0
      %2104 = vmatmul.mubr.bf16.gmra.mrb[0].mxu0 %v1996
      %v2105 = vpop.f32.mrb[0].mxu0
      %v2106 = vadd.f32 0.0, %v2105
      %v2107 = vpop.f32.mrb[0].mxu0
      %v2108 = vpop.f32.mrb[0].mxu0
      %v2109 = vadd.f32 0.0, %v2108
      %v2110 = vpop.f32.mrb[0].mxu0
      %2111 = vmatprep.mubr.bf16.mxu0 0
      %2112 = vmatmul.mubr.bf16.gmra.mrb[0].mxu0 %v1999
      %v2113 = vpop.f32.mrb[0].mxu0
      %v2114 = vadd.f32 0.0, %v2113
      %v2115 = vpop.f32.mrb[0].mxu0
      %v2116 = vpop.f32.mrb[0].mxu0
      %v2117 = vadd.f32 0.0, %v2116
      %v2118 = vpop.f32.mrb[0].mxu0
      %2119 = vmatprep.mubr.bf16.mxu0 0
      %2120 = vmatmul.mubr.bf16.gmra.mrb[0].mxu0 %v2002
      %v2121 = vpop.f32.mrb[0].mxu0
      %v2122 = vadd.f32 0.0, %v2121
      %v2123 = vpop.f32.mrb[0].mxu0
      %v2124 = vpop.f32.mrb[0].mxu0
      %v2125 = vadd.f32 0.0, %v2124
      %v2126 = vpop.f32.mrb[0].mxu0
      %2127 = vmatprep.mubr.bf16.mxu0 0
      %2128 = vmatmul.mubr.bf16.gmra.mrb[0].mxu0 %v2005
      %v2129 = vpop.f32.mrb[0].mxu0
      %v2130 = vadd.f32 0.0, %v2129
      %v2131 = vpop.f32.mrb[0].mxu0
      %v2132 = vpop.f32.mrb[0].mxu0
      %v2133 = vadd.f32 0.0, %v2132
      %v2134 = vpop.f32.mrb[0].mxu0
      %2135 = vmatprep.mubr.bf16.mxu0 0
      %2136 = vmatmul.mubr.bf16.gmra.mrb[0].mxu0 %v2008
      %v2137 = vpop.f32.mrb[0].mxu0
      %v2138 = vadd.f32 0.0, %v2137
      %v2139 = vpop.f32.mrb[0].mxu0
      %v2140 = vpop.f32.mrb[0].mxu0
      %v2141 = vadd.f32 0.0, %v2140
      %v2142 = vpop.f32.mrb[0].mxu0
      %2143 = vmatprep.mubr.bf16.mxu0 0
      %2144 = vmatmul.mubr.bf16.gmra.mrb[0].mxu0 %v2011
      %v2145 = vpop.f32.mrb[0].mxu0
      %v2146 = vadd.f32 0.0, %v2145
      %v2147 = vpop.f32.mrb[0].mxu0
      %v2148 = vpop.f32.mrb[0].mxu0
      %v2149 = vadd.f32 0.0, %v2148
      %v2150 = vpop.f32.mrb[0].mxu0
      %2151 = vmatprep.mubr.bf16.mxu0 0
      %2152 = vmatmul.mubr.bf16.gmra.mrb[0].mxu0 %v2014
      %v2153 = vpop.f32.mrb[0].mxu0
      %v2154 = vadd.f32 0.0, %v2153
      %v2155 = vpop.f32.mrb[0].mxu0
      %v2156 = vpop.f32.mrb[0].mxu0
      %v2157 = vadd.f32 0.0, %v2156
      %v2158 = vpop.f32.mrb[0].mxu0
      %2159 = vmatprep.mubr.bf16.mxu0 0
      %2160 = vmatmul.mubr.bf16.gmra.mrb[0].mxu0 %v2017
      %v2161 = vpop.f32.mrb[0].mxu0
      %v2162 = vadd.f32 0.0, %v2161
      %v2163 = vpop.f32.mrb[0].mxu0
      %v2164 = vpop.f32.mrb[0].mxu0
      %v2165 = vadd.f32 0.0, %v2164
      %v2166 = vpop.f32.mrb[0].mxu0
      %2167 = vmatprep.mubr.bf16.mxu0 0
      %2168 = vmatmul.mubr.bf16.gmra.mrb[0].mxu0 %v2020
      %v2169 = vpop.f32.mrb[0].mxu0
      %v2170 = vadd.f32 0.0, %v2169
      %v2171 = vpop.f32.mrb[0].mxu0
      %v2172 = vpop.f32.mrb[0].mxu0
      %v2173 = vadd.f32 0.0, %v2172
      %v2174 = vpop.f32.mrb[0].mxu0
      %2175 = vmatprep.mubr.bf16.mxu0 0
      %2176 = vmatmul.mubr.bf16.gmra.mrb[0].mxu0 %v2023
      %v2177 = vpop.f32.mrb[0].mxu0
      %v2178 = vadd.f32 0.0, %v2177
      %v2179 = vpop.f32.mrb[0].mxu0
      %v2180 = vpop.f32.mrb[0].mxu0
      %v2181 = vadd.f32 0.0, %v2180
      %v2182 = vpop.f32.mrb[0].mxu0
      %2183 = vmatprep.mubr.bf16.mxu0 0
      %2184 = vmatmul.mubr.bf16.gmra.mrb[0].mxu0 %v2026
      %v2185 = vpop.f32.mrb[0].mxu0
      %v2186 = vadd.f32 0.0, %v2185
      %v2187 = vpop.f32.mrb[0].mxu0
      %v2188 = vpop.f32.mrb[0].mxu0
      %v2189 = vadd.f32 0.0, %v2188
      %v2190 = vpop.f32.mrb[0].mxu0
      %2191 = vdwg.mxu0
      %v2192 = vld [vmem:[#allocation2] sm:$0xff]
      %v2193 = vld [vmem:[#allocation2 + $0x8] sm:$0xff]
      %v2194 = vld [vmem:[#allocation2 + $0x10] sm:$0xff]
      %v2195 = vld [vmem:[#allocation2 + $0x18] sm:$0xff]
      %v2196 = vld [vmem:[#allocation2 + $0x20] sm:$0xff]
      %v2197 = vld [vmem:[#allocation2 + $0x28] sm:$0xff]
      %v2198 = vld [vmem:[#allocation2 + $0x30] sm:$0xff]
      %v2199 = vld [vmem:[#allocation2 + $0x38] sm:$0xff]
      %v2200 = vld [vmem:[#allocation2 + $0x40] sm:$0xff]
      %v2201 = vld [vmem:[#allocation2 + $0x48] sm:$0xff]
      %v2202 = vld [vmem:[#allocation2 + $0x50] sm:$0xff]
      %v2203 = vld [vmem:[#allocation2 + $0x58] sm:$0xff]
      %v2204 = vld [vmem:[#allocation2 + $0x60] sm:$0xff]
      %v2205 = vld [vmem:[#allocation2 + $0x68] sm:$0xff]
      %v2206 = vld [vmem:[#allocation2 + $0x70] sm:$0xff]
      %v2207 = vld [vmem:[#allocation2 + $0x78] sm:$0xff]
      %v2208 = vld [vmem:[#allocation2 + $0x80] sm:$0xff]
      %v2209 = vld [vmem:[#allocation2 + $0x88] sm:$0xff]
      %v2210 = vld [vmem:[#allocation2 + $0x90] sm:$0xff]
      %v2211 = vld [vmem:[#allocation2 + $0x98] sm:$0xff]
      %v2212 = vld [vmem:[#allocation2 + $0xa0] sm:$0xff]
      %v2213 = vld [vmem:[#allocation2 + $0xa8] sm:$0xff]
      %v2214 = vld [vmem:[#allocation2 + $0xb0] sm:$0xff]
      %v2215 = vld [vmem:[#allocation2 + $0xb8] sm:$0xff]
      %v2216 = vld [vmem:[#allocation2 + $0xc0] sm:$0xff]
      %v2217 = vld [vmem:[#allocation2 + $0xc8] sm:$0xff]
      %v2218 = vld [vmem:[#allocation2 + $0xd0] sm:$0xff]
      %v2219 = vld [vmem:[#allocation2 + $0xd8] sm:$0xff]
      %v2220 = vld [vmem:[#allocation2 + $0xe0] sm:$0xff]
      %v2221 = vld [vmem:[#allocation2 + $0xe8] sm:$0xff]
      %v2222 = vld [vmem:[#allocation2 + $0xf0] sm:$0xff]
      %v2223 = vld [vmem:[#allocation2 + $0xf8] sm:$0xff]
      %v2224 = vadd.f32 %v2192, %v2066
      %v2225 = vadd.f32 %v2193, %v2069
      %v2226 = vadd.f32 %v2194, %v2074
      %v2227 = vadd.f32 %v2195, %v2077
      %v2228 = vadd.f32 %v2196, %v2082
      %v2229 = vadd.f32 %v2197, %v2085
      %v2230 = vadd.f32 %v2198, %v2090
      %v2231 = vadd.f32 %v2199, %v2093
      %v2232 = vadd.f32 %v2200, %v2098
      %v2233 = vadd.f32 %v2201, %v2101
      %v2234 = vadd.f32 %v2202, %v2106
      %v2235 = vadd.f32 %v2203, %v2109
      %v2236 = vadd.f32 %v2204, %v2114
      %v2237 = vadd.f32 %v2205, %v2117
      %v2238 = vadd.f32 %v2206, %v2122
      %v2239 = vadd.f32 %v2207, %v2125
      %v2240 = vadd.f32 %v2208, %v2130
      %v2241 = vadd.f32 %v2209, %v2133
      %v2242 = vadd.f32 %v2210, %v2138
      %v2243 = vadd.f32 %v2211, %v2141
      %v2244 = vadd.f32 %v2212, %v2146
      %v2245 = vadd.f32 %v2213, %v2149
      %v2246 = vadd.f32 %v2214, %v2154
      %v2247 = vadd.f32 %v2215, %v2157
      %v2248 = vadd.f32 %v2216, %v2162
      %v2249 = vadd.f32 %v2217, %v2165
      %v2250 = vadd.f32 %v2218, %v2170
      %v2251 = vadd.f32 %v2219, %v2173
      %v2252 = vadd.f32 %v2220, %v2178
      %v2253 = vadd.f32 %v2221, %v2181
      %v2254 = vadd.f32 %v2222, %v2186
      %v2255 = vadd.f32 %v2223, %v2189
      %2256 = vst [vmem:[#allocation2] sm:$0xff] %v2224
      %2257 = vst [vmem:[#allocation2 + $0x8] sm:$0xff] %v2225
      %2258 = vst [vmem:[#allocation2 + $0x10] sm:$0xff] %v2226
      %2259 = vst [vmem:[#allocation2 + $0x18] sm:$0xff] %v2227
      %2260 = vst [vmem:[#allocation2 + $0x20] sm:$0xff] %v2228
      %2261 = vst [vmem:[#allocation2 + $0x28] sm:$0xff] %v2229
      %2262 = vst [vmem:[#allocation2 + $0x30] sm:$0xff] %v2230
      %2263 = vst [vmem:[#allocation2 + $0x38] sm:$0xff] %v2231
      %2264 = vst [vmem:[#allocation2 + $0x40] sm:$0xff] %v2232
      %2265 = vst [vmem:[#allocation2 + $0x48] sm:$0xff] %v2233
      %2266 = vst [vmem:[#allocation2 + $0x50] sm:$0xff] %v2234
      %2267 = vst [vmem:[#allocation2 + $0x58] sm:$0xff] %v2235
      %2268 = vst [vmem:[#allocation2 + $0x60] sm:$0xff] %v2236
      %2269 = vst [vmem:[#allocation2 + $0x68] sm:$0xff] %v2237
      %2270 = vst [vmem:[#allocation2 + $0x70] sm:$0xff] %v2238
      %2271 = vst [vmem:[#allocation2 + $0x78] sm:$0xff] %v2239
      %2272 = vst [vmem:[#allocation2 + $0x80] sm:$0xff] %v2240
      %2273 = vst [vmem:[#allocation2 + $0x88] sm:$0xff] %v2241
      %2274 = vst [vmem:[#allocation2 + $0x90] sm:$0xff] %v2242
      %2275 = vst [vmem:[#allocation2 + $0x98] sm:$0xff] %v2243
      %2276 = vst [vmem:[#allocation2 + $0xa0] sm:$0xff] %v2244
      %2277 = vst [vmem:[#allocation2 + $0xa8] sm:$0xff] %v2245
      %2278 = vst [vmem:[#allocation2 + $0xb0] sm:$0xff] %v2246
      %2279 = vst [vmem:[#allocation2 + $0xb8] sm:$0xff] %v2247
      %2280 = vst [vmem:[#allocation2 + $0xc0] sm:$0xff] %v2248
      %2281 = vst [vmem:[#allocation2 + $0xc8] sm:$0xff] %v2249
      %2282 = vst [vmem:[#allocation2 + $0xd0] sm:$0xff] %v2250
      %2283 = vst [vmem:[#allocation2 + $0xd8] sm:$0xff] %v2251
      %2284 = vst [vmem:[#allocation2 + $0xe0] sm:$0xff] %v2252
      %2285 = vst [vmem:[#allocation2 + $0xe8] sm:$0xff] %v2253
      %2286 = vst [vmem:[#allocation2 + $0xf0] sm:$0xff] %v2254
      %2287 = vst [vmem:[#allocation2 + $0xf8] sm:$0xff] %v2255
      %s2288 = sadd.s32 %s197, 2
      %s2289 = smul.u32 %s2288, 24
      %s2290 = scalar_lea.vmem %s184, %s2289
      %v2291 = vld [vmem:[%s2290] sm:$0xff]
      %v2292 = vld [vmem:[%s2290 + $0x8] sm:$0xff]
      %v2293 = vld [vmem:[%s2290 + $0x18] sm:$0xff]
      %v2294 = vld [vmem:[%s2290 + $0x20] sm:$0xff]
      %v2295 = vld [vmem:[%s2290 + $0x30] sm:$0xff]
      %v2296 = vld [vmem:[%s2290 + $0x38] sm:$0xff]
      %v2297 = vld [vmem:[%s2290 + $0x48] sm:$0xff]
      %v2298 = vld [vmem:[%s2290 + $0x50] sm:$0xff]
      %v2299 = vld [vmem:[%s2290 + $0x60] sm:$0xff]
      %v2300 = vld [vmem:[%s2290 + $0x68] sm:$0xff]
      %v2301 = vld [vmem:[%s2290 + $0x78] sm:$0xff]
      %v2302 = vld [vmem:[%s2290 + $0x80] sm:$0xff]
      %v2303 = vld [vmem:[%s2290 + $0x90] sm:$0xff]
      %v2304 = vld [vmem:[%s2290 + $0x98] sm:$0xff]
      %v2305 = vld [vmem:[%s2290 + $0xa8] sm:$0xff]
      %v2306 = vld [vmem:[%s2290 + $0xb0] sm:$0xff]
      %v2307 = vld [vmem:[%s2290 + $0xc0] sm:$0xff]
      %v2308 = vld [vmem:[%s2290 + $0xc8] sm:$0xff]
      %v2309 = vld [vmem:[%s2290 + $0xd8] sm:$0xff]
      %v2310 = vld [vmem:[%s2290 + $0xe0] sm:$0xff]
      %v2311 = vld [vmem:[%s2290 + $0xf0] sm:$0xff]
      %v2312 = vld [vmem:[%s2290 + $0xf8] sm:$0xff]
      %v2313 = vld [vmem:[%s2290 + $0x108] sm:$0xff]
      %v2314 = vld [vmem:[%s2290 + $0x110] sm:$0xff]
      %v2315 = vld [vmem:[%s2290 + $0x120] sm:$0xff]
      %v2316 = vld [vmem:[%s2290 + $0x128] sm:$0xff]
      %v2317 = vld [vmem:[%s2290 + $0x138] sm:$0xff]
      %v2318 = vld [vmem:[%s2290 + $0x140] sm:$0xff]
      %v2319 = vld [vmem:[%s2290 + $0x150] sm:$0xff]
      %v2320 = vld [vmem:[%s2290 + $0x158] sm:$0xff]
      %v2321 = vld [vmem:[%s2290 + $0x168] sm:$0xff]
      %v2322 = vld [vmem:[%s2290 + $0x170] sm:$0xff]
      %v2323 = vpack.c.bf16 %v2292, %v2291
      %v2324 = vpack.c.bf16 %v2294, %v2293
      %v2325 = vpack.c.bf16 %v2296, %v2295
      %v2326 = vpack.c.bf16 %v2298, %v2297
      %v2327 = vpack.c.bf16 %v2300, %v2299
      %v2328 = vpack.c.bf16 %v2302, %v2301
      %v2329 = vpack.c.bf16 %v2304, %v2303
      %v2330 = vpack.c.bf16 %v2306, %v2305
      %v2331 = vpack.c.bf16 %v2308, %v2307
      %v2332 = vpack.c.bf16 %v2310, %v2309
      %v2333 = vpack.c.bf16 %v2312, %v2311
      %v2334 = vpack.c.bf16 %v2314, %v2313
      %v2335 = vpack.c.bf16 %v2316, %v2315
      %v2336 = vpack.c.bf16 %v2318, %v2317
      %v2337 = vpack.c.bf16 %v2320, %v2319
      %v2338 = vpack.c.bf16 %v2322, %v2321
      %s2339 = scalar_lea.vmem %s1, 12
      %v2340 = vld [vmem:[%s2339] sm:$0x3]
      %v2342 = vsel %vm249, %v2323, 0
      %v2345 = vsel %vm249, %v2324, 0
      %v2348 = vsel %vm249, %v2325, 0
      %v2351 = vsel %vm249, %v2326, 0
      %v2354 = vsel %vm249, %v2327, 0
      %v2357 = vsel %vm249, %v2328, 0
      %v2360 = vsel %vm249, %v2329, 0
      %v2363 = vsel %vm249, %v2330, 0
      %v2366 = vsel %vm249, %v2331, 0
      %v2369 = vsel %vm249, %v2332, 0
      %v2372 = vsel %vm249, %v2333, 0
      %v2375 = vsel %vm249, %v2334, 0
      %v2378 = vsel %vm249, %v2335, 0
      %v2381 = vsel %vm249, %v2336, 0
      %v2384 = vsel %vm249, %v2337, 0
      %v2387 = vsel %vm249, %v2338, 0
      %v2390 = vsel %vm298, %v2340, 0
      %2392 = vmatprep.subr.bf16.mxu0 0
      %2393 = vmatpush1.bf16.msra.mxu0 %v2390
      %2394 = vmatprep.subr.bf16.mxu0 0
      %2395 = vmatpush1.bf16.msra.mxu0 0
      %2396 = vmatprep.subr.bf16.mxu0 0
      %2397 = vmatpush1.bf16.msra.mxu0 0
      %2398 = vmatprep.subr.bf16.mxu0 0
      %2399 = vmatpush1.bf16.msra.mxu0 0
      %2400 = vmatprep.subr.bf16.mxu0 0
      %2401 = vmatpush1.bf16.msra.mxu0 0
      %2402 = vmatprep.subr.bf16.mxu0 0
      %2403 = vmatpush1.bf16.msra.mxu0 0
      %2404 = vmatprep.subr.bf16.mxu0 0
      %2405 = vmatpush1.bf16.msra.mxu0 0
      %2406 = vmatprep.subr.bf16.mxu0 0
      %2407 = vmatpush1.bf16.msra.mxu0 0
      %2408 = vmatprep.subr.bf16.mxu0 0
      %2409 = vmatpush1.bf16.msra.mxu0 0
      %2410 = vmatprep.subr.bf16.mxu0 0
      %2411 = vmatpush1.bf16.msra.mxu0 0
      %2412 = vmatprep.subr.bf16.mxu0 0
      %2413 = vmatpush1.bf16.msra.mxu0 0
      %2414 = vmatprep.subr.bf16.mxu0 0
      %2415 = vmatpush1.bf16.msra.mxu0 0
      %2416 = vmatprep.subr.bf16.mxu0 0
      %2417 = vmatpush1.bf16.msra.mxu0 0
      %2418 = vmatprep.subr.bf16.mxu0 0
      %2419 = vmatpush1.bf16.msra.mxu0 0
      %2420 = vmatprep.subr.bf16.mxu0 0
      %2421 = vmatpush1.bf16.msra.mxu0 0
      %2422 = vmatprep.subr.bf16.mxu0 0
      %2423 = vmatpush1.bf16.msra.mxu0 0
      %2424 = vmatprep.mubr.bf16.mxu0 0
      %2425 = vmatmul.mubr.bf16.gmra.mrb[0].mxu0 %v2342
      %v2426 = vpop.f32.mrb[0].mxu0
      %v2427 = vadd.f32 0.0, %v2426
      %v2428 = vpop.f32.mrb[0].mxu0
      %v2429 = vpop.f32.mrb[0].mxu0
      %v2430 = vadd.f32 0.0, %v2429
      %v2431 = vpop.f32.mrb[0].mxu0
      %2432 = vmatprep.mubr.bf16.mxu0 0
      %2433 = vmatmul.mubr.bf16.gmra.mrb[0].mxu0 %v2345
      %v2434 = vpop.f32.mrb[0].mxu0
      %v2435 = vadd.f32 0.0, %v2434
      %v2436 = vpop.f32.mrb[0].mxu0
      %v2437 = vpop.f32.mrb[0].mxu0
      %v2438 = vadd.f32 0.0, %v2437
      %v2439 = vpop.f32.mrb[0].mxu0
      %2440 = vmatprep.mubr.bf16.mxu0 0
      %2441 = vmatmul.mubr.bf16.gmra.mrb[0].mxu0 %v2348
      %v2442 = vpop.f32.mrb[0].mxu0
      %v2443 = vadd.f32 0.0, %v2442
      %v2444 = vpop.f32.mrb[0].mxu0
      %v2445 = vpop.f32.mrb[0].mxu0
      %v2446 = vadd.f32 0.0, %v2445
      %v2447 = vpop.f32.mrb[0].mxu0
      %2448 = vmatprep.mubr.bf16.mxu0 0
      %2449 = vmatmul.mubr.bf16.gmra.mrb[0].mxu0 %v2351
      %v2450 = vpop.f32.mrb[0].mxu0
      %v2451 = vadd.f32 0.0, %v2450
      %v2452 = vpop.f32.mrb[0].mxu0
      %v2453 = vpop.f32.mrb[0].mxu0
      %v2454 = vadd.f32 0.0, %v2453
      %v2455 = vpop.f32.mrb[0].mxu0
      %2456 = vmatprep.mubr.bf16.mxu0 0
      %2457 = vmatmul.mubr.bf16.gmra.mrb[0].mxu0 %v2354
      %v2458 = vpop.f32.mrb[0].mxu0
      %v2459 = vadd.f32 0.0, %v2458
      %v2460 = vpop.f32.mrb[0].mxu0
      %v2461 = vpop.f32.mrb[0].mxu0
      %v2462 = vadd.f32 0.0, %v2461
      %v2463 = vpop.f32.mrb[0].mxu0
      %2464 = vmatprep.mubr.bf16.mxu0 0
      %2465 = vmatmul.mubr.bf16.gmra.mrb[0].mxu0 %v2357
      %v2466 = vpop.f32.mrb[0].mxu0
      %v2467 = vadd.f32 0.0, %v2466
      %v2468 = vpop.f32.mrb[0].mxu0
      %v2469 = vpop.f32.mrb[0].mxu0
      %v2470 = vadd.f32 0.0, %v2469
      %v2471 = vpop.f32.mrb[0].mxu0
      %2472 = vmatprep.mubr.bf16.mxu0 0
      %2473 = vmatmul.mubr.bf16.gmra.mrb[0].mxu0 %v2360
      %v2474 = vpop.f32.mrb[0].mxu0
      %v2475 = vadd.f32 0.0, %v2474
      %v2476 = vpop.f32.mrb[0].mxu0
      %v2477 = vpop.f32.mrb[0].mxu0
      %v2478 = vadd.f32 0.0, %v2477
      %v2479 = vpop.f32.mrb[0].mxu0
      %2480 = vmatprep.mubr.bf16.mxu0 0
      %2481 = vmatmul.mubr.bf16.gmra.mrb[0].mxu0 %v2363
      %v2482 = vpop.f32.mrb[0].mxu0
      %v2483 = vadd.f32 0.0, %v2482
      %v2484 = vpop.f32.mrb[0].mxu0
      %v2485 = vpop.f32.mrb[0].mxu0
      %v2486 = vadd.f32 0.0, %v2485
      %v2487 = vpop.f32.mrb[0].mxu0
      %2488 = vmatprep.mubr.bf16.mxu0 0
      %2489 = vmatmul.mubr.bf16.gmra.mrb[0].mxu0 %v2366
      %v2490 = vpop.f32.mrb[0].mxu0
      %v2491 = vadd.f32 0.0, %v2490
      %v2492 = vpop.f32.mrb[0].mxu0
      %v2493 = vpop.f32.mrb[0].mxu0
      %v2494 = vadd.f32 0.0, %v2493
      %v2495 = vpop.f32.mrb[0].mxu0
      %2496 = vmatprep.mubr.bf16.mxu0 0
      %2497 = vmatmul.mubr.bf16.gmra.mrb[0].mxu0 %v2369
      %v2498 = vpop.f32.mrb[0].mxu0
      %v2499 = vadd.f32 0.0, %v2498
      %v2500 = vpop.f32.mrb[0].mxu0
      %v2501 = vpop.f32.mrb[0].mxu0
      %v2502 = vadd.f32 0.0, %v2501
      %v2503 = vpop.f32.mrb[0].mxu0
      %2504 = vmatprep.mubr.bf16.mxu0 0
      %2505 = vmatmul.mubr.bf16.gmra.mrb[0].mxu0 %v2372
      %v2506 = vpop.f32.mrb[0].mxu0
      %v2507 = vadd.f32 0.0, %v2506
      %v2508 = vpop.f32.mrb[0].mxu0
      %v2509 = vpop.f32.mrb[0].mxu0
      %v2510 = vadd.f32 0.0, %v2509
      %v2511 = vpop.f32.mrb[0].mxu0
      %2512 = vmatprep.mubr.bf16.mxu0 0
      %2513 = vmatmul.mubr.bf16.gmra.mrb[0].mxu0 %v2375
      %v2514 = vpop.f32.mrb[0].mxu0
      %v2515 = vadd.f32 0.0, %v2514
      %v2516 = vpop.f32.mrb[0].mxu0
      %v2517 = vpop.f32.mrb[0].mxu0
      %v2518 = vadd.f32 0.0, %v2517
      %v2519 = vpop.f32.mrb[0].mxu0
      %2520 = vmatprep.mubr.bf16.mxu0 0
      %2521 = vmatmul.mubr.bf16.gmra.mrb[0].mxu0 %v2378
      %v2522 = vpop.f32.mrb[0].mxu0
      %v2523 = vadd.f32 0.0, %v2522
      %v2524 = vpop.f32.mrb[0].mxu0
      %v2525 = vpop.f32.mrb[0].mxu0
      %v2526 = vadd.f32 0.0, %v2525
      %v2527 = vpop.f32.mrb[0].mxu0
      %2528 = vmatprep.mubr.bf16.mxu0 0
      %2529 = vmatmul.mubr.bf16.gmra.mrb[0].mxu0 %v2381
      %v2530 = vpop.f32.mrb[0].mxu0
      %v2531 = vadd.f32 0.0, %v2530
      %v2532 = vpop.f32.mrb[0].mxu0
      %v2533 = vpop.f32.mrb[0].mxu0
      %v2534 = vadd.f32 0.0, %v2533
      %v2535 = vpop.f32.mrb[0].mxu0
      %2536 = vmatprep.mubr.bf16.mxu0 0
      %2537 = vmatmul.mubr.bf16.gmra.mrb[0].mxu0 %v2384
      %v2538 = vpop.f32.mrb[0].mxu0
      %v2539 = vadd.f32 0.0, %v2538
      %v2540 = vpop.f32.mrb[0].mxu0
      %v2541 = vpop.f32.mrb[0].mxu0
      %v2542 = vadd.f32 0.0, %v2541
      %v2543 = vpop.f32.mrb[0].mxu0
      %2544 = vmatprep.mubr.bf16.mxu0 0
      %2545 = vmatmul.mubr.bf16.gmra.mrb[0].mxu0 %v2387
      %v2546 = vpop.f32.mrb[0].mxu0
      %v2547 = vadd.f32 0.0, %v2546
      %v2548 = vpop.f32.mrb[0].mxu0
      %v2549 = vpop.f32.mrb[0].mxu0
      %v2550 = vadd.f32 0.0, %v2549
      %v2551 = vpop.f32.mrb[0].mxu0
      %2552 = vdwg.mxu0
      %v2553 = vld [vmem:[#allocation2] sm:$0xff]
      %v2554 = vld [vmem:[#allocation2 + $0x8] sm:$0xff]
      %v2555 = vld [vmem:[#allocation2 + $0x10] sm:$0xff]
      %v2556 = vld [vmem:[#allocation2 + $0x18] sm:$0xff]
      %v2557 = vld [vmem:[#allocation2 + $0x20] sm:$0xff]
      %v2558 = vld [vmem:[#allocation2 + $0x28] sm:$0xff]
      %v2559 = vld [vmem:[#allocation2 + $0x30] sm:$0xff]
      %v2560 = vld [vmem:[#allocation2 + $0x38] sm:$0xff]
      %v2561 = vld [vmem:[#allocation2 + $0x40] sm:$0xff]
      %v2562 = vld [vmem:[#allocation2 + $0x48] sm:$0xff]
      %v2563 = vld [vmem:[#allocation2 + $0x50] sm:$0xff]
      %v2564 = vld [vmem:[#allocation2 + $0x58] sm:$0xff]
      %v2565 = vld [vmem:[#allocation2 + $0x60] sm:$0xff]
      %v2566 = vld [vmem:[#allocation2 + $0x68] sm:$0xff]
      %v2567 = vld [vmem:[#allocation2 + $0x70] sm:$0xff]
      %v2568 = vld [vmem:[#allocation2 + $0x78] sm:$0xff]
      %v2569 = vld [vmem:[#allocation2 + $0x80] sm:$0xff]
      %v2570 = vld [vmem:[#allocation2 + $0x88] sm:$0xff]
      %v2571 = vld [vmem:[#allocation2 + $0x90] sm:$0xff]
      %v2572 = vld [vmem:[#allocation2 + $0x98] sm:$0xff]
      %v2573 = vld [vmem:[#allocation2 + $0xa0] sm:$0xff]
      %v2574 = vld [vmem:[#allocation2 + $0xa8] sm:$0xff]
      %v2575 = vld [vmem:[#allocation2 + $0xb0] sm:$0xff]
      %v2576 = vld [vmem:[#allocation2 + $0xb8] sm:$0xff]
      %v2577 = vld [vmem:[#allocation2 + $0xc0] sm:$0xff]
      %v2578 = vld [vmem:[#allocation2 + $0xc8] sm:$0xff]
      %v2579 = vld [vmem:[#allocation2 + $0xd0] sm:$0xff]
      %v2580 = vld [vmem:[#allocation2 + $0xd8] sm:$0xff]
      %v2581 = vld [vmem:[#allocation2 + $0xe0] sm:$0xff]
      %v2582 = vld [vmem:[#allocation2 + $0xe8] sm:$0xff]
      %v2583 = vld [vmem:[#allocation2 + $0xf0] sm:$0xff]
      %v2584 = vld [vmem:[#allocation2 + $0xf8] sm:$0xff]
      %v2585 = vadd.f32 %v2553, %v2427
      %v2586 = vadd.f32 %v2554, %v2430
      %v2587 = vadd.f32 %v2555, %v2435
      %v2588 = vadd.f32 %v2556, %v2438
      %v2589 = vadd.f32 %v2557, %v2443
      %v2590 = vadd.f32 %v2558, %v2446
      %v2591 = vadd.f32 %v2559, %v2451
      %v2592 = vadd.f32 %v2560, %v2454
      %v2593 = vadd.f32 %v2561, %v2459
      %v2594 = vadd.f32 %v2562, %v2462
      %v2595 = vadd.f32 %v2563, %v2467
      %v2596 = vadd.f32 %v2564, %v2470
      %v2597 = vadd.f32 %v2565, %v2475
      %v2598 = vadd.f32 %v2566, %v2478
      %v2599 = vadd.f32 %v2567, %v2483
      %v2600 = vadd.f32 %v2568, %v2486
      %v2601 = vadd.f32 %v2569, %v2491
      %v2602 = vadd.f32 %v2570, %v2494
      %v2603 = vadd.f32 %v2571, %v2499
      %v2604 = vadd.f32 %v2572, %v2502
      %v2605 = vadd.f32 %v2573, %v2507
      %v2606 = vadd.f32 %v2574, %v2510
      %v2607 = vadd.f32 %v2575, %v2515
      %v2608 = vadd.f32 %v2576, %v2518
      %v2609 = vadd.f32 %v2577, %v2523
      %v2610 = vadd.f32 %v2578, %v2526
      %v2611 = vadd.f32 %v2579, %v2531
      %v2612 = vadd.f32 %v2580, %v2534
      %v2613 = vadd.f32 %v2581, %v2539
      %v2614 = vadd.f32 %v2582, %v2542
      %v2615 = vadd.f32 %v2583, %v2547
      %v2616 = vadd.f32 %v2584, %v2550
      %2617 = vst [vmem:[#allocation2] sm:$0xff] %v2585
      %2618 = vst [vmem:[#allocation2 + $0x8] sm:$0xff] %v2586
      %2619 = vst [vmem:[#allocation2 + $0x10] sm:$0xff] %v2587
      %2620 = vst [vmem:[#allocation2 + $0x18] sm:$0xff] %v2588
      %2621 = vst [vmem:[#allocation2 + $0x20] sm:$0xff] %v2589
      %2622 = vst [vmem:[#allocation2 + $0x28] sm:$0xff] %v2590
      %2623 = vst [vmem:[#allocation2 + $0x30] sm:$0xff] %v2591
      %2624 = vst [vmem:[#allocation2 + $0x38] sm:$0xff] %v2592
      %2625 = vst [vmem:[#allocation2 + $0x40] sm:$0xff] %v2593
      %2626 = vst [vmem:[#allocation2 + $0x48] sm:$0xff] %v2594
      %2627 = vst [vmem:[#allocation2 + $0x50] sm:$0xff] %v2595
      %2628 = vst [vmem:[#allocation2 + $0x58] sm:$0xff] %v2596
      %2629 = vst [vmem:[#allocation2 + $0x60] sm:$0xff] %v2597
      %2630 = vst [vmem:[#allocation2 + $0x68] sm:$0xff] %v2598
      %2631 = vst [vmem:[#allocation2 + $0x70] sm:$0xff] %v2599
      %2632 = vst [vmem:[#allocation2 + $0x78] sm:$0xff] %v2600
      %2633 = vst [vmem:[#allocation2 + $0x80] sm:$0xff] %v2601
      %2634 = vst [vmem:[#allocation2 + $0x88] sm:$0xff] %v2602
      %2635 = vst [vmem:[#allocation2 + $0x90] sm:$0xff] %v2603
      %2636 = vst [vmem:[#allocation2 + $0x98] sm:$0xff] %v2604
      %2637 = vst [vmem:[#allocation2 + $0xa0] sm:$0xff] %v2605
      %2638 = vst [vmem:[#allocation2 + $0xa8] sm:$0xff] %v2606
      %2639 = vst [vmem:[#allocation2 + $0xb0] sm:$0xff] %v2607
      %2640 = vst [vmem:[#allocation2 + $0xb8] sm:$0xff] %v2608
      %2641 = vst [vmem:[#allocation2 + $0xc0] sm:$0xff] %v2609
      %2642 = vst [vmem:[#allocation2 + $0xc8] sm:$0xff] %v2610
      %2643 = vst [vmem:[#allocation2 + $0xd0] sm:$0xff] %v2611
      %2644 = vst [vmem:[#allocation2 + $0xd8] sm:$0xff] %v2612
      %2645 = vst [vmem:[#allocation2 + $0xe0] sm:$0xff] %v2613
      %2646 = vst [vmem:[#allocation2 + $0xe8] sm:$0xff] %v2614
      %2647 = vst [vmem:[#allocation2 + $0xf0] sm:$0xff] %v2615
      %2648 = vst [vmem:[#allocation2 + $0xf8] sm:$0xff] %v2616
      %v2649 = vld [vmem:[%s2290 + $0x1] sm:$0xff]
      %v2650 = vld [vmem:[%s2290 + $0x9] sm:$0xff]
      %v2651 = vld [vmem:[%s2290 + $0x19] sm:$0xff]
      %v2652 = vld [vmem:[%s2290 + $0x21] sm:$0xff]
      %v2653 = vld [vmem:[%s2290 + $0x31] sm:$0xff]
      %v2654 = vld [vmem:[%s2290 + $0x39] sm:$0xff]
      %v2655 = vld [vmem:[%s2290 + $0x49] sm:$0xff]
      %v2656 = vld [vmem:[%s2290 + $0x51] sm:$0xff]
      %v2657 = vld [vmem:[%s2290 + $0x61] sm:$0xff]
      %v2658 = vld [vmem:[%s2290 + $0x69] sm:$0xff]
      %v2659 = vld [vmem:[%s2290 + $0x79] sm:$0xff]
      %v2660 = vld [vmem:[%s2290 + $0x81] sm:$0xff]
      %v2661 = vld [vmem:[%s2290 + $0x91] sm:$0xff]
      %v2662 = vld [vmem:[%s2290 + $0x99] sm:$0xff]
      %v2663 = vld [vmem:[%s2290 + $0xa9] sm:$0xff]
      %v2664 = vld [vmem:[%s2290 + $0xb1] sm:$0xff]
      %v2665 = vld [vmem:[%s2290 + $0xc1] sm:$0xff]
      %v2666 = vld [vmem:[%s2290 + $0xc9] sm:$0xff]
      %v2667 = vld [vmem:[%s2290 + $0xd9] sm:$0xff]
      %v2668 = vld [vmem:[%s2290 + $0xe1] sm:$0xff]
      %v2669 = vld [vmem:[%s2290 + $0xf1] sm:$0xff]
      %v2670 = vld [vmem:[%s2290 + $0xf9] sm:$0xff]
      %v2671 = vld [vmem:[%s2290 + $0x109] sm:$0xff]
      %v2672 = vld [vmem:[%s2290 + $0x111] sm:$0xff]
      %v2673 = vld [vmem:[%s2290 + $0x121] sm:$0xff]
      %v2674 = vld [vmem:[%s2290 + $0x129] sm:$0xff]
      %v2675 = vld [vmem:[%s2290 + $0x139] sm:$0xff]
      %v2676 = vld [vmem:[%s2290 + $0x141] sm:$0xff]
      %v2677 = vld [vmem:[%s2290 + $0x151] sm:$0xff]
      %v2678 = vld [vmem:[%s2290 + $0x159] sm:$0xff]
      %v2679 = vld [vmem:[%s2290 + $0x169] sm:$0xff]
      %v2680 = vld [vmem:[%s2290 + $0x171] sm:$0xff]
      %v2681 = vpack.c.bf16 %v2650, %v2649
      %v2682 = vpack.c.bf16 %v2652, %v2651
      %v2683 = vpack.c.bf16 %v2654, %v2653
      %v2684 = vpack.c.bf16 %v2656, %v2655
      %v2685 = vpack.c.bf16 %v2658, %v2657
      %v2686 = vpack.c.bf16 %v2660, %v2659
      %v2687 = vpack.c.bf16 %v2662, %v2661
      %v2688 = vpack.c.bf16 %v2664, %v2663
      %v2689 = vpack.c.bf16 %v2666, %v2665
      %v2690 = vpack.c.bf16 %v2668, %v2667
      %v2691 = vpack.c.bf16 %v2670, %v2669
      %v2692 = vpack.c.bf16 %v2672, %v2671
      %v2693 = vpack.c.bf16 %v2674, %v2673
      %v2694 = vpack.c.bf16 %v2676, %v2675
      %v2695 = vpack.c.bf16 %v2678, %v2677
      %v2696 = vpack.c.bf16 %v2680, %v2679
      %s2697 = scalar_lea.vmem %s1, 14
      %v2698 = vld [vmem:[%s2697] sm:$0x3]
      %v2700 = vsel %vm249, %v2681, 0
      %v2703 = vsel %vm249, %v2682, 0
      %v2706 = vsel %vm249, %v2683, 0
      %v2709 = vsel %vm249, %v2684, 0
      %v2712 = vsel %vm249, %v2685, 0
      %v2715 = vsel %vm249, %v2686, 0
      %v2718 = vsel %vm249, %v2687, 0
      %v2721 = vsel %vm249, %v2688, 0
      %v2724 = vsel %vm249, %v2689, 0
      %v2727 = vsel %vm249, %v2690, 0
      %v2730 = vsel %vm249, %v2691, 0
      %v2733 = vsel %vm249, %v2692, 0
      %v2736 = vsel %vm249, %v2693, 0
      %v2739 = vsel %vm249, %v2694, 0
      %v2742 = vsel %vm249, %v2695, 0
      %v2745 = vsel %vm249, %v2696, 0
      %v2748 = vsel %vm298, %v2698, 0
      %2750 = vmatprep.subr.bf16.mxu0 0
      %2751 = vmatpush1.bf16.msra.mxu0 %v2748
      %2752 = vmatprep.subr.bf16.mxu0 0
      %2753 = vmatpush1.bf16.msra.mxu0 0
      %2754 = vmatprep.subr.bf16.mxu0 0
      %2755 = vmatpush1.bf16.msra.mxu0 0
      %2756 = vmatprep.subr.bf16.mxu0 0
      %2757 = vmatpush1.bf16.msra.mxu0 0
      %2758 = vmatprep.subr.bf16.mxu0 0
      %2759 = vmatpush1.bf16.msra.mxu0 0
      %2760 = vmatprep.subr.bf16.mxu0 0
      %2761 = vmatpush1.bf16.msra.mxu0 0
      %2762 = vmatprep.subr.bf16.mxu0 0
      %2763 = vmatpush1.bf16.msra.mxu0 0
      %2764 = vmatprep.subr.bf16.mxu0 0
      %2765 = vmatpush1.bf16.msra.mxu0 0
      %2766 = vmatprep.subr.bf16.mxu0 0
      %2767 = vmatpush1.bf16.msra.mxu0 0
      %2768 = vmatprep.subr.bf16.mxu0 0
      %2769 = vmatpush1.bf16.msra.mxu0 0
      %2770 = vmatprep.subr.bf16.mxu0 0
      %2771 = vmatpush1.bf16.msra.mxu0 0
      %2772 = vmatprep.subr.bf16.mxu0 0
      %2773 = vmatpush1.bf16.msra.mxu0 0
      %2774 = vmatprep.subr.bf16.mxu0 0
      %2775 = vmatpush1.bf16.msra.mxu0 0
      %2776 = vmatprep.subr.bf16.mxu0 0
      %2777 = vmatpush1.bf16.msra.mxu0 0
      %2778 = vmatprep.subr.bf16.mxu0 0
      %2779 = vmatpush1.bf16.msra.mxu0 0
      %2780 = vmatprep.subr.bf16.mxu0 0
      %2781 = vmatpush1.bf16.msra.mxu0 0
      %2782 = vmatprep.mubr.bf16.mxu0 0
      %2783 = vmatmul.mubr.bf16.gmra.mrb[0].mxu0 %v2700
      %v2784 = vpop.f32.mrb[0].mxu0
      %v2785 = vadd.f32 0.0, %v2784
      %v2786 = vpop.f32.mrb[0].mxu0
      %v2787 = vpop.f32.mrb[0].mxu0
      %v2788 = vadd.f32 0.0, %v2787
      %v2789 = vpop.f32.mrb[0].mxu0
      %2790 = vmatprep.mubr.bf16.mxu0 0
      %2791 = vmatmul.mubr.bf16.gmra.mrb[0].mxu0 %v2703
      %v2792 = vpop.f32.mrb[0].mxu0
      %v2793 = vadd.f32 0.0, %v2792
      %v2794 = vpop.f32.mrb[0].mxu0
      %v2795 = vpop.f32.mrb[0].mxu0
      %v2796 = vadd.f32 0.0, %v2795
      %v2797 = vpop.f32.mrb[0].mxu0
      %2798 = vmatprep.mubr.bf16.mxu0 0
      %2799 = vmatmul.mubr.bf16.gmra.mrb[0].mxu0 %v2706
      %v2800 = vpop.f32.mrb[0].mxu0
      %v2801 = vadd.f32 0.0, %v2800
      %v2802 = vpop.f32.mrb[0].mxu0
      %v2803 = vpop.f32.mrb[0].mxu0
      %v2804 = vadd.f32 0.0, %v2803
      %v2805 = vpop.f32.mrb[0].mxu0
      %2806 = vmatprep.mubr.bf16.mxu0 0
      %2807 = vmatmul.mubr.bf16.gmra.mrb[0].mxu0 %v2709
      %v2808 = vpop.f32.mrb[0].mxu0
      %v2809 = vadd.f32 0.0, %v2808
      %v2810 = vpop.f32.mrb[0].mxu0
      %v2811 = vpop.f32.mrb[0].mxu0
      %v2812 = vadd.f32 0.0, %v2811
      %v2813 = vpop.f32.mrb[0].mxu0
      %2814 = vmatprep.mubr.bf16.mxu0 0
      %2815 = vmatmul.mubr.bf16.gmra.mrb[0].mxu0 %v2712
      %v2816 = vpop.f32.mrb[0].mxu0
      %v2817 = vadd.f32 0.0, %v2816
      %v2818 = vpop.f32.mrb[0].mxu0
      %v2819 = vpop.f32.mrb[0].mxu0
      %v2820 = vadd.f32 0.0, %v2819
      %v2821 = vpop.f32.mrb[0].mxu0
      %2822 = vmatprep.mubr.bf16.mxu0 0
      %2823 = vmatmul.mubr.bf16.gmra.mrb[0].mxu0 %v2715
      %v2824 = vpop.f32.mrb[0].mxu0
      %v2825 = vadd.f32 0.0, %v2824
      %v2826 = vpop.f32.mrb[0].mxu0
      %v2827 = vpop.f32.mrb[0].mxu0
      %v2828 = vadd.f32 0.0, %v2827
      %v2829 = vpop.f32.mrb[0].mxu0
      %2830 = vmatprep.mubr.bf16.mxu0 0
      %2831 = vmatmul.mubr.bf16.gmra.mrb[0].mxu0 %v2718
      %v2832 = vpop.f32.mrb[0].mxu0
      %v2833 = vadd.f32 0.0, %v2832
      %v2834 = vpop.f32.mrb[0].mxu0
      %v2835 = vpop.f32.mrb[0].mxu0
      %v2836 = vadd.f32 0.0, %v2835
      %v2837 = vpop.f32.mrb[0].mxu0
      %2838 = vmatprep.mubr.bf16.mxu0 0
      %2839 = vmatmul.mubr.bf16.gmra.mrb[0].mxu0 %v2721
      %v2840 = vpop.f32.mrb[0].mxu0
      %v2841 = vadd.f32 0.0, %v2840
      %v2842 = vpop.f32.mrb[0].mxu0
      %v2843 = vpop.f32.mrb[0].mxu0
      %v2844 = vadd.f32 0.0, %v2843
      %v2845 = vpop.f32.mrb[0].mxu0
      %2846 = vmatprep.mubr.bf16.mxu0 0
      %2847 = vmatmul.mubr.bf16.gmra.mrb[0].mxu0 %v2724
      %v2848 = vpop.f32.mrb[0].mxu0
      %v2849 = vadd.f32 0.0, %v2848
      %v2850 = vpop.f32.mrb[0].mxu0
      %v2851 = vpop.f32.mrb[0].mxu0
      %v2852 = vadd.f32 0.0, %v2851
      %v2853 = vpop.f32.mrb[0].mxu0
      %2854 = vmatprep.mubr.bf16.mxu0 0
      %2855 = vmatmul.mubr.bf16.gmra.mrb[0].mxu0 %v2727
      %v2856 = vpop.f32.mrb[0].mxu0
      %v2857 = vadd.f32 0.0, %v2856
      %v2858 = vpop.f32.mrb[0].mxu0
      %v2859 = vpop.f32.mrb[0].mxu0
      %v2860 = vadd.f32 0.0, %v2859
      %v2861 = vpop.f32.mrb[0].mxu0
      %2862 = vmatprep.mubr.bf16.mxu0 0
      %2863 = vmatmul.mubr.bf16.gmra.mrb[0].mxu0 %v2730
      %v2864 = vpop.f32.mrb[0].mxu0
      %v2865 = vadd.f32 0.0, %v2864
      %v2866 = vpop.f32.mrb[0].mxu0
      %v2867 = vpop.f32.mrb[0].mxu0
      %v2868 = vadd.f32 0.0, %v2867
      %v2869 = vpop.f32.mrb[0].mxu0
      %2870 = vmatprep.mubr.bf16.mxu0 0
      %2871 = vmatmul.mubr.bf16.gmra.mrb[0].mxu0 %v2733
      %v2872 = vpop.f32.mrb[0].mxu0
      %v2873 = vadd.f32 0.0, %v2872
      %v2874 = vpop.f32.mrb[0].mxu0
      %v2875 = vpop.f32.mrb[0].mxu0
      %v2876 = vadd.f32 0.0, %v2875
      %v2877 = vpop.f32.mrb[0].mxu0
      %2878 = vmatprep.mubr.bf16.mxu0 0
      %2879 = vmatmul.mubr.bf16.gmra.mrb[0].mxu0 %v2736
      %v2880 = vpop.f32.mrb[0].mxu0
      %v2881 = vadd.f32 0.0, %v2880
      %v2882 = vpop.f32.mrb[0].mxu0
      %v2883 = vpop.f32.mrb[0].mxu0
      %v2884 = vadd.f32 0.0, %v2883
      %v2885 = vpop.f32.mrb[0].mxu0
      %2886 = vmatprep.mubr.bf16.mxu0 0
      %2887 = vmatmul.mubr.bf16.gmra.mrb[0].mxu0 %v2739
      %v2888 = vpop.f32.mrb[0].mxu0
      %v2889 = vadd.f32 0.0, %v2888
      %v2890 = vpop.f32.mrb[0].mxu0
      %v2891 = vpop.f32.mrb[0].mxu0
      %v2892 = vadd.f32 0.0, %v2891
      %v2893 = vpop.f32.mrb[0].mxu0
      %2894 = vmatprep.mubr.bf16.mxu0 0
      %2895 = vmatmul.mubr.bf16.gmra.mrb[0].mxu0 %v2742
      %v2896 = vpop.f32.mrb[0].mxu0
      %v2897 = vadd.f32 0.0, %v2896
      %v2898 = vpop.f32.mrb[0].mxu0
      %v2899 = vpop.f32.mrb[0].mxu0
      %v2900 = vadd.f32 0.0, %v2899
      %v2901 = vpop.f32.mrb[0].mxu0
      %2902 = vmatprep.mubr.bf16.mxu0 0
      %2903 = vmatmul.mubr.bf16.gmra.mrb[0].mxu0 %v2745
      %v2904 = vpop.f32.mrb[0].mxu0
      %v2905 = vadd.f32 0.0, %v2904
      %v2906 = vpop.f32.mrb[0].mxu0
      %v2907 = vpop.f32.mrb[0].mxu0
      %v2908 = vadd.f32 0.0, %v2907
      %v2909 = vpop.f32.mrb[0].mxu0
      %2910 = vdwg.mxu0
      %v2911 = vld [vmem:[#allocation2] sm:$0xff]
      %v2912 = vld [vmem:[#allocation2 + $0x8] sm:$0xff]
      %v2913 = vld [vmem:[#allocation2 + $0x10] sm:$0xff]
      %v2914 = vld [vmem:[#allocation2 + $0x18] sm:$0xff]
      %v2915 = vld [vmem:[#allocation2 + $0x20] sm:$0xff]
      %v2916 = vld [vmem:[#allocation2 + $0x28] sm:$0xff]
      %v2917 = vld [vmem:[#allocation2 + $0x30] sm:$0xff]
      %v2918 = vld [vmem:[#allocation2 + $0x38] sm:$0xff]
      %v2919 = vld [vmem:[#allocation2 + $0x40] sm:$0xff]
      %v2920 = vld [vmem:[#allocation2 + $0x48] sm:$0xff]
      %v2921 = vld [vmem:[#allocation2 + $0x50] sm:$0xff]
      %v2922 = vld [vmem:[#allocation2 + $0x58] sm:$0xff]
      %v2923 = vld [vmem:[#allocation2 + $0x60] sm:$0xff]
      %v2924 = vld [vmem:[#allocation2 + $0x68] sm:$0xff]
      %v2925 = vld [vmem:[#allocation2 + $0x70] sm:$0xff]
      %v2926 = vld [vmem:[#allocation2 + $0x78] sm:$0xff]
      %v2927 = vld [vmem:[#allocation2 + $0x80] sm:$0xff]
      %v2928 = vld [vmem:[#allocation2 + $0x88] sm:$0xff]
      %v2929 = vld [vmem:[#allocation2 + $0x90] sm:$0xff]
      %v2930 = vld [vmem:[#allocation2 + $0x98] sm:$0xff]
      %v2931 = vld [vmem:[#allocation2 + $0xa0] sm:$0xff]
      %v2932 = vld [vmem:[#allocation2 + $0xa8] sm:$0xff]
      %v2933 = vld [vmem:[#allocation2 + $0xb0] sm:$0xff]
      %v2934 = vld [vmem:[#allocation2 + $0xb8] sm:$0xff]
      %v2935 = vld [vmem:[#allocation2 + $0xc0] sm:$0xff]
      %v2936 = vld [vmem:[#allocation2 + $0xc8] sm:$0xff]
      %v2937 = vld [vmem:[#allocation2 + $0xd0] sm:$0xff]
      %v2938 = vld [vmem:[#allocation2 + $0xd8] sm:$0xff]
      %v2939 = vld [vmem:[#allocation2 + $0xe0] sm:$0xff]
      %v2940 = vld [vmem:[#allocation2 + $0xe8] sm:$0xff]
      %v2941 = vld [vmem:[#allocation2 + $0xf0] sm:$0xff]
      %v2942 = vld [vmem:[#allocation2 + $0xf8] sm:$0xff]
      %v2943 = vadd.f32 %v2911, %v2785
      %v2944 = vadd.f32 %v2912, %v2788
      %v2945 = vadd.f32 %v2913, %v2793
      %v2946 = vadd.f32 %v2914, %v2796
      %v2947 = vadd.f32 %v2915, %v2801
      %v2948 = vadd.f32 %v2916, %v2804
      %v2949 = vadd.f32 %v2917, %v2809
      %v2950 = vadd.f32 %v2918, %v2812
      %v2951 = vadd.f32 %v2919, %v2817
      %v2952 = vadd.f32 %v2920, %v2820
      %v2953 = vadd.f32 %v2921, %v2825
      %v2954 = vadd.f32 %v2922, %v2828
      %v2955 = vadd.f32 %v2923, %v2833
      %v2956 = vadd.f32 %v2924, %v2836
      %v2957 = vadd.f32 %v2925, %v2841
      %v2958 = vadd.f32 %v2926, %v2844
      %v2959 = vadd.f32 %v2927, %v2849
      %v2960 = vadd.f32 %v2928, %v2852
      %v2961 = vadd.f32 %v2929, %v2857
      %v2962 = vadd.f32 %v2930, %v2860
      %v2963 = vadd.f32 %v2931, %v2865
      %v2964 = vadd.f32 %v2932, %v2868
      %v2965 = vadd.f32 %v2933, %v2873
      %v2966 = vadd.f32 %v2934, %v2876
      %v2967 = vadd.f32 %v2935, %v2881
      %v2968 = vadd.f32 %v2936, %v2884
      %v2969 = vadd.f32 %v2937, %v2889
      %v2970 = vadd.f32 %v2938, %v2892
      %v2971 = vadd.f32 %v2939, %v2897
      %v2972 = vadd.f32 %v2940, %v2900
      %v2973 = vadd.f32 %v2941, %v2905
      %v2974 = vadd.f32 %v2942, %v2908
      %2975 = vst [vmem:[#allocation2] sm:$0xff] %v2943
      %2976 = vst [vmem:[#allocation2 + $0x8] sm:$0xff] %v2944
      %2977 = vst [vmem:[#allocation2 + $0x10] sm:$0xff] %v2945
      %2978 = vst [vmem:[#allocation2 + $0x18] sm:$0xff] %v2946
      %2979 = vst [vmem:[#allocation2 + $0x20] sm:$0xff] %v2947
      %2980 = vst [vmem:[#allocation2 + $0x28] sm:$0xff] %v2948
      %2981 = vst [vmem:[#allocation2 + $0x30] sm:$0xff] %v2949
      %2982 = vst [vmem:[#allocation2 + $0x38] sm:$0xff] %v2950
      %2983 = vst [vmem:[#allocation2 + $0x40] sm:$0xff] %v2951
      %2984 = vst [vmem:[#allocation2 + $0x48] sm:$0xff] %v2952
      %2985 = vst [vmem:[#allocation2 + $0x50] sm:$0xff] %v2953
      %2986 = vst [vmem:[#allocation2 + $0x58] sm:$0xff] %v2954
      %2987 = vst [vmem:[#allocation2 + $0x60] sm:$0xff] %v2955
      %2988 = vst [vmem:[#allocation2 + $0x68] sm:$0xff] %v2956
      %2989 = vst [vmem:[#allocation2 + $0x70] sm:$0xff] %v2957
      %2990 = vst [vmem:[#allocation2 + $0x78] sm:$0xff] %v2958
      %2991 = vst [vmem:[#allocation2 + $0x80] sm:$0xff] %v2959
      %2992 = vst [vmem:[#allocation2 + $0x88] sm:$0xff] %v2960
      %2993 = vst [vmem:[#allocation2 + $0x90] sm:$0xff] %v2961
      %2994 = vst [vmem:[#allocation2 + $0x98] sm:$0xff] %v2962
      %2995 = vst [vmem:[#allocation2 + $0xa0] sm:$0xff] %v2963
      %2996 = vst [vmem:[#allocation2 + $0xa8] sm:$0xff] %v2964
      %2997 = vst [vmem:[#allocation2 + $0xb0] sm:$0xff] %v2965
      %2998 = vst [vmem:[#allocation2 + $0xb8] sm:$0xff] %v2966
      %2999 = vst [vmem:[#allocation2 + $0xc0] sm:$0xff] %v2967
      %3000 = vst [vmem:[#allocation2 + $0xc8] sm:$0xff] %v2968
      %3001 = vst [vmem:[#allocation2 + $0xd0] sm:$0xff] %v2969
      %3002 = vst [vmem:[#allocation2 + $0xd8] sm:$0xff] %v2970
      %3003 = vst [vmem:[#allocation2 + $0xe0] sm:$0xff] %v2971
      %3004 = vst [vmem:[#allocation2 + $0xe8] sm:$0xff] %v2972
      %3005 = vst [vmem:[#allocation2 + $0xf0] sm:$0xff] %v2973
      %3006 = vst [vmem:[#allocation2 + $0xf8] sm:$0xff] %v2974
      %v3007 = vld [vmem:[%s2290 + $0x2] sm:$0xff]
      %v3008 = vld [vmem:[%s2290 + $0xa] sm:$0xff]
      %v3009 = vld [vmem:[%s2290 + $0x1a] sm:$0xff]
      %v3010 = vld [vmem:[%s2290 + $0x22] sm:$0xff]
      %v3011 = vld [vmem:[%s2290 + $0x32] sm:$0xff]
      %v3012 = vld [vmem:[%s2290 + $0x3a] sm:$0xff]
      %v3013 = vld [vmem:[%s2290 + $0x4a] sm:$0xff]
      %v3014 = vld [vmem:[%s2290 + $0x52] sm:$0xff]
      %v3015 = vld [vmem:[%s2290 + $0x62] sm:$0xff]
      %v3016 = vld [vmem:[%s2290 + $0x6a] sm:$0xff]
      %v3017 = vld [vmem:[%s2290 + $0x7a] sm:$0xff]
      %v3018 = vld [vmem:[%s2290 + $0x82] sm:$0xff]
      %v3019 = vld [vmem:[%s2290 + $0x92] sm:$0xff]
      %v3020 = vld [vmem:[%s2290 + $0x9a] sm:$0xff]
      %v3021 = vld [vmem:[%s2290 + $0xaa] sm:$0xff]
      %v3022 = vld [vmem:[%s2290 + $0xb2] sm:$0xff]
      %v3023 = vld [vmem:[%s2290 + $0xc2] sm:$0xff]
      %v3024 = vld [vmem:[%s2290 + $0xca] sm:$0xff]
      %v3025 = vld [vmem:[%s2290 + $0xda] sm:$0xff]
      %v3026 = vld [vmem:[%s2290 + $0xe2] sm:$0xff]
      %v3027 = vld [vmem:[%s2290 + $0xf2] sm:$0xff]
      %v3028 = vld [vmem:[%s2290 + $0xfa] sm:$0xff]
      %v3029 = vld [vmem:[%s2290 + $0x10a] sm:$0xff]
      %v3030 = vld [vmem:[%s2290 + $0x112] sm:$0xff]
      %v3031 = vld [vmem:[%s2290 + $0x122] sm:$0xff]
      %v3032 = vld [vmem:[%s2290 + $0x12a] sm:$0xff]
      %v3033 = vld [vmem:[%s2290 + $0x13a] sm:$0xff]
      %v3034 = vld [vmem:[%s2290 + $0x142] sm:$0xff]
      %v3035 = vld [vmem:[%s2290 + $0x152] sm:$0xff]
      %v3036 = vld [vmem:[%s2290 + $0x15a] sm:$0xff]
      %v3037 = vld [vmem:[%s2290 + $0x16a] sm:$0xff]
      %v3038 = vld [vmem:[%s2290 + $0x172] sm:$0xff]
      %v3039 = vpack.c.bf16 %v3008, %v3007
      %v3040 = vpack.c.bf16 %v3010, %v3009
      %v3041 = vpack.c.bf16 %v3012, %v3011
      %v3042 = vpack.c.bf16 %v3014, %v3013
      %v3043 = vpack.c.bf16 %v3016, %v3015
      %v3044 = vpack.c.bf16 %v3018, %v3017
      %v3045 = vpack.c.bf16 %v3020, %v3019
      %v3046 = vpack.c.bf16 %v3022, %v3021
      %v3047 = vpack.c.bf16 %v3024, %v3023
      %v3048 = vpack.c.bf16 %v3026, %v3025
      %v3049 = vpack.c.bf16 %v3028, %v3027
      %v3050 = vpack.c.bf16 %v3030, %v3029
      %v3051 = vpack.c.bf16 %v3032, %v3031
      %v3052 = vpack.c.bf16 %v3034, %v3033
      %v3053 = vpack.c.bf16 %v3036, %v3035
      %v3054 = vpack.c.bf16 %v3038, %v3037
      %s3055 = scalar_lea.vmem %s1, 16
      %v3056 = vld [vmem:[%s3055] sm:$0x3]
      %v3058 = vsel %vm249, %v3039, 0
      %v3061 = vsel %vm249, %v3040, 0
      %v3064 = vsel %vm249, %v3041, 0
      %v3067 = vsel %vm249, %v3042, 0
      %v3070 = vsel %vm249, %v3043, 0
      %v3073 = vsel %vm249, %v3044, 0
      %v3076 = vsel %vm249, %v3045, 0
      %v3079 = vsel %vm249, %v3046, 0
      %v3082 = vsel %vm249, %v3047, 0
      %v3085 = vsel %vm249, %v3048, 0
      %v3088 = vsel %vm249, %v3049, 0
      %v3091 = vsel %vm249, %v3050, 0
      %v3094 = vsel %vm249, %v3051, 0
      %v3097 = vsel %vm249, %v3052, 0
      %v3100 = vsel %vm249, %v3053, 0
      %v3103 = vsel %vm249, %v3054, 0
      %v3106 = vsel %vm298, %v3056, 0
      %3108 = vmatprep.subr.bf16.mxu0 0
      %3109 = vmatpush1.bf16.msra.mxu0 %v3106
      %3110 = vmatprep.subr.bf16.mxu0 0
      %3111 = vmatpush1.bf16.msra.mxu0 0
      %3112 = vmatprep.subr.bf16.mxu0 0
      %3113 = vmatpush1.bf16.msra.mxu0 0
      %3114 = vmatprep.subr.bf16.mxu0 0
      %3115 = vmatpush1.bf16.msra.mxu0 0
      %3116 = vmatprep.subr.bf16.mxu0 0
      %3117 = vmatpush1.bf16.msra.mxu0 0
      %3118 = vmatprep.subr.bf16.mxu0 0
      %3119 = vmatpush1.bf16.msra.mxu0 0
      %3120 = vmatprep.subr.bf16.mxu0 0
      %3121 = vmatpush1.bf16.msra.mxu0 0
      %3122 = vmatprep.subr.bf16.mxu0 0
      %3123 = vmatpush1.bf16.msra.mxu0 0
      %3124 = vmatprep.subr.bf16.mxu0 0
      %3125 = vmatpush1.bf16.msra.mxu0 0
      %3126 = vmatprep.subr.bf16.mxu0 0
      %3127 = vmatpush1.bf16.msra.mxu0 0
      %3128 = vmatprep.subr.bf16.mxu0 0
      %3129 = vmatpush1.bf16.msra.mxu0 0
      %3130 = vmatprep.subr.bf16.mxu0 0
      %3131 = vmatpush1.bf16.msra.mxu0 0
      %3132 = vmatprep.subr.bf16.mxu0 0
      %3133 = vmatpush1.bf16.msra.mxu0 0
      %3134 = vmatprep.subr.bf16.mxu0 0
      %3135 = vmatpush1.bf16.msra.mxu0 0
      %3136 = vmatprep.subr.bf16.mxu0 0
      %3137 = vmatpush1.bf16.msra.mxu0 0
      %3138 = vmatprep.subr.bf16.mxu0 0
      %3139 = vmatpush1.bf16.msra.mxu0 0
      %3140 = vmatprep.mubr.bf16.mxu0 0
      %3141 = vmatmul.mubr.bf16.gmra.mrb[0].mxu0 %v3058
      %v3142 = vpop.f32.mrb[0].mxu0
      %v3143 = vadd.f32 0.0, %v3142
      %v3144 = vpop.f32.mrb[0].mxu0
      %v3145 = vpop.f32.mrb[0].mxu0
      %v3146 = vadd.f32 0.0, %v3145
      %v3147 = vpop.f32.mrb[0].mxu0
      %3148 = vmatprep.mubr.bf16.mxu0 0
      %3149 = vmatmul.mubr.bf16.gmra.mrb[0].mxu0 %v3061
      %v3150 = vpop.f32.mrb[0].mxu0
      %v3151 = vadd.f32 0.0, %v3150
      %v3152 = vpop.f32.mrb[0].mxu0
      %v3153 = vpop.f32.mrb[0].mxu0
      %v3154 = vadd.f32 0.0, %v3153
      %v3155 = vpop.f32.mrb[0].mxu0
      %3156 = vmatprep.mubr.bf16.mxu0 0
      %3157 = vmatmul.mubr.bf16.gmra.mrb[0].mxu0 %v3064
      %v3158 = vpop.f32.mrb[0].mxu0
      %v3159 = vadd.f32 0.0, %v3158
      %v3160 = vpop.f32.mrb[0].mxu0
      %v3161 = vpop.f32.mrb[0].mxu0
      %v3162 = vadd.f32 0.0, %v3161
      %v3163 = vpop.f32.mrb[0].mxu0
      %3164 = vmatprep.mubr.bf16.mxu0 0
      %3165 = vmatmul.mubr.bf16.gmra.mrb[0].mxu0 %v3067
      %v3166 = vpop.f32.mrb[0].mxu0
      %v3167 = vadd.f32 0.0, %v3166
      %v3168 = vpop.f32.mrb[0].mxu0
      %v3169 = vpop.f32.mrb[0].mxu0
      %v3170 = vadd.f32 0.0, %v3169
      %v3171 = vpop.f32.mrb[0].mxu0
      %3172 = vmatprep.mubr.bf16.mxu0 0
      %3173 = vmatmul.mubr.bf16.gmra.mrb[0].mxu0 %v3070
      %v3174 = vpop.f32.mrb[0].mxu0
      %v3175 = vadd.f32 0.0, %v3174
      %v3176 = vpop.f32.mrb[0].mxu0
      %v3177 = vpop.f32.mrb[0].mxu0
      %v3178 = vadd.f32 0.0, %v3177
      %v3179 = vpop.f32.mrb[0].mxu0
      %3180 = vmatprep.mubr.bf16.mxu0 0
      %3181 = vmatmul.mubr.bf16.gmra.mrb[0].mxu0 %v3073
      %v3182 = vpop.f32.mrb[0].mxu0
      %v3183 = vadd.f32 0.0, %v3182
      %v3184 = vpop.f32.mrb[0].mxu0
      %v3185 = vpop.f32.mrb[0].mxu0
      %v3186 = vadd.f32 0.0, %v3185
      %v3187 = vpop.f32.mrb[0].mxu0
      %3188 = vmatprep.mubr.bf16.mxu0 0
      %3189 = vmatmul.mubr.bf16.gmra.mrb[0].mxu0 %v3076
      %v3190 = vpop.f32.mrb[0].mxu0
      %v3191 = vadd.f32 0.0, %v3190
      %v3192 = vpop.f32.mrb[0].mxu0
      %v3193 = vpop.f32.mrb[0].mxu0
      %v3194 = vadd.f32 0.0, %v3193
      %v3195 = vpop.f32.mrb[0].mxu0
      %3196 = vmatprep.mubr.bf16.mxu0 0
      %3197 = vmatmul.mubr.bf16.gmra.mrb[0].mxu0 %v3079
      %v3198 = vpop.f32.mrb[0].mxu0
      %v3199 = vadd.f32 0.0, %v3198
      %v3200 = vpop.f32.mrb[0].mxu0
      %v3201 = vpop.f32.mrb[0].mxu0
      %v3202 = vadd.f32 0.0, %v3201
      %v3203 = vpop.f32.mrb[0].mxu0
      %3204 = vmatprep.mubr.bf16.mxu0 0
      %3205 = vmatmul.mubr.bf16.gmra.mrb[0].mxu0 %v3082
      %v3206 = vpop.f32.mrb[0].mxu0
      %v3207 = vadd.f32 0.0, %v3206
      %v3208 = vpop.f32.mrb[0].mxu0
      %v3209 = vpop.f32.mrb[0].mxu0
      %v3210 = vadd.f32 0.0, %v3209
      %v3211 = vpop.f32.mrb[0].mxu0
      %3212 = vmatprep.mubr.bf16.mxu0 0
      %3213 = vmatmul.mubr.bf16.gmra.mrb[0].mxu0 %v3085
      %v3214 = vpop.f32.mrb[0].mxu0
      %v3215 = vadd.f32 0.0, %v3214
      %v3216 = vpop.f32.mrb[0].mxu0
      %v3217 = vpop.f32.mrb[0].mxu0
      %v3218 = vadd.f32 0.0, %v3217
      %v3219 = vpop.f32.mrb[0].mxu0
      %3220 = vmatprep.mubr.bf16.mxu0 0
      %3221 = vmatmul.mubr.bf16.gmra.mrb[0].mxu0 %v3088
      %v3222 = vpop.f32.mrb[0].mxu0
      %v3223 = vadd.f32 0.0, %v3222
      %v3224 = vpop.f32.mrb[0].mxu0
      %v3225 = vpop.f32.mrb[0].mxu0
      %v3226 = vadd.f32 0.0, %v3225
      %v3227 = vpop.f32.mrb[0].mxu0
      %3228 = vmatprep.mubr.bf16.mxu0 0
      %3229 = vmatmul.mubr.bf16.gmra.mrb[0].mxu0 %v3091
      %v3230 = vpop.f32.mrb[0].mxu0
      %v3231 = vadd.f32 0.0, %v3230
      %v3232 = vpop.f32.mrb[0].mxu0
      %v3233 = vpop.f32.mrb[0].mxu0
      %v3234 = vadd.f32 0.0, %v3233
      %v3235 = vpop.f32.mrb[0].mxu0
      %3236 = vmatprep.mubr.bf16.mxu0 0
      %3237 = vmatmul.mubr.bf16.gmra.mrb[0].mxu0 %v3094
      %v3238 = vpop.f32.mrb[0].mxu0
      %v3239 = vadd.f32 0.0, %v3238
      %v3240 = vpop.f32.mrb[0].mxu0
      %v3241 = vpop.f32.mrb[0].mxu0
      %v3242 = vadd.f32 0.0, %v3241
      %v3243 = vpop.f32.mrb[0].mxu0
      %3244 = vmatprep.mubr.bf16.mxu0 0
      %3245 = vmatmul.mubr.bf16.gmra.mrb[0].mxu0 %v3097
      %v3246 = vpop.f32.mrb[0].mxu0
      %v3247 = vadd.f32 0.0, %v3246
      %v3248 = vpop.f32.mrb[0].mxu0
      %v3249 = vpop.f32.mrb[0].mxu0
      %v3250 = vadd.f32 0.0, %v3249
      %v3251 = vpop.f32.mrb[0].mxu0
      %3252 = vmatprep.mubr.bf16.mxu0 0
      %3253 = vmatmul.mubr.bf16.gmra.mrb[0].mxu0 %v3100
      %v3254 = vpop.f32.mrb[0].mxu0
      %v3255 = vadd.f32 0.0, %v3254
      %v3256 = vpop.f32.mrb[0].mxu0
      %v3257 = vpop.f32.mrb[0].mxu0
      %v3258 = vadd.f32 0.0, %v3257
      %v3259 = vpop.f32.mrb[0].mxu0
      %3260 = vmatprep.mubr.bf16.mxu0 0
      %3261 = vmatmul.mubr.bf16.gmra.mrb[0].mxu0 %v3103
      %v3262 = vpop.f32.mrb[0].mxu0
      %v3263 = vadd.f32 0.0, %v3262
      %v3264 = vpop.f32.mrb[0].mxu0
      %v3265 = vpop.f32.mrb[0].mxu0
      %v3266 = vadd.f32 0.0, %v3265
      %v3267 = vpop.f32.mrb[0].mxu0
      %3268 = vdwg.mxu0
      %v3269 = vld [vmem:[#allocation2] sm:$0xff]
      %v3270 = vld [vmem:[#allocation2 + $0x8] sm:$0xff]
      %v3271 = vld [vmem:[#allocation2 + $0x10] sm:$0xff]
      %v3272 = vld [vmem:[#allocation2 + $0x18] sm:$0xff]
      %v3273 = vld [vmem:[#allocation2 + $0x20] sm:$0xff]
      %v3274 = vld [vmem:[#allocation2 + $0x28] sm:$0xff]
      %v3275 = vld [vmem:[#allocation2 + $0x30] sm:$0xff]
      %v3276 = vld [vmem:[#allocation2 + $0x38] sm:$0xff]
      %v3277 = vld [vmem:[#allocation2 + $0x40] sm:$0xff]
      %v3278 = vld [vmem:[#allocation2 + $0x48] sm:$0xff]
      %v3279 = vld [vmem:[#allocation2 + $0x50] sm:$0xff]
      %v3280 = vld [vmem:[#allocation2 + $0x58] sm:$0xff]
      %v3281 = vld [vmem:[#allocation2 + $0x60] sm:$0xff]
      %v3282 = vld [vmem:[#allocation2 + $0x68] sm:$0xff]
      %v3283 = vld [vmem:[#allocation2 + $0x70] sm:$0xff]
      %v3284 = vld [vmem:[#allocation2 + $0x78] sm:$0xff]
      %v3285 = vld [vmem:[#allocation2 + $0x80] sm:$0xff]
      %v3286 = vld [vmem:[#allocation2 + $0x88] sm:$0xff]
      %v3287 = vld [vmem:[#allocation2 + $0x90] sm:$0xff]
      %v3288 = vld [vmem:[#allocation2 + $0x98] sm:$0xff]
      %v3289 = vld [vmem:[#allocation2 + $0xa0] sm:$0xff]
      %v3290 = vld [vmem:[#allocation2 + $0xa8] sm:$0xff]
      %v3291 = vld [vmem:[#allocation2 + $0xb0] sm:$0xff]
      %v3292 = vld [vmem:[#allocation2 + $0xb8] sm:$0xff]
      %v3293 = vld [vmem:[#allocation2 + $0xc0] sm:$0xff]
      %v3294 = vld [vmem:[#allocation2 + $0xc8] sm:$0xff]
      %v3295 = vld [vmem:[#allocation2 + $0xd0] sm:$0xff]
      %v3296 = vld [vmem:[#allocation2 + $0xd8] sm:$0xff]
      %v3297 = vld [vmem:[#allocation2 + $0xe0] sm:$0xff]
      %v3298 = vld [vmem:[#allocation2 + $0xe8] sm:$0xff]
      %v3299 = vld [vmem:[#allocation2 + $0xf0] sm:$0xff]
      %v3300 = vld [vmem:[#allocation2 + $0xf8] sm:$0xff]
      %v3301 = vadd.f32 %v3269, %v3143
      %v3302 = vadd.f32 %v3270, %v3146
      %v3303 = vadd.f32 %v3271, %v3151
      %v3304 = vadd.f32 %v3272, %v3154
      %v3305 = vadd.f32 %v3273, %v3159
      %v3306 = vadd.f32 %v3274, %v3162
      %v3307 = vadd.f32 %v3275, %v3167
      %v3308 = vadd.f32 %v3276, %v3170
      %v3309 = vadd.f32 %v3277, %v3175
      %v3310 = vadd.f32 %v3278, %v3178
      %v3311 = vadd.f32 %v3279, %v3183
      %v3312 = vadd.f32 %v3280, %v3186
      %v3313 = vadd.f32 %v3281, %v3191
      %v3314 = vadd.f32 %v3282, %v3194
      %v3315 = vadd.f32 %v3283, %v3199
      %v3316 = vadd.f32 %v3284, %v3202
      %v3317 = vadd.f32 %v3285, %v3207
      %v3318 = vadd.f32 %v3286, %v3210
      %v3319 = vadd.f32 %v3287, %v3215
      %v3320 = vadd.f32 %v3288, %v3218
      %v3321 = vadd.f32 %v3289, %v3223
      %v3322 = vadd.f32 %v3290, %v3226
      %v3323 = vadd.f32 %v3291, %v3231
      %v3324 = vadd.f32 %v3292, %v3234
      %v3325 = vadd.f32 %v3293, %v3239
      %v3326 = vadd.f32 %v3294, %v3242
      %v3327 = vadd.f32 %v3295, %v3247
      %v3328 = vadd.f32 %v3296, %v3250
      %v3329 = vadd.f32 %v3297, %v3255
      %v3330 = vadd.f32 %v3298, %v3258
      %v3331 = vadd.f32 %v3299, %v3263
      %v3332 = vadd.f32 %v3300, %v3266
      %3333 = vst [vmem:[#allocation2] sm:$0xff] %v3301
      %3334 = vst [vmem:[#allocation2 + $0x8] sm:$0xff] %v3302
      %3335 = vst [vmem:[#allocation2 + $0x10] sm:$0xff] %v3303
      %3336 = vst [vmem:[#allocation2 + $0x18] sm:$0xff] %v3304
      %3337 = vst [vmem:[#allocation2 + $0x20] sm:$0xff] %v3305
      %3338 = vst [vmem:[#allocation2 + $0x28] sm:$0xff] %v3306
      %3339 = vst [vmem:[#allocation2 + $0x30] sm:$0xff] %v3307
      %3340 = vst [vmem:[#allocation2 + $0x38] sm:$0xff] %v3308
      %3341 = vst [vmem:[#allocation2 + $0x40] sm:$0xff] %v3309
      %3342 = vst [vmem:[#allocation2 + $0x48] sm:$0xff] %v3310
      %3343 = vst [vmem:[#allocation2 + $0x50] sm:$0xff] %v3311
      %3344 = vst [vmem:[#allocation2 + $0x58] sm:$0xff] %v3312
      %3345 = vst [vmem:[#allocation2 + $0x60] sm:$0xff] %v3313
      %3346 = vst [vmem:[#allocation2 + $0x68] sm:$0xff] %v3314
      %3347 = vst [vmem:[#allocation2 + $0x70] sm:$0xff] %v3315
      %3348 = vst [vmem:[#allocation2 + $0x78] sm:$0xff] %v3316
      %3349 = vst [vmem:[#allocation2 + $0x80] sm:$0xff] %v3317
      %3350 = vst [vmem:[#allocation2 + $0x88] sm:$0xff] %v3318
      %3351 = vst [vmem:[#allocation2 + $0x90] sm:$0xff] %v3319
      %3352 = vst [vmem:[#allocation2 + $0x98] sm:$0xff] %v3320
      %3353 = vst [vmem:[#allocation2 + $0xa0] sm:$0xff] %v3321
      %3354 = vst [vmem:[#allocation2 + $0xa8] sm:$0xff] %v3322
      %3355 = vst [vmem:[#allocation2 + $0xb0] sm:$0xff] %v3323
      %3356 = vst [vmem:[#allocation2 + $0xb8] sm:$0xff] %v3324
      %3357 = vst [vmem:[#allocation2 + $0xc0] sm:$0xff] %v3325
      %3358 = vst [vmem:[#allocation2 + $0xc8] sm:$0xff] %v3326
      %3359 = vst [vmem:[#allocation2 + $0xd0] sm:$0xff] %v3327
      %3360 = vst [vmem:[#allocation2 + $0xd8] sm:$0xff] %v3328
      %3361 = vst [vmem:[#allocation2 + $0xe0] sm:$0xff] %v3329
      %3362 = vst [vmem:[#allocation2 + $0xe8] sm:$0xff] %v3330
      %3363 = vst [vmem:[#allocation2 + $0xf0] sm:$0xff] %v3331
      %3364 = vst [vmem:[#allocation2 + $0xf8] sm:$0xff] %v3332
      %v3365 = vld [vmem:[#allocation2] sm:$0xff]
      %v3366 = vld [vmem:[#allocation2 + $0x8] sm:$0xff]
      %v3367 = vld [vmem:[#allocation2 + $0x10] sm:$0xff]
      %v3368 = vld [vmem:[#allocation2 + $0x18] sm:$0xff]
      %v3369 = vld [vmem:[#allocation2 + $0x20] sm:$0xff]
      %v3370 = vld [vmem:[#allocation2 + $0x28] sm:$0xff]
      %v3371 = vld [vmem:[#allocation2 + $0x30] sm:$0xff]
      %v3372 = vld [vmem:[#allocation2 + $0x38] sm:$0xff]
      %v3373 = vld [vmem:[#allocation2 + $0x40] sm:$0xff]
      %v3374 = vld [vmem:[#allocation2 + $0x48] sm:$0xff]
      %v3375 = vld [vmem:[#allocation2 + $0x50] sm:$0xff]
      %v3376 = vld [vmem:[#allocation2 + $0x58] sm:$0xff]
      %v3377 = vld [vmem:[#allocation2 + $0x60] sm:$0xff]
      %v3378 = vld [vmem:[#allocation2 + $0x68] sm:$0xff]
      %v3379 = vld [vmem:[#allocation2 + $0x70] sm:$0xff]
      %v3380 = vld [vmem:[#allocation2 + $0x78] sm:$0xff]
      %v3381 = vld [vmem:[#allocation2 + $0x80] sm:$0xff]
      %v3382 = vld [vmem:[#allocation2 + $0x88] sm:$0xff]
      %v3383 = vld [vmem:[#allocation2 + $0x90] sm:$0xff]
      %v3384 = vld [vmem:[#allocation2 + $0x98] sm:$0xff]
      %v3385 = vld [vmem:[#allocation2 + $0xa0] sm:$0xff]
      %v3386 = vld [vmem:[#allocation2 + $0xa8] sm:$0xff]
      %v3387 = vld [vmem:[#allocation2 + $0xb0] sm:$0xff]
      %v3388 = vld [vmem:[#allocation2 + $0xb8] sm:$0xff]
      %v3389 = vld [vmem:[#allocation2 + $0xc0] sm:$0xff]
      %v3390 = vld [vmem:[#allocation2 + $0xc8] sm:$0xff]
      %v3391 = vld [vmem:[#allocation2 + $0xd0] sm:$0xff]
      %v3392 = vld [vmem:[#allocation2 + $0xd8] sm:$0xff]
      %v3393 = vld [vmem:[#allocation2 + $0xe0] sm:$0xff]
      %v3394 = vld [vmem:[#allocation2 + $0xe8] sm:$0xff]
      %v3395 = vld [vmem:[#allocation2 + $0xf0] sm:$0xff]
      %v3396 = vld [vmem:[#allocation2 + $0xf8] sm:$0xff]
      %v3397 = vld [vmem:[%s2] sm:$0x1]
      %v3399 = vlaneseq
      %v3400 = vshrl.u32 %v3399, 7
      %v3401 = vsub.s32 0, %v3400
      %v3402 = vrot.slane %v3397, %v3401
      %v3404 = vadd.f32 %v3365, %v3402
      %v3405 = vadd.f32 %v3366, %v3402
      %v3406 = vadd.f32 %v3367, %v3402
      %v3407 = vadd.f32 %v3368, %v3402
      %v3408 = vadd.f32 %v3369, %v3402
      %v3409 = vadd.f32 %v3370, %v3402
      %v3410 = vadd.f32 %v3371, %v3402
      %v3411 = vadd.f32 %v3372, %v3402
      %v3412 = vadd.f32 %v3373, %v3402
      %v3413 = vadd.f32 %v3374, %v3402
      %v3414 = vadd.f32 %v3375, %v3402
      %v3415 = vadd.f32 %v3376, %v3402
      %v3416 = vadd.f32 %v3377, %v3402
      %v3417 = vadd.f32 %v3378, %v3402
      %v3418 = vadd.f32 %v3379, %v3402
      %v3419 = vadd.f32 %v3380, %v3402
      %v3420 = vadd.f32 %v3381, %v3402
      %v3421 = vadd.f32 %v3382, %v3402
      %v3422 = vadd.f32 %v3383, %v3402
      %v3423 = vadd.f32 %v3384, %v3402
      %v3424 = vadd.f32 %v3385, %v3402
      %v3425 = vadd.f32 %v3386, %v3402
      %v3426 = vadd.f32 %v3387, %v3402
      %v3427 = vadd.f32 %v3388, %v3402
      %v3428 = vadd.f32 %v3389, %v3402
      %v3429 = vadd.f32 %v3390, %v3402
      %v3430 = vadd.f32 %v3391, %v3402
      %v3431 = vadd.f32 %v3392, %v3402
      %v3432 = vadd.f32 %v3393, %v3402
      %v3433 = vadd.f32 %v3394, %v3402
      %v3434 = vadd.f32 %v3395, %v3402
      %v3435 = vadd.f32 %v3396, %v3402
      %v3436 = vmul.f32 %v3404, 0.2
      %v3437 = vmul.f32 %v3405, 0.2
      %v3438 = vmul.f32 %v3406, 0.2
      %v3439 = vmul.f32 %v3407, 0.2
      %v3440 = vmul.f32 %v3408, 0.2
      %v3441 = vmul.f32 %v3409, 0.2
      %v3442 = vmul.f32 %v3410, 0.2
      %v3443 = vmul.f32 %v3411, 0.2
      %v3444 = vmul.f32 %v3412, 0.2
      %v3445 = vmul.f32 %v3413, 0.2
      %v3446 = vmul.f32 %v3414, 0.2
      %v3447 = vmul.f32 %v3415, 0.2
      %v3448 = vmul.f32 %v3416, 0.2
      %v3449 = vmul.f32 %v3417, 0.2
      %v3450 = vmul.f32 %v3418, 0.2
      %v3451 = vmul.f32 %v3419, 0.2
      %v3452 = vmul.f32 %v3420, 0.2
      %v3453 = vmul.f32 %v3421, 0.2
      %v3454 = vmul.f32 %v3422, 0.2
      %v3455 = vmul.f32 %v3423, 0.2
      %v3456 = vmul.f32 %v3424, 0.2
      %v3457 = vmul.f32 %v3425, 0.2
      %v3458 = vmul.f32 %v3426, 0.2
      %v3459 = vmul.f32 %v3427, 0.2
      %v3460 = vmul.f32 %v3428, 0.2
      %v3461 = vmul.f32 %v3429, 0.2
      %v3462 = vmul.f32 %v3430, 0.2
      %v3463 = vmul.f32 %v3431, 0.2
      %v3464 = vmul.f32 %v3432, 0.2
      %v3465 = vmul.f32 %v3433, 0.2
      %v3466 = vmul.f32 %v3434, 0.2
      %v3467 = vmul.f32 %v3435, 0.2
      %v3468 = vmax.f32 %v3404, %v3436
      %v3469 = vmax.f32 %v3405, %v3437
      %v3470 = vmax.f32 %v3406, %v3438
      %v3471 = vmax.f32 %v3407, %v3439
      %v3472 = vmax.f32 %v3408, %v3440
      %v3473 = vmax.f32 %v3409, %v3441
      %v3474 = vmax.f32 %v3410, %v3442
      %v3475 = vmax.f32 %v3411, %v3443
      %v3476 = vmax.f32 %v3412, %v3444
      %v3477 = vmax.f32 %v3413, %v3445
      %v3478 = vmax.f32 %v3414, %v3446
      %v3479 = vmax.f32 %v3415, %v3447
      %v3480 = vmax.f32 %v3416, %v3448
      %v3481 = vmax.f32 %v3417, %v3449
      %v3482 = vmax.f32 %v3418, %v3450
      %v3483 = vmax.f32 %v3419, %v3451
      %v3484 = vmax.f32 %v3420, %v3452
      %v3485 = vmax.f32 %v3421, %v3453
      %v3486 = vmax.f32 %v3422, %v3454
      %v3487 = vmax.f32 %v3423, %v3455
      %v3488 = vmax.f32 %v3424, %v3456
      %v3489 = vmax.f32 %v3425, %v3457
      %v3490 = vmax.f32 %v3426, %v3458
      %v3491 = vmax.f32 %v3427, %v3459
      %v3492 = vmax.f32 %v3428, %v3460
      %v3493 = vmax.f32 %v3429, %v3461
      %v3494 = vmax.f32 %v3430, %v3462
      %v3495 = vmax.f32 %v3431, %v3463
      %v3496 = vmax.f32 %v3432, %v3464
      %v3497 = vmax.f32 %v3433, %v3465
      %v3498 = vmax.f32 %v3434, %v3466
      %v3499 = vmax.f32 %v3435, %v3467
      %vm3500 = vcmask 64512
      %3501 = vst.msk [vmem:[%s194] sm:$0xff] %vm3500, %v3468
      %3502 = vst.msk [vmem:[%s194 + $0x8] sm:$0xff] %vm3500, %v3469
      %3503 = vst.msk [vmem:[%s194 + $0x10] sm:$0xff] %vm3500, %v3470
      %3504 = vst.msk [vmem:[%s194 + $0x18] sm:$0xff] %vm3500, %v3471
      %3505 = vst.msk [vmem:[%s194 + $0x20] sm:$0xff] %vm3500, %v3472
      %3506 = vst.msk [vmem:[%s194 + $0x28] sm:$0xff] %vm3500, %v3473
      %3507 = vst.msk [vmem:[%s194 + $0x30] sm:$0xff] %vm3500, %v3474
      %3508 = vst.msk [vmem:[%s194 + $0x38] sm:$0xff] %vm3500, %v3475
      %3509 = vst.msk [vmem:[%s194 + $0x40] sm:$0xff] %vm3500, %v3476
      %3510 = vst.msk [vmem:[%s194 + $0x48] sm:$0xff] %vm3500, %v3477
      %3511 = vst.msk [vmem:[%s194 + $0x50] sm:$0xff] %vm3500, %v3478
      %3512 = vst.msk [vmem:[%s194 + $0x58] sm:$0xff] %vm3500, %v3479
      %3513 = vst.msk [vmem:[%s194 + $0x60] sm:$0xff] %vm3500, %v3480
      %3514 = vst.msk [vmem:[%s194 + $0x68] sm:$0xff] %vm3500, %v3481
      %3515 = vst.msk [vmem:[%s194 + $0x70] sm:$0xff] %vm3500, %v3482
      %3516 = vst.msk [vmem:[%s194 + $0x78] sm:$0xff] %vm3500, %v3483
      %3517 = vst.msk [vmem:[%s194 + $0x80] sm:$0xff] %vm3500, %v3484
      %3518 = vst.msk [vmem:[%s194 + $0x88] sm:$0xff] %vm3500, %v3485
      %3519 = vst.msk [vmem:[%s194 + $0x90] sm:$0xff] %vm3500, %v3486
      %3520 = vst.msk [vmem:[%s194 + $0x98] sm:$0xff] %vm3500, %v3487
      %3521 = vst.msk [vmem:[%s194 + $0xa0] sm:$0xff] %vm3500, %v3488
      %3522 = vst.msk [vmem:[%s194 + $0xa8] sm:$0xff] %vm3500, %v3489
      %3523 = vst.msk [vmem:[%s194 + $0xb0] sm:$0xff] %vm3500, %v3490
      %3524 = vst.msk [vmem:[%s194 + $0xb8] sm:$0xff] %vm3500, %v3491
      %3525 = vst.msk [vmem:[%s194 + $0xc0] sm:$0xff] %vm3500, %v3492
      %3526 = vst.msk [vmem:[%s194 + $0xc8] sm:$0xff] %vm3500, %v3493
      %3527 = vst.msk [vmem:[%s194 + $0xd0] sm:$0xff] %vm3500, %v3494
      %3528 = vst.msk [vmem:[%s194 + $0xd8] sm:$0xff] %vm3500, %v3495
      %3529 = vst.msk [vmem:[%s194 + $0xe0] sm:$0xff] %vm3500, %v3496
      %3530 = vst.msk [vmem:[%s194 + $0xe8] sm:$0xff] %vm3500, %v3497
      %3531 = vst.msk [vmem:[%s194 + $0xf0] sm:$0xff] %vm3500, %v3498
      %3532 = vst.msk [vmem:[%s194 + $0xf8] sm:$0xff] %vm3500, %v3499
      %s3533 = smul.u32 16, %s19
      %p3534 = scmp.lt.s32.totalorder %s18, 1
      %s3535 = scalar_select %p3534, %s18, 1
      %p3536 = scmp.lt.s32.totalorder %s3533, 15
      %s3537 = scalar_select %p3536, %s3533, 15
      %s3538 = smul.addr %s3537, 2
      %s3539 = smul.addr %s3535, 32
      %s3540 = sadd.s32 %s3538, %s3539
      %s3541 = smul.addr %s3540, 8
      %s3542 = scalar_lea.vmem %s3, %s3541
      // Predicated region
      $region33: #{tpu_custom_call.1} parent=31 // pred_check
        %p3543 = pneg %p114
      $region34: #{tpu_custom_call.1} parent=31 // pred_check_branch
        %3545 = sbr.rel (%p3543) target = $region36
      $region35: #{tpu_custom_call.1} parent=31 // pred_region
        %s3546 = smul.u32 16, %s19
      $region36: #{tpu_custom_call.1} parent=31 // pred_fallthru
        _
    $region32: #{tpu_custom_call.1} parent=5 // pred_fallthru
      _
    %p3547 = scmp.le.s32.totalorder 2, %s9
    // Predicated region
    $region37: #{tpu_custom_call.1} parent=5 // pred_check
      %p3548 = pneg %p3547
    $region38: #{tpu_custom_call.1} parent=5 // pred_check_branch
      %3550 = sbr.rel (%p3548) target = $region40
    $region39: #{tpu_custom_call.1} parent=5 // pred_region
      %s3551 = ssub.s32 %s9, 2
      // Predicated region
      $region41: #{tpu_custom_call.1} parent=39 // pred_check
        %p3552 = pneg %p120
      $region42: #{tpu_custom_call.1} parent=39 // pred_check_branch
        %3554 = sbr.rel (%p3552) target = $region44
      $region43: #{tpu_custom_call.1} parent=39 // pred_region
        %s3555 = smul.u32 16, %s21
        %p3556 = scmp.lt.s32.totalorder %s20, 1
        %s3557 = scalar_select %p3556, %s20, 1
        %p3558 = scmp.lt.s32.totalorder %s3555, 15
        %s3559 = scalar_select %p3558, %s3555, 15
        %s3560 = smul.addr %s3559, 2
        %s3561 = smul.addr %s3557, 32
        %s3562 = sadd.s32 %s3560, %s3561
        %s3563 = smul.addr %s3562, 8
        %s3564 = scalar_lea.vmem %s3, %s3563
      $region44: #{tpu_custom_call.1} parent=39 // pred_fallthru
        _
    $region40: #{tpu_custom_call.1} parent=5 // pred_fallthru
      _
  $region6: #{tpu_custom_call.1} parent=0 // loop_footer
    %s13 = sadd.s32 1, %s9
  $region7: #{tpu_custom_call.1} parent=0 // loop_footer_branch
    %8 = sbr.rel target = $region3
  $region8: #{tpu_custom_call.1} parent=0 // loop_exit
    _

// kernel: tpu_custom_call.1
$region0: #{tpu_custom_call.1}
  #allocation0 [shape = 'u32[]', space=smem, size = 0x4, offset = 0x4, fixed_abs, tag = 'smem constant byte address 0x4 - core index']
  #allocation1 [shape = 'u32[144,128]{1,0:T(1,128)}', space=vmem, size = 0x12000, scoped, tag = 'internal scratch']
  #allocation2 [shape = 'f32[256,128]{1,0:T(8,128)}', space=vmem, size = 0x20000, scoped, tag = 'scratch operand']
  %s0 = inlined_call_operand.vmem [shape: f32[2,18,18,4], index: 0, kind: input, shape index: {}]
  %s1 = inlined_call_operand.vmem [shape: bf16[9,4,128], index: 1, kind: input, shape index: {}]
  %s2 = inlined_call_operand.vmem [shape: f32[1,128], index: 2, kind: input, shape index: {}]
  %s3 = inlined_call_operand.vmem [shape: f32[2,16,16,8], index: 3, kind: output, shape index: {}]
  %s4 = sld [smem:[#allocation0]]
  $region45: #{tpu_custom_call.1} parent=0
    _
  %s6 = ssub.s32 1, %s4
  %s7 = scalar_select 0, %s6, %s4
  loop: start=0, step=1, limit=4
  $region2: #{tpu_custom_call.1} parent=0 // loop_pre_header
    _
  $region3: #{tpu_custom_call.1} parent=0 // loop_header
    %s9 = sphi 0, %s13
    %p10 = scmp.ge.s32.totalorder %s9, 4
    %s16 = sphi 0, %s28
    %s17 = sphi 0, %s24
    %s18 = sphi 0, %s16
    %s19 = sphi 0, %s17
    %s20 = sphi 0, %s18
    %s21 = sphi 0, %s19
    %s31 = sphi 0, %s33
    %s34 = sphi 0, %s31
    %s35 = sphi 0, %s34
    %s51 = sphi 0, %s35
    %s55 = sphi 0, %s55
    %s57 = sphi 0, %s55
    %s58 = sphi 0, %s57
    %s72 = sphi 0, %s58
    %s76 = sphi 0, %s76
    %s78 = sphi 0, %s76
    %s79 = sphi 0, %s78
    %s93 = sphi 0, %s79
    %s101 = sphi 0, %s103
    %s104 = sphi 0, %s101
    %s105 = sphi 0, %s104
    %s121 = sphi 0, %s105
  $region4: #{tpu_custom_call.1} parent=0 // loop_header_branch
    %12 = sbr.rel (%p10) target = $region8
  $region5: #{tpu_custom_call.1} parent=0 // loop_body
    %s14 = ssub.s32 %s9, 1
    %s15 = ssub.s32 %s9, 2
    %s22 = sadd.s32 1, %s17
    %p23 = scmp.ge.s32.totalorder %s22, 1
    %s24 = scalar_select %p23, 0, %s22
    %s25 = sadd.s32 1, %s16
    %s26 = scalar_select %p23, %s25, %s16
    %p27 = scmp.ge.s32.totalorder %s26, 2
    %s28 = scalar_select %p27, 0, %s26
    %s29 = ssub.s32 %s16, %s28
    %p30 = scmp.eq.s32.totalorder %s29, 0
    %s32 = sadd.s32 %s31, 1
    %s33 = scalar_select %p30, %s31, %s32
    %p36 = pneg %p30
    %p37 = scmp.eq.s32.totalorder %s9, 1
    %p38 = por %p36, %p37
    %p39 = scmp.ne.s32.totalorder %s31, %s34
    %p40 = scmp.eq.s32.totalorder %s9, 0
    %p41 = por %p39, %p40
    %p42 = scmp.ne.s32.totalorder %s31, %s34
    %p43 = scmp.eq.s32.totalorder %s14, 1
    %p44 = por %p42, %p43
    %p45 = scmp.ne.s32.totalorder %s34, %s35
    %p46 = scmp.eq.s32.totalorder %s14, 0
    %p47 = por %p45, %p46
    %p48 = scmp.ne.s32.totalorder %s34, %s35
    %p49 = scmp.eq.s32.totalorder %s15, 1
    %p50 = por %p48, %p49
    %p52 = scmp.ne.s32.totalorder %s35, %s51
    %p53 = scmp.eq.s32.totalorder %s15, 0
    %p54 = por %p52, %p53
    %s56 = sadd.s32 %s55, 1
    %p59 = scmp.eq.s32.totalorder %s9, 1
    %p60 = scmp.ne.s32.totalorder %s55, %s57
    %p61 = scmp.eq.s32.totalorder %s9, 0
    %p62 = por %p60, %p61
    %p63 = scmp.ne.s32.totalorder %s55, %s57
    %p64 = scmp.eq.s32.totalorder %s14, 1
    %p65 = por %p63, %p64
    %p66 = scmp.ne.s32.totalorder %s57, %s58
    %p67 = scmp.eq.s32.totalorder %s14, 0
    %p68 = por %p66, %p67
    %p69 = scmp.ne.s32.totalorder %s57, %s58
    %p70 = scmp.eq.s32.totalorder %s15, 1
    %p71 = por %p69, %p70
    %p73 = scmp.ne.s32.totalorder %s58, %s72
    %p74 = scmp.eq.s32.totalorder %s15, 0
    %p75 = por %p73, %p74
    %s77 = sadd.s32 %s76, 1
    %p80 = scmp.eq.s32.totalorder %s9, 1
    %p81 = scmp.ne.s32.totalorder %s76, %s78
    %p82 = scmp.eq.s32.totalorder %s9, 0
    %p83 = por %p81, %p82
    %p84 = scmp.ne.s32.totalorder %s76, %s78
    %p85 = scmp.eq.s32.totalorder %s14, 1
    %p86 = por %p84, %p85
    %p87 = scmp.ne.s32.totalorder %s78, %s79
    %p88 = scmp.eq.s32.totalorder %s14, 0
    %p89 = por %p87, %p88
    %p90 = scmp.ne.s32.totalorder %s78, %s79
    %p91 = scmp.eq.s32.totalorder %s15, 1
    %p92 = por %p90, %p91
    %p94 = scmp.ne.s32.totalorder %s79, %s93
    %p95 = scmp.eq.s32.totalorder %s15, 0
    %p96 = por %p94, %p95
    %s97 = ssub.s32 %s16, %s28
    %s98 = ssub.s32 %s17, %s24
    %s99 = sor.u32 %s97, %s98
    %p100 = scmp.eq.s32.totalorder %s99, 0
    %s102 = sadd.s32 %s101, 1
    %s103 = scalar_select %p100, %s101, %s102
    %p106 = pneg %p100
    %p107 = scmp.eq.s32.totalorder %s9, 1
    %p108 = por %p106, %p107
    %p109 = scmp.ne.s32.totalorder %s101, %s104
    %p110 = scmp.eq.s32.totalorder %s9, 0
    %p111 = por %p109, %p110
    %p112 = scmp.ne.s32.totalorder %s101, %s104
    %p113 = scmp.eq.s32.totalorder %s14, 1
    %p114 = por %p112, %p113
    %p115 = scmp.ne.s32.totalorder %s104, %s105
    %p116 = scmp.eq.s32.totalorder %s14, 0
    %p117 = por %p115, %p116
    %p118 = scmp.ne.s32.totalorder %s104, %s105
    %p119 = scmp.eq.s32.totalorder %s15, 1
    %p120 = por %p118, %p119
    %p122 = scmp.ne.s32.totalorder %s105, %s121
    %p123 = scmp.eq.s32.totalorder %s15, 0
    %p124 = por %p122, %p123
    %p125 = scmp.le.s32.totalorder 1, %s9
    %p126 = scmp.lt.s32.totalorder %s9, 3
    %p127 = pnand %p125, %p126
    %p128 = pneg %p127
    // Predicated region
    $region9: #{tpu_custom_call.1} parent=5 // pred_check
      _
    $region10: #{tpu_custom_call.1} parent=5 // pred_check_branch
      %130 = sbr.rel (%p127) target = $region12
    $region11: #{tpu_custom_call.1} parent=5 // pred_region
      %s131 = ssub.s32 %s9, 1
      // Predicated region
      $region13: #{tpu_custom_call.1} parent=11 // pred_check
        %p132 = pneg %p68
      $region14: #{tpu_custom_call.1} parent=11 // pred_check_branch
        %134 = sbr.rel (%p132) target = $region16
      $region15: #{tpu_custom_call.1} parent=11 // pred_region
        _
      $region16: #{tpu_custom_call.1} parent=11 // pred_fallthru
        _
      // Predicated region
      $region17: #{tpu_custom_call.1} parent=11 // pred_check
        %p135 = pneg %p89
      $region18: #{tpu_custom_call.1} parent=11 // pred_check_branch
        %137 = sbr.rel (%p135) target = $region20
      $region19: #{tpu_custom_call.1} parent=11 // pred_region
        _
      $region20: #{tpu_custom_call.1} parent=11 // pred_fallthru
        _
    $region12: #{tpu_custom_call.1} parent=5 // pred_fallthru
      _
    %p138 = scmp.lt.s32.totalorder %s9, 2
    // Predicated region
    $region21: #{tpu_custom_call.1} parent=5 // pred_check
      %p139 = pneg %p138
    $region22: #{tpu_custom_call.1} parent=5 // pred_check_branch
      %141 = sbr.rel (%p139) target = $region24
    $region23: #{tpu_custom_call.1} parent=5 // pred_region
      // Predicated region
      $region25: #{tpu_custom_call.1} parent=23 // pred_check
        %p142 = pneg %p41
      $region26: #{tpu_custom_call.1} parent=23 // pred_check_branch
        %144 = sbr.rel (%p142) target = $region28
      $region27: #{tpu_custom_call.1} parent=23 // pred_region
        %p145 = scmp.lt.s32.totalorder %s16, 1
        %s146 = scalar_select %p145, %s16, 1
        %s147 = smul.addr %s146, 54
        %s148 = smul.addr %s147, 8
        %s149 = scalar_lea.vmem %s0, %s148
      $region28: #{tpu_custom_call.1} parent=23 // pred_fallthru
        _
    $region24: #{tpu_custom_call.1} parent=5 // pred_fallthru
      _
    %p150 = scmp.le.s32.totalorder 1, %s9
    %p151 = scmp.lt.s32.totalorder %s9, 3
    %p152 = pnand %p150, %p151
    %p153 = pneg %p152
    // Predicated region
    $region29: #{tpu_custom_call.1} parent=5 // pred_check
      _
    $region30: #{tpu_custom_call.1} parent=5 // pred_check_branch
      %155 = sbr.rel (%p152) target = $region32
    $region31: #{tpu_custom_call.1} parent=5 // pred_region
      %s156 = ssub.s32 %s9, 1
      %p157 = scmp.lt.s32.totalorder %s18, 1
      %s158 = scalar_select %p157, %s18, 1
      %s159 = smul.addr %s158, 54
      %s160 = smul.addr %s159, 8
      %s161 = scalar_lea.vmem %s0, %s160
      %p162 = pneg %p47
      %p163 = pneg %p44
      %p164 = pneg %p68
      %p165 = pneg %p65
      %p166 = pneg %p89
      %p167 = pneg %p86
      %p168 = pneg %p117
      %p169 = pneg %p114
      %s170 = smul.u32 16, %s19
      %p171 = scmp.lt.s32.totalorder %s18, 1
      %s172 = scalar_select %p171, %s18, 1
      %p173 = scmp.lt.s32.totalorder %s170, 15
      %s174 = scalar_select %p173, %s170, 15
      %s175 = smul.addr %s174, 2
      %s176 = smul.addr %s172, 32
      %s177 = sadd.s32 %s175, %s176
      %s178 = smul.addr %s177, 8
      %s179 = scalar_lea.vmem %s3, %s178
      %p180 = scmp.lt.s32.totalorder %s18, 1
      %s181 = scalar_select %p180, %s18, 1
      %s182 = smul.addr %s181, 54
      %s183 = smul.addr %s182, 8
      %s184 = scalar_lea.vmem %s0, %s183
      %s185 = smul.u32 16, %s19
      %p186 = scmp.lt.s32.totalorder %s18, 1
      %s187 = scalar_select %p186, %s18, 1
      %p188 = scmp.lt.s32.totalorder %s185, 15
      %s189 = scalar_select %p188, %s185, 15
      %s190 = smul.addr %s189, 2
      %s191 = smul.addr %s187, 32
      %s192 = sadd.s32 %s190, %s191
      %s193 = smul.addr %s192, 8
      %s194 = scalar_lea.vmem %s3, %s193
      %s195 = smul.u32 16, %s19
      %s197 = smul.u32 %s19, 16
      %s198 = smul.u32 %s197, 24
      %s199 = scalar_lea.vmem %s184, %s198
      %v200 = vld [vmem:[%s199] sm:$0xff]
      %v201 = vld [vmem:[%s199 + $0x8] sm:$0xff]
      %v202 = vld [vmem:[%s199 + $0x18] sm:$0xff]
      %v203 = vld [vmem:[%s199 + $0x20] sm:$0xff]
      %v204 = vld [vmem:[%s199 + $0x30] sm:$0xff]
      %v205 = vld [vmem:[%s199 + $0x38] sm:$0xff]
      %v206 = vld [vmem:[%s199 + $0x48] sm:$0xff]
      %v207 = vld [vmem:[%s199 + $0x50] sm:$0xff]
      %v208 = vld [vmem:[%s199 + $0x60] sm:$0xff]
      %v209 = vld [vmem:[%s199 + $0x68] sm:$0xff]
      %v210 = vld [vmem:[%s199 + $0x78] sm:$0xff]
      %v211 = vld [vmem:[%s199 + $0x80] sm:$0xff]
      %v212 = vld [vmem:[%s199 + $0x90] sm:$0xff]
      %v213 = vld [vmem:[%s199 + $0x98] sm:$0xff]
      %v214 = vld [vmem:[%s199 + $0xa8] sm:$0xff]
      %v215 = vld [vmem:[%s199 + $0xb0] sm:$0xff]
      %v216 = vld [vmem:[%s199 + $0xc0] sm:$0xff]
      %v217 = vld [vmem:[%s199 + $0xc8] sm:$0xff]
      %v218 = vld [vmem:[%s199 + $0xd8] sm:$0xff]
      %v219 = vld [vmem:[%s199 + $0xe0] sm:$0xff]
      %v220 = vld [vmem:[%s199 + $0xf0] sm:$0xff]
      %v221 = vld [vmem:[%s199 + $0xf8] sm:$0xff]
      %v222 = vld [vmem:[%s199 + $0x108] sm:$0xff]
      %v223 = vld [vmem:[%s199 + $0x110] sm:$0xff]
      %v224 = vld [vmem:[%s199 + $0x120] sm:$0xff]
      %v225 = vld [vmem:[%s199 + $0x128] sm:$0xff]
      %v226 = vld [vmem:[%s199 + $0x138] sm:$0xff]
      %v227 = vld [vmem:[%s199 + $0x140] sm:$0xff]
      %v228 = vld [vmem:[%s199 + $0x150] sm:$0xff]
      %v229 = vld [vmem:[%s199 + $0x158] sm:$0xff]
      %v230 = vld [vmem:[%s199 + $0x168] sm:$0xff]
      %v231 = vld [vmem:[%s199 + $0x170] sm:$0xff]
      %v232 = vpack.c.bf16 %v201, %v200
      %v233 = vpack.c.bf16 %v203, %v202
      %v234 = vpack.c.bf16 %v205, %v204
      %v235 = vpack.c.bf16 %v207, %v206
      %v236 = vpack.c.bf16 %v209, %v208
      %v237 = vpack.c.bf16 %v211, %v210
      %v238 = vpack.c.bf16 %v213, %v212
      %v239 = vpack.c.bf16 %v215, %v214
      %v240 = vpack.c.bf16 %v217, %v216
      %v241 = vpack.c.bf16 %v219, %v218
      %v242 = vpack.c.bf16 %v221, %v220
      %v243 = vpack.c.bf16 %v223, %v222
      %v244 = vpack.c.bf16 %v225, %v224
      %v245 = vpack.c.bf16 %v227, %v226
      %v246 = vpack.c.bf16 %v229, %v228
      %v247 = vpack.c.bf16 %v231, %v230
      %v248 = vld [vmem:[%s1] sm:$0x3]
      %vm249 = vcmask 31744
      %v251 = vsel %vm249, %v232, 0
      %v254 = vsel %vm249, %v233, 0
      %v257 = vsel %vm249, %v234, 0
      %v260 = vsel %vm249, %v235, 0
      %v263 = vsel %vm249, %v236, 0
      %v266 = vsel %vm249, %v237, 0
      %v269 = vsel %vm249, %v238, 0
      %v272 = vsel %vm249, %v239, 0
      %v275 = vsel %vm249, %v240, 0
      %v278 = vsel %vm249, %v241, 0
      %v281 = vsel %vm249, %v242, 0
      %v284 = vsel %vm249, %v243, 0
      %v287 = vsel %vm249, %v244, 0
      %v290 = vsel %vm249, %v245, 0
      %v293 = vsel %vm249, %v246, 0
      %v296 = vsel %vm249, %v247, 0
      %vm298 = vcmask 1041408
      %v300 = vsel %vm298, %v248, 0
      %302 = vmatprep.subr.bf16.mxu0 0
      %303 = vmatpush1.bf16.msra.mxu0 %v300
      %304 = vmatprep.subr.bf16.mxu0 0
      %305 = vmatpush1.bf16.msra.mxu0 0
      %306 = vmatprep.subr.bf16.mxu0 0
      %307 = vmatpush1.bf16.msra.mxu0 0
      %308 = vmatprep.subr.bf16.mxu0 0
      %309 = vmatpush1.bf16.msra.mxu0 0
      %310 = vmatprep.subr.bf16.mxu0 0
      %311 = vmatpush1.bf16.msra.mxu0 0
      %312 = vmatprep.subr.bf16.mxu0 0
      %313 = vmatpush1.bf16.msra.mxu0 0
      %314 = vmatprep.subr.bf16.mxu0 0
      %315 = vmatpush1.bf16.msra.mxu0 0
      %316 = vmatprep.subr.bf16.mxu0 0
      %317 = vmatpush1.bf16.msra.mxu0 0
      %318 = vmatprep.subr.bf16.mxu0 0
      %319 = vmatpush1.bf16.msra.mxu0 0
      %320 = vmatprep.subr.bf16.mxu0 0
      %321 = vmatpush1.bf16.msra.mxu0 0
      %322 = vmatprep.subr.bf16.mxu0 0
      %323 = vmatpush1.bf16.msra.mxu0 0
      %324 = vmatprep.subr.bf16.mxu0 0
      %325 = vmatpush1.bf16.msra.mxu0 0
      %326 = vmatprep.subr.bf16.mxu0 0
      %327 = vmatpush1.bf16.msra.mxu0 0
      %328 = vmatprep.subr.bf16.mxu0 0
      %329 = vmatpush1.bf16.msra.mxu0 0
      %330 = vmatprep.subr.bf16.mxu0 0
      %331 = vmatpush1.bf16.msra.mxu0 0
      %332 = vmatprep.subr.bf16.mxu0 0
      %333 = vmatpush1.bf16.msra.mxu0 0
      %334 = vmatprep.mubr.bf16.mxu0 0
      %335 = vmatmul.mubr.bf16.gmra.mrb[0].mxu0 %v251
      %v336 = vpop.f32.mrb[0].mxu0
      %v337 = vadd.f32 0.0, %v336
      %v338 = vpop.f32.mrb[0].mxu0
      %v339 = vpop.f32.mrb[0].mxu0
      %v340 = vadd.f32 0.0, %v339
      %v341 = vpop.f32.mrb[0].mxu0
      %342 = vmatprep.mubr.bf16.mxu0 0
      %343 = vmatmul.mubr.bf16.gmra.mrb[0].mxu0 %v254
      %v344 = vpop.f32.mrb[0].mxu0
      %v345 = vadd.f32 0.0, %v344
      %v346 = vpop.f32.mrb[0].mxu0
      %v347 = vpop.f32.mrb[0].mxu0
      %v348 = vadd.f32 0.0, %v347
      %v349 = vpop.f32.mrb[0].mxu0
      %350 = vmatprep.mubr.bf16.mxu0 0
      %351 = vmatmul.mubr.bf16.gmra.mrb[0].mxu0 %v257
      %v352 = vpop.f32.mrb[0].mxu0
      %v353 = vadd.f32 0.0, %v352
      %v354 = vpop.f32.mrb[0].mxu0
      %v355 = vpop.f32.mrb[0].mxu0
      %v356 = vadd.f32 0.0, %v355
      %v357 = vpop.f32.mrb[0].mxu0
      %358 = vmatprep.mubr.bf16.mxu0 0
      %359 = vmatmul.mubr.bf16.gmra.mrb[0].mxu0 %v260
      %v360 = vpop.f32.mrb[0].mxu0
      %v361 = vadd.f32 0.0, %v360
      %v362 = vpop.f32.mrb[0].mxu0
      %v363 = vpop.f32.mrb[0].mxu0
      %v364 = vadd.f32 0.0, %v363
      %v365 = vpop.f32.mrb[0].mxu0
      %366 = vmatprep.mubr.bf16.mxu0 0
      %367 = vmatmul.mubr.bf16.gmra.mrb[0].mxu0 %v263
      %v368 = vpop.f32.mrb[0].mxu0
      %v369 = vadd.f32 0.0, %v368
      %v370 = vpop.f32.mrb[0].mxu0
      %v371 = vpop.f32.mrb[0].mxu0
      %v372 = vadd.f32 0.0, %v371
      %v373 = vpop.f32.mrb[0].mxu0
      %374 = vmatprep.mubr.bf16.mxu0 0
      %375 = vmatmul.mubr.bf16.gmra.mrb[0].mxu0 %v266
      %v376 = vpop.f32.mrb[0].mxu0
      %v377 = vadd.f32 0.0, %v376
      %v378 = vpop.f32.mrb[0].mxu0
      %v379 = vpop.f32.mrb[0].mxu0
      %v380 = vadd.f32 0.0, %v379
      %v381 = vpop.f32.mrb[0].mxu0
      %382 = vmatprep.mubr.bf16.mxu0 0
      %383 = vmatmul.mubr.bf16.gmra.mrb[0].mxu0 %v269
      %v384 = vpop.f32.mrb[0].mxu0
      %v385 = vadd.f32 0.0, %v384
      %v386 = vpop.f32.mrb[0].mxu0
      %v387 = vpop.f32.mrb[0].mxu0
      %v388 = vadd.f32 0.0, %v387
      %v389 = vpop.f32.mrb[0].mxu0
      %390 = vmatprep.mubr.bf16.mxu0 0
      %391 = vmatmul.mubr.bf16.gmra.mrb[0].mxu0 %v272
      %v392 = vpop.f32.mrb[0].mxu0
      %v393 = vadd.f32 0.0, %v392
      %v394 = vpop.f32.mrb[0].mxu0
      %v395 = vpop.f32.mrb[0].mxu0
      %v396 = vadd.f32 0.0, %v395
      %v397 = vpop.f32.mrb[0].mxu0
      %398 = vmatprep.mubr.bf16.mxu0 0
      %399 = vmatmul.mubr.bf16.gmra.mrb[0].mxu0 %v275
      %v400 = vpop.f32.mrb[0].mxu0
      %v401 = vadd.f32 0.0, %v400
      %v402 = vpop.f32.mrb[0].mxu0
      %v403 = vpop.f32.mrb[0].mxu0
      %v404 = vadd.f32 0.0, %v403
      %v405 = vpop.f32.mrb[0].mxu0
      %406 = vmatprep.mubr.bf16.mxu0 0
      %407 = vmatmul.mubr.bf16.gmra.mrb[0].mxu0 %v278
      %v408 = vpop.f32.mrb[0].mxu0
      %v409 = vadd.f32 0.0, %v408
      %v410 = vpop.f32.mrb[0].mxu0
      %v411 = vpop.f32.mrb[0].mxu0
      %v412 = vadd.f32 0.0, %v411
      %v413 = vpop.f32.mrb[0].mxu0
      %414 = vmatprep.mubr.bf16.mxu0 0
      %415 = vmatmul.mubr.bf16.gmra.mrb[0].mxu0 %v281
      %v416 = vpop.f32.mrb[0].mxu0
      %v417 = vadd.f32 0.0, %v416
      %v418 = vpop.f32.mrb[0].mxu0
      %v419 = vpop.f32.mrb[0].mxu0
      %v420 = vadd.f32 0.0, %v419
      %v421 = vpop.f32.mrb[0].mxu0
      %422 = vmatprep.mubr.bf16.mxu0 0
      %423 = vmatmul.mubr.bf16.gmra.mrb[0].mxu0 %v284
      %v424 = vpop.f32.mrb[0].mxu0
      %v425 = vadd.f32 0.0, %v424
      %v426 = vpop.f32.mrb[0].mxu0
      %v427 = vpop.f32.mrb[0].mxu0
      %v428 = vadd.f32 0.0, %v427
      %v429 = vpop.f32.mrb[0].mxu0
      %430 = vmatprep.mubr.bf16.mxu0 0
      %431 = vmatmul.mubr.bf16.gmra.mrb[0].mxu0 %v287
      %v432 = vpop.f32.mrb[0].mxu0
      %v433 = vadd.f32 0.0, %v432
      %v434 = vpop.f32.mrb[0].mxu0
      %v435 = vpop.f32.mrb[0].mxu0
      %v436 = vadd.f32 0.0, %v435
      %v437 = vpop.f32.mrb[0].mxu0
      %438 = vmatprep.mubr.bf16.mxu0 0
      %439 = vmatmul.mubr.bf16.gmra.mrb[0].mxu0 %v290
      %v440 = vpop.f32.mrb[0].mxu0
      %v441 = vadd.f32 0.0, %v440
      %v442 = vpop.f32.mrb[0].mxu0
      %v443 = vpop.f32.mrb[0].mxu0
      %v444 = vadd.f32 0.0, %v443
      %v445 = vpop.f32.mrb[0].mxu0
      %446 = vmatprep.mubr.bf16.mxu0 0
      %447 = vmatmul.mubr.bf16.gmra.mrb[0].mxu0 %v293
      %v448 = vpop.f32.mrb[0].mxu0
      %v449 = vadd.f32 0.0, %v448
      %v450 = vpop.f32.mrb[0].mxu0
      %v451 = vpop.f32.mrb[0].mxu0
      %v452 = vadd.f32 0.0, %v451
      %v453 = vpop.f32.mrb[0].mxu0
      %454 = vmatprep.mubr.bf16.mxu0 0
      %455 = vmatmul.mubr.bf16.gmra.mrb[0].mxu0 %v296
      %v456 = vpop.f32.mrb[0].mxu0
      %v457 = vadd.f32 0.0, %v456
      %v458 = vpop.f32.mrb[0].mxu0
      %v459 = vpop.f32.mrb[0].mxu0
      %v460 = vadd.f32 0.0, %v459
      %v461 = vpop.f32.mrb[0].mxu0
      %462 = vdwg.mxu0
      %463 = vst [vmem:[#allocation2] sm:$0xff] %v337
      %464 = vst [vmem:[#allocation2 + $0x8] sm:$0xff] %v340
      %465 = vst [vmem:[#allocation2 + $0x10] sm:$0xff] %v345
      %466 = vst [vmem:[#allocation2 + $0x18] sm:$0xff] %v348
      %467 = vst [vmem:[#allocation2 + $0x20] sm:$0xff] %v353
      %468 = vst [vmem:[#allocation2 + $0x28] sm:$0xff] %v356
      %469 = vst [vmem:[#allocation2 + $0x30] sm:$0xff] %v361
      %470 = vst [vmem:[#allocation2 + $0x38] sm:$0xff] %v364
      %471 = vst [vmem:[#allocation2 + $0x40] sm:$0xff] %v369
      %472 = vst [vmem:[#allocation2 + $0x48] sm:$0xff] %v372
      %473 = vst [vmem:[#allocation2 + $0x50] sm:$0xff] %v377
      %474 = vst [vmem:[#allocation2 + $0x58] sm:$0xff] %v380
      %475 = vst [vmem:[#allocation2 + $0x60] sm:$0xff] %v385
      %476 = vst [vmem:[#allocation2 + $0x68] sm:$0xff] %v388
      %477 = vst [vmem:[#allocation2 + $0x70] sm:$0xff] %v393
      %478 = vst [vmem:[#allocation2 + $0x78] sm:$0xff] %v396
      %479 = vst [vmem:[#allocation2 + $0x80] sm:$0xff] %v401
      %480 = vst [vmem:[#allocation2 + $0x88] sm:$0xff] %v404
      %481 = vst [vmem:[#allocation2 + $0x90] sm:$0xff] %v409
      %482 = vst [vmem:[#allocation2 + $0x98] sm:$0xff] %v412
      %483 = vst [vmem:[#allocation2 + $0xa0] sm:$0xff] %v417
      %484 = vst [vmem:[#allocation2 + $0xa8] sm:$0xff] %v420
      %485 = vst [vmem:[#allocation2 + $0xb0] sm:$0xff] %v425
      %486 = vst [vmem:[#allocation2 + $0xb8] sm:$0xff] %v428
      %487 = vst [vmem:[#allocation2 + $0xc0] sm:$0xff] %v433
      %488 = vst [vmem:[#allocation2 + $0xc8] sm:$0xff] %v436
      %489 = vst [vmem:[#allocation2 + $0xd0] sm:$0xff] %v441
      %490 = vst [vmem:[#allocation2 + $0xd8] sm:$0xff] %v444
      %491 = vst [vmem:[#allocation2 + $0xe0] sm:$0xff] %v449
      %492 = vst [vmem:[#allocation2 + $0xe8] sm:$0xff] %v452
      %493 = vst [vmem:[#allocation2 + $0xf0] sm:$0xff] %v457
      %494 = vst [vmem:[#allocation2 + $0xf8] sm:$0xff] %v460
      %v495 = vld [vmem:[%s199 + $0x1] sm:$0xff]
      %v496 = vld [vmem:[%s199 + $0x9] sm:$0xff]
      %v497 = vld [vmem:[%s199 + $0x19] sm:$0xff]
      %v498 = vld [vmem:[%s199 + $0x21] sm:$0xff]
      %v499 = vld [vmem:[%s199 + $0x31] sm:$0xff]
      %v500 = vld [vmem:[%s199 + $0x39] sm:$0xff]
      %v501 = vld [vmem:[%s199 + $0x49] sm:$0xff]
      %v502 = vld [vmem:[%s199 + $0x51] sm:$0xff]
      %v503 = vld [vmem:[%s199 + $0x61] sm:$0xff]
      %v504 = vld [vmem:[%s199 + $0x69] sm:$0xff]
      %v505 = vld [vmem:[%s199 + $0x79] sm:$0xff]
      %v506 = vld [vmem:[%s199 + $0x81] sm:$0xff]
      %v507 = vld [vmem:[%s199 + $0x91] sm:$0xff]
      %v508 = vld [vmem:[%s199 + $0x99] sm:$0xff]
      %v509 = vld [vmem:[%s199 + $0xa9] sm:$0xff]
      %v510 = vld [vmem:[%s199 + $0xb1] sm:$0xff]
      %v511 = vld [vmem:[%s199 + $0xc1] sm:$0xff]
      %v512 = vld [vmem:[%s199 + $0xc9] sm:$0xff]
      %v513 = vld [vmem:[%s199 + $0xd9] sm:$0xff]
      %v514 = vld [vmem:[%s199 + $0xe1] sm:$0xff]
      %v515 = vld [vmem:[%s199 + $0xf1] sm:$0xff]
      %v516 = vld [vmem:[%s199 + $0xf9] sm:$0xff]
      %v517 = vld [vmem:[%s199 + $0x109] sm:$0xff]
      %v518 = vld [vmem:[%s199 + $0x111] sm:$0xff]
      %v519 = vld [vmem:[%s199 + $0x121] sm:$0xff]
      %v520 = vld [vmem:[%s199 + $0x129] sm:$0xff]
      %v521 = vld [vmem:[%s199 + $0x139] sm:$0xff]
      %v522 = vld [vmem:[%s199 + $0x141] sm:$0xff]
      %v523 = vld [vmem:[%s199 + $0x151] sm:$0xff]
      %v524 = vld [vmem:[%s199 + $0x159] sm:$0xff]
      %v525 = vld [vmem:[%s199 + $0x169] sm:$0xff]
      %v526 = vld [vmem:[%s199 + $0x171] sm:$0xff]
      %v527 = vpack.c.bf16 %v496, %v495
      %v528 = vpack.c.bf16 %v498, %v497
      %v529 = vpack.c.bf16 %v500, %v499
      %v530 = vpack.c.bf16 %v502, %v501
      %v531 = vpack.c.bf16 %v504, %v503
      %v532 = vpack.c.bf16 %v506, %v505
      %v533 = vpack.c.bf16 %v508, %v507
      %v534 = vpack.c.bf16 %v510, %v509
      %v535 = vpack.c.bf16 %v512, %v511
      %v536 = vpack.c.bf16 %v514, %v513
      %v537 = vpack.c.bf16 %v516, %v515
      %v538 = vpack.c.bf16 %v518, %v517
      %v539 = vpack.c.bf16 %v520, %v519
      %v540 = vpack.c.bf16 %v522, %v521
      %v541 = vpack.c.bf16 %v524, %v523
      %v542 = vpack.c.bf16 %v526, %v525
      %s543 = scalar_lea.vmem %s1, 2
      %v544 = vld [vmem:[%s543] sm:$0x3]
      %v546 = vsel %vm249, %v527, 0
      %v549 = vsel %vm249, %v528, 0
      %v552 = vsel %vm249, %v529, 0
      %v555 = vsel %vm249, %v530, 0
      %v558 = vsel %vm249, %v531, 0
      %v561 = vsel %vm249, %v532, 0
      %v564 = vsel %vm249, %v533, 0
      %v567 = vsel %vm249, %v534, 0
      %v570 = vsel %vm249, %v535, 0
      %v573 = vsel %vm249, %v536, 0
      %v576 = vsel %vm249, %v537, 0
      %v579 = vsel %vm249, %v538, 0
      %v582 = vsel %vm249, %v539, 0
      %v585 = vsel %vm249, %v540, 0
      %v588 = vsel %vm249, %v541, 0
      %v591 = vsel %vm249, %v542, 0
      %v594 = vsel %vm298, %v544, 0
      %596 = vmatprep.subr.bf16.mxu0 0
      %597 = vmatpush1.bf16.msra.mxu0 %v594
      %598 = vmatprep.subr.bf16.mxu0 0
      %599 = vmatpush1.bf16.msra.mxu0 0
      %600 = vmatprep.subr.bf16.mxu0 0
      %601 = vmatpush1.bf16.msra.mxu0 0
      %602 = vmatprep.subr.bf16.mxu0 0
      %603 = vmatpush1.bf16.msra.mxu0 0
      %604 = vmatprep.subr.bf16.mxu0 0
      %605 = vmatpush1.bf16.msra.mxu0 0
      %606 = vmatprep.subr.bf16.mxu0 0
      %607 = vmatpush1.bf16.msra.mxu0 0
      %608 = vmatprep.subr.bf16.mxu0 0
      %609 = vmatpush1.bf16.msra.mxu0 0
      %610 = vmatprep.subr.bf16.mxu0 0
      %611 = vmatpush1.bf16.msra.mxu0 0
      %612 = vmatprep.subr.bf16.mxu0 0
      %613 = vmatpush1.bf16.msra.mxu0 0
      %614 = vmatprep.subr.bf16.mxu0 0
      %615 = vmatpush1.bf16.msra.mxu0 0
      %616 = vmatprep.subr.bf16.mxu0 0
      %617 = vmatpush1.bf16.msra.mxu0 0
      %618 = vmatprep.subr.bf16.mxu0 0
      %619 = vmatpush1.bf16.msra.mxu0 0
      %620 = vmatprep.subr.bf16.mxu0 0
      %621 = vmatpush1.bf16.msra.mxu0 0
      %622 = vmatprep.subr.bf16.mxu0 0
      %623 = vmatpush1.bf16.msra.mxu0 0
      %624 = vmatprep.subr.bf16.mxu0 0
      %625 = vmatpush1.bf16.msra.mxu0 0
      %626 = vmatprep.subr.bf16.mxu0 0
      %627 = vmatpush1.bf16.msra.mxu0 0
      %628 = vmatprep.mubr.bf16.mxu0 0
      %629 = vmatmul.mubr.bf16.gmra.mrb[0].mxu0 %v546
      %v630 = vpop.f32.mrb[0].mxu0
      %v631 = vadd.f32 0.0, %v630
      %v632 = vpop.f32.mrb[0].mxu0
      %v633 = vpop.f32.mrb[0].mxu0
      %v634 = vadd.f32 0.0, %v633
      %v635 = vpop.f32.mrb[0].mxu0
      %636 = vmatprep.mubr.bf16.mxu0 0
      %637 = vmatmul.mubr.bf16.gmra.mrb[0].mxu0 %v549
      %v638 = vpop.f32.mrb[0].mxu0
      %v639 = vadd.f32 0.0, %v638
      %v640 = vpop.f32.mrb[0].mxu0
      %v641 = vpop.f32.mrb[0].mxu0
      %v642 = vadd.f32 0.0, %v641
      %v643 = vpop.f32.mrb[0].mxu0
      %644 = vmatprep.mubr.bf16.mxu0 0
      %645 = vmatmul.mubr.bf16.gmra.mrb[0].mxu0 %v552
      %v646 = vpop.f32.mrb[0].mxu0
      %v647 = vadd.f32 0.0, %v646
      %v648 = vpop.f32.mrb[0].mxu0
      %v649 = vpop.f32.mrb[0].mxu0
      %v650 = vadd.f32 0.0, %v649
      %v651 = vpop.f32.mrb[0].mxu0
      %652 = vmatprep.mubr.bf16.mxu0 0
      %653 = vmatmul.mubr.bf16.gmra.mrb[0].mxu0 %v555
      %v654 = vpop.f32.mrb[0].mxu0
      %v655 = vadd.f32 0.0, %v654
      %v656 = vpop.f32.mrb[0].mxu0
      %v657 = vpop.f32.mrb[0].mxu0
      %v658 = vadd.f32 0.0, %v657
      %v659 = vpop.f32.mrb[0].mxu0
      %660 = vmatprep.mubr.bf16.mxu0 0
      %661 = vmatmul.mubr.bf16.gmra.mrb[0].mxu0 %v558
      %v662 = vpop.f32.mrb[0].mxu0
      %v663 = vadd.f32 0.0, %v662
      %v664 = vpop.f32.mrb[0].mxu0
      %v665 = vpop.f32.mrb[0].mxu0
      %v666 = vadd.f32 0.0, %v665
      %v667 = vpop.f32.mrb[0].mxu0
      %668 = vmatprep.mubr.bf16.mxu0 0
      %669 = vmatmul.mubr.bf16.gmra.mrb[0].mxu0 %v561
      %v670 = vpop.f32.mrb[0].mxu0
      %v671 = vadd.f32 0.0, %v670
      %v672 = vpop.f32.mrb[0].mxu0
      %v673 = vpop.f32.mrb[0].mxu0
      %v674 = vadd.f32 0.0, %v673
      %v675 = vpop.f32.mrb[0].mxu0
      %676 = vmatprep.mubr.bf16.mxu0 0
      %677 = vmatmul.mubr.bf16.gmra.mrb[0].mxu0 %v564
      %v678 = vpop.f32.mrb[0].mxu0
      %v679 = vadd.f32 0.0, %v678
      %v680 = vpop.f32.mrb[0].mxu0
      %v681 = vpop.f32.mrb[0].mxu0
      %v682 = vadd.f32 0.0, %v681
      %v683 = vpop.f32.mrb[0].mxu0
      %684 = vmatprep.mubr.bf16.mxu0 0
      %685 = vmatmul.mubr.bf16.gmra.mrb[0].mxu0 %v567
      %v686 = vpop.f32.mrb[0].mxu0
      %v687 = vadd.f32 0.0, %v686
      %v688 = vpop.f32.mrb[0].mxu0
      %v689 = vpop.f32.mrb[0].mxu0
      %v690 = vadd.f32 0.0, %v689
      %v691 = vpop.f32.mrb[0].mxu0
      %692 = vmatprep.mubr.bf16.mxu0 0
      %693 = vmatmul.mubr.bf16.gmra.mrb[0].mxu0 %v570
      %v694 = vpop.f32.mrb[0].mxu0
      %v695 = vadd.f32 0.0, %v694
      %v696 = vpop.f32.mrb[0].mxu0
      %v697 = vpop.f32.mrb[0].mxu0
      %v698 = vadd.f32 0.0, %v697
      %v699 = vpop.f32.mrb[0].mxu0
      %700 = vmatprep.mubr.bf16.mxu0 0
      %701 = vmatmul.mubr.bf16.gmra.mrb[0].mxu0 %v573
      %v702 = vpop.f32.mrb[0].mxu0
      %v703 = vadd.f32 0.0, %v702
      %v704 = vpop.f32.mrb[0].mxu0
      %v705 = vpop.f32.mrb[0].mxu0
      %v706 = vadd.f32 0.0, %v705
      %v707 = vpop.f32.mrb[0].mxu0
      %708 = vmatprep.mubr.bf16.mxu0 0
      %709 = vmatmul.mubr.bf16.gmra.mrb[0].mxu0 %v576
      %v710 = vpop.f32.mrb[0].mxu0
      %v711 = vadd.f32 0.0, %v710
      %v712 = vpop.f32.mrb[0].mxu0
      %v713 = vpop.f32.mrb[0].mxu0
      %v714 = vadd.f32 0.0, %v713
      %v715 = vpop.f32.mrb[0].mxu0
      %716 = vmatprep.mubr.bf16.mxu0 0
      %717 = vmatmul.mubr.bf16.gmra.mrb[0].mxu0 %v579
      %v718 = vpop.f32.mrb[0].mxu0
      %v719 = vadd.f32 0.0, %v718
      %v720 = vpop.f32.mrb[0].mxu0
      %v721 = vpop.f32.mrb[0].mxu0
      %v722 = vadd.f32 0.0, %v721
      %v723 = vpop.f32.mrb[0].mxu0
      %724 = vmatprep.mubr.bf16.mxu0 0
      %725 = vmatmul.mubr.bf16.gmra.mrb[0].mxu0 %v582
      %v726 = vpop.f32.mrb[0].mxu0
      %v727 = vadd.f32 0.0, %v726
      %v728 = vpop.f32.mrb[0].mxu0
      %v729 = vpop.f32.mrb[0].mxu0
      %v730 = vadd.f32 0.0, %v729
      %v731 = vpop.f32.mrb[0].mxu0
      %732 = vmatprep.mubr.bf16.mxu0 0
      %733 = vmatmul.mubr.bf16.gmra.mrb[0].mxu0 %v585
      %v734 = vpop.f32.mrb[0].mxu0
      %v735 = vadd.f32 0.0, %v734
      %v736 = vpop.f32.mrb[0].mxu0
      %v737 = vpop.f32.mrb[0].mxu0
      %v738 = vadd.f32 0.0, %v737
      %v739 = vpop.f32.mrb[0].mxu0
      %740 = vmatprep.mubr.bf16.mxu0 0
      %741 = vmatmul.mubr.bf16.gmra.mrb[0].mxu0 %v588
      %v742 = vpop.f32.mrb[0].mxu0
      %v743 = vadd.f32 0.0, %v742
      %v744 = vpop.f32.mrb[0].mxu0
      %v745 = vpop.f32.mrb[0].mxu0
      %v746 = vadd.f32 0.0, %v745
      %v747 = vpop.f32.mrb[0].mxu0
      %748 = vmatprep.mubr.bf16.mxu0 0
      %749 = vmatmul.mubr.bf16.gmra.mrb[0].mxu0 %v591
      %v750 = vpop.f32.mrb[0].mxu0
      %v751 = vadd.f32 0.0, %v750
      %v752 = vpop.f32.mrb[0].mxu0
      %v753 = vpop.f32.mrb[0].mxu0
      %v754 = vadd.f32 0.0, %v753
      %v755 = vpop.f32.mrb[0].mxu0
      %756 = vdwg.mxu0
      %v757 = vld [vmem:[#allocation2] sm:$0xff]
      %v758 = vld [vmem:[#allocation2 + $0x8] sm:$0xff]
      %v759 = vld [vmem:[#allocation2 + $0x10] sm:$0xff]
      %v760 = vld [vmem:[#allocation2 + $0x18] sm:$0xff]
      %v761 = vld [vmem:[#allocation2 + $0x20] sm:$0xff]
      %v762 = vld [vmem:[#allocation2 + $0x28] sm:$0xff]
      %v763 = vld [vmem:[#allocation2 + $0x30] sm:$0xff]
      %v764 = vld [vmem:[#allocation2 + $0x38] sm:$0xff]
      %v765 = vld [vmem:[#allocation2 + $0x40] sm:$0xff]
      %v766 = vld [vmem:[#allocation2 + $0x48] sm:$0xff]
      %v767 = vld [vmem:[#allocation2 + $0x50] sm:$0xff]
      %v768 = vld [vmem:[#allocation2 + $0x58] sm:$0xff]
      %v769 = vld [vmem:[#allocation2 + $0x60] sm:$0xff]
      %v770 = vld [vmem:[#allocation2 + $0x68] sm:$0xff]
      %v771 = vld [vmem:[#allocation2 + $0x70] sm:$0xff]
      %v772 = vld [vmem:[#allocation2 + $0x78] sm:$0xff]
      %v773 = vld [vmem:[#allocation2 + $0x80] sm:$0xff]
      %v774 = vld [vmem:[#allocation2 + $0x88] sm:$0xff]
      %v775 = vld [vmem:[#allocation2 + $0x90] sm:$0xff]
      %v776 = vld [vmem:[#allocation2 + $0x98] sm:$0xff]
      %v777 = vld [vmem:[#allocation2 + $0xa0] sm:$0xff]
      %v778 = vld [vmem:[#allocation2 + $0xa8] sm:$0xff]
      %v779 = vld [vmem:[#allocation2 + $0xb0] sm:$0xff]
      %v780 = vld [vmem:[#allocation2 + $0xb8] sm:$0xff]
      %v781 = vld [vmem:[#allocation2 + $0xc0] sm:$0xff]
      %v782 = vld [vmem:[#allocation2 + $0xc8] sm:$0xff]
      %v783 = vld [vmem:[#allocation2 + $0xd0] sm:$0xff]
      %v784 = vld [vmem:[#allocation2 + $0xd8] sm:$0xff]
      %v785 = vld [vmem:[#allocation2 + $0xe0] sm:$0xff]
      %v786 = vld [vmem:[#allocation2 + $0xe8] sm:$0xff]
      %v787 = vld [vmem:[#allocation2 + $0xf0] sm:$0xff]
      %v788 = vld [vmem:[#allocation2 + $0xf8] sm:$0xff]
      %v789 = vadd.f32 %v757, %v631
      %v790 = vadd.f32 %v758, %v634
      %v791 = vadd.f32 %v759, %v639
      %v792 = vadd.f32 %v760, %v642
      %v793 = vadd.f32 %v761, %v647
      %v794 = vadd.f32 %v762, %v650
      %v795 = vadd.f32 %v763, %v655
      %v796 = vadd.f32 %v764, %v658
      %v797 = vadd.f32 %v765, %v663
      %v798 = vadd.f32 %v766, %v666
      %v799 = vadd.f32 %v767, %v671
      %v800 = vadd.f32 %v768, %v674
      %v801 = vadd.f32 %v769, %v679
      %v802 = vadd.f32 %v770, %v682
      %v803 = vadd.f32 %v771, %v687
      %v804 = vadd.f32 %v772, %v690
      %v805 = vadd.f32 %v773, %v695
      %v806 = vadd.f32 %v774, %v698
      %v807 = vadd.f32 %v775, %v703
      %v808 = vadd.f32 %v776, %v706
      %v809 = vadd.f32 %v777, %v711
      %v810 = vadd.f32 %v778, %v714
      %v811 = vadd.f32 %v779, %v719
      %v812 = vadd.f32 %v780, %v722
      %v813 = vadd.f32 %v781, %v727
      %v814 = vadd.f32 %v782, %v730
      %v815 = vadd.f32 %v783, %v735
      %v816 = vadd.f32 %v784, %v738
      %v817 = vadd.f32 %v785, %v743
      %v818 = vadd.f32 %v786, %v746
      %v819 = vadd.f32 %v787, %v751
      %v820 = vadd.f32 %v788, %v754
      %821 = vst [vmem:[#allocation2] sm:$0xff] %v789
      %822 = vst [vmem:[#allocation2 + $0x8] sm:$0xff] %v790
      %823 = vst [vmem:[#allocation2 + $0x10] sm:$0xff] %v791
      %824 = vst [vmem:[#allocation2 + $0x18] sm:$0xff] %v792
      %825 = vst [vmem:[#allocation2 + $0x20] sm:$0xff] %v793
      %826 = vst [vmem:[#allocation2 + $0x28] sm:$0xff] %v794
      %827 = vst [vmem:[#allocation2 + $0x30] sm:$0xff] %v795
      %828 = vst [vmem:[#allocation2 + $0x38] sm:$0xff] %v796
      %829 = vst [vmem:[#allocation2 + $0x40] sm:$0xff] %v797
      %830 = vst [vmem:[#allocation2 + $0x48] sm:$0xff] %v798
      %831 = vst [vmem:[#allocation2 + $0x50] sm:$0xff] %v799
      %832 = vst [vmem:[#allocation2 + $0x58] sm:$0xff] %v800
      %833 = vst [vmem:[#allocation2 + $0x60] sm:$0xff] %v801
      %834 = vst [vmem:[#allocation2 + $0x68] sm:$0xff] %v802
      %835 = vst [vmem:[#allocation2 + $0x70] sm:$0xff] %v803
      %836 = vst [vmem:[#allocation2 + $0x78] sm:$0xff] %v804
      %837 = vst [vmem:[#allocation2 + $0x80] sm:$0xff] %v805
      %838 = vst [vmem:[#allocation2 + $0x88] sm:$0xff] %v806
      %839 = vst [vmem:[#allocation2 + $0x90] sm:$0xff] %v807
      %840 = vst [vmem:[#allocation2 + $0x98] sm:$0xff] %v808
      %841 = vst [vmem:[#allocation2 + $0xa0] sm:$0xff] %v809
      %842 = vst [vmem:[#allocation2 + $0xa8] sm:$0xff] %v810
      %843 = vst [vmem:[#allocation2 + $0xb0] sm:$0xff] %v811
      %844 = vst [vmem:[#allocation2 + $0xb8] sm:$0xff] %v812
      %845 = vst [vmem:[#allocation2 + $0xc0] sm:$0xff] %v813
      %846 = vst [vmem:[#allocation2 + $0xc8] sm:$0xff] %v814
      %847 = vst [vmem:[#allocation2 + $0xd0] sm:$0xff] %v815
      %848 = vst [vmem:[#allocation2 + $0xd8] sm:$0xff] %v816
      %849 = vst [vmem:[#allocation2 + $0xe0] sm:$0xff] %v817
      %850 = vst [vmem:[#allocation2 + $0xe8] sm:$0xff] %v818
      %851 = vst [vmem:[#allocation2 + $0xf0] sm:$0xff] %v819
      %852 = vst [vmem:[#allocation2 + $0xf8] sm:$0xff] %v820
      %v853 = vld [vmem:[%s199 + $0x2] sm:$0xff]
      %v854 = vld [vmem:[%s199 + $0xa] sm:$0xff]
      %v855 = vld [vmem:[%s199 + $0x1a] sm:$0xff]
      %v856 = vld [vmem:[%s199 + $0x22] sm:$0xff]
      %v857 = vld [vmem:[%s199 + $0x32] sm:$0xff]
      %v858 = vld [vmem:[%s199 + $0x3a] sm:$0xff]
      %v859 = vld [vmem:[%s199 + $0x4a] sm:$0xff]
      %v860 = vld [vmem:[%s199 + $0x52] sm:$0xff]
      %v861 = vld [vmem:[%s199 + $0x62] sm:$0xff]
      %v862 = vld [vmem:[%s199 + $0x6a] sm:$0xff]
      %v863 = vld [vmem:[%s199 + $0x7a] sm:$0xff]
      %v864 = vld [vmem:[%s199 + $0x82] sm:$0xff]
      %v865 = vld [vmem:[%s199 + $0x92] sm:$0xff]
      %v866 = vld [vmem:[%s199 + $0x9a] sm:$0xff]
      %v867 = vld [vmem:[%s199 + $0xaa] sm:$0xff]
      %v868 = vld [vmem:[%s199 + $0xb2] sm:$0xff]
      %v869 = vld [vmem:[%s199 + $0xc2] sm:$0xff]
      %v870 = vld [vmem:[%s199 + $0xca] sm:$0xff]
      %v871 = vld [vmem:[%s199 + $0xda] sm:$0xff]
      %v872 = vld [vmem:[%s199 + $0xe2] sm:$0xff]
      %v873 = vld [vmem:[%s199 + $0xf2] sm:$0xff]
      %v874 = vld [vmem:[%s199 + $0xfa] sm:$0xff]
      %v875 = vld [vmem:[%s199 + $0x10a] sm:$0xff]
      %v876 = vld [vmem:[%s199 + $0x112] sm:$0xff]
      %v877 = vld [vmem:[%s199 + $0x122] sm:$0xff]
      %v878 = vld [vmem:[%s199 + $0x12a] sm:$0xff]
      %v879 = vld [vmem:[%s199 + $0x13a] sm:$0xff]
      %v880 = vld [vmem:[%s199 + $0x142] sm:$0xff]
      %v881 = vld [vmem:[%s199 + $0x152] sm:$0xff]
      %v882 = vld [vmem:[%s199 + $0x15a] sm:$0xff]
      %v883 = vld [vmem:[%s199 + $0x16a] sm:$0xff]
      %v884 = vld [vmem:[%s199 + $0x172] sm:$0xff]
      %v885 = vpack.c.bf16 %v854, %v853
      %v886 = vpack.c.bf16 %v856, %v855
      %v887 = vpack.c.bf16 %v858, %v857
      %v888 = vpack.c.bf16 %v860, %v859
      %v889 = vpack.c.bf16 %v862, %v861
      %v890 = vpack.c.bf16 %v864, %v863
      %v891 = vpack.c.bf16 %v866, %v865
      %v892 = vpack.c.bf16 %v868, %v867
      %v893 = vpack.c.bf16 %v870, %v869
      %v894 = vpack.c.bf16 %v872, %v871
      %v895 = vpack.c.bf16 %v874, %v873
      %v896 = vpack.c.bf16 %v876, %v875
      %v897 = vpack.c.bf16 %v878, %v877
      %v898 = vpack.c.bf16 %v880, %v879
      %v899 = vpack.c.bf16 %v882, %v881
      %v900 = vpack.c.bf16 %v884, %v883
      %s901 = scalar_lea.vmem %s1, 4
      %v902 = vld [vmem:[%s901] sm:$0x3]
      %v904 = vsel %vm249, %v885, 0
      %v907 = vsel %vm249, %v886, 0
      %v910 = vsel %vm249, %v887, 0
      %v913 = vsel %vm249, %v888, 0
      %v916 = vsel %vm249, %v889, 0
      %v919 = vsel %vm249, %v890, 0
      %v922 = vsel %vm249, %v891, 0
      %v925 = vsel %vm249, %v892, 0
      %v928 = vsel %vm249, %v893, 0
      %v931 = vsel %vm249, %v894, 0
      %v934 = vsel %vm249, %v895, 0
      %v937 = vsel %vm249, %v896, 0
      %v940 = vsel %vm249, %v897, 0
      %v943 = vsel %vm249, %v898, 0
      %v946 = vsel %vm249, %v899, 0
      %v949 = vsel %vm249, %v900, 0
      %v952 = vsel %vm298, %v902, 0
      %954 = vmatprep.subr.bf16.mxu0 0
      %955 = vmatpush1.bf16.msra.mxu0 %v952
      %956 = vmatprep.subr.bf16.mxu0 0
      %957 = vmatpush1.bf16.msra.mxu0 0
      %958 = vmatprep.subr.bf16.mxu0 0
      %959 = vmatpush1.bf16.msra.mxu0 0
      %960 = vmatprep.subr.bf16.mxu0 0
      %961 = vmatpush1.bf16.msra.mxu0 0
      %962 = vmatprep.subr.bf16.mxu0 0
      %963 = vmatpush1.bf16.msra.mxu0 0
      %964 = vmatprep.subr.bf16.mxu0 0
      %965 = vmatpush1.bf16.msra.mxu0 0
      %966 = vmatprep.subr.bf16.mxu0 0
      %967 = vmatpush1.bf16.msra.mxu0 0
      %968 = vmatprep.subr.bf16.mxu0 0
      %969 = vmatpush1.bf16.msra.mxu0 0
      %970 = vmatprep.subr.bf16.mxu0 0
      %971 = vmatpush1.bf16.msra.mxu0 0
      %972 = vmatprep.subr.bf16.mxu0 0
      %973 = vmatpush1.bf16.msra.mxu0 0
      %974 = vmatprep.subr.bf16.mxu0 0
      %975 = vmatpush1.bf16.msra.mxu0 0
      %976 = vmatprep.subr.bf16.mxu0 0
      %977 = vmatpush1.bf16.msra.mxu0 0
      %978 = vmatprep.subr.bf16.mxu0 0
      %979 = vmatpush1.bf16.msra.mxu0 0
      %980 = vmatprep.subr.bf16.mxu0 0
      %981 = vmatpush1.bf16.msra.mxu0 0
      %982 = vmatprep.subr.bf16.mxu0 0
      %983 = vmatpush1.bf16.msra.mxu0 0
      %984 = vmatprep.subr.bf16.mxu0 0
      %985 = vmatpush1.bf16.msra.mxu0 0
      %986 = vmatprep.mubr.bf16.mxu0 0
      %987 = vmatmul.mubr.bf16.gmra.mrb[0].mxu0 %v904
      %v988 = vpop.f32.mrb[0].mxu0
      %v989 = vadd.f32 0.0, %v988
      %v990 = vpop.f32.mrb[0].mxu0
      %v991 = vpop.f32.mrb[0].mxu0
      %v992 = vadd.f32 0.0, %v991
      %v993 = vpop.f32.mrb[0].mxu0
      %994 = vmatprep.mubr.bf16.mxu0 0
      %995 = vmatmul.mubr.bf16.gmra.mrb[0].mxu0 %v907
      %v996 = vpop.f32.mrb[0].mxu0
      %v997 = vadd.f32 0.0, %v996
      %v998 = vpop.f32.mrb[0].mxu0
      %v999 = vpop.f32.mrb[0].mxu0
      %v1000 = vadd.f32 0.0, %v999
      %v1001 = vpop.f32.mrb[0].mxu0
      %1002 = vmatprep.mubr.bf16.mxu0 0
      %1003 = vmatmul.mubr.bf16.gmra.mrb[0].mxu0 %v910
      %v1004 = vpop.f32.mrb[0].mxu0
      %v1005 = vadd.f32 0.0, %v1004
      %v1006 = vpop.f32.mrb[0].mxu0
      %v1007 = vpop.f32.mrb[0].mxu0
      %v1008 = vadd.f32 0.0, %v1007
      %v1009 = vpop.f32.mrb[0].mxu0
      %1010 = vmatprep.mubr.bf16.mxu0 0
      %1011 = vmatmul.mubr.bf16.gmra.mrb[0].mxu0 %v913
      %v1012 = vpop.f32.mrb[0].mxu0
      %v1013 = vadd.f32 0.0, %v1012
      %v1014 = vpop.f32.mrb[0].mxu0
      %v1015 = vpop.f32.mrb[0].mxu0
      %v1016 = vadd.f32 0.0, %v1015
      %v1017 = vpop.f32.mrb[0].mxu0
      %1018 = vmatprep.mubr.bf16.mxu0 0
      %1019 = vmatmul.mubr.bf16.gmra.mrb[0].mxu0 %v916
      %v1020 = vpop.f32.mrb[0].mxu0
      %v1021 = vadd.f32 0.0, %v1020
      %v1022 = vpop.f32.mrb[0].mxu0
      %v1023 = vpop.f32.mrb[0].mxu0
      %v1024 = vadd.f32 0.0, %v1023
      %v1025 = vpop.f32.mrb[0].mxu0
      %1026 = vmatprep.mubr.bf16.mxu0 0
      %1027 = vmatmul.mubr.bf16.gmra.mrb[0].mxu0 %v919
      %v1028 = vpop.f32.mrb[0].mxu0
      %v1029 = vadd.f32 0.0, %v1028
      %v1030 = vpop.f32.mrb[0].mxu0
      %v1031 = vpop.f32.mrb[0].mxu0
      %v1032 = vadd.f32 0.0, %v1031
      %v1033 = vpop.f32.mrb[0].mxu0
      %1034 = vmatprep.mubr.bf16.mxu0 0
      %1035 = vmatmul.mubr.bf16.gmra.mrb[0].mxu0 %v922
      %v1036 = vpop.f32.mrb[0].mxu0
      %v1037 = vadd.f32 0.0, %v1036
      %v1038 = vpop.f32.mrb[0].mxu0
      %v1039 = vpop.f32.mrb[0].mxu0
      %v1040 = vadd.f32 0.0, %v1039
      %v1041 = vpop.f32.mrb[0].mxu0
      %1042 = vmatprep.mubr.bf16.mxu0 0
      %1043 = vmatmul.mubr.bf16.gmra.mrb[0].mxu0 %v925
      %v1044 = vpop.f32.mrb[0].mxu0
      %v1045 = vadd.f32 0.0, %v1044
      %v1046 = vpop.f32.mrb[0].mxu0
      %v1047 = vpop.f32.mrb[0].mxu0
      %v1048 = vadd.f32 0.0, %v1047
      %v1049 = vpop.f32.mrb[0].mxu0
      %1050 = vmatprep.mubr.bf16.mxu0 0
      %1051 = vmatmul.mubr.bf16.gmra.mrb[0].mxu0 %v928
      %v1052 = vpop.f32.mrb[0].mxu0
      %v1053 = vadd.f32 0.0, %v1052
      %v1054 = vpop.f32.mrb[0].mxu0
      %v1055 = vpop.f32.mrb[0].mxu0
      %v1056 = vadd.f32 0.0, %v1055
      %v1057 = vpop.f32.mrb[0].mxu0
      %1058 = vmatprep.mubr.bf16.mxu0 0
      %1059 = vmatmul.mubr.bf16.gmra.mrb[0].mxu0 %v931
      %v1060 = vpop.f32.mrb[0].mxu0
      %v1061 = vadd.f32 0.0, %v1060
      %v1062 = vpop.f32.mrb[0].mxu0
      %v1063 = vpop.f32.mrb[0].mxu0
      %v1064 = vadd.f32 0.0, %v1063
      %v1065 = vpop.f32.mrb[0].mxu0
      %1066 = vmatprep.mubr.bf16.mxu0 0
      %1067 = vmatmul.mubr.bf16.gmra.mrb[0].mxu0 %v934
      %v1068 = vpop.f32.mrb[0].mxu0
      %v1069 = vadd.f32 0.0, %v1068
      %v1070 = vpop.f32.mrb[0].mxu0
      %v1071 = vpop.f32.mrb[0].mxu0
      %v1072 = vadd.f32 0.0, %v1071
      %v1073 = vpop.f32.mrb[0].mxu0
      %1074 = vmatprep.mubr.bf16.mxu0 0
      %1075 = vmatmul.mubr.bf16.gmra.mrb[0].mxu0 %v937
      %v1076 = vpop.f32.mrb[0].mxu0
      %v1077 = vadd.f32 0.0, %v1076
      %v1078 = vpop.f32.mrb[0].mxu0
      %v1079 = vpop.f32.mrb[0].mxu0
      %v1080 = vadd.f32 0.0, %v1079
      %v1081 = vpop.f32.mrb[0].mxu0
      %1082 = vmatprep.mubr.bf16.mxu0 0
      %1083 = vmatmul.mubr.bf16.gmra.mrb[0].mxu0 %v940
      %v1084 = vpop.f32.mrb[0].mxu0
      %v1085 = vadd.f32 0.0, %v1084
      %v1086 = vpop.f32.mrb[0].mxu0
      %v1087 = vpop.f32.mrb[0].mxu0
      %v1088 = vadd.f32 0.0, %v1087
      %v1089 = vpop.f32.mrb[0].mxu0
      %1090 = vmatprep.mubr.bf16.mxu0 0
      %1091 = vmatmul.mubr.bf16.gmra.mrb[0].mxu0 %v943
      %v1092 = vpop.f32.mrb[0].mxu0
      %v1093 = vadd.f32 0.0, %v1092
      %v1094 = vpop.f32.mrb[0].mxu0
      %v1095 = vpop.f32.mrb[0].mxu0
      %v1096 = vadd.f32 0.0, %v1095
      %v1097 = vpop.f32.mrb[0].mxu0
      %1098 = vmatprep.mubr.bf16.mxu0 0
      %1099 = vmatmul.mubr.bf16.gmra.mrb[0].mxu0 %v946
      %v1100 = vpop.f32.mrb[0].mxu0
      %v1101 = vadd.f32 0.0, %v1100
      %v1102 = vpop.f32.mrb[0].mxu0
      %v1103 = vpop.f32.mrb[0].mxu0
      %v1104 = vadd.f32 0.0, %v1103
      %v1105 = vpop.f32.mrb[0].mxu0
      %1106 = vmatprep.mubr.bf16.mxu0 0
      %1107 = vmatmul.mubr.bf16.gmra.mrb[0].mxu0 %v949
      %v1108 = vpop.f32.mrb[0].mxu0
      %v1109 = vadd.f32 0.0, %v1108
      %v1110 = vpop.f32.mrb[0].mxu0
      %v1111 = vpop.f32.mrb[0].mxu0
      %v1112 = vadd.f32 0.0, %v1111
      %v1113 = vpop.f32.mrb[0].mxu0
      %1114 = vdwg.mxu0
      %v1115 = vld [vmem:[#allocation2] sm:$0xff]
      %v1116 = vld [vmem:[#allocation2 + $0x8] sm:$0xff]
      %v1117 = vld [vmem:[#allocation2 + $0x10] sm:$0xff]
      %v1118 = vld [vmem:[#allocation2 + $0x18] sm:$0xff]
      %v1119 = vld [vmem:[#allocation2 + $0x20] sm:$0xff]
      %v1120 = vld [vmem:[#allocation2 + $0x28] sm:$0xff]
      %v1121 = vld [vmem:[#allocation2 + $0x30] sm:$0xff]
      %v1122 = vld [vmem:[#allocation2 + $0x38] sm:$0xff]
      %v1123 = vld [vmem:[#allocation2 + $0x40] sm:$0xff]
      %v1124 = vld [vmem:[#allocation2 + $0x48] sm:$0xff]
      %v1125 = vld [vmem:[#allocation2 + $0x50] sm:$0xff]
      %v1126 = vld [vmem:[#allocation2 + $0x58] sm:$0xff]
      %v1127 = vld [vmem:[#allocation2 + $0x60] sm:$0xff]
      %v1128 = vld [vmem:[#allocation2 + $0x68] sm:$0xff]
      %v1129 = vld [vmem:[#allocation2 + $0x70] sm:$0xff]
      %v1130 = vld [vmem:[#allocation2 + $0x78] sm:$0xff]
      %v1131 = vld [vmem:[#allocation2 + $0x80] sm:$0xff]
      %v1132 = vld [vmem:[#allocation2 + $0x88] sm:$0xff]
      %v1133 = vld [vmem:[#allocation2 + $0x90] sm:$0xff]
      %v1134 = vld [vmem:[#allocation2 + $0x98] sm:$0xff]
      %v1135 = vld [vmem:[#allocation2 + $0xa0] sm:$0xff]
      %v1136 = vld [vmem:[#allocation2 + $0xa8] sm:$0xff]
      %v1137 = vld [vmem:[#allocation2 + $0xb0] sm:$0xff]
      %v1138 = vld [vmem:[#allocation2 + $0xb8] sm:$0xff]
      %v1139 = vld [vmem:[#allocation2 + $0xc0] sm:$0xff]
      %v1140 = vld [vmem:[#allocation2 + $0xc8] sm:$0xff]
      %v1141 = vld [vmem:[#allocation2 + $0xd0] sm:$0xff]
      %v1142 = vld [vmem:[#allocation2 + $0xd8] sm:$0xff]
      %v1143 = vld [vmem:[#allocation2 + $0xe0] sm:$0xff]
      %v1144 = vld [vmem:[#allocation2 + $0xe8] sm:$0xff]
      %v1145 = vld [vmem:[#allocation2 + $0xf0] sm:$0xff]
      %v1146 = vld [vmem:[#allocation2 + $0xf8] sm:$0xff]
      %v1147 = vadd.f32 %v1115, %v989
      %v1148 = vadd.f32 %v1116, %v992
      %v1149 = vadd.f32 %v1117, %v997
      %v1150 = vadd.f32 %v1118, %v1000
      %v1151 = vadd.f32 %v1119, %v1005
      %v1152 = vadd.f32 %v1120, %v1008
      %v1153 = vadd.f32 %v1121, %v1013
      %v1154 = vadd.f32 %v1122, %v1016
      %v1155 = vadd.f32 %v1123, %v1021
      %v1156 = vadd.f32 %v1124, %v1024
      %v1157 = vadd.f32 %v1125, %v1029
      %v1158 = vadd.f32 %v1126, %v1032
      %v1159 = vadd.f32 %v1127, %v1037
      %v1160 = vadd.f32 %v1128, %v1040
      %v1161 = vadd.f32 %v1129, %v1045
      %v1162 = vadd.f32 %v1130, %v1048
      %v1163 = vadd.f32 %v1131, %v1053
      %v1164 = vadd.f32 %v1132, %v1056
      %v1165 = vadd.f32 %v1133, %v1061
      %v1166 = vadd.f32 %v1134, %v1064
      %v1167 = vadd.f32 %v1135, %v1069
      %v1168 = vadd.f32 %v1136, %v1072
      %v1169 = vadd.f32 %v1137, %v1077
      %v1170 = vadd.f32 %v1138, %v1080
      %v1171 = vadd.f32 %v1139, %v1085
      %v1172 = vadd.f32 %v1140, %v1088
      %v1173 = vadd.f32 %v1141, %v1093
      %v1174 = vadd.f32 %v1142, %v1096
      %v1175 = vadd.f32 %v1143, %v1101
      %v1176 = vadd.f32 %v1144, %v1104
      %v1177 = vadd.f32 %v1145, %v1109
      %v1178 = vadd.f32 %v1146, %v1112
      %1179 = vst [vmem:[#allocation2] sm:$0xff] %v1147
      %1180 = vst [vmem:[#allocation2 + $0x8] sm:$0xff] %v1148
      %1181 = vst [vmem:[#allocation2 + $0x10] sm:$0xff] %v1149
      %1182 = vst [vmem:[#allocation2 + $0x18] sm:$0xff] %v1150
      %1183 = vst [vmem:[#allocation2 + $0x20] sm:$0xff] %v1151
      %1184 = vst [vmem:[#allocation2 + $0x28] sm:$0xff] %v1152
      %1185 = vst [vmem:[#allocation2 + $0x30] sm:$0xff] %v1153
      %1186 = vst [vmem:[#allocation2 + $0x38] sm:$0xff] %v1154
      %1187 = vst [vmem:[#allocation2 + $0x40] sm:$0xff] %v1155
      %1188 = vst [vmem:[#allocation2 + $0x48] sm:$0xff] %v1156
      %1189 = vst [vmem:[#allocation2 + $0x50] sm:$0xff] %v1157
      %1190 = vst [vmem:[#allocation2 + $0x58] sm:$0xff] %v1158
      %1191 = vst [vmem:[#allocation2 + $0x60] sm:$0xff] %v1159
      %1192 = vst [vmem:[#allocation2 + $0x68] sm:$0xff] %v1160
      %1193 = vst [vmem:[#allocation2 + $0x70] sm:$0xff] %v1161
      %1194 = vst [vmem:[#allocation2 + $0x78] sm:$0xff] %v1162
      %1195 = vst [vmem:[#allocation2 + $0x80] sm:$0xff] %v1163
      %1196 = vst [vmem:[#allocation2 + $0x88] sm:$0xff] %v1164
      %1197 = vst [vmem:[#allocation2 + $0x90] sm:$0xff] %v1165
      %1198 = vst [vmem:[#allocation2 + $0x98] sm:$0xff] %v1166
      %1199 = vst [vmem:[#allocation2 + $0xa0] sm:$0xff] %v1167
      %1200 = vst [vmem:[#allocation2 + $0xa8] sm:$0xff] %v1168
      %1201 = vst [vmem:[#allocation2 + $0xb0] sm:$0xff] %v1169
      %1202 = vst [vmem:[#allocation2 + $0xb8] sm:$0xff] %v1170
      %1203 = vst [vmem:[#allocation2 + $0xc0] sm:$0xff] %v1171
      %1204 = vst [vmem:[#allocation2 + $0xc8] sm:$0xff] %v1172
      %1205 = vst [vmem:[#allocation2 + $0xd0] sm:$0xff] %v1173
      %1206 = vst [vmem:[#allocation2 + $0xd8] sm:$0xff] %v1174
      %1207 = vst [vmem:[#allocation2 + $0xe0] sm:$0xff] %v1175
      %1208 = vst [vmem:[#allocation2 + $0xe8] sm:$0xff] %v1176
      %1209 = vst [vmem:[#allocation2 + $0xf0] sm:$0xff] %v1177
      %1210 = vst [vmem:[#allocation2 + $0xf8] sm:$0xff] %v1178
      %s1211 = sadd.s32 %s197, 1
      %s1212 = smul.u32 %s1211, 24
      %s1213 = scalar_lea.vmem %s184, %s1212
      %v1214 = vld [vmem:[%s1213] sm:$0xff]
      %v1215 = vld [vmem:[%s1213 + $0x8] sm:$0xff]
      %v1216 = vld [vmem:[%s1213 + $0x18] sm:$0xff]
      %v1217 = vld [vmem:[%s1213 + $0x20] sm:$0xff]
      %v1218 = vld [vmem:[%s1213 + $0x30] sm:$0xff]
      %v1219 = vld [vmem:[%s1213 + $0x38] sm:$0xff]
      %v1220 = vld [vmem:[%s1213 + $0x48] sm:$0xff]
      %v1221 = vld [vmem:[%s1213 + $0x50] sm:$0xff]
      %v1222 = vld [vmem:[%s1213 + $0x60] sm:$0xff]
      %v1223 = vld [vmem:[%s1213 + $0x68] sm:$0xff]
      %v1224 = vld [vmem:[%s1213 + $0x78] sm:$0xff]
      %v1225 = vld [vmem:[%s1213 + $0x80] sm:$0xff]
      %v1226 = vld [vmem:[%s1213 + $0x90] sm:$0xff]
      %v1227 = vld [vmem:[%s1213 + $0x98] sm:$0xff]
      %v1228 = vld [vmem:[%s1213 + $0xa8] sm:$0xff]
      %v1229 = vld [vmem:[%s1213 + $0xb0] sm:$0xff]
      %v1230 = vld [vmem:[%s1213 + $0xc0] sm:$0xff]
      %v1231 = vld [vmem:[%s1213 + $0xc8] sm:$0xff]
      %v1232 = vld [vmem:[%s1213 + $0xd8] sm:$0xff]
      %v1233 = vld [vmem:[%s1213 + $0xe0] sm:$0xff]
      %v1234 = vld [vmem:[%s1213 + $0xf0] sm:$0xff]
      %v1235 = vld [vmem:[%s1213 + $0xf8] sm:$0xff]
      %v1236 = vld [vmem:[%s1213 + $0x108] sm:$0xff]
      %v1237 = vld [vmem:[%s1213 + $0x110] sm:$0xff]
      %v1238 = vld [vmem:[%s1213 + $0x120] sm:$0xff]
      %v1239 = vld [vmem:[%s1213 + $0x128] sm:$0xff]
      %v1240 = vld [vmem:[%s1213 + $0x138] sm:$0xff]
      %v1241 = vld [vmem:[%s1213 + $0x140] sm:$0xff]
      %v1242 = vld [vmem:[%s1213 + $0x150] sm:$0xff]
      %v1243 = vld [vmem:[%s1213 + $0x158] sm:$0xff]
      %v1244 = vld [vmem:[%s1213 + $0x168] sm:$0xff]
      %v1245 = vld [vmem:[%s1213 + $0x170] sm:$0xff]
      %v1246 = vpack.c.bf16 %v1215, %v1214
      %v1247 = vpack.c.bf16 %v1217, %v1216
      %v1248 = vpack.c.bf16 %v1219, %v1218
      %v1249 = vpack.c.bf16 %v1221, %v1220
      %v1250 = vpack.c.bf16 %v1223, %v1222
      %v1251 = vpack.c.bf16 %v1225, %v1224
      %v1252 = vpack.c.bf16 %v1227, %v1226
      %v1253 = vpack.c.bf16 %v1229, %v1228
      %v1254 = vpack.c.bf16 %v1231, %v1230
      %v1255 = vpack.c.bf16 %v1233, %v1232
      %v1256 = vpack.c.bf16 %v1235, %v1234
      %v1257 = vpack.c.bf16 %v1237, %v1236
      %v1258 = vpack.c.bf16 %v1239, %v1238
      %v1259 = vpack.c.bf16 %v1241, %v1240
      %v1260 = vpack.c.bf16 %v1243, %v1242
      %v1261 = vpack.c.bf16 %v1245, %v1244
      %s1262 = scalar_lea.vmem %s1, 6
      %v1263 = vld [vmem:[%s1262] sm:$0x3]
      %v1265 = vsel %vm249, %v1246, 0
      %v1268 = vsel %vm249, %v1247, 0
      %v1271 = vsel %vm249, %v1248, 0
      %v1274 = vsel %vm249, %v1249, 0
      %v1277 = vsel %vm249, %v1250, 0
      %v1280 = vsel %vm249, %v1251, 0
      %v1283 = vsel %vm249, %v1252, 0
      %v1286 = vsel %vm249, %v1253, 0
      %v1289 = vsel %vm249, %v1254, 0
      %v1292 = vsel %vm249, %v1255, 0
      %v1295 = vsel %vm249, %v1256, 0
      %v1298 = vsel %vm249, %v1257, 0
      %v1301 = vsel %vm249, %v1258, 0
      %v1304 = vsel %vm249, %v1259, 0
      %v1307 = vsel %vm249, %v1260, 0
      %v1310 = vsel %vm249, %v1261, 0
      %v1313 = vsel %vm298, %v1263, 0
      %1315 = vmatprep.subr.bf16.mxu0 0
      %1316 = vmatpush1.bf16.msra.mxu0 %v1313
      %1317 = vmatprep.subr.bf16.mxu0 0
      %1318 = vmatpush1.bf16.msra.mxu0 0
      %1319 = vmatprep.subr.bf16.mxu0 0
      %1320 = vmatpush1.bf16.msra.mxu0 0
      %1321 = vmatprep.subr.bf16.mxu0 0
      %1322 = vmatpush1.bf16.msra.mxu0 0
      %1323 = vmatprep.subr.bf16.mxu0 0
      %1324 = vmatpush1.bf16.msra.mxu0 0
      %1325 = vmatprep.subr.bf16.mxu0 0
      %1326 = vmatpush1.bf16.msra.mxu0 0
      %1327 = vmatprep.subr.bf16.mxu0 0
      %1328 = vmatpush1.bf16.msra.mxu0 0
      %1329 = vmatprep.subr.bf16.mxu0 0
      %1330 = vmatpush1.bf16.msra.mxu0 0
      %1331 = vmatprep.subr.bf16.mxu0 0
      %1332 = vmatpush1.bf16.msra.mxu0 0
      %1333 = vmatprep.subr.bf16.mxu0 0
      %1334 = vmatpush1.bf16.msra.mxu0 0
      %1335 = vmatprep.subr.bf16.mxu0 0
      %1336 = vmatpush1.bf16.msra.mxu0 0
      %1337 = vmatprep.subr.bf16.mxu0 0
      %1338 = vmatpush1.bf16.msra.mxu0 0
      %1339 = vmatprep.subr.bf16.mxu0 0
      %1340 = vmatpush1.bf16.msra.mxu0 0
      %1341 = vmatprep.subr.bf16.mxu0 0
      %1342 = vmatpush1.bf16.msra.mxu0 0
      %1343 = vmatprep.subr.bf16.mxu0 0
      %1344 = vmatpush1.bf16.msra.mxu0 0
      %1345 = vmatprep.subr.bf16.mxu0 0
      %1346 = vmatpush1.bf16.msra.mxu0 0
      %1347 = vmatprep.mubr.bf16.mxu0 0
      %1348 = vmatmul.mubr.bf16.gmra.mrb[0].mxu0 %v1265
      %v1349 = vpop.f32.mrb[0].mxu0
      %v1350 = vadd.f32 0.0, %v1349
      %v1351 = vpop.f32.mrb[0].mxu0
      %v1352 = vpop.f32.mrb[0].mxu0
      %v1353 = vadd.f32 0.0, %v1352
      %v1354 = vpop.f32.mrb[0].mxu0
      %1355 = vmatprep.mubr.bf16.mxu0 0
      %1356 = vmatmul.mubr.bf16.gmra.mrb[0].mxu0 %v1268
      %v1357 = vpop.f32.mrb[0].mxu0
      %v1358 = vadd.f32 0.0, %v1357
      %v1359 = vpop.f32.mrb[0].mxu0
      %v1360 = vpop.f32.mrb[0].mxu0
      %v1361 = vadd.f32 0.0, %v1360
      %v1362 = vpop.f32.mrb[0].mxu0
      %1363 = vmatprep.mubr.bf16.mxu0 0
      %1364 = vmatmul.mubr.bf16.gmra.mrb[0].mxu0 %v1271
      %v1365 = vpop.f32.mrb[0].mxu0
      %v1366 = vadd.f32 0.0, %v1365
      %v1367 = vpop.f32.mrb[0].mxu0
      %v1368 = vpop.f32.mrb[0].mxu0
      %v1369 = vadd.f32 0.0, %v1368
      %v1370 = vpop.f32.mrb[0].mxu0
      %1371 = vmatprep.mubr.bf16.mxu0 0
      %1372 = vmatmul.mubr.bf16.gmra.mrb[0].mxu0 %v1274
      %v1373 = vpop.f32.mrb[0].mxu0
      %v1374 = vadd.f32 0.0, %v1373
      %v1375 = vpop.f32.mrb[0].mxu0
      %v1376 = vpop.f32.mrb[0].mxu0
      %v1377 = vadd.f32 0.0, %v1376
      %v1378 = vpop.f32.mrb[0].mxu0
      %1379 = vmatprep.mubr.bf16.mxu0 0
      %1380 = vmatmul.mubr.bf16.gmra.mrb[0].mxu0 %v1277
      %v1381 = vpop.f32.mrb[0].mxu0
      %v1382 = vadd.f32 0.0, %v1381
      %v1383 = vpop.f32.mrb[0].mxu0
      %v1384 = vpop.f32.mrb[0].mxu0
      %v1385 = vadd.f32 0.0, %v1384
      %v1386 = vpop.f32.mrb[0].mxu0
      %1387 = vmatprep.mubr.bf16.mxu0 0
      %1388 = vmatmul.mubr.bf16.gmra.mrb[0].mxu0 %v1280
      %v1389 = vpop.f32.mrb[0].mxu0
      %v1390 = vadd.f32 0.0, %v1389
      %v1391 = vpop.f32.mrb[0].mxu0
      %v1392 = vpop.f32.mrb[0].mxu0
      %v1393 = vadd.f32 0.0, %v1392
      %v1394 = vpop.f32.mrb[0].mxu0
      %1395 = vmatprep.mubr.bf16.mxu0 0
      %1396 = vmatmul.mubr.bf16.gmra.mrb[0].mxu0 %v1283
      %v1397 = vpop.f32.mrb[0].mxu0
      %v1398 = vadd.f32 0.0, %v1397
      %v1399 = vpop.f32.mrb[0].mxu0
      %v1400 = vpop.f32.mrb[0].mxu0
      %v1401 = vadd.f32 0.0, %v1400
      %v1402 = vpop.f32.mrb[0].mxu0
      %1403 = vmatprep.mubr.bf16.mxu0 0
      %1404 = vmatmul.mubr.bf16.gmra.mrb[0].mxu0 %v1286
      %v1405 = vpop.f32.mrb[0].mxu0
      %v1406 = vadd.f32 0.0, %v1405
      %v1407 = vpop.f32.mrb[0].mxu0
      %v1408 = vpop.f32.mrb[0].mxu0
      %v1409 = vadd.f32 0.0, %v1408
      %v1410 = vpop.f32.mrb[0].mxu0
      %1411 = vmatprep.mubr.bf16.mxu0 0
      %1412 = vmatmul.mubr.bf16.gmra.mrb[0].mxu0 %v1289
      %v1413 = vpop.f32.mrb[0].mxu0
      %v1414 = vadd.f32 0.0, %v1413
      %v1415 = vpop.f32.mrb[0].mxu0
      %v1416 = vpop.f32.mrb[0].mxu0
      %v1417 = vadd.f32 0.0, %v1416
      %v1418 = vpop.f32.mrb[0].mxu0
      %1419 = vmatprep.mubr.bf16.mxu0 0
      %1420 = vmatmul.mubr.bf16.gmra.mrb[0].mxu0 %v1292
      %v1421 = vpop.f32.mrb[0].mxu0
      %v1422 = vadd.f32 0.0, %v1421
      %v1423 = vpop.f32.mrb[0].mxu0
      %v1424 = vpop.f32.mrb[0].mxu0
      %v1425 = vadd.f32 0.0, %v1424
      %v1426 = vpop.f32.mrb[0].mxu0
      %1427 = vmatprep.mubr.bf16.mxu0 0
      %1428 = vmatmul.mubr.bf16.gmra.mrb[0].mxu0 %v1295
      %v1429 = vpop.f32.mrb[0].mxu0
      %v1430 = vadd.f32 0.0, %v1429
      %v1431 = vpop.f32.mrb[0].mxu0
      %v1432 = vpop.f32.mrb[0].mxu0
      %v1433 = vadd.f32 0.0, %v1432
      %v1434 = vpop.f32.mrb[0].mxu0
      %1435 = vmatprep.mubr.bf16.mxu0 0
      %1436 = vmatmul.mubr.bf16.gmra.mrb[0].mxu0 %v1298
      %v1437 = vpop.f32.mrb[0].mxu0
      %v1438 = vadd.f32 0.0, %v1437
      %v1439 = vpop.f32.mrb[0].mxu0
      %v1440 = vpop.f32.mrb[0].mxu0
      %v1441 = vadd.f32 0.0, %v1440
      %v1442 = vpop.f32.mrb[0].mxu0
      %1443 = vmatprep.mubr.bf16.mxu0 0
      %1444 = vmatmul.mubr.bf16.gmra.mrb[0].mxu0 %v1301
      %v1445 = vpop.f32.mrb[0].mxu0
      %v1446 = vadd.f32 0.0, %v1445
      %v1447 = vpop.f32.mrb[0].mxu0
      %v1448 = vpop.f32.mrb[0].mxu0
      %v1449 = vadd.f32 0.0, %v1448
      %v1450 = vpop.f32.mrb[0].mxu0
      %1451 = vmatprep.mubr.bf16.mxu0 0
      %1452 = vmatmul.mubr.bf16.gmra.mrb[0].mxu0 %v1304
      %v1453 = vpop.f32.mrb[0].mxu0
      %v1454 = vadd.f32 0.0, %v1453
      %v1455 = vpop.f32.mrb[0].mxu0
      %v1456 = vpop.f32.mrb[0].mxu0
      %v1457 = vadd.f32 0.0, %v1456
      %v1458 = vpop.f32.mrb[0].mxu0
      %1459 = vmatprep.mubr.bf16.mxu0 0
      %1460 = vmatmul.mubr.bf16.gmra.mrb[0].mxu0 %v1307
      %v1461 = vpop.f32.mrb[0].mxu0
      %v1462 = vadd.f32 0.0, %v1461
      %v1463 = vpop.f32.mrb[0].mxu0
      %v1464 = vpop.f32.mrb[0].mxu0
      %v1465 = vadd.f32 0.0, %v1464
      %v1466 = vpop.f32.mrb[0].mxu0
      %1467 = vmatprep.mubr.bf16.mxu0 0
      %1468 = vmatmul.mubr.bf16.gmra.mrb[0].mxu0 %v1310
      %v1469 = vpop.f32.mrb[0].mxu0
      %v1470 = vadd.f32 0.0, %v1469
      %v1471 = vpop.f32.mrb[0].mxu0
      %v1472 = vpop.f32.mrb[0].mxu0
      %v1473 = vadd.f32 0.0, %v1472
      %v1474 = vpop.f32.mrb[0].mxu0
      %1475 = vdwg.mxu0
      %v1476 = vld [vmem:[#allocation2] sm:$0xff]
      %v1477 = vld [vmem:[#allocation2 + $0x8] sm:$0xff]
      %v1478 = vld [vmem:[#allocation2 + $0x10] sm:$0xff]
      %v1479 = vld [vmem:[#allocation2 + $0x18] sm:$0xff]
      %v1480 = vld [vmem:[#allocation2 + $0x20] sm:$0xff]
      %v1481 = vld [vmem:[#allocation2 + $0x28] sm:$0xff]
      %v1482 = vld [vmem:[#allocation2 + $0x30] sm:$0xff]
      %v1483 = vld [vmem:[#allocation2 + $0x38] sm:$0xff]
      %v1484 = vld [vmem:[#allocation2 + $0x40] sm:$0xff]
      %v1485 = vld [vmem:[#allocation2 + $0x48] sm:$0xff]
      %v1486 = vld [vmem:[#allocation2 + $0x50] sm:$0xff]
      %v1487 = vld [vmem:[#allocation2 + $0x58] sm:$0xff]
      %v1488 = vld [vmem:[#allocation2 + $0x60] sm:$0xff]
      %v1489 = vld [vmem:[#allocation2 + $0x68] sm:$0xff]
      %v1490 = vld [vmem:[#allocation2 + $0x70] sm:$0xff]
      %v1491 = vld [vmem:[#allocation2 + $0x78] sm:$0xff]
      %v1492 = vld [vmem:[#allocation2 + $0x80] sm:$0xff]
      %v1493 = vld [vmem:[#allocation2 + $0x88] sm:$0xff]
      %v1494 = vld [vmem:[#allocation2 + $0x90] sm:$0xff]
      %v1495 = vld [vmem:[#allocation2 + $0x98] sm:$0xff]
      %v1496 = vld [vmem:[#allocation2 + $0xa0] sm:$0xff]
      %v1497 = vld [vmem:[#allocation2 + $0xa8] sm:$0xff]
      %v1498 = vld [vmem:[#allocation2 + $0xb0] sm:$0xff]
      %v1499 = vld [vmem:[#allocation2 + $0xb8] sm:$0xff]
      %v1500 = vld [vmem:[#allocation2 + $0xc0] sm:$0xff]
      %v1501 = vld [vmem:[#allocation2 + $0xc8] sm:$0xff]
      %v1502 = vld [vmem:[#allocation2 + $0xd0] sm:$0xff]
      %v1503 = vld [vmem:[#allocation2 + $0xd8] sm:$0xff]
      %v1504 = vld [vmem:[#allocation2 + $0xe0] sm:$0xff]
      %v1505 = vld [vmem:[#allocation2 + $0xe8] sm:$0xff]
      %v1506 = vld [vmem:[#allocation2 + $0xf0] sm:$0xff]
      %v1507 = vld [vmem:[#allocation2 + $0xf8] sm:$0xff]
      %v1508 = vadd.f32 %v1476, %v1350
      %v1509 = vadd.f32 %v1477, %v1353
      %v1510 = vadd.f32 %v1478, %v1358
      %v1511 = vadd.f32 %v1479, %v1361
      %v1512 = vadd.f32 %v1480, %v1366
      %v1513 = vadd.f32 %v1481, %v1369
      %v1514 = vadd.f32 %v1482, %v1374
      %v1515 = vadd.f32 %v1483, %v1377
      %v1516 = vadd.f32 %v1484, %v1382
      %v1517 = vadd.f32 %v1485, %v1385
      %v1518 = vadd.f32 %v1486, %v1390
      %v1519 = vadd.f32 %v1487, %v1393
      %v1520 = vadd.f32 %v1488, %v1398
      %v1521 = vadd.f32 %v1489, %v1401
      %v1522 = vadd.f32 %v1490, %v1406
      %v1523 = vadd.f32 %v1491, %v1409
      %v1524 = vadd.f32 %v1492, %v1414
      %v1525 = vadd.f32 %v1493, %v1417
      %v1526 = vadd.f32 %v1494, %v1422
      %v1527 = vadd.f32 %v1495, %v1425
      %v1528 = vadd.f32 %v1496, %v1430
      %v1529 = vadd.f32 %v1497, %v1433
      %v1530 = vadd.f32 %v1498, %v1438
      %v1531 = vadd.f32 %v1499, %v1441
      %v1532 = vadd.f32 %v1500, %v1446
      %v1533 = vadd.f32 %v1501, %v1449
      %v1534 = vadd.f32 %v1502, %v1454
      %v1535 = vadd.f32 %v1503, %v1457
      %v1536 = vadd.f32 %v1504, %v1462
      %v1537 = vadd.f32 %v1505, %v1465
      %v1538 = vadd.f32 %v1506, %v1470
      %v1539 = vadd.f32 %v1507, %v1473
      %1540 = vst [vmem:[#allocation2] sm:$0xff] %v1508
      %1541 = vst [vmem:[#allocation2 + $0x8] sm:$0xff] %v1509
      %1542 = vst [vmem:[#allocation2 + $0x10] sm:$0xff] %v1510
      %1543 = vst [vmem:[#allocation2 + $0x18] sm:$0xff] %v1511
      %1544 = vst [vmem:[#allocation2 + $0x20] sm:$0xff] %v1512
      %1545 = vst [vmem:[#allocation2 + $0x28] sm:$0xff] %v1513
      %1546 = vst [vmem:[#allocation2 + $0x30] sm:$0xff] %v1514
      %1547 = vst [vmem:[#allocation2 + $0x38] sm:$0xff] %v1515
      %1548 = vst [vmem:[#allocation2 + $0x40] sm:$0xff] %v1516
      %1549 = vst [vmem:[#allocation2 + $0x48] sm:$0xff] %v1517
      %1550 = vst [vmem:[#allocation2 + $0x50] sm:$0xff] %v1518
      %1551 = vst [vmem:[#allocation2 + $0x58] sm:$0xff] %v1519
      %1552 = vst [vmem:[#allocation2 + $0x60] sm:$0xff] %v1520
      %1553 = vst [vmem:[#allocation2 + $0x68] sm:$0xff] %v1521
      %1554 = vst [vmem:[#allocation2 + $0x70] sm:$0xff] %v1522
      %1555 = vst [vmem:[#allocation2 + $0x78] sm:$0xff] %v1523
      %1556 = vst [vmem:[#allocation2 + $0x80] sm:$0xff] %v1524
      %1557 = vst [vmem:[#allocation2 + $0x88] sm:$0xff] %v1525
      %1558 = vst [vmem:[#allocation2 + $0x90] sm:$0xff] %v1526
      %1559 = vst [vmem:[#allocation2 + $0x98] sm:$0xff] %v1527
      %1560 = vst [vmem:[#allocation2 + $0xa0] sm:$0xff] %v1528
      %1561 = vst [vmem:[#allocation2 + $0xa8] sm:$0xff] %v1529
      %1562 = vst [vmem:[#allocation2 + $0xb0] sm:$0xff] %v1530
      %1563 = vst [vmem:[#allocation2 + $0xb8] sm:$0xff] %v1531
      %1564 = vst [vmem:[#allocation2 + $0xc0] sm:$0xff] %v1532
      %1565 = vst [vmem:[#allocation2 + $0xc8] sm:$0xff] %v1533
      %1566 = vst [vmem:[#allocation2 + $0xd0] sm:$0xff] %v1534
      %1567 = vst [vmem:[#allocation2 + $0xd8] sm:$0xff] %v1535
      %1568 = vst [vmem:[#allocation2 + $0xe0] sm:$0xff] %v1536
      %1569 = vst [vmem:[#allocation2 + $0xe8] sm:$0xff] %v1537
      %1570 = vst [vmem:[#allocation2 + $0xf0] sm:$0xff] %v1538
      %1571 = vst [vmem:[#allocation2 + $0xf8] sm:$0xff] %v1539
      %v1572 = vld [vmem:[%s1213 + $0x1] sm:$0xff]
      %v1573 = vld [vmem:[%s1213 + $0x9] sm:$0xff]
      %v1574 = vld [vmem:[%s1213 + $0x19] sm:$0xff]
      %v1575 = vld [vmem:[%s1213 + $0x21] sm:$0xff]
      %v1576 = vld [vmem:[%s1213 + $0x31] sm:$0xff]
      %v1577 = vld [vmem:[%s1213 + $0x39] sm:$0xff]
      %v1578 = vld [vmem:[%s1213 + $0x49] sm:$0xff]
      %v1579 = vld [vmem:[%s1213 + $0x51] sm:$0xff]
      %v1580 = vld [vmem:[%s1213 + $0x61] sm:$0xff]
      %v1581 = vld [vmem:[%s1213 + $0x69] sm:$0xff]
      %v1582 = vld [vmem:[%s1213 + $0x79] sm:$0xff]
      %v1583 = vld [vmem:[%s1213 + $0x81] sm:$0xff]
      %v1584 = vld [vmem:[%s1213 + $0x91] sm:$0xff]
      %v1585 = vld [vmem:[%s1213 + $0x99] sm:$0xff]
      %v1586 = vld [vmem:[%s1213 + $0xa9] sm:$0xff]
      %v1587 = vld [vmem:[%s1213 + $0xb1] sm:$0xff]
      %v1588 = vld [vmem:[%s1213 + $0xc1] sm:$0xff]
      %v1589 = vld [vmem:[%s1213 + $0xc9] sm:$0xff]
      %v1590 = vld [vmem:[%s1213 + $0xd9] sm:$0xff]
      %v1591 = vld [vmem:[%s1213 + $0xe1] sm:$0xff]
      %v1592 = vld [vmem:[%s1213 + $0xf1] sm:$0xff]
      %v1593 = vld [vmem:[%s1213 + $0xf9] sm:$0xff]
      %v1594 = vld [vmem:[%s1213 + $0x109] sm:$0xff]
      %v1595 = vld [vmem:[%s1213 + $0x111] sm:$0xff]
      %v1596 = vld [vmem:[%s1213 + $0x121] sm:$0xff]
      %v1597 = vld [vmem:[%s1213 + $0x129] sm:$0xff]
      %v1598 = vld [vmem:[%s1213 + $0x139] sm:$0xff]
      %v1599 = vld [vmem:[%s1213 + $0x141] sm:$0xff]
      %v1600 = vld [vmem:[%s1213 + $0x151] sm:$0xff]
      %v1601 = vld [vmem:[%s1213 + $0x159] sm:$0xff]
      %v1602 = vld [vmem:[%s1213 + $0x169] sm:$0xff]
      %v1603 = vld [vmem:[%s1213 + $0x171] sm:$0xff]
      %v1604 = vpack.c.bf16 %v1573, %v1572
      %v1605 = vpack.c.bf16 %v1575, %v1574
      %v1606 = vpack.c.bf16 %v1577, %v1576
      %v1607 = vpack.c.bf16 %v1579, %v1578
      %v1608 = vpack.c.bf16 %v1581, %v1580
      %v1609 = vpack.c.bf16 %v1583, %v1582
      %v1610 = vpack.c.bf16 %v1585, %v1584
      %v1611 = vpack.c.bf16 %v1587, %v1586
      %v1612 = vpack.c.bf16 %v1589, %v1588
      %v1613 = vpack.c.bf16 %v1591, %v1590
      %v1614 = vpack.c.bf16 %v1593, %v1592
      %v1615 = vpack.c.bf16 %v1595, %v1594
      %v1616 = vpack.c.bf16 %v1597, %v1596
      %v1617 = vpack.c.bf16 %v1599, %v1598
      %v1618 = vpack.c.bf16 %v1601, %v1600
      %v1619 = vpack.c.bf16 %v1603, %v1602
      %s1620 = scalar_lea.vmem %s1, 8
      %v1621 = vld [vmem:[%s1620] sm:$0x3]
      %v1623 = vsel %vm249, %v1604, 0
      %v1626 = vsel %vm249, %v1605, 0
      %v1629 = vsel %vm249, %v1606, 0
      %v1632 = vsel %vm249, %v1607, 0
      %v1635 = vsel %vm249, %v1608, 0
      %v1638 = vsel %vm249, %v1609, 0
      %v1641 = vsel %vm249, %v1610, 0
      %v1644 = vsel %vm249, %v1611, 0
      %v1647 = vsel %vm249, %v1612, 0
      %v1650 = vsel %vm249, %v1613, 0
      %v1653 = vsel %vm249, %v1614, 0
      %v1656 = vsel %vm249, %v1615, 0
      %v1659 = vsel %vm249, %v1616, 0
      %v1662 = vsel %vm249, %v1617, 0
      %v1665 = vsel %vm249, %v1618, 0
      %v1668 = vsel %vm249, %v1619, 0
      %v1671 = vsel %vm298, %v1621, 0
      %1673 = vmatprep.subr.bf16.mxu0 0
      %1674 = vmatpush1.bf16.msra.mxu0 %v1671
      %1675 = vmatprep.subr.bf16.mxu0 0
      %1676 = vmatpush1.bf16.msra.mxu0 0
      %1677 = vmatprep.subr.bf16.mxu0 0
      %1678 = vmatpush1.bf16.msra.mxu0 0
      %1679 = vmatprep.subr.bf16.mxu0 0
      %1680 = vmatpush1.bf16.msra.mxu0 0
      %1681 = vmatprep.subr.bf16.mxu0 0
      %1682 = vmatpush1.bf16.msra.mxu0 0
      %1683 = vmatprep.subr.bf16.mxu0 0
      %1684 = vmatpush1.bf16.msra.mxu0 0
      %1685 = vmatprep.subr.bf16.mxu0 0
      %1686 = vmatpush1.bf16.msra.mxu0 0
      %1687 = vmatprep.subr.bf16.mxu0 0
      %1688 = vmatpush1.bf16.msra.mxu0 0
      %1689 = vmatprep.subr.bf16.mxu0 0
      %1690 = vmatpush1.bf16.msra.mxu0 0
      %1691 = vmatprep.subr.bf16.mxu0 0
      %1692 = vmatpush1.bf16.msra.mxu0 0
      %1693 = vmatprep.subr.bf16.mxu0 0
      %1694 = vmatpush1.bf16.msra.mxu0 0
      %1695 = vmatprep.subr.bf16.mxu0 0
      %1696 = vmatpush1.bf16.msra.mxu0 0
      %1697 = vmatprep.subr.bf16.mxu0 0
      %1698 = vmatpush1.bf16.msra.mxu0 0
      %1699 = vmatprep.subr.bf16.mxu0 0
      %1700 = vmatpush1.bf16.msra.mxu0 0
      %1701 = vmatprep.subr.bf16.mxu0 0
      %1702 = vmatpush1.bf16.msra.mxu0 0
      %1703 = vmatprep.subr.bf16.mxu0 0
      %1704 = vmatpush1.bf16.msra.mxu0 0
      %1705 = vmatprep.mubr.bf16.mxu0 0
      %1706 = vmatmul.mubr.bf16.gmra.mrb[0].mxu0 %v1623
      %v1707 = vpop.f32.mrb[0].mxu0
      %v1708 = vadd.f32 0.0, %v1707
      %v1709 = vpop.f32.mrb[0].mxu0
      %v1710 = vpop.f32.mrb[0].mxu0
      %v1711 = vadd.f32 0.0, %v1710
      %v1712 = vpop.f32.mrb[0].mxu0
      %1713 = vmatprep.mubr.bf16.mxu0 0
      %1714 = vmatmul.mubr.bf16.gmra.mrb[0].mxu0 %v1626
      %v1715 = vpop.f32.mrb[0].mxu0
      %v1716 = vadd.f32 0.0, %v1715
      %v1717 = vpop.f32.mrb[0].mxu0
      %v1718 = vpop.f32.mrb[0].mxu0
      %v1719 = vadd.f32 0.0, %v1718
      %v1720 = vpop.f32.mrb[0].mxu0
      %1721 = vmatprep.mubr.bf16.mxu0 0
      %1722 = vmatmul.mubr.bf16.gmra.mrb[0].mxu0 %v1629
      %v1723 = vpop.f32.mrb[0].mxu0
      %v1724 = vadd.f32 0.0, %v1723
      %v1725 = vpop.f32.mrb[0].mxu0
      %v1726 = vpop.f32.mrb[0].mxu0
      %v1727 = vadd.f32 0.0, %v1726
      %v1728 = vpop.f32.mrb[0].mxu0
      %1729 = vmatprep.mubr.bf16.mxu0 0
      %1730 = vmatmul.mubr.bf16.gmra.mrb[0].mxu0 %v1632
      %v1731 = vpop.f32.mrb[0].mxu0
      %v1732 = vadd.f32 0.0, %v1731
      %v1733 = vpop.f32.mrb[0].mxu0
      %v1734 = vpop.f32.mrb[0].mxu0
      %v1735 = vadd.f32 0.0, %v1734
      %v1736 = vpop.f32.mrb[0].mxu0
      %1737 = vmatprep.mubr.bf16.mxu0 0
      %1738 = vmatmul.mubr.bf16.gmra.mrb[0].mxu0 %v1635
      %v1739 = vpop.f32.mrb[0].mxu0
      %v1740 = vadd.f32 0.0, %v1739
      %v1741 = vpop.f32.mrb[0].mxu0
      %v1742 = vpop.f32.mrb[0].mxu0
      %v1743 = vadd.f32 0.0, %v1742
      %v1744 = vpop.f32.mrb[0].mxu0
      %1745 = vmatprep.mubr.bf16.mxu0 0
      %1746 = vmatmul.mubr.bf16.gmra.mrb[0].mxu0 %v1638
      %v1747 = vpop.f32.mrb[0].mxu0
      %v1748 = vadd.f32 0.0, %v1747
      %v1749 = vpop.f32.mrb[0].mxu0
      %v1750 = vpop.f32.mrb[0].mxu0
      %v1751 = vadd.f32 0.0, %v1750
      %v1752 = vpop.f32.mrb[0].mxu0
      %1753 = vmatprep.mubr.bf16.mxu0 0
      %1754 = vmatmul.mubr.bf16.gmra.mrb[0].mxu0 %v1641
      %v1755 = vpop.f32.mrb[0].mxu0
      %v1756 = vadd.f32 0.0, %v1755
      %v1757 = vpop.f32.mrb[0].mxu0
      %v1758 = vpop.f32.mrb[0].mxu0
      %v1759 = vadd.f32 0.0, %v1758
      %v1760 = vpop.f32.mrb[0].mxu0
      %1761 = vmatprep.mubr.bf16.mxu0 0
      %1762 = vmatmul.mubr.bf16.gmra.mrb[0].mxu0 %v1644
      %v1763 = vpop.f32.mrb[0].mxu0
      %v1764 = vadd.f32 0.0, %v1763
      %v1765 = vpop.f32.mrb[0].mxu0
      %v1766 = vpop.f32.mrb[0].mxu0
      %v1767 = vadd.f32 0.0, %v1766
      %v1768 = vpop.f32.mrb[0].mxu0
      %1769 = vmatprep.mubr.bf16.mxu0 0
      %1770 = vmatmul.mubr.bf16.gmra.mrb[0].mxu0 %v1647
      %v1771 = vpop.f32.mrb[0].mxu0
      %v1772 = vadd.f32 0.0, %v1771
      %v1773 = vpop.f32.mrb[0].mxu0
      %v1774 = vpop.f32.mrb[0].mxu0
      %v1775 = vadd.f32 0.0, %v1774
      %v1776 = vpop.f32.mrb[0].mxu0
      %1777 = vmatprep.mubr.bf16.mxu0 0
      %1778 = vmatmul.mubr.bf16.gmra.mrb[0].mxu0 %v1650
      %v1779 = vpop.f32.mrb[0].mxu0
      %v1780 = vadd.f32 0.0, %v1779
      %v1781 = vpop.f32.mrb[0].mxu0
      %v1782 = vpop.f32.mrb[0].mxu0
      %v1783 = vadd.f32 0.0, %v1782
      %v1784 = vpop.f32.mrb[0].mxu0
      %1785 = vmatprep.mubr.bf16.mxu0 0
      %1786 = vmatmul.mubr.bf16.gmra.mrb[0].mxu0 %v1653
      %v1787 = vpop.f32.mrb[0].mxu0
      %v1788 = vadd.f32 0.0, %v1787
      %v1789 = vpop.f32.mrb[0].mxu0
      %v1790 = vpop.f32.mrb[0].mxu0
      %v1791 = vadd.f32 0.0, %v1790
      %v1792 = vpop.f32.mrb[0].mxu0
      %1793 = vmatprep.mubr.bf16.mxu0 0
      %1794 = vmatmul.mubr.bf16.gmra.mrb[0].mxu0 %v1656
      %v1795 = vpop.f32.mrb[0].mxu0
      %v1796 = vadd.f32 0.0, %v1795
      %v1797 = vpop.f32.mrb[0].mxu0
      %v1798 = vpop.f32.mrb[0].mxu0
      %v1799 = vadd.f32 0.0, %v1798
      %v1800 = vpop.f32.mrb[0].mxu0
      %1801 = vmatprep.mubr.bf16.mxu0 0
      %1802 = vmatmul.mubr.bf16.gmra.mrb[0].mxu0 %v1659
      %v1803 = vpop.f32.mrb[0].mxu0
      %v1804 = vadd.f32 0.0, %v1803
      %v1805 = vpop.f32.mrb[0].mxu0
      %v1806 = vpop.f32.mrb[0].mxu0
      %v1807 = vadd.f32 0.0, %v1806
      %v1808 = vpop.f32.mrb[0].mxu0
      %1809 = vmatprep.mubr.bf16.mxu0 0
      %1810 = vmatmul.mubr.bf16.gmra.mrb[0].mxu0 %v1662
      %v1811 = vpop.f32.mrb[0].mxu0
      %v1812 = vadd.f32 0.0, %v1811
      %v1813 = vpop.f32.mrb[0].mxu0
      %v1814 = vpop.f32.mrb[0].mxu0
      %v1815 = vadd.f32 0.0, %v1814
      %v1816 = vpop.f32.mrb[0].mxu0
      %1817 = vmatprep.mubr.bf16.mxu0 0
      %1818 = vmatmul.mubr.bf16.gmra.mrb[0].mxu0 %v1665
      %v1819 = vpop.f32.mrb[0].mxu0
      %v1820 = vadd.f32 0.0, %v1819
      %v1821 = vpop.f32.mrb[0].mxu0
      %v1822 = vpop.f32.mrb[0].mxu0
      %v1823 = vadd.f32 0.0, %v1822
      %v1824 = vpop.f32.mrb[0].mxu0
      %1825 = vmatprep.mubr.bf16.mxu0 0
      %1826 = vmatmul.mubr.bf16.gmra.mrb[0].mxu0 %v1668
      %v1827 = vpop.f32.mrb[0].mxu0
      %v1828 = vadd.f32 0.0, %v1827
      %v1829 = vpop.f32.mrb[0].mxu0
      %v1830 = vpop.f32.mrb[0].mxu0
      %v1831 = vadd.f32 0.0, %v1830
      %v1832 = vpop.f32.mrb[0].mxu0
      %1833 = vdwg.mxu0
      %v1834 = vld [vmem:[#allocation2] sm:$0xff]
      %v1835 = vld [vmem:[#allocation2 + $0x8] sm:$0xff]
      %v1836 = vld [vmem:[#allocation2 + $0x10] sm:$0xff]
      %v1837 = vld [vmem:[#allocation2 + $0x18] sm:$0xff]
      %v1838 = vld [vmem:[#allocation2 + $0x20] sm:$0xff]
      %v1839 = vld [vmem:[#allocation2 + $0x28] sm:$0xff]
      %v1840 = vld [vmem:[#allocation2 + $0x30] sm:$0xff]
      %v1841 = vld [vmem:[#allocation2 + $0x38] sm:$0xff]
      %v1842 = vld [vmem:[#allocation2 + $0x40] sm:$0xff]
      %v1843 = vld [vmem:[#allocation2 + $0x48] sm:$0xff]
      %v1844 = vld [vmem:[#allocation2 + $0x50] sm:$0xff]
      %v1845 = vld [vmem:[#allocation2 + $0x58] sm:$0xff]
      %v1846 = vld [vmem:[#allocation2 + $0x60] sm:$0xff]
      %v1847 = vld [vmem:[#allocation2 + $0x68] sm:$0xff]
      %v1848 = vld [vmem:[#allocation2 + $0x70] sm:$0xff]
      %v1849 = vld [vmem:[#allocation2 + $0x78] sm:$0xff]
      %v1850 = vld [vmem:[#allocation2 + $0x80] sm:$0xff]
      %v1851 = vld [vmem:[#allocation2 + $0x88] sm:$0xff]
      %v1852 = vld [vmem:[#allocation2 + $0x90] sm:$0xff]
      %v1853 = vld [vmem:[#allocation2 + $0x98] sm:$0xff]
      %v1854 = vld [vmem:[#allocation2 + $0xa0] sm:$0xff]
      %v1855 = vld [vmem:[#allocation2 + $0xa8] sm:$0xff]
      %v1856 = vld [vmem:[#allocation2 + $0xb0] sm:$0xff]
      %v1857 = vld [vmem:[#allocation2 + $0xb8] sm:$0xff]
      %v1858 = vld [vmem:[#allocation2 + $0xc0] sm:$0xff]
      %v1859 = vld [vmem:[#allocation2 + $0xc8] sm:$0xff]
      %v1860 = vld [vmem:[#allocation2 + $0xd0] sm:$0xff]
      %v1861 = vld [vmem:[#allocation2 + $0xd8] sm:$0xff]
      %v1862 = vld [vmem:[#allocation2 + $0xe0] sm:$0xff]
      %v1863 = vld [vmem:[#allocation2 + $0xe8] sm:$0xff]
      %v1864 = vld [vmem:[#allocation2 + $0xf0] sm:$0xff]
      %v1865 = vld [vmem:[#allocation2 + $0xf8] sm:$0xff]
      %v1866 = vadd.f32 %v1834, %v1708
      %v1867 = vadd.f32 %v1835, %v1711
      %v1868 = vadd.f32 %v1836, %v1716
      %v1869 = vadd.f32 %v1837, %v1719
      %v1870 = vadd.f32 %v1838, %v1724
      %v1871 = vadd.f32 %v1839, %v1727
      %v1872 = vadd.f32 %v1840, %v1732
      %v1873 = vadd.f32 %v1841, %v1735
      %v1874 = vadd.f32 %v1842, %v1740
      %v1875 = vadd.f32 %v1843, %v1743
      %v1876 = vadd.f32 %v1844, %v1748
      %v1877 = vadd.f32 %v1845, %v1751
      %v1878 = vadd.f32 %v1846, %v1756
      %v1879 = vadd.f32 %v1847, %v1759
      %v1880 = vadd.f32 %v1848, %v1764
      %v1881 = vadd.f32 %v1849, %v1767
      %v1882 = vadd.f32 %v1850, %v1772
      %v1883 = vadd.f32 %v1851, %v1775
      %v1884 = vadd.f32 %v1852, %v1780
      %v1885 = vadd.f32 %v1853, %v1783
      %v1886 = vadd.f32 %v1854, %v1788
      %v1887 = vadd.f32 %v1855, %v1791
      %v1888 = vadd.f32 %v1856, %v1796
      %v1889 = vadd.f32 %v1857, %v1799
      %v1890 = vadd.f32 %v1858, %v1804
      %v1891 = vadd.f32 %v1859, %v1807
      %v1892 = vadd.f32 %v1860, %v1812
      %v1893 = vadd.f32 %v1861, %v1815
      %v1894 = vadd.f32 %v1862, %v1820
      %v1895 = vadd.f32 %v1863, %v1823
      %v1896 = vadd.f32 %v1864, %v1828
      %v1897 = vadd.f32 %v1865, %v1831
      %1898 = vst [vmem:[#allocation2] sm:$0xff] %v1866
      %1899 = vst [vmem:[#allocation2 + $0x8] sm:$0xff] %v1867
      %1900 = vst [vmem:[#allocation2 + $0x10] sm:$0xff] %v1868
      %1901 = vst [vmem:[#allocation2 + $0x18] sm:$0xff] %v1869
      %1902 = vst [vmem:[#allocation2 + $0x20] sm:$0xff] %v1870
      %1903 = vst [vmem:[#allocation2 + $0x28] sm:$0xff] %v1871
      %1904 = vst [vmem:[#allocation2 + $0x30] sm:$0xff] %v1872
      %1905 = vst [vmem:[#allocation2 + $0x38] sm:$0xff] %v1873
      %1906 = vst [vmem:[#allocation2 + $0x40] sm:$0xff] %v1874
      %1907 = vst [vmem:[#allocation2 + $0x48] sm:$0xff] %v1875
      %1908 = vst [vmem:[#allocation2 + $0x50] sm:$0xff] %v1876
      %1909 = vst [vmem:[#allocation2 + $0x58] sm:$0xff] %v1877
      %1910 = vst [vmem:[#allocation2 + $0x60] sm:$0xff] %v1878
      %1911 = vst [vmem:[#allocation2 + $0x68] sm:$0xff] %v1879
      %1912 = vst [vmem:[#allocation2 + $0x70] sm:$0xff] %v1880
      %1913 = vst [vmem:[#allocation2 + $0x78] sm:$0xff] %v1881
      %1914 = vst [vmem:[#allocation2 + $0x80] sm:$0xff] %v1882
      %1915 = vst [vmem:[#allocation2 + $0x88] sm:$0xff] %v1883
      %1916 = vst [vmem:[#allocation2 + $0x90] sm:$0xff] %v1884
      %1917 = vst [vmem:[#allocation2 + $0x98] sm:$0xff] %v1885
      %1918 = vst [vmem:[#allocation2 + $0xa0] sm:$0xff] %v1886
      %1919 = vst [vmem:[#allocation2 + $0xa8] sm:$0xff] %v1887
      %1920 = vst [vmem:[#allocation2 + $0xb0] sm:$0xff] %v1888
      %1921 = vst [vmem:[#allocation2 + $0xb8] sm:$0xff] %v1889
      %1922 = vst [vmem:[#allocation2 + $0xc0] sm:$0xff] %v1890
      %1923 = vst [vmem:[#allocation2 + $0xc8] sm:$0xff] %v1891
      %1924 = vst [vmem:[#allocation2 + $0xd0] sm:$0xff] %v1892
      %1925 = vst [vmem:[#allocation2 + $0xd8] sm:$0xff] %v1893
      %1926 = vst [vmem:[#allocation2 + $0xe0] sm:$0xff] %v1894
      %1927 = vst [vmem:[#allocation2 + $0xe8] sm:$0xff] %v1895
      %1928 = vst [vmem:[#allocation2 + $0xf0] sm:$0xff] %v1896
      %1929 = vst [vmem:[#allocation2 + $0xf8] sm:$0xff] %v1897
      %v1930 = vld [vmem:[%s1213 + $0x2] sm:$0xff]
      %v1931 = vld [vmem:[%s1213 + $0xa] sm:$0xff]
      %v1932 = vld [vmem:[%s1213 + $0x1a] sm:$0xff]
      %v1933 = vld [vmem:[%s1213 + $0x22] sm:$0xff]
      %v1934 = vld [vmem:[%s1213 + $0x32] sm:$0xff]
      %v1935 = vld [vmem:[%s1213 + $0x3a] sm:$0xff]
      %v1936 = vld [vmem:[%s1213 + $0x4a] sm:$0xff]
      %v1937 = vld [vmem:[%s1213 + $0x52] sm:$0xff]
      %v1938 = vld [vmem:[%s1213 + $0x62] sm:$0xff]
      %v1939 = vld [vmem:[%s1213 + $0x6a] sm:$0xff]
      %v1940 = vld [vmem:[%s1213 + $0x7a] sm:$0xff]
      %v1941 = vld [vmem:[%s1213 + $0x82] sm:$0xff]
      %v1942 = vld [vmem:[%s1213 + $0x92] sm:$0xff]
      %v1943 = vld [vmem:[%s1213 + $0x9a] sm:$0xff]
      %v1944 = vld [vmem:[%s1213 + $0xaa] sm:$0xff]
      %v1945 = vld [vmem:[%s1213 + $0xb2] sm:$0xff]
      %v1946 = vld [vmem:[%s1213 + $0xc2] sm:$0xff]
      %v1947 = vld [vmem:[%s1213 + $0xca] sm:$0xff]
      %v1948 = vld [vmem:[%s1213 + $0xda] sm:$0xff]
      %v1949 = vld [vmem:[%s1213 + $0xe2] sm:$0xff]
      %v1950 = vld [vmem:[%s1213 + $0xf2] sm:$0xff]
      %v1951 = vld [vmem:[%s1213 + $0xfa] sm:$0xff]
      %v1952 = vld [vmem:[%s1213 + $0x10a] sm:$0xff]
      %v1953 = vld [vmem:[%s1213 + $0x112] sm:$0xff]
      %v1954 = vld [vmem:[%s1213 + $0x122] sm:$0xff]
      %v1955 = vld [vmem:[%s1213 + $0x12a] sm:$0xff]
      %v1956 = vld [vmem:[%s1213 + $0x13a] sm:$0xff]
      %v1957 = vld [vmem:[%s1213 + $0x142] sm:$0xff]
      %v1958 = vld [vmem:[%s1213 + $0x152] sm:$0xff]
      %v1959 = vld [vmem:[%s1213 + $0x15a] sm:$0xff]
      %v1960 = vld [vmem:[%s1213 + $0x16a] sm:$0xff]
      %v1961 = vld [vmem:[%s1213 + $0x172] sm:$0xff]
      %v1962 = vpack.c.bf16 %v1931, %v1930
      %v1963 = vpack.c.bf16 %v1933, %v1932
      %v1964 = vpack.c.bf16 %v1935, %v1934
      %v1965 = vpack.c.bf16 %v1937, %v1936
      %v1966 = vpack.c.bf16 %v1939, %v1938
      %v1967 = vpack.c.bf16 %v1941, %v1940
      %v1968 = vpack.c.bf16 %v1943, %v1942
      %v1969 = vpack.c.bf16 %v1945, %v1944
      %v1970 = vpack.c.bf16 %v1947, %v1946
      %v1971 = vpack.c.bf16 %v1949, %v1948
      %v1972 = vpack.c.bf16 %v1951, %v1950
      %v1973 = vpack.c.bf16 %v1953, %v1952
      %v1974 = vpack.c.bf16 %v1955, %v1954
      %v1975 = vpack.c.bf16 %v1957, %v1956
      %v1976 = vpack.c.bf16 %v1959, %v1958
      %v1977 = vpack.c.bf16 %v1961, %v1960
      %s1978 = scalar_lea.vmem %s1, 10
      %v1979 = vld [vmem:[%s1978] sm:$0x3]
      %v1981 = vsel %vm249, %v1962, 0
      %v1984 = vsel %vm249, %v1963, 0
      %v1987 = vsel %vm249, %v1964, 0
      %v1990 = vsel %vm249, %v1965, 0
      %v1993 = vsel %vm249, %v1966, 0
      %v1996 = vsel %vm249, %v1967, 0
      %v1999 = vsel %vm249, %v1968, 0
      %v2002 = vsel %vm249, %v1969, 0
      %v2005 = vsel %vm249, %v1970, 0
      %v2008 = vsel %vm249, %v1971, 0
      %v2011 = vsel %vm249, %v1972, 0
      %v2014 = vsel %vm249, %v1973, 0
      %v2017 = vsel %vm249, %v1974, 0
      %v2020 = vsel %vm249, %v1975, 0
      %v2023 = vsel %vm249, %v1976, 0
      %v2026 = vsel %vm249, %v1977, 0
      %v2029 = vsel %vm298, %v1979, 0
      %2031 = vmatprep.subr.bf16.mxu0 0
      %2032 = vmatpush1.bf16.msra.mxu0 %v2029
      %2033 = vmatprep.subr.bf16.mxu0 0
      %2034 = vmatpush1.bf16.msra.mxu0 0
      %2035 = vmatprep.subr.bf16.mxu0 0
      %2036 = vmatpush1.bf16.msra.mxu0 0
      %2037 = vmatprep.subr.bf16.mxu0 0
      %2038 = vmatpush1.bf16.msra.mxu0 0
      %2039 = vmatprep.subr.bf16.mxu0 0
      %2040 = vmatpush1.bf16.msra.mxu0 0
      %2041 = vmatprep.subr.bf16.mxu0 0
      %2042 = vmatpush1.bf16.msra.mxu0 0
      %2043 = vmatprep.subr.bf16.mxu0 0
      %2044 = vmatpush1.bf16.msra.mxu0 0
      %2045 = vmatprep.subr.bf16.mxu0 0
      %2046 = vmatpush1.bf16.msra.mxu0 0
      %2047 = vmatprep.subr.bf16.mxu0 0
      %2048 = vmatpush1.bf16.msra.mxu0 0
      %2049 = vmatprep.subr.bf16.mxu0 0
      %2050 = vmatpush1.bf16.msra.mxu0 0
      %2051 = vmatprep.subr.bf16.mxu0 0
      %2052 = vmatpush1.bf16.msra.mxu0 0
      %2053 = vmatprep.subr.bf16.mxu0 0
      %2054 = vmatpush1.bf16.msra.mxu0 0
      %2055 = vmatprep.subr.bf16.mxu0 0
      %2056 = vmatpush1.bf16.msra.mxu0 0
      %2057 = vmatprep.subr.bf16.mxu0 0
      %2058 = vmatpush1.bf16.msra.mxu0 0
      %2059 = vmatprep.subr.bf16.mxu0 0
      %2060 = vmatpush1.bf16.msra.mxu0 0
      %2061 = vmatprep.subr.bf16.mxu0 0
      %2062 = vmatpush1.bf16.msra.mxu0 0
      %2063 = vmatprep.mubr.bf16.mxu0 0
      %2064 = vmatmul.mubr.bf16.gmra.mrb[0].mxu0 %v1981
      %v2065 = vpop.f32.mrb[0].mxu0
      %v2066 = vadd.f32 0.0, %v2065
      %v2067 = vpop.f32.mrb[0].mxu0
      %v2068 = vpop.f32.mrb[0].mxu0
      %v2069 = vadd.f32 0.0, %v2068
      %v2070 = vpop.f32.mrb[0].mxu0
      %2071 = vmatprep.mubr.bf16.mxu0 0
      %2072 = vmatmul.mubr.bf16.gmra.mrb[0].mxu0 %v1984
      %v2073 = vpop.f32.mrb[0].mxu0
      %v2074 = vadd.f32 0.0, %v2073
      %v2075 = vpop.f32.mrb[0].mxu0
      %v2076 = vpop.f32.mrb[0].mxu0
      %v2077 = vadd.f32 0.0, %v2076
      %v2078 = vpop.f32.mrb[0].mxu0
      %2079 = vmatprep.mubr.bf16.mxu0 0
      %2080 = vmatmul.mubr.bf16.gmra.mrb[0].mxu0 %v1987
      %v2081 = vpop.f32.mrb[0].mxu0
      %v2082 = vadd.f32 0.0, %v2081
      %v2083 = vpop.f32.mrb[0].mxu0
      %v2084 = vpop.f32.mrb[0].mxu0
      %v2085 = vadd.f32 0.0, %v2084
      %v2086 = vpop.f32.mrb[0].mxu0
      %2087 = vmatprep.mubr.bf16.mxu0 0
      %2088 = vmatmul.mubr.bf16.gmra.mrb[0].mxu0 %v1990
      %v2089 = vpop.f32.mrb[0].mxu0
      %v2090 = vadd.f32 0.0, %v2089
      %v2091 = vpop.f32.mrb[0].mxu0
      %v2092 = vpop.f32.mrb[0].mxu0
      %v2093 = vadd.f32 0.0, %v2092
      %v2094 = vpop.f32.mrb[0].mxu0
      %2095 = vmatprep.mubr.bf16.mxu0 0
      %2096 = vmatmul.mubr.bf16.gmra.mrb[0].mxu0 %v1993
      %v2097 = vpop.f32.mrb[0].mxu0
      %v2098 = vadd.f32 0.0, %v2097
      %v2099 = vpop.f32.mrb[0].mxu0
      %v2100 = vpop.f32.mrb[0].mxu0
      %v2101 = vadd.f32 0.0, %v2100
      %v2102 = vpop.f32.mrb[0].mxu0
      %2103 = vmatprep.mubr.bf16.mxu0 0
      %2104 = vmatmul.mubr.bf16.gmra.mrb[0].mxu0 %v1996
      %v2105 = vpop.f32.mrb[0].mxu0
      %v2106 = vadd.f32 0.0, %v2105
      %v2107 = vpop.f32.mrb[0].mxu0
      %v2108 = vpop.f32.mrb[0].mxu0
      %v2109 = vadd.f32 0.0, %v2108
      %v2110 = vpop.f32.mrb[0].mxu0
      %2111 = vmatprep.mubr.bf16.mxu0 0
      %2112 = vmatmul.mubr.bf16.gmra.mrb[0].mxu0 %v1999
      %v2113 = vpop.f32.mrb[0].mxu0
      %v2114 = vadd.f32 0.0, %v2113
      %v2115 = vpop.f32.mrb[0].mxu0
      %v2116 = vpop.f32.mrb[0].mxu0
      %v2117 = vadd.f32 0.0, %v2116
      %v2118 = vpop.f32.mrb[0].mxu0
      %2119 = vmatprep.mubr.bf16.mxu0 0
      %2120 = vmatmul.mubr.bf16.gmra.mrb[0].mxu0 %v2002
      %v2121 = vpop.f32.mrb[0].mxu0
      %v2122 = vadd.f32 0.0, %v2121
      %v2123 = vpop.f32.mrb[0].mxu0
      %v2124 = vpop.f32.mrb[0].mxu0
      %v2125 = vadd.f32 0.0, %v2124
      %v2126 = vpop.f32.mrb[0].mxu0
      %2127 = vmatprep.mubr.bf16.mxu0 0
      %2128 = vmatmul.mubr.bf16.gmra.mrb[0].mxu0 %v2005
      %v2129 = vpop.f32.mrb[0].mxu0
      %v2130 = vadd.f32 0.0, %v2129
      %v2131 = vpop.f32.mrb[0].mxu0
      %v2132 = vpop.f32.mrb[0].mxu0
      %v2133 = vadd.f32 0.0, %v2132
      %v2134 = vpop.f32.mrb[0].mxu0
      %2135 = vmatprep.mubr.bf16.mxu0 0
      %2136 = vmatmul.mubr.bf16.gmra.mrb[0].mxu0 %v2008
      %v2137 = vpop.f32.mrb[0].mxu0
      %v2138 = vadd.f32 0.0, %v2137
      %v2139 = vpop.f32.mrb[0].mxu0
      %v2140 = vpop.f32.mrb[0].mxu0
      %v2141 = vadd.f32 0.0, %v2140
      %v2142 = vpop.f32.mrb[0].mxu0
      %2143 = vmatprep.mubr.bf16.mxu0 0
      %2144 = vmatmul.mubr.bf16.gmra.mrb[0].mxu0 %v2011
      %v2145 = vpop.f32.mrb[0].mxu0
      %v2146 = vadd.f32 0.0, %v2145
      %v2147 = vpop.f32.mrb[0].mxu0
      %v2148 = vpop.f32.mrb[0].mxu0
      %v2149 = vadd.f32 0.0, %v2148
      %v2150 = vpop.f32.mrb[0].mxu0
      %2151 = vmatprep.mubr.bf16.mxu0 0
      %2152 = vmatmul.mubr.bf16.gmra.mrb[0].mxu0 %v2014
      %v2153 = vpop.f32.mrb[0].mxu0
      %v2154 = vadd.f32 0.0, %v2153
      %v2155 = vpop.f32.mrb[0].mxu0
      %v2156 = vpop.f32.mrb[0].mxu0
      %v2157 = vadd.f32 0.0, %v2156
      %v2158 = vpop.f32.mrb[0].mxu0
      %2159 = vmatprep.mubr.bf16.mxu0 0
      %2160 = vmatmul.mubr.bf16.gmra.mrb[0].mxu0 %v2017
      %v2161 = vpop.f32.mrb[0].mxu0
      %v2162 = vadd.f32 0.0, %v2161
      %v2163 = vpop.f32.mrb[0].mxu0
      %v2164 = vpop.f32.mrb[0].mxu0
      %v2165 = vadd.f32 0.0, %v2164
      %v2166 = vpop.f32.mrb[0].mxu0
      %2167 = vmatprep.mubr.bf16.mxu0 0
      %2168 = vmatmul.mubr.bf16.gmra.mrb[0].mxu0 %v2020
      %v2169 = vpop.f32.mrb[0].mxu0
      %v2170 = vadd.f32 0.0, %v2169
      %v2171 = vpop.f32.mrb[0].mxu0
      %v2172 = vpop.f32.mrb[0].mxu0
      %v2173 = vadd.f32 0.0, %v2172
      %v2174 = vpop.f32.mrb[0].mxu0
      %2175 = vmatprep.mubr.bf16.mxu0 0
      %2176 = vmatmul.mubr.bf16.gmra.mrb[0].mxu0 %v2023
      %v2177 = vpop.f32.mrb[0].mxu0
      %v2178 = vadd.f32 0.0, %v2177
      %v2179 = vpop.f32.mrb[0].mxu0
      %v2180 = vpop.f32.mrb[0].mxu0
      %v2181 = vadd.f32 0.0, %v2180
      %v2182 = vpop.f32.mrb[0].mxu0
      %2183 = vmatprep.mubr.bf16.mxu0 0
      %2184 = vmatmul.mubr.bf16.gmra.mrb[0].mxu0 %v2026
      %v2185 = vpop.f32.mrb[0].mxu0
      %v2186 = vadd.f32 0.0, %v2185
      %v2187 = vpop.f32.mrb[0].mxu0
      %v2188 = vpop.f32.mrb[0].mxu0
      %v2189 = vadd.f32 0.0, %v2188
      %v2190 = vpop.f32.mrb[0].mxu0
      %2191 = vdwg.mxu0
      %v2192 = vld [vmem:[#allocation2] sm:$0xff]
      %v2193 = vld [vmem:[#allocation2 + $0x8] sm:$0xff]
      %v2194 = vld [vmem:[#allocation2 + $0x10] sm:$0xff]
      %v2195 = vld [vmem:[#allocation2 + $0x18] sm:$0xff]
      %v2196 = vld [vmem:[#allocation2 + $0x20] sm:$0xff]
      %v2197 = vld [vmem:[#allocation2 + $0x28] sm:$0xff]
      %v2198 = vld [vmem:[#allocation2 + $0x30] sm:$0xff]
      %v2199 = vld [vmem:[#allocation2 + $0x38] sm:$0xff]
      %v2200 = vld [vmem:[#allocation2 + $0x40] sm:$0xff]
      %v2201 = vld [vmem:[#allocation2 + $0x48] sm:$0xff]
      %v2202 = vld [vmem:[#allocation2 + $0x50] sm:$0xff]
      %v2203 = vld [vmem:[#allocation2 + $0x58] sm:$0xff]
      %v2204 = vld [vmem:[#allocation2 + $0x60] sm:$0xff]
      %v2205 = vld [vmem:[#allocation2 + $0x68] sm:$0xff]
      %v2206 = vld [vmem:[#allocation2 + $0x70] sm:$0xff]
      %v2207 = vld [vmem:[#allocation2 + $0x78] sm:$0xff]
      %v2208 = vld [vmem:[#allocation2 + $0x80] sm:$0xff]
      %v2209 = vld [vmem:[#allocation2 + $0x88] sm:$0xff]
      %v2210 = vld [vmem:[#allocation2 + $0x90] sm:$0xff]
      %v2211 = vld [vmem:[#allocation2 + $0x98] sm:$0xff]
      %v2212 = vld [vmem:[#allocation2 + $0xa0] sm:$0xff]
      %v2213 = vld [vmem:[#allocation2 + $0xa8] sm:$0xff]
      %v2214 = vld [vmem:[#allocation2 + $0xb0] sm:$0xff]
      %v2215 = vld [vmem:[#allocation2 + $0xb8] sm:$0xff]
      %v2216 = vld [vmem:[#allocation2 + $0xc0] sm:$0xff]
      %v2217 = vld [vmem:[#allocation2 + $0xc8] sm:$0xff]
      %v2218 = vld [vmem:[#allocation2 + $0xd0] sm:$0xff]
      %v2219 = vld [vmem:[#allocation2 + $0xd8] sm:$0xff]
      %v2220 = vld [vmem:[#allocation2 + $0xe0] sm:$0xff]
      %v2221 = vld [vmem:[#allocation2 + $0xe8] sm:$0xff]
      %v2222 = vld [vmem:[#allocation2 + $0xf0] sm:$0xff]
      %v2223 = vld [vmem:[#allocation2 + $0xf8] sm:$0xff]
      %v2224 = vadd.f32 %v2192, %v2066
      %v2225 = vadd.f32 %v2193, %v2069
      %v2226 = vadd.f32 %v2194, %v2074
      %v2227 = vadd.f32 %v2195, %v2077
      %v2228 = vadd.f32 %v2196, %v2082
      %v2229 = vadd.f32 %v2197, %v2085
      %v2230 = vadd.f32 %v2198, %v2090
      %v2231 = vadd.f32 %v2199, %v2093
      %v2232 = vadd.f32 %v2200, %v2098
      %v2233 = vadd.f32 %v2201, %v2101
      %v2234 = vadd.f32 %v2202, %v2106
      %v2235 = vadd.f32 %v2203, %v2109
      %v2236 = vadd.f32 %v2204, %v2114
      %v2237 = vadd.f32 %v2205, %v2117
      %v2238 = vadd.f32 %v2206, %v2122
      %v2239 = vadd.f32 %v2207, %v2125
      %v2240 = vadd.f32 %v2208, %v2130
      %v2241 = vadd.f32 %v2209, %v2133
      %v2242 = vadd.f32 %v2210, %v2138
      %v2243 = vadd.f32 %v2211, %v2141
      %v2244 = vadd.f32 %v2212, %v2146
      %v2245 = vadd.f32 %v2213, %v2149
      %v2246 = vadd.f32 %v2214, %v2154
      %v2247 = vadd.f32 %v2215, %v2157
      %v2248 = vadd.f32 %v2216, %v2162
      %v2249 = vadd.f32 %v2217, %v2165
      %v2250 = vadd.f32 %v2218, %v2170
      %v2251 = vadd.f32 %v2219, %v2173
      %v2252 = vadd.f32 %v2220, %v2178
      %v2253 = vadd.f32 %v2221, %v2181
      %v2254 = vadd.f32 %v2222, %v2186
      %v2255 = vadd.f32 %v2223, %v2189
      %2256 = vst [vmem:[#allocation2] sm:$0xff] %v2224
      %2257 = vst [vmem:[#allocation2 + $0x8] sm:$0xff] %v2225
      %2258 = vst [vmem:[#allocation2 + $0x10] sm:$0xff] %v2226
      %2259 = vst [vmem:[#allocation2 + $0x18] sm:$0xff] %v2227
      %2260 = vst [vmem:[#allocation2 + $0x20] sm:$0xff] %v2228
      %2261 = vst [vmem:[#allocation2 + $0x28] sm:$0xff] %v2229
      %2262 = vst [vmem:[#allocation2 + $0x30] sm:$0xff] %v2230
      %2263 = vst [vmem:[#allocation2 + $0x38] sm:$0xff] %v2231
      %2264 = vst [vmem:[#allocation2 + $0x40] sm:$0xff] %v2232
      %2265 = vst [vmem:[#allocation2 + $0x48] sm:$0xff] %v2233
      %2266 = vst [vmem:[#allocation2 + $0x50] sm:$0xff] %v2234
      %2267 = vst [vmem:[#allocation2 + $0x58] sm:$0xff] %v2235
      %2268 = vst [vmem:[#allocation2 + $0x60] sm:$0xff] %v2236
      %2269 = vst [vmem:[#allocation2 + $0x68] sm:$0xff] %v2237
      %2270 = vst [vmem:[#allocation2 + $0x70] sm:$0xff] %v2238
      %2271 = vst [vmem:[#allocation2 + $0x78] sm:$0xff] %v2239
      %2272 = vst [vmem:[#allocation2 + $0x80] sm:$0xff] %v2240
      %2273 = vst [vmem:[#allocation2 + $0x88] sm:$0xff] %v2241
      %2274 = vst [vmem:[#allocation2 + $0x90] sm:$0xff] %v2242
      %2275 = vst [vmem:[#allocation2 + $0x98] sm:$0xff] %v2243
      %2276 = vst [vmem:[#allocation2 + $0xa0] sm:$0xff] %v2244
      %2277 = vst [vmem:[#allocation2 + $0xa8] sm:$0xff] %v2245
      %2278 = vst [vmem:[#allocation2 + $0xb0] sm:$0xff] %v2246
      %2279 = vst [vmem:[#allocation2 + $0xb8] sm:$0xff] %v2247
      %2280 = vst [vmem:[#allocation2 + $0xc0] sm:$0xff] %v2248
      %2281 = vst [vmem:[#allocation2 + $0xc8] sm:$0xff] %v2249
      %2282 = vst [vmem:[#allocation2 + $0xd0] sm:$0xff] %v2250
      %2283 = vst [vmem:[#allocation2 + $0xd8] sm:$0xff] %v2251
      %2284 = vst [vmem:[#allocation2 + $0xe0] sm:$0xff] %v2252
      %2285 = vst [vmem:[#allocation2 + $0xe8] sm:$0xff] %v2253
      %2286 = vst [vmem:[#allocation2 + $0xf0] sm:$0xff] %v2254
      %2287 = vst [vmem:[#allocation2 + $0xf8] sm:$0xff] %v2255
      %s2288 = sadd.s32 %s197, 2
      %s2289 = smul.u32 %s2288, 24
      %s2290 = scalar_lea.vmem %s184, %s2289
      %v2291 = vld [vmem:[%s2290] sm:$0xff]
      %v2292 = vld [vmem:[%s2290 + $0x8] sm:$0xff]
      %v2293 = vld [vmem:[%s2290 + $0x18] sm:$0xff]
      %v2294 = vld [vmem:[%s2290 + $0x20] sm:$0xff]
      %v2295 = vld [vmem:[%s2290 + $0x30] sm:$0xff]
      %v2296 = vld [vmem:[%s2290 + $0x38] sm:$0xff]
      %v2297 = vld [vmem:[%s2290 + $0x48] sm:$0xff]
      %v2298 = vld [vmem:[%s2290 + $0x50] sm:$0xff]
      %v2299 = vld [vmem:[%s2290 + $0x60] sm:$0xff]
      %v2300 = vld [vmem:[%s2290 + $0x68] sm:$0xff]
      %v2301 = vld [vmem:[%s2290 + $0x78] sm:$0xff]
      %v2302 = vld [vmem:[%s2290 + $0x80] sm:$0xff]
      %v2303 = vld [vmem:[%s2290 + $0x90] sm:$0xff]
      %v2304 = vld [vmem:[%s2290 + $0x98] sm:$0xff]
      %v2305 = vld [vmem:[%s2290 + $0xa8] sm:$0xff]
      %v2306 = vld [vmem:[%s2290 + $0xb0] sm:$0xff]
      %v2307 = vld [vmem:[%s2290 + $0xc0] sm:$0xff]
      %v2308 = vld [vmem:[%s2290 + $0xc8] sm:$0xff]
      %v2309 = vld [vmem:[%s2290 + $0xd8] sm:$0xff]
      %v2310 = vld [vmem:[%s2290 + $0xe0] sm:$0xff]
      %v2311 = vld [vmem:[%s2290 + $0xf0] sm:$0xff]
      %v2312 = vld [vmem:[%s2290 + $0xf8] sm:$0xff]
      %v2313 = vld [vmem:[%s2290 + $0x108] sm:$0xff]
      %v2314 = vld [vmem:[%s2290 + $0x110] sm:$0xff]
      %v2315 = vld [vmem:[%s2290 + $0x120] sm:$0xff]
      %v2316 = vld [vmem:[%s2290 + $0x128] sm:$0xff]
      %v2317 = vld [vmem:[%s2290 + $0x138] sm:$0xff]
      %v2318 = vld [vmem:[%s2290 + $0x140] sm:$0xff]
      %v2319 = vld [vmem:[%s2290 + $0x150] sm:$0xff]
      %v2320 = vld [vmem:[%s2290 + $0x158] sm:$0xff]
      %v2321 = vld [vmem:[%s2290 + $0x168] sm:$0xff]
      %v2322 = vld [vmem:[%s2290 + $0x170] sm:$0xff]
      %v2323 = vpack.c.bf16 %v2292, %v2291
      %v2324 = vpack.c.bf16 %v2294, %v2293
      %v2325 = vpack.c.bf16 %v2296, %v2295
      %v2326 = vpack.c.bf16 %v2298, %v2297
      %v2327 = vpack.c.bf16 %v2300, %v2299
      %v2328 = vpack.c.bf16 %v2302, %v2301
      %v2329 = vpack.c.bf16 %v2304, %v2303
      %v2330 = vpack.c.bf16 %v2306, %v2305
      %v2331 = vpack.c.bf16 %v2308, %v2307
      %v2332 = vpack.c.bf16 %v2310, %v2309
      %v2333 = vpack.c.bf16 %v2312, %v2311
      %v2334 = vpack.c.bf16 %v2314, %v2313
      %v2335 = vpack.c.bf16 %v2316, %v2315
      %v2336 = vpack.c.bf16 %v2318, %v2317
      %v2337 = vpack.c.bf16 %v2320, %v2319
      %v2338 = vpack.c.bf16 %v2322, %v2321
      %s2339 = scalar_lea.vmem %s1, 12
      %v2340 = vld [vmem:[%s2339] sm:$0x3]
      %v2342 = vsel %vm249, %v2323, 0
      %v2345 = vsel %vm249, %v2324, 0
      %v2348 = vsel %vm249, %v2325, 0
      %v2351 = vsel %vm249, %v2326, 0
      %v2354 = vsel %vm249, %v2327, 0
      %v2357 = vsel %vm249, %v2328, 0
      %v2360 = vsel %vm249, %v2329, 0
      %v2363 = vsel %vm249, %v2330, 0
      %v2366 = vsel %vm249, %v2331, 0
      %v2369 = vsel %vm249, %v2332, 0
      %v2372 = vsel %vm249, %v2333, 0
      %v2375 = vsel %vm249, %v2334, 0
      %v2378 = vsel %vm249, %v2335, 0
      %v2381 = vsel %vm249, %v2336, 0
      %v2384 = vsel %vm249, %v2337, 0
      %v2387 = vsel %vm249, %v2338, 0
      %v2390 = vsel %vm298, %v2340, 0
      %2392 = vmatprep.subr.bf16.mxu0 0
      %2393 = vmatpush1.bf16.msra.mxu0 %v2390
      %2394 = vmatprep.subr.bf16.mxu0 0
      %2395 = vmatpush1.bf16.msra.mxu0 0
      %2396 = vmatprep.subr.bf16.mxu0 0
      %2397 = vmatpush1.bf16.msra.mxu0 0
      %2398 = vmatprep.subr.bf16.mxu0 0
      %2399 = vmatpush1.bf16.msra.mxu0 0
      %2400 = vmatprep.subr.bf16.mxu0 0
      %2401 = vmatpush1.bf16.msra.mxu0 0
      %2402 = vmatprep.subr.bf16.mxu0 0
      %2403 = vmatpush1.bf16.msra.mxu0 0
      %2404 = vmatprep.subr.bf16.mxu0 0
      %2405 = vmatpush1.bf16.msra.mxu0 0
      %2406 = vmatprep.subr.bf16.mxu0 0
      %2407 = vmatpush1.bf16.msra.mxu0 0
      %2408 = vmatprep.subr.bf16.mxu0 0
      %2409 = vmatpush1.bf16.msra.mxu0 0
      %2410 = vmatprep.subr.bf16.mxu0 0
      %2411 = vmatpush1.bf16.msra.mxu0 0
      %2412 = vmatprep.subr.bf16.mxu0 0
      %2413 = vmatpush1.bf16.msra.mxu0 0
      %2414 = vmatprep.subr.bf16.mxu0 0
      %2415 = vmatpush1.bf16.msra.mxu0 0
      %2416 = vmatprep.subr.bf16.mxu0 0
      %2417 = vmatpush1.bf16.msra.mxu0 0
      %2418 = vmatprep.subr.bf16.mxu0 0
      %2419 = vmatpush1.bf16.msra.mxu0 0
      %2420 = vmatprep.subr.bf16.mxu0 0
      %2421 = vmatpush1.bf16.msra.mxu0 0
      %2422 = vmatprep.subr.bf16.mxu0 0
      %2423 = vmatpush1.bf16.msra.mxu0 0
      %2424 = vmatprep.mubr.bf16.mxu0 0
      %2425 = vmatmul.mubr.bf16.gmra.mrb[0].mxu0 %v2342
      %v2426 = vpop.f32.mrb[0].mxu0
      %v2427 = vadd.f32 0.0, %v2426
      %v2428 = vpop.f32.mrb[0].mxu0
      %v2429 = vpop.f32.mrb[0].mxu0
      %v2430 = vadd.f32 0.0, %v2429
      %v2431 = vpop.f32.mrb[0].mxu0
      %2432 = vmatprep.mubr.bf16.mxu0 0
      %2433 = vmatmul.mubr.bf16.gmra.mrb[0].mxu0 %v2345
      %v2434 = vpop.f32.mrb[0].mxu0
      %v2435 = vadd.f32 0.0, %v2434
      %v2436 = vpop.f32.mrb[0].mxu0
      %v2437 = vpop.f32.mrb[0].mxu0
      %v2438 = vadd.f32 0.0, %v2437
      %v2439 = vpop.f32.mrb[0].mxu0
      %2440 = vmatprep.mubr.bf16.mxu0 0
      %2441 = vmatmul.mubr.bf16.gmra.mrb[0].mxu0 %v2348
      %v2442 = vpop.f32.mrb[0].mxu0
      %v2443 = vadd.f32 0.0, %v2442
      %v2444 = vpop.f32.mrb[0].mxu0
      %v2445 = vpop.f32.mrb[0].mxu0
      %v2446 = vadd.f32 0.0, %v2445
      %v2447 = vpop.f32.mrb[0].mxu0
      %2448 = vmatprep.mubr.bf16.mxu0 0
      %2449 = vmatmul.mubr.bf16.gmra.mrb[0].mxu0 %v2351
      %v2450 = vpop.f32.mrb[0].mxu0
      %v2451 = vadd.f32 0.0, %v2450
      %v2452 = vpop.f32.mrb[0].mxu0
      %v2453 = vpop.f32.mrb[0].mxu0
      %v2454 = vadd.f32 0.0, %v2453
      %v2455 = vpop.f32.mrb[0].mxu0
      %2456 = vmatprep.mubr.bf16.mxu0 0
      %2457 = vmatmul.mubr.bf16.gmra.mrb[0].mxu0 %v2354
      %v2458 = vpop.f32.mrb[0].mxu0
      %v2459 = vadd.f32 0.0, %v2458
      %v2460 = vpop.f32.mrb[0].mxu0
      %v2461 = vpop.f32.mrb[0].mxu0
      %v2462 = vadd.f32 0.0, %v2461
      %v2463 = vpop.f32.mrb[0].mxu0
      %2464 = vmatprep.mubr.bf16.mxu0 0
      %2465 = vmatmul.mubr.bf16.gmra.mrb[0].mxu0 %v2357
      %v2466 = vpop.f32.mrb[0].mxu0
      %v2467 = vadd.f32 0.0, %v2466
      %v2468 = vpop.f32.mrb[0].mxu0
      %v2469 = vpop.f32.mrb[0].mxu0
      %v2470 = vadd.f32 0.0, %v2469
      %v2471 = vpop.f32.mrb[0].mxu0
      %2472 = vmatprep.mubr.bf16.mxu0 0
      %2473 = vmatmul.mubr.bf16.gmra.mrb[0].mxu0 %v2360
      %v2474 = vpop.f32.mrb[0].mxu0
      %v2475 = vadd.f32 0.0, %v2474
      %v2476 = vpop.f32.mrb[0].mxu0
      %v2477 = vpop.f32.mrb[0].mxu0
      %v2478 = vadd.f32 0.0, %v2477
      %v2479 = vpop.f32.mrb[0].mxu0
      %2480 = vmatprep.mubr.bf16.mxu0 0
      %2481 = vmatmul.mubr.bf16.gmra.mrb[0].mxu0 %v2363
      %v2482 = vpop.f32.mrb[0].mxu0
      %v2483 = vadd.f32 0.0, %v2482
      %v2484 = vpop.f32.mrb[0].mxu0
      %v2485 = vpop.f32.mrb[0].mxu0
      %v2486 = vadd.f32 0.0, %v2485
      %v2487 = vpop.f32.mrb[0].mxu0
      %2488 = vmatprep.mubr.bf16.mxu0 0
      %2489 = vmatmul.mubr.bf16.gmra.mrb[0].mxu0 %v2366
      %v2490 = vpop.f32.mrb[0].mxu0
      %v2491 = vadd.f32 0.0, %v2490
      %v2492 = vpop.f32.mrb[0].mxu0
      %v2493 = vpop.f32.mrb[0].mxu0
      %v2494 = vadd.f32 0.0, %v2493
      %v2495 = vpop.f32.mrb[0].mxu0
      %2496 = vmatprep.mubr.bf16.mxu0 0
      %2497 = vmatmul.mubr.bf16.gmra.mrb[0].mxu0 %v2369
      %v2498 = vpop.f32.mrb[0].mxu0
      %v2499 = vadd.f32 0.0, %v2498
      %v2500 = vpop.f32.mrb[0].mxu0
      %v2501 = vpop.f32.mrb[0].mxu0
      %v2502 = vadd.f32 0.0, %v2501
      %v2503 = vpop.f32.mrb[0].mxu0
      %2504 = vmatprep.mubr.bf16.mxu0 0
      %2505 = vmatmul.mubr.bf16.gmra.mrb[0].mxu0 %v2372
      %v2506 = vpop.f32.mrb[0].mxu0
      %v2507 = vadd.f32 0.0, %v2506
      %v2508 = vpop.f32.mrb[0].mxu0
      %v2509 = vpop.f32.mrb[0].mxu0
      %v2510 = vadd.f32 0.0, %v2509
      %v2511 = vpop.f32.mrb[0].mxu0
      %2512 = vmatprep.mubr.bf16.mxu0 0
      %2513 = vmatmul.mubr.bf16.gmra.mrb[0].mxu0 %v2375
      %v2514 = vpop.f32.mrb[0].mxu0
      %v2515 = vadd.f32 0.0, %v2514
      %v2516 = vpop.f32.mrb[0].mxu0
      %v2517 = vpop.f32.mrb[0].mxu0
      %v2518 = vadd.f32 0.0, %v2517
      %v2519 = vpop.f32.mrb[0].mxu0
      %2520 = vmatprep.mubr.bf16.mxu0 0
      %2521 = vmatmul.mubr.bf16.gmra.mrb[0].mxu0 %v2378
      %v2522 = vpop.f32.mrb[0].mxu0
      %v2523 = vadd.f32 0.0, %v2522
      %v2524 = vpop.f32.mrb[0].mxu0
      %v2525 = vpop.f32.mrb[0].mxu0
      %v2526 = vadd.f32 0.0, %v2525
      %v2527 = vpop.f32.mrb[0].mxu0
      %2528 = vmatprep.mubr.bf16.mxu0 0
      %2529 = vmatmul.mubr.bf16.gmra.mrb[0].mxu0 %v2381
      %v2530 = vpop.f32.mrb[0].mxu0
      %v2531 = vadd.f32 0.0, %v2530
      %v2532 = vpop.f32.mrb[0].mxu0
      %v2533 = vpop.f32.mrb[0].mxu0
      %v2534 = vadd.f32 0.0, %v2533
      %v2535 = vpop.f32.mrb[0].mxu0
      %2536 = vmatprep.mubr.bf16.mxu0 0
      %2537 = vmatmul.mubr.bf16.gmra.mrb[0].mxu0 %v2384
      %v2538 = vpop.f32.mrb[0].mxu0
      %v2539 = vadd.f32 0.0, %v2538
      %v2540 = vpop.f32.mrb[0].mxu0
      %v2541 = vpop.f32.mrb[0].mxu0
      %v2542 = vadd.f32 0.0, %v2541
      %v2543 = vpop.f32.mrb[0].mxu0
      %2544 = vmatprep.mubr.bf16.mxu0 0
      %2545 = vmatmul.mubr.bf16.gmra.mrb[0].mxu0 %v2387
      %v2546 = vpop.f32.mrb[0].mxu0
      %v2547 = vadd.f32 0.0, %v2546
      %v2548 = vpop.f32.mrb[0].mxu0
      %v2549 = vpop.f32.mrb[0].mxu0
      %v2550 = vadd.f32 0.0, %v2549
      %v2551 = vpop.f32.mrb[0].mxu0
      %2552 = vdwg.mxu0
      %v2553 = vld [vmem:[#allocation2] sm:$0xff]
      %v2554 = vld [vmem:[#allocation2 + $0x8] sm:$0xff]
      %v2555 = vld [vmem:[#allocation2 + $0x10] sm:$0xff]
      %v2556 = vld [vmem:[#allocation2 + $0x18] sm:$0xff]
      %v2557 = vld [vmem:[#allocation2 + $0x20] sm:$0xff]
      %v2558 = vld [vmem:[#allocation2 + $0x28] sm:$0xff]
      %v2559 = vld [vmem:[#allocation2 + $0x30] sm:$0xff]
      %v2560 = vld [vmem:[#allocation2 + $0x38] sm:$0xff]
      %v2561 = vld [vmem:[#allocation2 + $0x40] sm:$0xff]
      %v2562 = vld [vmem:[#allocation2 + $0x48] sm:$0xff]
      %v2563 = vld [vmem:[#allocation2 + $0x50] sm:$0xff]
      %v2564 = vld [vmem:[#allocation2 + $0x58] sm:$0xff]
      %v2565 = vld [vmem:[#allocation2 + $0x60] sm:$0xff]
      %v2566 = vld [vmem:[#allocation2 + $0x68] sm:$0xff]
      %v2567 = vld [vmem:[#allocation2 + $0x70] sm:$0xff]
      %v2568 = vld [vmem:[#allocation2 + $0x78] sm:$0xff]
      %v2569 = vld [vmem:[#allocation2 + $0x80] sm:$0xff]
      %v2570 = vld [vmem:[#allocation2 + $0x88] sm:$0xff]
      %v2571 = vld [vmem:[#allocation2 + $0x90] sm:$0xff]
      %v2572 = vld [vmem:[#allocation2 + $0x98] sm:$0xff]
      %v2573 = vld [vmem:[#allocation2 + $0xa0] sm:$0xff]
      %v2574 = vld [vmem:[#allocation2 + $0xa8] sm:$0xff]
      %v2575 = vld [vmem:[#allocation2 + $0xb0] sm:$0xff]
      %v2576 = vld [vmem:[#allocation2 + $0xb8] sm:$0xff]
      %v2577 = vld [vmem:[#allocation2 + $0xc0] sm:$0xff]
      %v2578 = vld [vmem:[#allocation2 + $0xc8] sm:$0xff]
      %v2579 = vld [vmem:[#allocation2 + $0xd0] sm:$0xff]
      %v2580 = vld [vmem:[#allocation2 + $0xd8] sm:$0xff]
      %v2581 = vld [vmem:[#allocation2 + $0xe0] sm:$0xff]
      %v2582 = vld [vmem:[#allocation2 + $0xe8] sm:$0xff]
      %v2583 = vld [vmem:[#allocation2 + $0xf0] sm:$0xff]
      %v2584 = vld [vmem:[#allocation2 + $0xf8] sm:$0xff]
      %v2585 = vadd.f32 %v2553, %v2427
      %v2586 = vadd.f32 %v2554, %v2430
      %v2587 = vadd.f32 %v2555, %v2435
      %v2588 = vadd.f32 %v2556, %v2438
      %v2589 = vadd.f32 %v2557, %v2443
      %v2590 = vadd.f32 %v2558, %v2446
      %v2591 = vadd.f32 %v2559, %v2451
      %v2592 = vadd.f32 %v2560, %v2454
      %v2593 = vadd.f32 %v2561, %v2459
      %v2594 = vadd.f32 %v2562, %v2462
      %v2595 = vadd.f32 %v2563, %v2467
      %v2596 = vadd.f32 %v2564, %v2470
      %v2597 = vadd.f32 %v2565, %v2475
      %v2598 = vadd.f32 %v2566, %v2478
      %v2599 = vadd.f32 %v2567, %v2483
      %v2600 = vadd.f32 %v2568, %v2486
      %v2601 = vadd.f32 %v2569, %v2491
      %v2602 = vadd.f32 %v2570, %v2494
      %v2603 = vadd.f32 %v2571, %v2499
      %v2604 = vadd.f32 %v2572, %v2502
      %v2605 = vadd.f32 %v2573, %v2507
      %v2606 = vadd.f32 %v2574, %v2510
      %v2607 = vadd.f32 %v2575, %v2515
      %v2608 = vadd.f32 %v2576, %v2518
      %v2609 = vadd.f32 %v2577, %v2523
      %v2610 = vadd.f32 %v2578, %v2526
      %v2611 = vadd.f32 %v2579, %v2531
      %v2612 = vadd.f32 %v2580, %v2534
      %v2613 = vadd.f32 %v2581, %v2539
      %v2614 = vadd.f32 %v2582, %v2542
      %v2615 = vadd.f32 %v2583, %v2547
      %v2616 = vadd.f32 %v2584, %v2550
      %2617 = vst [vmem:[#allocation2] sm:$0xff] %v2585
      %2618 = vst [vmem:[#allocation2 + $0x8] sm:$0xff] %v2586
      %2619 = vst [vmem:[#allocation2 + $0x10] sm:$0xff] %v2587
      %2620 = vst [vmem:[#allocation2 + $0x18] sm:$0xff] %v2588
      %2621 = vst [vmem:[#allocation2 + $0x20] sm:$0xff] %v2589
      %2622 = vst [vmem:[#allocation2 + $0x28] sm:$0xff] %v2590
      %2623 = vst [vmem:[#allocation2 + $0x30] sm:$0xff] %v2591
      %2624 = vst [vmem:[#allocation2 + $0x38] sm:$0xff] %v2592
      %2625 = vst [vmem:[#allocation2 + $0x40] sm:$0xff] %v2593
      %2626 = vst [vmem:[#allocation2 + $0x48] sm:$0xff] %v2594
      %2627 = vst [vmem:[#allocation2 + $0x50] sm:$0xff] %v2595
      %2628 = vst [vmem:[#allocation2 + $0x58] sm:$0xff] %v2596
      %2629 = vst [vmem:[#allocation2 + $0x60] sm:$0xff] %v2597
      %2630 = vst [vmem:[#allocation2 + $0x68] sm:$0xff] %v2598
      %2631 = vst [vmem:[#allocation2 + $0x70] sm:$0xff] %v2599
      %2632 = vst [vmem:[#allocation2 + $0x78] sm:$0xff] %v2600
      %2633 = vst [vmem:[#allocation2 + $0x80] sm:$0xff] %v2601
      %2634 = vst [vmem:[#allocation2 + $0x88] sm:$0xff] %v2602
      %2635 = vst [vmem:[#allocation2 + $0x90] sm:$0xff] %v2603
      %2636 = vst [vmem:[#allocation2 + $0x98] sm:$0xff] %v2604
      %2637 = vst [vmem:[#allocation2 + $0xa0] sm:$0xff] %v2605
      %2638 = vst [vmem:[#allocation2 + $0xa8] sm:$0xff] %v2606
      %2639 = vst [vmem:[#allocation2 + $0xb0] sm:$0xff] %v2607
      %2640 = vst [vmem:[#allocation2 + $0xb8] sm:$0xff] %v2608
      %2641 = vst [vmem:[#allocation2 + $0xc0] sm:$0xff] %v2609
      %2642 = vst [vmem:[#allocation2 + $0xc8] sm:$0xff] %v2610
      %2643 = vst [vmem:[#allocation2 + $0xd0] sm:$0xff] %v2611
      %2644 = vst [vmem:[#allocation2 + $0xd8] sm:$0xff] %v2612
      %2645 = vst [vmem:[#allocation2 + $0xe0] sm:$0xff] %v2613
      %2646 = vst [vmem:[#allocation2 + $0xe8] sm:$0xff] %v2614
      %2647 = vst [vmem:[#allocation2 + $0xf0] sm:$0xff] %v2615
      %2648 = vst [vmem:[#allocation2 + $0xf8] sm:$0xff] %v2616
      %v2649 = vld [vmem:[%s2290 + $0x1] sm:$0xff]
      %v2650 = vld [vmem:[%s2290 + $0x9] sm:$0xff]
      %v2651 = vld [vmem:[%s2290 + $0x19] sm:$0xff]
      %v2652 = vld [vmem:[%s2290 + $0x21] sm:$0xff]
      %v2653 = vld [vmem:[%s2290 + $0x31] sm:$0xff]
      %v2654 = vld [vmem:[%s2290 + $0x39] sm:$0xff]
      %v2655 = vld [vmem:[%s2290 + $0x49] sm:$0xff]
      %v2656 = vld [vmem:[%s2290 + $0x51] sm:$0xff]
      %v2657 = vld [vmem:[%s2290 + $0x61] sm:$0xff]
      %v2658 = vld [vmem:[%s2290 + $0x69] sm:$0xff]
      %v2659 = vld [vmem:[%s2290 + $0x79] sm:$0xff]
      %v2660 = vld [vmem:[%s2290 + $0x81] sm:$0xff]
      %v2661 = vld [vmem:[%s2290 + $0x91] sm:$0xff]
      %v2662 = vld [vmem:[%s2290 + $0x99] sm:$0xff]
      %v2663 = vld [vmem:[%s2290 + $0xa9] sm:$0xff]
      %v2664 = vld [vmem:[%s2290 + $0xb1] sm:$0xff]
      %v2665 = vld [vmem:[%s2290 + $0xc1] sm:$0xff]
      %v2666 = vld [vmem:[%s2290 + $0xc9] sm:$0xff]
      %v2667 = vld [vmem:[%s2290 + $0xd9] sm:$0xff]
      %v2668 = vld [vmem:[%s2290 + $0xe1] sm:$0xff]
      %v2669 = vld [vmem:[%s2290 + $0xf1] sm:$0xff]
      %v2670 = vld [vmem:[%s2290 + $0xf9] sm:$0xff]
      %v2671 = vld [vmem:[%s2290 + $0x109] sm:$0xff]
      %v2672 = vld [vmem:[%s2290 + $0x111] sm:$0xff]
      %v2673 = vld [vmem:[%s2290 + $0x121] sm:$0xff]
      %v2674 = vld [vmem:[%s2290 + $0x129] sm:$0xff]
      %v2675 = vld [vmem:[%s2290 + $0x139] sm:$0xff]
      %v2676 = vld [vmem:[%s2290 + $0x141] sm:$0xff]
      %v2677 = vld [vmem:[%s2290 + $0x151] sm:$0xff]
      %v2678 = vld [vmem:[%s2290 + $0x159] sm:$0xff]
      %v2679 = vld [vmem:[%s2290 + $0x169] sm:$0xff]
      %v2680 = vld [vmem:[%s2290 + $0x171] sm:$0xff]
      %v2681 = vpack.c.bf16 %v2650, %v2649
      %v2682 = vpack.c.bf16 %v2652, %v2651
      %v2683 = vpack.c.bf16 %v2654, %v2653
      %v2684 = vpack.c.bf16 %v2656, %v2655
      %v2685 = vpack.c.bf16 %v2658, %v2657
      %v2686 = vpack.c.bf16 %v2660, %v2659
      %v2687 = vpack.c.bf16 %v2662, %v2661
      %v2688 = vpack.c.bf16 %v2664, %v2663
      %v2689 = vpack.c.bf16 %v2666, %v2665
      %v2690 = vpack.c.bf16 %v2668, %v2667
      %v2691 = vpack.c.bf16 %v2670, %v2669
      %v2692 = vpack.c.bf16 %v2672, %v2671
      %v2693 = vpack.c.bf16 %v2674, %v2673
      %v2694 = vpack.c.bf16 %v2676, %v2675
      %v2695 = vpack.c.bf16 %v2678, %v2677
      %v2696 = vpack.c.bf16 %v2680, %v2679
      %s2697 = scalar_lea.vmem %s1, 14
      %v2698 = vld [vmem:[%s2697] sm:$0x3]
      %v2700 = vsel %vm249, %v2681, 0
      %v2703 = vsel %vm249, %v2682, 0
      %v2706 = vsel %vm249, %v2683, 0
      %v2709 = vsel %vm249, %v2684, 0
      %v2712 = vsel %vm249, %v2685, 0
      %v2715 = vsel %vm249, %v2686, 0
      %v2718 = vsel %vm249, %v2687, 0
      %v2721 = vsel %vm249, %v2688, 0
      %v2724 = vsel %vm249, %v2689, 0
      %v2727 = vsel %vm249, %v2690, 0
      %v2730 = vsel %vm249, %v2691, 0
      %v2733 = vsel %vm249, %v2692, 0
      %v2736 = vsel %vm249, %v2693, 0
      %v2739 = vsel %vm249, %v2694, 0
      %v2742 = vsel %vm249, %v2695, 0
      %v2745 = vsel %vm249, %v2696, 0
      %v2748 = vsel %vm298, %v2698, 0
      %2750 = vmatprep.subr.bf16.mxu0 0
      %2751 = vmatpush1.bf16.msra.mxu0 %v2748
      %2752 = vmatprep.subr.bf16.mxu0 0
      %2753 = vmatpush1.bf16.msra.mxu0 0
      %2754 = vmatprep.subr.bf16.mxu0 0
      %2755 = vmatpush1.bf16.msra.mxu0 0
      %2756 = vmatprep.subr.bf16.mxu0 0
      %2757 = vmatpush1.bf16.msra.mxu0 0
      %2758 = vmatprep.subr.bf16.mxu0 0
      %2759 = vmatpush1.bf16.msra.mxu0 0
      %2760 = vmatprep.subr.bf16.mxu0 0
      %2761 = vmatpush1.bf16.msra.mxu0 0
      %2762 = vmatprep.subr.bf16.mxu0 0
      %2763 = vmatpush1.bf16.msra.mxu0 0
      %2764 = vmatprep.subr.bf16.mxu0 0
      %2765 = vmatpush1.bf16.msra.mxu0 0
      %2766 = vmatprep.subr.bf16.mxu0 0
      %2767 = vmatpush1.bf16.msra.mxu0 0
      %2768 = vmatprep.subr.bf16.mxu0 0
      %2769 = vmatpush1.bf16.msra.mxu0 0
      %2770 = vmatprep.subr.bf16.mxu0 0
      %2771 = vmatpush1.bf16.msra.mxu0 0
      %2772 = vmatprep.subr.bf16.mxu0 0
      %2773 = vmatpush1.bf16.msra.mxu0 0
      %2774 = vmatprep.subr.bf16.mxu0 0
      %2775 = vmatpush1.bf16.msra.mxu0 0
      %2776 = vmatprep.subr.bf16.mxu0 0
      %2777 = vmatpush1.bf16.msra.mxu0 0
      %2778 = vmatprep.subr.bf16.mxu0 0
      %2779 = vmatpush1.bf16.msra.mxu0 0
      %2780 = vmatprep.subr.bf16.mxu0 0
      %2781 = vmatpush1.bf16.msra.mxu0 0
      %2782 = vmatprep.mubr.bf16.mxu0 0
      %2783 = vmatmul.mubr.bf16.gmra.mrb[0].mxu0 %v2700
      %v2784 = vpop.f32.mrb[0].mxu0
      %v2785 = vadd.f32 0.0, %v2784
      %v2786 = vpop.f32.mrb[0].mxu0
      %v2787 = vpop.f32.mrb[0].mxu0
      %v2788 = vadd.f32 0.0, %v2787
      %v2789 = vpop.f32.mrb[0].mxu0
      %2790 = vmatprep.mubr.bf16.mxu0 0
      %2791 = vmatmul.mubr.bf16.gmra.mrb[0].mxu0 %v2703
      %v2792 = vpop.f32.mrb[0].mxu0
      %v2793 = vadd.f32 0.0, %v2792
      %v2794 = vpop.f32.mrb[0].mxu0
      %v2795 = vpop.f32.mrb[0].mxu0
      %v2796 = vadd.f32 0.0, %v2795
      %v2797 = vpop.f32.mrb[0].mxu0
      %2798 = vmatprep.mubr.bf16.mxu0 0
      %2799 = vmatmul.mubr.bf16.gmra.mrb[0].mxu0 %v2706
      %v2800 = vpop.f32.mrb[0].mxu0
      %v2801 = vadd.f32 0.0, %v2800
      %v2802 = vpop.f32.mrb[0].mxu0
      %v2803 = vpop.f32.mrb[0].mxu0
      %v2804 = vadd.f32 0.0, %v2803
      %v2805 = vpop.f32.mrb[0].mxu0
      %2806 = vmatprep.mubr.bf16.mxu0 0
      %2807 = vmatmul.mubr.bf16.gmra.mrb[0].mxu0 %v2709
      %v2808 = vpop.f32.mrb[0].mxu0
      %v2809 = vadd.f32 0.0, %v2808
      %v2810 = vpop.f32.mrb[0].mxu0
      %v2811 = vpop.f32.mrb[0].mxu0
      %v2812 = vadd.f32 0.0, %v2811
      %v2813 = vpop.f32.mrb[0].mxu0
      %2814 = vmatprep.mubr.bf16.mxu0 0
      %2815 = vmatmul.mubr.bf16.gmra.mrb[0].mxu0 %v2712
      %v2816 = vpop.f32.mrb[0].mxu0
      %v2817 = vadd.f32 0.0, %v2816
      %v2818 = vpop.f32.mrb[0].mxu0
      %v2819 = vpop.f32.mrb[0].mxu0
      %v2820 = vadd.f32 0.0, %v2819
      %v2821 = vpop.f32.mrb[0].mxu0
      %2822 = vmatprep.mubr.bf16.mxu0 0
      %2823 = vmatmul.mubr.bf16.gmra.mrb[0].mxu0 %v2715
      %v2824 = vpop.f32.mrb[0].mxu0
      %v2825 = vadd.f32 0.0, %v2824
      %v2826 = vpop.f32.mrb[0].mxu0
      %v2827 = vpop.f32.mrb[0].mxu0
      %v2828 = vadd.f32 0.0, %v2827
      %v2829 = vpop.f32.mrb[0].mxu0
      %2830 = vmatprep.mubr.bf16.mxu0 0
      %2831 = vmatmul.mubr.bf16.gmra.mrb[0].mxu0 %v2718
      %v2832 = vpop.f32.mrb[0].mxu0
      %v2833 = vadd.f32 0.0, %v2832
      %v2834 = vpop.f32.mrb[0].mxu0
      %v2835 = vpop.f32.mrb[0].mxu0
      %v2836 = vadd.f32 0.0, %v2835
      %v2837 = vpop.f32.mrb[0].mxu0
      %2838 = vmatprep.mubr.bf16.mxu0 0
      %2839 = vmatmul.mubr.bf16.gmra.mrb[0].mxu0 %v2721
      %v2840 = vpop.f32.mrb[0].mxu0
      %v2841 = vadd.f32 0.0, %v2840
      %v2842 = vpop.f32.mrb[0].mxu0
      %v2843 = vpop.f32.mrb[0].mxu0
      %v2844 = vadd.f32 0.0, %v2843
      %v2845 = vpop.f32.mrb[0].mxu0
      %2846 = vmatprep.mubr.bf16.mxu0 0
      %2847 = vmatmul.mubr.bf16.gmra.mrb[0].mxu0 %v2724
      %v2848 = vpop.f32.mrb[0].mxu0
      %v2849 = vadd.f32 0.0, %v2848
      %v2850 = vpop.f32.mrb[0].mxu0
      %v2851 = vpop.f32.mrb[0].mxu0
      %v2852 = vadd.f32 0.0, %v2851
      %v2853 = vpop.f32.mrb[0].mxu0
      %2854 = vmatprep.mubr.bf16.mxu0 0
      %2855 = vmatmul.mubr.bf16.gmra.mrb[0].mxu0 %v2727
      %v2856 = vpop.f32.mrb[0].mxu0
      %v2857 = vadd.f32 0.0, %v2856
      %v2858 = vpop.f32.mrb[0].mxu0
      %v2859 = vpop.f32.mrb[0].mxu0
      %v2860 = vadd.f32 0.0, %v2859
      %v2861 = vpop.f32.mrb[0].mxu0
      %2862 = vmatprep.mubr.bf16.mxu0 0
      %2863 = vmatmul.mubr.bf16.gmra.mrb[0].mxu0 %v2730
      %v2864 = vpop.f32.mrb[0].mxu0
      %v2865 = vadd.f32 0.0, %v2864
      %v2866 = vpop.f32.mrb[0].mxu0
      %v2867 = vpop.f32.mrb[0].mxu0
      %v2868 = vadd.f32 0.0, %v2867
      %v2869 = vpop.f32.mrb[0].mxu0
      %2870 = vmatprep.mubr.bf16.mxu0 0
      %2871 = vmatmul.mubr.bf16.gmra.mrb[0].mxu0 %v2733
      %v2872 = vpop.f32.mrb[0].mxu0
      %v2873 = vadd.f32 0.0, %v2872
      %v2874 = vpop.f32.mrb[0].mxu0
      %v2875 = vpop.f32.mrb[0].mxu0
      %v2876 = vadd.f32 0.0, %v2875
      %v2877 = vpop.f32.mrb[0].mxu0
      %2878 = vmatprep.mubr.bf16.mxu0 0
      %2879 = vmatmul.mubr.bf16.gmra.mrb[0].mxu0 %v2736
      %v2880 = vpop.f32.mrb[0].mxu0
      %v2881 = vadd.f32 0.0, %v2880
      %v2882 = vpop.f32.mrb[0].mxu0
      %v2883 = vpop.f32.mrb[0].mxu0
      %v2884 = vadd.f32 0.0, %v2883
      %v2885 = vpop.f32.mrb[0].mxu0
      %2886 = vmatprep.mubr.bf16.mxu0 0
      %2887 = vmatmul.mubr.bf16.gmra.mrb[0].mxu0 %v2739
      %v2888 = vpop.f32.mrb[0].mxu0
      %v2889 = vadd.f32 0.0, %v2888
      %v2890 = vpop.f32.mrb[0].mxu0
      %v2891 = vpop.f32.mrb[0].mxu0
      %v2892 = vadd.f32 0.0, %v2891
      %v2893 = vpop.f32.mrb[0].mxu0
      %2894 = vmatprep.mubr.bf16.mxu0 0
      %2895 = vmatmul.mubr.bf16.gmra.mrb[0].mxu0 %v2742
      %v2896 = vpop.f32.mrb[0].mxu0
      %v2897 = vadd.f32 0.0, %v2896
      %v2898 = vpop.f32.mrb[0].mxu0
      %v2899 = vpop.f32.mrb[0].mxu0
      %v2900 = vadd.f32 0.0, %v2899
      %v2901 = vpop.f32.mrb[0].mxu0
      %2902 = vmatprep.mubr.bf16.mxu0 0
      %2903 = vmatmul.mubr.bf16.gmra.mrb[0].mxu0 %v2745
      %v2904 = vpop.f32.mrb[0].mxu0
      %v2905 = vadd.f32 0.0, %v2904
      %v2906 = vpop.f32.mrb[0].mxu0
      %v2907 = vpop.f32.mrb[0].mxu0
      %v2908 = vadd.f32 0.0, %v2907
      %v2909 = vpop.f32.mrb[0].mxu0
      %2910 = vdwg.mxu0
      %v2911 = vld [vmem:[#allocation2] sm:$0xff]
      %v2912 = vld [vmem:[#allocation2 + $0x8] sm:$0xff]
      %v2913 = vld [vmem:[#allocation2 + $0x10] sm:$0xff]
      %v2914 = vld [vmem:[#allocation2 + $0x18] sm:$0xff]
      %v2915 = vld [vmem:[#allocation2 + $0x20] sm:$0xff]
      %v2916 = vld [vmem:[#allocation2 + $0x28] sm:$0xff]
      %v2917 = vld [vmem:[#allocation2 + $0x30] sm:$0xff]
      %v2918 = vld [vmem:[#allocation2 + $0x38] sm:$0xff]
      %v2919 = vld [vmem:[#allocation2 + $0x40] sm:$0xff]
      %v2920 = vld [vmem:[#allocation2 + $0x48] sm:$0xff]
      %v2921 = vld [vmem:[#allocation2 + $0x50] sm:$0xff]
      %v2922 = vld [vmem:[#allocation2 + $0x58] sm:$0xff]
      %v2923 = vld [vmem:[#allocation2 + $0x60] sm:$0xff]
      %v2924 = vld [vmem:[#allocation2 + $0x68] sm:$0xff]
      %v2925 = vld [vmem:[#allocation2 + $0x70] sm:$0xff]
      %v2926 = vld [vmem:[#allocation2 + $0x78] sm:$0xff]
      %v2927 = vld [vmem:[#allocation2 + $0x80] sm:$0xff]
      %v2928 = vld [vmem:[#allocation2 + $0x88] sm:$0xff]
      %v2929 = vld [vmem:[#allocation2 + $0x90] sm:$0xff]
      %v2930 = vld [vmem:[#allocation2 + $0x98] sm:$0xff]
      %v2931 = vld [vmem:[#allocation2 + $0xa0] sm:$0xff]
      %v2932 = vld [vmem:[#allocation2 + $0xa8] sm:$0xff]
      %v2933 = vld [vmem:[#allocation2 + $0xb0] sm:$0xff]
      %v2934 = vld [vmem:[#allocation2 + $0xb8] sm:$0xff]
      %v2935 = vld [vmem:[#allocation2 + $0xc0] sm:$0xff]
      %v2936 = vld [vmem:[#allocation2 + $0xc8] sm:$0xff]
      %v2937 = vld [vmem:[#allocation2 + $0xd0] sm:$0xff]
      %v2938 = vld [vmem:[#allocation2 + $0xd8] sm:$0xff]
      %v2939 = vld [vmem:[#allocation2 + $0xe0] sm:$0xff]
      %v2940 = vld [vmem:[#allocation2 + $0xe8] sm:$0xff]
      %v2941 = vld [vmem:[#allocation2 + $0xf0] sm:$0xff]
      %v2942 = vld [vmem:[#allocation2 + $0xf8] sm:$0xff]
      %v2943 = vadd.f32 %v2911, %v2785
      %v2944 = vadd.f32 %v2912, %v2788
      %v2945 = vadd.f32 %v2913, %v2793
      %v2946 = vadd.f32 %v2914, %v2796
      %v2947 = vadd.f32 %v2915, %v2801
      %v2948 = vadd.f32 %v2916, %v2804
      %v2949 = vadd.f32 %v2917, %v2809
      %v2950 = vadd.f32 %v2918, %v2812
      %v2951 = vadd.f32 %v2919, %v2817
      %v2952 = vadd.f32 %v2920, %v2820
      %v2953 = vadd.f32 %v2921, %v2825
      %v2954 = vadd.f32 %v2922, %v2828
      %v2955 = vadd.f32 %v2923, %v2833
      %v2956 = vadd.f32 %v2924, %v2836
      %v2957 = vadd.f32 %v2925, %v2841
      %v2958 = vadd.f32 %v2926, %v2844
      %v2959 = vadd.f32 %v2927, %v2849
      %v2960 = vadd.f32 %v2928, %v2852
      %v2961 = vadd.f32 %v2929, %v2857
      %v2962 = vadd.f32 %v2930, %v2860
      %v2963 = vadd.f32 %v2931, %v2865
      %v2964 = vadd.f32 %v2932, %v2868
      %v2965 = vadd.f32 %v2933, %v2873
      %v2966 = vadd.f32 %v2934, %v2876
      %v2967 = vadd.f32 %v2935, %v2881
      %v2968 = vadd.f32 %v2936, %v2884
      %v2969 = vadd.f32 %v2937, %v2889
      %v2970 = vadd.f32 %v2938, %v2892
      %v2971 = vadd.f32 %v2939, %v2897
      %v2972 = vadd.f32 %v2940, %v2900
      %v2973 = vadd.f32 %v2941, %v2905
      %v2974 = vadd.f32 %v2942, %v2908
      %2975 = vst [vmem:[#allocation2] sm:$0xff] %v2943
      %2976 = vst [vmem:[#allocation2 + $0x8] sm:$0xff] %v2944
      %2977 = vst [vmem:[#allocation2 + $0x10] sm:$0xff] %v2945
      %2978 = vst [vmem:[#allocation2 + $0x18] sm:$0xff] %v2946
      %2979 = vst [vmem:[#allocation2 + $0x20] sm:$0xff] %v2947
      %2980 = vst [vmem:[#allocation2 + $0x28] sm:$0xff] %v2948
      %2981 = vst [vmem:[#allocation2 + $0x30] sm:$0xff] %v2949
      %2982 = vst [vmem:[#allocation2 + $0x38] sm:$0xff] %v2950
      %2983 = vst [vmem:[#allocation2 + $0x40] sm:$0xff] %v2951
      %2984 = vst [vmem:[#allocation2 + $0x48] sm:$0xff] %v2952
      %2985 = vst [vmem:[#allocation2 + $0x50] sm:$0xff] %v2953
      %2986 = vst [vmem:[#allocation2 + $0x58] sm:$0xff] %v2954
      %2987 = vst [vmem:[#allocation2 + $0x60] sm:$0xff] %v2955
      %2988 = vst [vmem:[#allocation2 + $0x68] sm:$0xff] %v2956
      %2989 = vst [vmem:[#allocation2 + $0x70] sm:$0xff] %v2957
      %2990 = vst [vmem:[#allocation2 + $0x78] sm:$0xff] %v2958
      %2991 = vst [vmem:[#allocation2 + $0x80] sm:$0xff] %v2959
      %2992 = vst [vmem:[#allocation2 + $0x88] sm:$0xff] %v2960
      %2993 = vst [vmem:[#allocation2 + $0x90] sm:$0xff] %v2961
      %2994 = vst [vmem:[#allocation2 + $0x98] sm:$0xff] %v2962
      %2995 = vst [vmem:[#allocation2 + $0xa0] sm:$0xff] %v2963
      %2996 = vst [vmem:[#allocation2 + $0xa8] sm:$0xff] %v2964
      %2997 = vst [vmem:[#allocation2 + $0xb0] sm:$0xff] %v2965
      %2998 = vst [vmem:[#allocation2 + $0xb8] sm:$0xff] %v2966
      %2999 = vst [vmem:[#allocation2 + $0xc0] sm:$0xff] %v2967
      %3000 = vst [vmem:[#allocation2 + $0xc8] sm:$0xff] %v2968
      %3001 = vst [vmem:[#allocation2 + $0xd0] sm:$0xff] %v2969
      %3002 = vst [vmem:[#allocation2 + $0xd8] sm:$0xff] %v2970
      %3003 = vst [vmem:[#allocation2 + $0xe0] sm:$0xff] %v2971
      %3004 = vst [vmem:[#allocation2 + $0xe8] sm:$0xff] %v2972
      %3005 = vst [vmem:[#allocation2 + $0xf0] sm:$0xff] %v2973
      %3006 = vst [vmem:[#allocation2 + $0xf8] sm:$0xff] %v2974
      %v3007 = vld [vmem:[%s2290 + $0x2] sm:$0xff]
      %v3008 = vld [vmem:[%s2290 + $0xa] sm:$0xff]
      %v3009 = vld [vmem:[%s2290 + $0x1a] sm:$0xff]
      %v3010 = vld [vmem:[%s2290 + $0x22] sm:$0xff]
      %v3011 = vld [vmem:[%s2290 + $0x32] sm:$0xff]
      %v3012 = vld [vmem:[%s2290 + $0x3a] sm:$0xff]
      %v3013 = vld [vmem:[%s2290 + $0x4a] sm:$0xff]
      %v3014 = vld [vmem:[%s2290 + $0x52] sm:$0xff]
      %v3015 = vld [vmem:[%s2290 + $0x62] sm:$0xff]
      %v3016 = vld [vmem:[%s2290 + $0x6a] sm:$0xff]
      %v3017 = vld [vmem:[%s2290 + $0x7a] sm:$0xff]
      %v3018 = vld [vmem:[%s2290 + $0x82] sm:$0xff]
      %v3019 = vld [vmem:[%s2290 + $0x92] sm:$0xff]
      %v3020 = vld [vmem:[%s2290 + $0x9a] sm:$0xff]
      %v3021 = vld [vmem:[%s2290 + $0xaa] sm:$0xff]
      %v3022 = vld [vmem:[%s2290 + $0xb2] sm:$0xff]
      %v3023 = vld [vmem:[%s2290 + $0xc2] sm:$0xff]
      %v3024 = vld [vmem:[%s2290 + $0xca] sm:$0xff]
      %v3025 = vld [vmem:[%s2290 + $0xda] sm:$0xff]
      %v3026 = vld [vmem:[%s2290 + $0xe2] sm:$0xff]
      %v3027 = vld [vmem:[%s2290 + $0xf2] sm:$0xff]
      %v3028 = vld [vmem:[%s2290 + $0xfa] sm:$0xff]
      %v3029 = vld [vmem:[%s2290 + $0x10a] sm:$0xff]
      %v3030 = vld [vmem:[%s2290 + $0x112] sm:$0xff]
      %v3031 = vld [vmem:[%s2290 + $0x122] sm:$0xff]
      %v3032 = vld [vmem:[%s2290 + $0x12a] sm:$0xff]
      %v3033 = vld [vmem:[%s2290 + $0x13a] sm:$0xff]
      %v3034 = vld [vmem:[%s2290 + $0x142] sm:$0xff]
      %v3035 = vld [vmem:[%s2290 + $0x152] sm:$0xff]
      %v3036 = vld [vmem:[%s2290 + $0x15a] sm:$0xff]
      %v3037 = vld [vmem:[%s2290 + $0x16a] sm:$0xff]
      %v3038 = vld [vmem:[%s2290 + $0x172] sm:$0xff]
      %v3039 = vpack.c.bf16 %v3008, %v3007
      %v3040 = vpack.c.bf16 %v3010, %v3009
      %v3041 = vpack.c.bf16 %v3012, %v3011
      %v3042 = vpack.c.bf16 %v3014, %v3013
      %v3043 = vpack.c.bf16 %v3016, %v3015
      %v3044 = vpack.c.bf16 %v3018, %v3017
      %v3045 = vpack.c.bf16 %v3020, %v3019
      %v3046 = vpack.c.bf16 %v3022, %v3021
      %v3047 = vpack.c.bf16 %v3024, %v3023
      %v3048 = vpack.c.bf16 %v3026, %v3025
      %v3049 = vpack.c.bf16 %v3028, %v3027
      %v3050 = vpack.c.bf16 %v3030, %v3029
      %v3051 = vpack.c.bf16 %v3032, %v3031
      %v3052 = vpack.c.bf16 %v3034, %v3033
      %v3053 = vpack.c.bf16 %v3036, %v3035
      %v3054 = vpack.c.bf16 %v3038, %v3037
      %s3055 = scalar_lea.vmem %s1, 16
      %v3056 = vld [vmem:[%s3055] sm:$0x3]
      %v3058 = vsel %vm249, %v3039, 0
      %v3061 = vsel %vm249, %v3040, 0
      %v3064 = vsel %vm249, %v3041, 0
      %v3067 = vsel %vm249, %v3042, 0
      %v3070 = vsel %vm249, %v3043, 0
      %v3073 = vsel %vm249, %v3044, 0
      %v3076 = vsel %vm249, %v3045, 0
      %v3079 = vsel %vm249, %v3046, 0
      %v3082 = vsel %vm249, %v3047, 0
      %v3085 = vsel %vm249, %v3048, 0
      %v3088 = vsel %vm249, %v3049, 0
      %v3091 = vsel %vm249, %v3050, 0
      %v3094 = vsel %vm249, %v3051, 0
      %v3097 = vsel %vm249, %v3052, 0
      %v3100 = vsel %vm249, %v3053, 0
      %v3103 = vsel %vm249, %v3054, 0
      %v3106 = vsel %vm298, %v3056, 0
      %3108 = vmatprep.subr.bf16.mxu0 0
      %3109 = vmatpush1.bf16.msra.mxu0 %v3106
      %3110 = vmatprep.subr.bf16.mxu0 0
      %3111 = vmatpush1.bf16.msra.mxu0 0
      %3112 = vmatprep.subr.bf16.mxu0 0
      %3113 = vmatpush1.bf16.msra.mxu0 0
      %3114 = vmatprep.subr.bf16.mxu0 0
      %3115 = vmatpush1.bf16.msra.mxu0 0
      %3116 = vmatprep.subr.bf16.mxu0 0
      %3117 = vmatpush1.bf16.msra.mxu0 0
      %3118 = vmatprep.subr.bf16.mxu0 0
      %3119 = vmatpush1.bf16.msra.mxu0 0
      %3120 = vmatprep.subr.bf16.mxu0 0
      %3121 = vmatpush1.bf16.msra.mxu0 0
      %3122 = vmatprep.subr.bf16.mxu0 0
      %3123 = vmatpush1.bf16.msra.mxu0 0
      %3124 = vmatprep.subr.bf16.mxu0 0
      %3125 = vmatpush1.bf16.msra.mxu0 0
      %3126 = vmatprep.subr.bf16.mxu0 0
      %3127 = vmatpush1.bf16.msra.mxu0 0
      %3128 = vmatprep.subr.bf16.mxu0 0
      %3129 = vmatpush1.bf16.msra.mxu0 0
      %3130 = vmatprep.subr.bf16.mxu0 0
      %3131 = vmatpush1.bf16.msra.mxu0 0
      %3132 = vmatprep.subr.bf16.mxu0 0
      %3133 = vmatpush1.bf16.msra.mxu0 0
      %3134 = vmatprep.subr.bf16.mxu0 0
      %3135 = vmatpush1.bf16.msra.mxu0 0
      %3136 = vmatprep.subr.bf16.mxu0 0
      %3137 = vmatpush1.bf16.msra.mxu0 0
      %3138 = vmatprep.subr.bf16.mxu0 0
      %3139 = vmatpush1.bf16.msra.mxu0 0
      %3140 = vmatprep.mubr.bf16.mxu0 0
      %3141 = vmatmul.mubr.bf16.gmra.mrb[0].mxu0 %v3058
      %v3142 = vpop.f32.mrb[0].mxu0
      %v3143 = vadd.f32 0.0, %v3142
      %v3144 = vpop.f32.mrb[0].mxu0
      %v3145 = vpop.f32.mrb[0].mxu0
      %v3146 = vadd.f32 0.0, %v3145
      %v3147 = vpop.f32.mrb[0].mxu0
      %3148 = vmatprep.mubr.bf16.mxu0 0
      %3149 = vmatmul.mubr.bf16.gmra.mrb[0].mxu0 %v3061
      %v3150 = vpop.f32.mrb[0].mxu0
      %v3151 = vadd.f32 0.0, %v3150
      %v3152 = vpop.f32.mrb[0].mxu0
      %v3153 = vpop.f32.mrb[0].mxu0
      %v3154 = vadd.f32 0.0, %v3153
      %v3155 = vpop.f32.mrb[0].mxu0
      %3156 = vmatprep.mubr.bf16.mxu0 0
      %3157 = vmatmul.mubr.bf16.gmra.mrb[0].mxu0 %v3064
      %v3158 = vpop.f32.mrb[0].mxu0
      %v3159 = vadd.f32 0.0, %v3158
      %v3160 = vpop.f32.mrb[0].mxu0
      %v3161 = vpop.f32.mrb[0].mxu0
      %v3162 = vadd.f32 0.0, %v3161
      %v3163 = vpop.f32.mrb[0].mxu0
      %3164 = vmatprep.mubr.bf16.mxu0 0
      %3165 = vmatmul.mubr.bf16.gmra.mrb[0].mxu0 %v3067
      %v3166 = vpop.f32.mrb[0].mxu0
      %v3167 = vadd.f32 0.0, %v3166
      %v3168 = vpop.f32.mrb[0].mxu0
      %v3169 = vpop.f32.mrb[0].mxu0
      %v3170 = vadd.f32 0.0, %v3169
      %v3171 = vpop.f32.mrb[0].mxu0
      %3172 = vmatprep.mubr.bf16.mxu0 0
      %3173 = vmatmul.mubr.bf16.gmra.mrb[0].mxu0 %v3070
      %v3174 = vpop.f32.mrb[0].mxu0
      %v3175 = vadd.f32 0.0, %v3174
      %v3176 = vpop.f32.mrb[0].mxu0
      %v3177 = vpop.f32.mrb[0].mxu0
      %v3178 = vadd.f32 0.0, %v3177
      %v3179 = vpop.f32.mrb[0].mxu0
      %3180 = vmatprep.mubr.bf16.mxu0 0
      %3181 = vmatmul.mubr.bf16.gmra.mrb[0].mxu0 %v3073
      %v3182 = vpop.f32.mrb[0].mxu0
      %v3183 = vadd.f32 0.0, %v3182
      %v3184 = vpop.f32.mrb[0].mxu0
      %v3185 = vpop.f32.mrb[0].mxu0
      %v3186 = vadd.f32 0.0, %v3185
      %v3187 = vpop.f32.mrb[0].mxu0
      %3188 = vmatprep.mubr.bf16.mxu0 0
      %3189 = vmatmul.mubr.bf16.gmra.mrb[0].mxu0 %v3076
      %v3190 = vpop.f32.mrb[0].mxu0
      %v3191 = vadd.f32 0.0, %v3190
      %v3192 = vpop.f32.mrb[0].mxu0
      %v3193 = vpop.f32.mrb[0].mxu0
      %v3194 = vadd.f32 0.0, %v3193
      %v3195 = vpop.f32.mrb[0].mxu0
      %3196 = vmatprep.mubr.bf16.mxu0 0
      %3197 = vmatmul.mubr.bf16.gmra.mrb[0].mxu0 %v3079
      %v3198 = vpop.f32.mrb[0].mxu0
      %v3199 = vadd.f32 0.0, %v3198
      %v3200 = vpop.f32.mrb[0].mxu0
      %v3201 = vpop.f32.mrb[0].mxu0
      %v3202 = vadd.f32 0.0, %v3201
      %v3203 = vpop.f32.mrb[0].mxu0
      %3204 = vmatprep.mubr.bf16.mxu0 0
      %3205 = vmatmul.mubr.bf16.gmra.mrb[0].mxu0 %v3082
      %v3206 = vpop.f32.mrb[0].mxu0
      %v3207 = vadd.f32 0.0, %v3206
      %v3208 = vpop.f32.mrb[0].mxu0
      %v3209 = vpop.f32.mrb[0].mxu0
      %v3210 = vadd.f32 0.0, %v3209
      %v3211 = vpop.f32.mrb[0].mxu0
      %3212 = vmatprep.mubr.bf16.mxu0 0
      %3213 = vmatmul.mubr.bf16.gmra.mrb[0].mxu0 %v3085
      %v3214 = vpop.f32.mrb[0].mxu0
      %v3215 = vadd.f32 0.0, %v3214
      %v3216 = vpop.f32.mrb[0].mxu0
      %v3217 = vpop.f32.mrb[0].mxu0
      %v3218 = vadd.f32 0.0, %v3217
      %v3219 = vpop.f32.mrb[0].mxu0
      %3220 = vmatprep.mubr.bf16.mxu0 0
      %3221 = vmatmul.mubr.bf16.gmra.mrb[0].mxu0 %v3088
      %v3222 = vpop.f32.mrb[0].mxu0
      %v3223 = vadd.f32 0.0, %v3222
      %v3224 = vpop.f32.mrb[0].mxu0
      %v3225 = vpop.f32.mrb[0].mxu0
      %v3226 = vadd.f32 0.0, %v3225
      %v3227 = vpop.f32.mrb[0].mxu0
      %3228 = vmatprep.mubr.bf16.mxu0 0
      %3229 = vmatmul.mubr.bf16.gmra.mrb[0].mxu0 %v3091
      %v3230 = vpop.f32.mrb[0].mxu0
      %v3231 = vadd.f32 0.0, %v3230
      %v3232 = vpop.f32.mrb[0].mxu0
      %v3233 = vpop.f32.mrb[0].mxu0
      %v3234 = vadd.f32 0.0, %v3233
      %v3235 = vpop.f32.mrb[0].mxu0
      %3236 = vmatprep.mubr.bf16.mxu0 0
      %3237 = vmatmul.mubr.bf16.gmra.mrb[0].mxu0 %v3094
      %v3238 = vpop.f32.mrb[0].mxu0
      %v3239 = vadd.f32 0.0, %v3238
      %v3240 = vpop.f32.mrb[0].mxu0
      %v3241 = vpop.f32.mrb[0].mxu0
      %v3242 = vadd.f32 0.0, %v3241
      %v3243 = vpop.f32.mrb[0].mxu0
      %3244 = vmatprep.mubr.bf16.mxu0 0
      %3245 = vmatmul.mubr.bf16.gmra.mrb[0].mxu0 %v3097
      %v3246 = vpop.f32.mrb[0].mxu0
      %v3247 = vadd.f32 0.0, %v3246
      %v3248 = vpop.f32.mrb[0].mxu0
      %v3249 = vpop.f32.mrb[0].mxu0
      %v3250 = vadd.f32 0.0, %v3249
      %v3251 = vpop.f32.mrb[0].mxu0
      %3252 = vmatprep.mubr.bf16.mxu0 0
      %3253 = vmatmul.mubr.bf16.gmra.mrb[0].mxu0 %v3100
      %v3254 = vpop.f32.mrb[0].mxu0
      %v3255 = vadd.f32 0.0, %v3254
      %v3256 = vpop.f32.mrb[0].mxu0
      %v3257 = vpop.f32.mrb[0].mxu0
      %v3258 = vadd.f32 0.0, %v3257
      %v3259 = vpop.f32.mrb[0].mxu0
      %3260 = vmatprep.mubr.bf16.mxu0 0
      %3261 = vmatmul.mubr.bf16.gmra.mrb[0].mxu0 %v3103
      %v3262 = vpop.f32.mrb[0].mxu0
      %v3263 = vadd.f32 0.0, %v3262
      %v3264 = vpop.f32.mrb[0].mxu0
      %v3265 = vpop.f32.mrb[0].mxu0
      %v3266 = vadd.f32 0.0, %v3265
      %v3267 = vpop.f32.mrb[0].mxu0
      %3268 = vdwg.mxu0
      %v3269 = vld [vmem:[#allocation2] sm:$0xff]
      %v3270 = vld [vmem:[#allocation2 + $0x8] sm:$0xff]
      %v3271 = vld [vmem:[#allocation2 + $0x10] sm:$0xff]
      %v3272 = vld [vmem:[#allocation2 + $0x18] sm:$0xff]
      %v3273 = vld [vmem:[#allocation2 + $0x20] sm:$0xff]
      %v3274 = vld [vmem:[#allocation2 + $0x28] sm:$0xff]
      %v3275 = vld [vmem:[#allocation2 + $0x30] sm:$0xff]
      %v3276 = vld [vmem:[#allocation2 + $0x38] sm:$0xff]
      %v3277 = vld [vmem:[#allocation2 + $0x40] sm:$0xff]
      %v3278 = vld [vmem:[#allocation2 + $0x48] sm:$0xff]
      %v3279 = vld [vmem:[#allocation2 + $0x50] sm:$0xff]
      %v3280 = vld [vmem:[#allocation2 + $0x58] sm:$0xff]
      %v3281 = vld [vmem:[#allocation2 + $0x60] sm:$0xff]
      %v3282 = vld [vmem:[#allocation2 + $0x68] sm:$0xff]
      %v3283 = vld [vmem:[#allocation2 + $0x70] sm:$0xff]
      %v3284 = vld [vmem:[#allocation2 + $0x78] sm:$0xff]
      %v3285 = vld [vmem:[#allocation2 + $0x80] sm:$0xff]
      %v3286 = vld [vmem:[#allocation2 + $0x88] sm:$0xff]
      %v3287 = vld [vmem:[#allocation2 + $0x90] sm:$0xff]
      %v3288 = vld [vmem:[#allocation2 + $0x98] sm:$0xff]
      %v3289 = vld [vmem:[#allocation2 + $0xa0] sm:$0xff]
      %v3290 = vld [vmem:[#allocation2 + $0xa8] sm:$0xff]
      %v3291 = vld [vmem:[#allocation2 + $0xb0] sm:$0xff]
      %v3292 = vld [vmem:[#allocation2 + $0xb8] sm:$0xff]
      %v3293 = vld [vmem:[#allocation2 + $0xc0] sm:$0xff]
      %v3294 = vld [vmem:[#allocation2 + $0xc8] sm:$0xff]
      %v3295 = vld [vmem:[#allocation2 + $0xd0] sm:$0xff]
      %v3296 = vld [vmem:[#allocation2 + $0xd8] sm:$0xff]
      %v3297 = vld [vmem:[#allocation2 + $0xe0] sm:$0xff]
      %v3298 = vld [vmem:[#allocation2 + $0xe8] sm:$0xff]
      %v3299 = vld [vmem:[#allocation2 + $0xf0] sm:$0xff]
      %v3300 = vld [vmem:[#allocation2 + $0xf8] sm:$0xff]
      %v3301 = vadd.f32 %v3269, %v3143
      %v3302 = vadd.f32 %v3270, %v3146
      %v3303 = vadd.f32 %v3271, %v3151
      %v3304 = vadd.f32 %v3272, %v3154
      %v3305 = vadd.f32 %v3273, %v3159
      %v3306 = vadd.f32 %v3274, %v3162
      %v3307 = vadd.f32 %v3275, %v3167
      %v3308 = vadd.f32 %v3276, %v3170
      %v3309 = vadd.f32 %v3277, %v3175
      %v3310 = vadd.f32 %v3278, %v3178
      %v3311 = vadd.f32 %v3279, %v3183
      %v3312 = vadd.f32 %v3280, %v3186
      %v3313 = vadd.f32 %v3281, %v3191
      %v3314 = vadd.f32 %v3282, %v3194
      %v3315 = vadd.f32 %v3283, %v3199
      %v3316 = vadd.f32 %v3284, %v3202
      %v3317 = vadd.f32 %v3285, %v3207
      %v3318 = vadd.f32 %v3286, %v3210
      %v3319 = vadd.f32 %v3287, %v3215
      %v3320 = vadd.f32 %v3288, %v3218
      %v3321 = vadd.f32 %v3289, %v3223
      %v3322 = vadd.f32 %v3290, %v3226
      %v3323 = vadd.f32 %v3291, %v3231
      %v3324 = vadd.f32 %v3292, %v3234
      %v3325 = vadd.f32 %v3293, %v3239
      %v3326 = vadd.f32 %v3294, %v3242
      %v3327 = vadd.f32 %v3295, %v3247
      %v3328 = vadd.f32 %v3296, %v3250
      %v3329 = vadd.f32 %v3297, %v3255
      %v3330 = vadd.f32 %v3298, %v3258
      %v3331 = vadd.f32 %v3299, %v3263
      %v3332 = vadd.f32 %v3300, %v3266
      %3333 = vst [vmem:[#allocation2] sm:$0xff] %v3301
      %3334 = vst [vmem:[#allocation2 + $0x8] sm:$0xff] %v3302
      %3335 = vst [vmem:[#allocation2 + $0x10] sm:$0xff] %v3303
      %3336 = vst [vmem:[#allocation2 + $0x18] sm:$0xff] %v3304
      %3337 = vst [vmem:[#allocation2 + $0x20] sm:$0xff] %v3305
      %3338 = vst [vmem:[#allocation2 + $0x28] sm:$0xff] %v3306
      %3339 = vst [vmem:[#allocation2 + $0x30] sm:$0xff] %v3307
      %3340 = vst [vmem:[#allocation2 + $0x38] sm:$0xff] %v3308
      %3341 = vst [vmem:[#allocation2 + $0x40] sm:$0xff] %v3309
      %3342 = vst [vmem:[#allocation2 + $0x48] sm:$0xff] %v3310
      %3343 = vst [vmem:[#allocation2 + $0x50] sm:$0xff] %v3311
      %3344 = vst [vmem:[#allocation2 + $0x58] sm:$0xff] %v3312
      %3345 = vst [vmem:[#allocation2 + $0x60] sm:$0xff] %v3313
      %3346 = vst [vmem:[#allocation2 + $0x68] sm:$0xff] %v3314
      %3347 = vst [vmem:[#allocation2 + $0x70] sm:$0xff] %v3315
      %3348 = vst [vmem:[#allocation2 + $0x78] sm:$0xff] %v3316
      %3349 = vst [vmem:[#allocation2 + $0x80] sm:$0xff] %v3317
      %3350 = vst [vmem:[#allocation2 + $0x88] sm:$0xff] %v3318
      %3351 = vst [vmem:[#allocation2 + $0x90] sm:$0xff] %v3319
      %3352 = vst [vmem:[#allocation2 + $0x98] sm:$0xff] %v3320
      %3353 = vst [vmem:[#allocation2 + $0xa0] sm:$0xff] %v3321
      %3354 = vst [vmem:[#allocation2 + $0xa8] sm:$0xff] %v3322
      %3355 = vst [vmem:[#allocation2 + $0xb0] sm:$0xff] %v3323
      %3356 = vst [vmem:[#allocation2 + $0xb8] sm:$0xff] %v3324
      %3357 = vst [vmem:[#allocation2 + $0xc0] sm:$0xff] %v3325
      %3358 = vst [vmem:[#allocation2 + $0xc8] sm:$0xff] %v3326
      %3359 = vst [vmem:[#allocation2 + $0xd0] sm:$0xff] %v3327
      %3360 = vst [vmem:[#allocation2 + $0xd8] sm:$0xff] %v3328
      %3361 = vst [vmem:[#allocation2 + $0xe0] sm:$0xff] %v3329
      %3362 = vst [vmem:[#allocation2 + $0xe8] sm:$0xff] %v3330
      %3363 = vst [vmem:[#allocation2 + $0xf0] sm:$0xff] %v3331
      %3364 = vst [vmem:[#allocation2 + $0xf8] sm:$0xff] %v3332
      %v3365 = vld [vmem:[#allocation2] sm:$0xff]
      %v3366 = vld [vmem:[#allocation2 + $0x8] sm:$0xff]
      %v3367 = vld [vmem:[#allocation2 + $0x10] sm:$0xff]
      %v3368 = vld [vmem:[#allocation2 + $0x18] sm:$0xff]
      %v3369 = vld [vmem:[#allocation2 + $0x20] sm:$0xff]
      %v3370 = vld [vmem:[#allocation2 + $0x28] sm:$0xff]
      %v3371 = vld [vmem:[#allocation2 + $0x30] sm:$0xff]
      %v3372 = vld [vmem:[#allocation2 + $0x38] sm:$0xff]
      %v3373 = vld [vmem:[#allocation2 + $0x40] sm:$0xff]
      %v3374 = vld [vmem:[#allocation2 + $0x48] sm:$0xff]
      %v3375 = vld [vmem:[#allocation2 + $0x50] sm:$0xff]
      %v3376 = vld [vmem:[#allocation2 + $0x58] sm:$0xff]
      %v3377 = vld [vmem:[#allocation2 + $0x60] sm:$0xff]
      %v3378 = vld [vmem:[#allocation2 + $0x68] sm:$0xff]
      %v3379 = vld [vmem:[#allocation2 + $0x70] sm:$0xff]
      %v3380 = vld [vmem:[#allocation2 + $0x78] sm:$0xff]
      %v3381 = vld [vmem:[#allocation2 + $0x80] sm:$0xff]
      %v3382 = vld [vmem:[#allocation2 + $0x88] sm:$0xff]
      %v3383 = vld [vmem:[#allocation2 + $0x90] sm:$0xff]
      %v3384 = vld [vmem:[#allocation2 + $0x98] sm:$0xff]
      %v3385 = vld [vmem:[#allocation2 + $0xa0] sm:$0xff]
      %v3386 = vld [vmem:[#allocation2 + $0xa8] sm:$0xff]
      %v3387 = vld [vmem:[#allocation2 + $0xb0] sm:$0xff]
      %v3388 = vld [vmem:[#allocation2 + $0xb8] sm:$0xff]
      %v3389 = vld [vmem:[#allocation2 + $0xc0] sm:$0xff]
      %v3390 = vld [vmem:[#allocation2 + $0xc8] sm:$0xff]
      %v3391 = vld [vmem:[#allocation2 + $0xd0] sm:$0xff]
      %v3392 = vld [vmem:[#allocation2 + $0xd8] sm:$0xff]
      %v3393 = vld [vmem:[#allocation2 + $0xe0] sm:$0xff]
      %v3394 = vld [vmem:[#allocation2 + $0xe8] sm:$0xff]
      %v3395 = vld [vmem:[#allocation2 + $0xf0] sm:$0xff]
      %v3396 = vld [vmem:[#allocation2 + $0xf8] sm:$0xff]
      %v3397 = vld [vmem:[%s2] sm:$0x1]
      %v3399 = vlaneseq
      %v3400 = vshrl.u32 %v3399, 7
      %v3401 = vsub.s32 0, %v3400
      %v3402 = vrot.slane %v3397, %v3401
      %v3404 = vadd.f32 %v3365, %v3402
      %v3405 = vadd.f32 %v3366, %v3402
      %v3406 = vadd.f32 %v3367, %v3402
      %v3407 = vadd.f32 %v3368, %v3402
      %v3408 = vadd.f32 %v3369, %v3402
      %v3409 = vadd.f32 %v3370, %v3402
      %v3410 = vadd.f32 %v3371, %v3402
      %v3411 = vadd.f32 %v3372, %v3402
      %v3412 = vadd.f32 %v3373, %v3402
      %v3413 = vadd.f32 %v3374, %v3402
      %v3414 = vadd.f32 %v3375, %v3402
      %v3415 = vadd.f32 %v3376, %v3402
      %v3416 = vadd.f32 %v3377, %v3402
      %v3417 = vadd.f32 %v3378, %v3402
      %v3418 = vadd.f32 %v3379, %v3402
      %v3419 = vadd.f32 %v3380, %v3402
      %v3420 = vadd.f32 %v3381, %v3402
      %v3421 = vadd.f32 %v3382, %v3402
      %v3422 = vadd.f32 %v3383, %v3402
      %v3423 = vadd.f32 %v3384, %v3402
      %v3424 = vadd.f32 %v3385, %v3402
      %v3425 = vadd.f32 %v3386, %v3402
      %v3426 = vadd.f32 %v3387, %v3402
      %v3427 = vadd.f32 %v3388, %v3402
      %v3428 = vadd.f32 %v3389, %v3402
      %v3429 = vadd.f32 %v3390, %v3402
      %v3430 = vadd.f32 %v3391, %v3402
      %v3431 = vadd.f32 %v3392, %v3402
      %v3432 = vadd.f32 %v3393, %v3402
      %v3433 = vadd.f32 %v3394, %v3402
      %v3434 = vadd.f32 %v3395, %v3402
      %v3435 = vadd.f32 %v3396, %v3402
      %v3436 = vmul.f32 %v3404, 0.2
      %v3437 = vmul.f32 %v3405, 0.2
      %v3438 = vmul.f32 %v3406, 0.2
      %v3439 = vmul.f32 %v3407, 0.2
      %v3440 = vmul.f32 %v3408, 0.2
      %v3441 = vmul.f32 %v3409, 0.2
      %v3442 = vmul.f32 %v3410, 0.2
      %v3443 = vmul.f32 %v3411, 0.2
      %v3444 = vmul.f32 %v3412, 0.2
      %v3445 = vmul.f32 %v3413, 0.2
      %v3446 = vmul.f32 %v3414, 0.2
      %v3447 = vmul.f32 %v3415, 0.2
      %v3448 = vmul.f32 %v3416, 0.2
      %v3449 = vmul.f32 %v3417, 0.2
      %v3450 = vmul.f32 %v3418, 0.2
      %v3451 = vmul.f32 %v3419, 0.2
      %v3452 = vmul.f32 %v3420, 0.2
      %v3453 = vmul.f32 %v3421, 0.2
      %v3454 = vmul.f32 %v3422, 0.2
      %v3455 = vmul.f32 %v3423, 0.2
      %v3456 = vmul.f32 %v3424, 0.2
      %v3457 = vmul.f32 %v3425, 0.2
      %v3458 = vmul.f32 %v3426, 0.2
      %v3459 = vmul.f32 %v3427, 0.2
      %v3460 = vmul.f32 %v3428, 0.2
      %v3461 = vmul.f32 %v3429, 0.2
      %v3462 = vmul.f32 %v3430, 0.2
      %v3463 = vmul.f32 %v3431, 0.2
      %v3464 = vmul.f32 %v3432, 0.2
      %v3465 = vmul.f32 %v3433, 0.2
      %v3466 = vmul.f32 %v3434, 0.2
      %v3467 = vmul.f32 %v3435, 0.2
      %v3468 = vmax.f32 %v3404, %v3436
      %v3469 = vmax.f32 %v3405, %v3437
      %v3470 = vmax.f32 %v3406, %v3438
      %v3471 = vmax.f32 %v3407, %v3439
      %v3472 = vmax.f32 %v3408, %v3440
      %v3473 = vmax.f32 %v3409, %v3441
      %v3474 = vmax.f32 %v3410, %v3442
      %v3475 = vmax.f32 %v3411, %v3443
      %v3476 = vmax.f32 %v3412, %v3444
      %v3477 = vmax.f32 %v3413, %v3445
      %v3478 = vmax.f32 %v3414, %v3446
      %v3479 = vmax.f32 %v3415, %v3447
      %v3480 = vmax.f32 %v3416, %v3448
      %v3481 = vmax.f32 %v3417, %v3449
      %v3482 = vmax.f32 %v3418, %v3450
      %v3483 = vmax.f32 %v3419, %v3451
      %v3484 = vmax.f32 %v3420, %v3452
      %v3485 = vmax.f32 %v3421, %v3453
      %v3486 = vmax.f32 %v3422, %v3454
      %v3487 = vmax.f32 %v3423, %v3455
      %v3488 = vmax.f32 %v3424, %v3456
      %v3489 = vmax.f32 %v3425, %v3457
      %v3490 = vmax.f32 %v3426, %v3458
      %v3491 = vmax.f32 %v3427, %v3459
      %v3492 = vmax.f32 %v3428, %v3460
      %v3493 = vmax.f32 %v3429, %v3461
      %v3494 = vmax.f32 %v3430, %v3462
      %v3495 = vmax.f32 %v3431, %v3463
      %v3496 = vmax.f32 %v3432, %v3464
      %v3497 = vmax.f32 %v3433, %v3465
      %v3498 = vmax.f32 %v3434, %v3466
      %v3499 = vmax.f32 %v3435, %v3467
      %vm3500 = vcmask 64512
      %3501 = vst.msk [vmem:[%s194] sm:$0xff] %vm3500, %v3468
      %3502 = vst.msk [vmem:[%s194 + $0x8] sm:$0xff] %vm3500, %v3469
      %3503 = vst.msk [vmem:[%s194 + $0x10] sm:$0xff] %vm3500, %v3470
      %3504 = vst.msk [vmem:[%s194 + $0x18] sm:$0xff] %vm3500, %v3471
      %3505 = vst.msk [vmem:[%s194 + $0x20] sm:$0xff] %vm3500, %v3472
      %3506 = vst.msk [vmem:[%s194 + $0x28] sm:$0xff] %vm3500, %v3473
      %3507 = vst.msk [vmem:[%s194 + $0x30] sm:$0xff] %vm3500, %v3474
      %3508 = vst.msk [vmem:[%s194 + $0x38] sm:$0xff] %vm3500, %v3475
      %3509 = vst.msk [vmem:[%s194 + $0x40] sm:$0xff] %vm3500, %v3476
      %3510 = vst.msk [vmem:[%s194 + $0x48] sm:$0xff] %vm3500, %v3477
      %3511 = vst.msk [vmem:[%s194 + $0x50] sm:$0xff] %vm3500, %v3478
      %3512 = vst.msk [vmem:[%s194 + $0x58] sm:$0xff] %vm3500, %v3479
      %3513 = vst.msk [vmem:[%s194 + $0x60] sm:$0xff] %vm3500, %v3480
      %3514 = vst.msk [vmem:[%s194 + $0x68] sm:$0xff] %vm3500, %v3481
      %3515 = vst.msk [vmem:[%s194 + $0x70] sm:$0xff] %vm3500, %v3482
      %3516 = vst.msk [vmem:[%s194 + $0x78] sm:$0xff] %vm3500, %v3483
      %3517 = vst.msk [vmem:[%s194 + $0x80] sm:$0xff] %vm3500, %v3484
      %3518 = vst.msk [vmem:[%s194 + $0x88] sm:$0xff] %vm3500, %v3485
      %3519 = vst.msk [vmem:[%s194 + $0x90] sm:$0xff] %vm3500, %v3486
      %3520 = vst.msk [vmem:[%s194 + $0x98] sm:$0xff] %vm3500, %v3487
      %3521 = vst.msk [vmem:[%s194 + $0xa0] sm:$0xff] %vm3500, %v3488
      %3522 = vst.msk [vmem:[%s194 + $0xa8] sm:$0xff] %vm3500, %v3489
      %3523 = vst.msk [vmem:[%s194 + $0xb0] sm:$0xff] %vm3500, %v3490
      %3524 = vst.msk [vmem:[%s194 + $0xb8] sm:$0xff] %vm3500, %v3491
      %3525 = vst.msk [vmem:[%s194 + $0xc0] sm:$0xff] %vm3500, %v3492
      %3526 = vst.msk [vmem:[%s194 + $0xc8] sm:$0xff] %vm3500, %v3493
      %3527 = vst.msk [vmem:[%s194 + $0xd0] sm:$0xff] %vm3500, %v3494
      %3528 = vst.msk [vmem:[%s194 + $0xd8] sm:$0xff] %vm3500, %v3495
      %3529 = vst.msk [vmem:[%s194 + $0xe0] sm:$0xff] %vm3500, %v3496
      %3530 = vst.msk [vmem:[%s194 + $0xe8] sm:$0xff] %vm3500, %v3497
      %3531 = vst.msk [vmem:[%s194 + $0xf0] sm:$0xff] %vm3500, %v3498
      %3532 = vst.msk [vmem:[%s194 + $0xf8] sm:$0xff] %vm3500, %v3499
      %s3533 = smul.u32 16, %s19
      %p3534 = scmp.lt.s32.totalorder %s18, 1
      %s3535 = scalar_select %p3534, %s18, 1
      %p3536 = scmp.lt.s32.totalorder %s3533, 15
      %s3537 = scalar_select %p3536, %s3533, 15
      %s3538 = smul.addr %s3537, 2
      %s3539 = smul.addr %s3535, 32
      %s3540 = sadd.s32 %s3538, %s3539
      %s3541 = smul.addr %s3540, 8
      %s3542 = scalar_lea.vmem %s3, %s3541
      // Predicated region
      $region33: #{tpu_custom_call.1} parent=31 // pred_check
        %p3543 = pneg %p114
      $region34: #{tpu_custom_call.1} parent=31 // pred_check_branch
        %3545 = sbr.rel (%p3543) target = $region36
      $region35: #{tpu_custom_call.1} parent=31 // pred_region
        %s3546 = smul.u32 16, %s19
      $region36: #{tpu_custom_call.1} parent=31 // pred_fallthru
        _
    $region32: #{tpu_custom_call.1} parent=5 // pred_fallthru
      _
    %p3547 = scmp.le.s32.totalorder 2, %s9
    // Predicated region
    $region37: #{tpu_custom_call.1} parent=5 // pred_check
      %p3548 = pneg %p3547
    $region38: #{tpu_custom_call.1} parent=5 // pred_check_branch
      %3550 = sbr.rel (%p3548) target = $region40
    $region39: #{tpu_custom_call.1} parent=5 // pred_region
      %s3551 = ssub.s32 %s9, 2
      // Predicated region
      $region41: #{tpu_custom_call.1} parent=39 // pred_check
        %p3552 = pneg %p120
      $region42: #{tpu_custom_call.1} parent=39 // pred_check_branch
        %3554 = sbr.rel (%p3552) target = $region44
      $region43: #{tpu_custom_call.1} parent=39 // pred_region
        %s3555 = smul.u32 16, %s21
        %p3556 = scmp.lt.s32.totalorder %s20, 1
        %s3557 = scalar_select %p3556, %s20, 1
        %p3558 = scmp.lt.s32.totalorder %s3555, 15
        %s3559 = scalar_select %p3558, %s3555, 15
        %s3560 = smul.addr %s3559, 2
        %s3561 = smul.addr %s3557, 32
        %s3562 = sadd.s32 %s3560, %s3561
        %s3563 = smul.addr %s3562, 8
        %s3564 = scalar_lea.vmem %s3, %s3563
      $region44: #{tpu_custom_call.1} parent=39 // pred_fallthru
        _
    $region40: #{tpu_custom_call.1} parent=5 // pred_fallthru
      _
  $region6: #{tpu_custom_call.1} parent=0 // loop_footer
    %s13 = sadd.s32 1, %s9
  $region7: #{tpu_custom_call.1} parent=0 // loop_footer_branch
    %8 = sbr.rel target = $region3
  $region8: #{tpu_custom_call.1} parent=0 // loop_exit
    _

// kernel: tpu_custom_call.1
$region0: #{tpu_custom_call.1}
  #allocation0 [shape = 'u32[]', space=smem, size = 0x4, offset = 0x4, fixed_abs, tag = 'smem constant byte address 0x4 - core index']
  #allocation1 [shape = 'u32[144,128]{1,0:T(1,128)}', space=vmem, size = 0x12000, scoped, tag = 'internal scratch']
  #allocation2 [shape = 'f32[256,36]{1,0:T(8,128)}', space=vmem, size = 0x20000, scoped, tag = 'scratch operand']
  %s0 = inlined_call_operand.vmem [shape: f32[2,18,18,4], index: 0, kind: input, shape index: {}]
  %s1 = inlined_call_operand.vmem [shape: f32[36,128], index: 1, kind: input, shape index: {}]
  %s2 = inlined_call_operand.vmem [shape: f32[1,128], index: 2, kind: input, shape index: {}]
  %s3 = inlined_call_operand.hbm [shape: f32[2,16,16,128], index: 3, kind: output, shape index: {}]
  %s4 = sld [smem:[#allocation0]]
  $region45: #{tpu_custom_call.1} parent=0
    _
  %s6 = ssub.s32 1, %s4
  %s7 = scalar_select 0, %s6, %s4
  $region1: #{tpu_custom_call.1} parent=0
    #allocation3 [shape = 'u8[262144]{0}', space=vmem, size = 0x40000, scoped, tag = 'output window, operand 0']
    #allocation4 [shape = 's32[2]{0}', space=sflag, size = 0x8, scoped, tag = 'scoped memory for tpu_custom_call.1']
    %8 = vsyncpa [#allocation4], 0
    %s9 = scalar_lea.sflag [#allocation4], 1
    %10 = vsyncpa %s9, 0
    loop: start=0, step=1, limit=4
    $region2: #{tpu_custom_call.1} parent=1 // loop_pre_header
      _
    $region3: #{tpu_custom_call.1} parent=1 // loop_header
      %s12 = sphi 0, %s16
      %p13 = scmp.ge.s32.totalorder %s12, 4
      %s19 = sphi 0, %s31
      %s20 = sphi 0, %s27
      %s21 = sphi 0, %s19
      %s22 = sphi 0, %s20
      %s23 = sphi 0, %s21
      %s24 = sphi 0, %s22
      %s34 = sphi 0, %s36
      %s37 = sphi 0, %s34
      %s38 = sphi 0, %s37
      %s54 = sphi 0, %s38
      %s58 = sphi 0, %s58
      %s60 = sphi 0, %s58
      %s61 = sphi 0, %s60
      %s75 = sphi 0, %s61
      %s79 = sphi 0, %s79
      %s81 = sphi 0, %s79
      %s82 = sphi 0, %s81
      %s96 = sphi 0, %s82
      %s104 = sphi 0, %s106
      %s107 = sphi 0, %s104
      %s108 = sphi 0, %s107
      %s124 = sphi 0, %s108
    $region4: #{tpu_custom_call.1} parent=1 // loop_header_branch
      %15 = sbr.rel (%p13) target = $region8
    $region5: #{tpu_custom_call.1} parent=1 // loop_body
      %s17 = ssub.s32 %s12, 1
      %s18 = ssub.s32 %s12, 2
      %s25 = sadd.s32 1, %s20
      %p26 = scmp.ge.s32.totalorder %s25, 1
      %s27 = scalar_select %p26, 0, %s25
      %s28 = sadd.s32 1, %s19
      %s29 = scalar_select %p26, %s28, %s19
      %p30 = scmp.ge.s32.totalorder %s29, 2
      %s31 = scalar_select %p30, 0, %s29
      %s32 = ssub.s32 %s19, %s31
      %p33 = scmp.eq.s32.totalorder %s32, 0
      %s35 = sadd.s32 %s34, 1
      %s36 = scalar_select %p33, %s34, %s35
      %p39 = pneg %p33
      %p40 = scmp.eq.s32.totalorder %s12, 1
      %p41 = por %p39, %p40
      %p42 = scmp.ne.s32.totalorder %s34, %s37
      %p43 = scmp.eq.s32.totalorder %s12, 0
      %p44 = por %p42, %p43
      %p45 = scmp.ne.s32.totalorder %s34, %s37
      %p46 = scmp.eq.s32.totalorder %s17, 1
      %p47 = por %p45, %p46
      %p48 = scmp.ne.s32.totalorder %s37, %s38
      %p49 = scmp.eq.s32.totalorder %s17, 0
      %p50 = por %p48, %p49
      %p51 = scmp.ne.s32.totalorder %s37, %s38
      %p52 = scmp.eq.s32.totalorder %s18, 1
      %p53 = por %p51, %p52
      %p55 = scmp.ne.s32.totalorder %s38, %s54
      %p56 = scmp.eq.s32.totalorder %s18, 0
      %p57 = por %p55, %p56
      %s59 = sadd.s32 %s58, 1
      %p62 = scmp.eq.s32.totalorder %s12, 1
      %p63 = scmp.ne.s32.totalorder %s58, %s60
      %p64 = scmp.eq.s32.totalorder %s12, 0
      %p65 = por %p63, %p64
      %p66 = scmp.ne.s32.totalorder %s58, %s60
      %p67 = scmp.eq.s32.totalorder %s17, 1
      %p68 = por %p66, %p67
      %p69 = scmp.ne.s32.totalorder %s60, %s61
      %p70 = scmp.eq.s32.totalorder %s17, 0
      %p71 = por %p69, %p70
      %p72 = scmp.ne.s32.totalorder %s60, %s61
      %p73 = scmp.eq.s32.totalorder %s18, 1
      %p74 = por %p72, %p73
      %p76 = scmp.ne.s32.totalorder %s61, %s75
      %p77 = scmp.eq.s32.totalorder %s18, 0
      %p78 = por %p76, %p77
      %s80 = sadd.s32 %s79, 1
      %p83 = scmp.eq.s32.totalorder %s12, 1
      %p84 = scmp.ne.s32.totalorder %s79, %s81
      %p85 = scmp.eq.s32.totalorder %s12, 0
      %p86 = por %p84, %p85
      %p87 = scmp.ne.s32.totalorder %s79, %s81
      %p88 = scmp.eq.s32.totalorder %s17, 1
      %p89 = por %p87, %p88
      %p90 = scmp.ne.s32.totalorder %s81, %s82
      %p91 = scmp.eq.s32.totalorder %s17, 0
      %p92 = por %p90, %p91
      %p93 = scmp.ne.s32.totalorder %s81, %s82
      %p94 = scmp.eq.s32.totalorder %s18, 1
      %p95 = por %p93, %p94
      %p97 = scmp.ne.s32.totalorder %s82, %s96
      %p98 = scmp.eq.s32.totalorder %s18, 0
      %p99 = por %p97, %p98
      %s100 = ssub.s32 %s19, %s31
      %s101 = ssub.s32 %s20, %s27
      %s102 = sor.u32 %s100, %s101
      %p103 = scmp.eq.s32.totalorder %s102, 0
      %s105 = sadd.s32 %s104, 1
      %s106 = scalar_select %p103, %s104, %s105
      %p109 = pneg %p103
      %p110 = scmp.eq.s32.totalorder %s12, 1
      %p111 = por %p109, %p110
      %p112 = scmp.ne.s32.totalorder %s104, %s107
      %p113 = scmp.eq.s32.totalorder %s12, 0
      %p114 = por %p112, %p113
      %p115 = scmp.ne.s32.totalorder %s104, %s107
      %p116 = scmp.eq.s32.totalorder %s17, 1
      %p117 = por %p115, %p116
      %p118 = scmp.ne.s32.totalorder %s107, %s108
      %p119 = scmp.eq.s32.totalorder %s17, 0
      %p120 = por %p118, %p119
      %p121 = scmp.ne.s32.totalorder %s107, %s108
      %p122 = scmp.eq.s32.totalorder %s18, 1
      %p123 = por %p121, %p122
      %p125 = scmp.ne.s32.totalorder %s108, %s124
      %p126 = scmp.eq.s32.totalorder %s18, 0
      %p127 = por %p125, %p126
      %p128 = scmp.le.s32.totalorder 1, %s12
      %p129 = scmp.lt.s32.totalorder %s12, 3
      %p130 = pnand %p128, %p129
      %p131 = pneg %p130
      // Predicated region
      $region9: #{tpu_custom_call.1} parent=5 // pred_check
        _
      $region10: #{tpu_custom_call.1} parent=5 // pred_check_branch
        %133 = sbr.rel (%p130) target = $region12
      $region11: #{tpu_custom_call.1} parent=5 // pred_region
        %s134 = ssub.s32 %s12, 1
        // Predicated region
        $region13: #{tpu_custom_call.1} parent=11 // pred_check
          %p135 = pneg %p71
        $region14: #{tpu_custom_call.1} parent=11 // pred_check_branch
          %137 = sbr.rel (%p135) target = $region16
        $region15: #{tpu_custom_call.1} parent=11 // pred_region
          _
        $region16: #{tpu_custom_call.1} parent=11 // pred_fallthru
          _
        // Predicated region
        $region17: #{tpu_custom_call.1} parent=11 // pred_check
          %p138 = pneg %p92
        $region18: #{tpu_custom_call.1} parent=11 // pred_check_branch
          %140 = sbr.rel (%p138) target = $region20
        $region19: #{tpu_custom_call.1} parent=11 // pred_region
          _
        $region20: #{tpu_custom_call.1} parent=11 // pred_fallthru
          _
      $region12: #{tpu_custom_call.1} parent=5 // pred_fallthru
        _
      %p141 = scmp.lt.s32.totalorder %s12, 2
      // Predicated region
      $region21: #{tpu_custom_call.1} parent=5 // pred_check
        %p142 = pneg %p141
      $region22: #{tpu_custom_call.1} parent=5 // pred_check_branch
        %144 = sbr.rel (%p142) target = $region24
      $region23: #{tpu_custom_call.1} parent=5 // pred_region
        // Predicated region
        $region25: #{tpu_custom_call.1} parent=23 // pred_check
          %p145 = pneg %p44
        $region26: #{tpu_custom_call.1} parent=23 // pred_check_branch
          %147 = sbr.rel (%p145) target = $region28
        $region27: #{tpu_custom_call.1} parent=23 // pred_region
          %p148 = scmp.lt.s32.totalorder %s19, 1
          %s149 = scalar_select %p148, %s19, 1
          %s150 = smul.addr %s149, 54
          %s151 = smul.addr %s150, 8
          %s152 = scalar_lea.vmem %s0, %s151
        $region28: #{tpu_custom_call.1} parent=23 // pred_fallthru
          _
      $region24: #{tpu_custom_call.1} parent=5 // pred_fallthru
        _
      %p153 = scmp.le.s32.totalorder 1, %s12
      %p154 = scmp.lt.s32.totalorder %s12, 3
      %p155 = pnand %p153, %p154
      %p156 = pneg %p155
      // Predicated region
      $region29: #{tpu_custom_call.1} parent=5 // pred_check
        _
      $region30: #{tpu_custom_call.1} parent=5 // pred_check_branch
        %158 = sbr.rel (%p155) target = $region32
      $region31: #{tpu_custom_call.1} parent=5 // pred_region
        %s159 = ssub.s32 %s12, 1
        %p160 = scmp.lt.s32.totalorder %s21, 1
        %s161 = scalar_select %p160, %s21, 1
        %s162 = smul.addr %s161, 54
        %s163 = smul.addr %s162, 8
        %s164 = scalar_lea.vmem %s0, %s163
        %p165 = pneg %p50
        %p166 = pneg %p47
        %p167 = pneg %p71
        %p168 = pneg %p68
        %p169 = pneg %p92
        %p170 = pneg %p89
        %p171 = pneg %p120
        %p172 = pneg %p117
        %s173 = sand.u32 %s107, 1
        %s174 = scalar_lea.sflag [#allocation4], %s173
        %s175 = sand.u32 %s107, 1
        %s176 = smul.addr %s175, 256
        %s177 = scalar_lea.vmem [#allocation3], %s176
        %p178 = scmp.lt.s32.totalorder %s21, 1
        %s179 = scalar_select %p178, %s21, 1
        %s180 = smul.addr %s179, 54
        %s181 = smul.addr %s180, 8
        %s182 = scalar_lea.vmem %s0, %s181
        %s183 = smul.u32 16, %s22
        %s184 = smul.u32 %s22, 16
        %s185 = smul.u32 %s184, 24
        %s186 = scalar_lea.vmem %s182, %s185
        %v187 = vld [vmem:[%s186] sm:$0xff]
        %v188 = vld [vmem:[%s186 + $0x8] sm:$0xff]
        %v189 = vld [vmem:[%s186 + $0x18] sm:$0xff]
        %v190 = vld [vmem:[%s186 + $0x20] sm:$0xff]
        %v191 = vld [vmem:[%s186 + $0x30] sm:$0xff]
        %v192 = vld [vmem:[%s186 + $0x38] sm:$0xff]
        %v193 = vld [vmem:[%s186 + $0x48] sm:$0xff]
        %v194 = vld [vmem:[%s186 + $0x50] sm:$0xff]
        %v195 = vld [vmem:[%s186 + $0x60] sm:$0xff]
        %v196 = vld [vmem:[%s186 + $0x68] sm:$0xff]
        %v197 = vld [vmem:[%s186 + $0x78] sm:$0xff]
        %v198 = vld [vmem:[%s186 + $0x80] sm:$0xff]
        %v199 = vld [vmem:[%s186 + $0x90] sm:$0xff]
        %v200 = vld [vmem:[%s186 + $0x98] sm:$0xff]
        %v201 = vld [vmem:[%s186 + $0xa8] sm:$0xff]
        %v202 = vld [vmem:[%s186 + $0xb0] sm:$0xff]
        %v203 = vld [vmem:[%s186 + $0xc0] sm:$0xff]
        %v204 = vld [vmem:[%s186 + $0xc8] sm:$0xff]
        %v205 = vld [vmem:[%s186 + $0xd8] sm:$0xff]
        %v206 = vld [vmem:[%s186 + $0xe0] sm:$0xff]
        %v207 = vld [vmem:[%s186 + $0xf0] sm:$0xff]
        %v208 = vld [vmem:[%s186 + $0xf8] sm:$0xff]
        %v209 = vld [vmem:[%s186 + $0x108] sm:$0xff]
        %v210 = vld [vmem:[%s186 + $0x110] sm:$0xff]
        %v211 = vld [vmem:[%s186 + $0x120] sm:$0xff]
        %v212 = vld [vmem:[%s186 + $0x128] sm:$0xff]
        %v213 = vld [vmem:[%s186 + $0x138] sm:$0xff]
        %v214 = vld [vmem:[%s186 + $0x140] sm:$0xff]
        %v215 = vld [vmem:[%s186 + $0x150] sm:$0xff]
        %v216 = vld [vmem:[%s186 + $0x158] sm:$0xff]
        %v217 = vld [vmem:[%s186 + $0x168] sm:$0xff]
        %v218 = vld [vmem:[%s186 + $0x170] sm:$0xff]
        %vm219 = vcmask 31744
        %220 = vst.msk [vmem:[#allocation2] sm:$0xff] %vm219, %v187
        %221 = vst.msk [vmem:[#allocation2 + $0x8] sm:$0xff] %vm219, %v188
        %222 = vst.msk [vmem:[#allocation2 + $0x10] sm:$0xff] %vm219, %v189
        %223 = vst.msk [vmem:[#allocation2 + $0x18] sm:$0xff] %vm219, %v190
        %224 = vst.msk [vmem:[#allocation2 + $0x20] sm:$0xff] %vm219, %v191
        %225 = vst.msk [vmem:[#allocation2 + $0x28] sm:$0xff] %vm219, %v192
        %226 = vst.msk [vmem:[#allocation2 + $0x30] sm:$0xff] %vm219, %v193
        %227 = vst.msk [vmem:[#allocation2 + $0x38] sm:$0xff] %vm219, %v194
        %228 = vst.msk [vmem:[#allocation2 + $0x40] sm:$0xff] %vm219, %v195
        %229 = vst.msk [vmem:[#allocation2 + $0x48] sm:$0xff] %vm219, %v196
        %230 = vst.msk [vmem:[#allocation2 + $0x50] sm:$0xff] %vm219, %v197
        %231 = vst.msk [vmem:[#allocation2 + $0x58] sm:$0xff] %vm219, %v198
        %232 = vst.msk [vmem:[#allocation2 + $0x60] sm:$0xff] %vm219, %v199
        %233 = vst.msk [vmem:[#allocation2 + $0x68] sm:$0xff] %vm219, %v200
        %234 = vst.msk [vmem:[#allocation2 + $0x70] sm:$0xff] %vm219, %v201
        %235 = vst.msk [vmem:[#allocation2 + $0x78] sm:$0xff] %vm219, %v202
        %236 = vst.msk [vmem:[#allocation2 + $0x80] sm:$0xff] %vm219, %v203
        %237 = vst.msk [vmem:[#allocation2 + $0x88] sm:$0xff] %vm219, %v204
        %238 = vst.msk [vmem:[#allocation2 + $0x90] sm:$0xff] %vm219, %v205
        %239 = vst.msk [vmem:[#allocation2 + $0x98] sm:$0xff] %vm219, %v206
        %240 = vst.msk [vmem:[#allocation2 + $0xa0] sm:$0xff] %vm219, %v207
        %241 = vst.msk [vmem:[#allocation2 + $0xa8] sm:$0xff] %vm219, %v208
        %242 = vst.msk [vmem:[#allocation2 + $0xb0] sm:$0xff] %vm219, %v209
        %243 = vst.msk [vmem:[#allocation2 + $0xb8] sm:$0xff] %vm219, %v210
        %244 = vst.msk [vmem:[#allocation2 + $0xc0] sm:$0xff] %vm219, %v211
        %245 = vst.msk [vmem:[#allocation2 + $0xc8] sm:$0xff] %vm219, %v212
        %246 = vst.msk [vmem:[#allocation2 + $0xd0] sm:$0xff] %vm219, %v213
        %247 = vst.msk [vmem:[#allocation2 + $0xd8] sm:$0xff] %vm219, %v214
        %248 = vst.msk [vmem:[#allocation2 + $0xe0] sm:$0xff] %vm219, %v215
        %249 = vst.msk [vmem:[#allocation2 + $0xe8] sm:$0xff] %vm219, %v216
        %250 = vst.msk [vmem:[#allocation2 + $0xf0] sm:$0xff] %vm219, %v217
        %251 = vst.msk [vmem:[#allocation2 + $0xf8] sm:$0xff] %vm219, %v218
        %v252 = vld [vmem:[%s186 + $0x1] sm:$0xff]
        %v253 = vld [vmem:[%s186 + $0x9] sm:$0xff]
        %v254 = vld [vmem:[%s186 + $0x19] sm:$0xff]
        %v255 = vld [vmem:[%s186 + $0x21] sm:$0xff]
        %v256 = vld [vmem:[%s186 + $0x31] sm:$0xff]
        %v257 = vld [vmem:[%s186 + $0x39] sm:$0xff]
        %v258 = vld [vmem:[%s186 + $0x49] sm:$0xff]
        %v259 = vld [vmem:[%s186 + $0x51] sm:$0xff]
        %v260 = vld [vmem:[%s186 + $0x61] sm:$0xff]
        %v261 = vld [vmem:[%s186 + $0x69] sm:$0xff]
        %v262 = vld [vmem:[%s186 + $0x79] sm:$0xff]
        %v263 = vld [vmem:[%s186 + $0x81] sm:$0xff]
        %v264 = vld [vmem:[%s186 + $0x91] sm:$0xff]
        %v265 = vld [vmem:[%s186 + $0x99] sm:$0xff]
        %v266 = vld [vmem:[%s186 + $0xa9] sm:$0xff]
        %v267 = vld [vmem:[%s186 + $0xb1] sm:$0xff]
        %v268 = vld [vmem:[%s186 + $0xc1] sm:$0xff]
        %v269 = vld [vmem:[%s186 + $0xc9] sm:$0xff]
        %v270 = vld [vmem:[%s186 + $0xd9] sm:$0xff]
        %v271 = vld [vmem:[%s186 + $0xe1] sm:$0xff]
        %v272 = vld [vmem:[%s186 + $0xf1] sm:$0xff]
        %v273 = vld [vmem:[%s186 + $0xf9] sm:$0xff]
        %v274 = vld [vmem:[%s186 + $0x109] sm:$0xff]
        %v275 = vld [vmem:[%s186 + $0x111] sm:$0xff]
        %v276 = vld [vmem:[%s186 + $0x121] sm:$0xff]
        %v277 = vld [vmem:[%s186 + $0x129] sm:$0xff]
        %v278 = vld [vmem:[%s186 + $0x139] sm:$0xff]
        %v279 = vld [vmem:[%s186 + $0x141] sm:$0xff]
        %v280 = vld [vmem:[%s186 + $0x151] sm:$0xff]
        %v281 = vld [vmem:[%s186 + $0x159] sm:$0xff]
        %v282 = vld [vmem:[%s186 + $0x169] sm:$0xff]
        %v283 = vld [vmem:[%s186 + $0x171] sm:$0xff]
        %316 = vrot.lane.b32.xlu0 %v252, 4
        %v317 = vpop.permute.xlu0 %316
        %318 = vrot.lane.b32.xlu0 %v253, 4
        %v319 = vpop.permute.xlu0 %318
        %320 = vrot.lane.b32.xlu0 %v254, 4
        %v321 = vpop.permute.xlu0 %320
        %322 = vrot.lane.b32.xlu0 %v255, 4
        %v323 = vpop.permute.xlu0 %322
        %324 = vrot.lane.b32.xlu0 %v256, 4
        %v325 = vpop.permute.xlu0 %324
        %326 = vrot.lane.b32.xlu0 %v257, 4
        %v327 = vpop.permute.xlu0 %326
        %328 = vrot.lane.b32.xlu0 %v258, 4
        %v329 = vpop.permute.xlu0 %328
        %330 = vrot.lane.b32.xlu0 %v259, 4
        %v331 = vpop.permute.xlu0 %330
        %332 = vrot.lane.b32.xlu0 %v260, 4
        %v333 = vpop.permute.xlu0 %332
        %334 = vrot.lane.b32.xlu0 %v261, 4
        %v335 = vpop.permute.xlu0 %334
        %336 = vrot.lane.b32.xlu0 %v262, 4
        %v337 = vpop.permute.xlu0 %336
        %338 = vrot.lane.b32.xlu0 %v263, 4
        %v339 = vpop.permute.xlu0 %338
        %340 = vrot.lane.b32.xlu0 %v264, 4
        %v341 = vpop.permute.xlu0 %340
        %342 = vrot.lane.b32.xlu0 %v265, 4
        %v343 = vpop.permute.xlu0 %342
        %344 = vrot.lane.b32.xlu0 %v266, 4
        %v345 = vpop.permute.xlu0 %344
        %346 = vrot.lane.b32.xlu0 %v267, 4
        %v347 = vpop.permute.xlu0 %346
        %348 = vrot.lane.b32.xlu0 %v268, 4
        %v349 = vpop.permute.xlu0 %348
        %350 = vrot.lane.b32.xlu0 %v269, 4
        %v351 = vpop.permute.xlu0 %350
        %352 = vrot.lane.b32.xlu0 %v270, 4
        %v353 = vpop.permute.xlu0 %352
        %354 = vrot.lane.b32.xlu0 %v271, 4
        %v355 = vpop.permute.xlu0 %354
        %356 = vrot.lane.b32.xlu0 %v272, 4
        %v357 = vpop.permute.xlu0 %356
        %358 = vrot.lane.b32.xlu0 %v273, 4
        %v359 = vpop.permute.xlu0 %358
        %360 = vrot.lane.b32.xlu0 %v274, 4
        %v361 = vpop.permute.xlu0 %360
        %362 = vrot.lane.b32.xlu0 %v275, 4
        %v363 = vpop.permute.xlu0 %362
        %364 = vrot.lane.b32.xlu0 %v276, 4
        %v365 = vpop.permute.xlu0 %364
        %366 = vrot.lane.b32.xlu0 %v277, 4
        %v367 = vpop.permute.xlu0 %366
        %368 = vrot.lane.b32.xlu0 %v278, 4
        %v369 = vpop.permute.xlu0 %368
        %370 = vrot.lane.b32.xlu0 %v279, 4
        %v371 = vpop.permute.xlu0 %370
        %372 = vrot.lane.b32.xlu0 %v280, 4
        %v373 = vpop.permute.xlu0 %372
        %374 = vrot.lane.b32.xlu0 %v281, 4
        %v375 = vpop.permute.xlu0 %374
        %376 = vrot.lane.b32.xlu0 %v282, 4
        %v377 = vpop.permute.xlu0 %376
        %378 = vrot.lane.b32.xlu0 %v283, 4
        %v379 = vpop.permute.xlu0 %378
        %vm412 = vcmask 64544
        %413 = vst.msk [vmem:[#allocation2] sm:$0xff] %vm412, %v317
        %414 = vst.msk [vmem:[#allocation2 + $0x8] sm:$0xff] %vm412, %v319
        %415 = vst.msk [vmem:[#allocation2 + $0x10] sm:$0xff] %vm412, %v321
        %416 = vst.msk [vmem:[#allocation2 + $0x18] sm:$0xff] %vm412, %v323
        %417 = vst.msk [vmem:[#allocation2 + $0x20] sm:$0xff] %vm412, %v325
        %418 = vst.msk [vmem:[#allocation2 + $0x28] sm:$0xff] %vm412, %v327
        %419 = vst.msk [vmem:[#allocation2 + $0x30] sm:$0xff] %vm412, %v329
        %420 = vst.msk [vmem:[#allocation2 + $0x38] sm:$0xff] %vm412, %v331
        %421 = vst.msk [vmem:[#allocation2 + $0x40] sm:$0xff] %vm412, %v333
        %422 = vst.msk [vmem:[#allocation2 + $0x48] sm:$0xff] %vm412, %v335
        %423 = vst.msk [vmem:[#allocation2 + $0x50] sm:$0xff] %vm412, %v337
        %424 = vst.msk [vmem:[#allocation2 + $0x58] sm:$0xff] %vm412, %v339
        %425 = vst.msk [vmem:[#allocation2 + $0x60] sm:$0xff] %vm412, %v341
        %426 = vst.msk [vmem:[#allocation2 + $0x68] sm:$0xff] %vm412, %v343
        %427 = vst.msk [vmem:[#allocation2 + $0x70] sm:$0xff] %vm412, %v345
        %428 = vst.msk [vmem:[#allocation2 + $0x78] sm:$0xff] %vm412, %v347
        %429 = vst.msk [vmem:[#allocation2 + $0x80] sm:$0xff] %vm412, %v349
        %430 = vst.msk [vmem:[#allocation2 + $0x88] sm:$0xff] %vm412, %v351
        %431 = vst.msk [vmem:[#allocation2 + $0x90] sm:$0xff] %vm412, %v353
        %432 = vst.msk [vmem:[#allocation2 + $0x98] sm:$0xff] %vm412, %v355
        %433 = vst.msk [vmem:[#allocation2 + $0xa0] sm:$0xff] %vm412, %v357
        %434 = vst.msk [vmem:[#allocation2 + $0xa8] sm:$0xff] %vm412, %v359
        %435 = vst.msk [vmem:[#allocation2 + $0xb0] sm:$0xff] %vm412, %v361
        %436 = vst.msk [vmem:[#allocation2 + $0xb8] sm:$0xff] %vm412, %v363
        %437 = vst.msk [vmem:[#allocation2 + $0xc0] sm:$0xff] %vm412, %v365
        %438 = vst.msk [vmem:[#allocation2 + $0xc8] sm:$0xff] %vm412, %v367
        %439 = vst.msk [vmem:[#allocation2 + $0xd0] sm:$0xff] %vm412, %v369
        %440 = vst.msk [vmem:[#allocation2 + $0xd8] sm:$0xff] %vm412, %v371
        %441 = vst.msk [vmem:[#allocation2 + $0xe0] sm:$0xff] %vm412, %v373
        %442 = vst.msk [vmem:[#allocation2 + $0xe8] sm:$0xff] %vm412, %v375
        %443 = vst.msk [vmem:[#allocation2 + $0xf0] sm:$0xff] %vm412, %v377
        %444 = vst.msk [vmem:[#allocation2 + $0xf8] sm:$0xff] %vm412, %v379
        %v445 = vld [vmem:[%s186 + $0x2] sm:$0xff]
        %v446 = vld [vmem:[%s186 + $0xa] sm:$0xff]
        %v447 = vld [vmem:[%s186 + $0x1a] sm:$0xff]
        %v448 = vld [vmem:[%s186 + $0x22] sm:$0xff]
        %v449 = vld [vmem:[%s186 + $0x32] sm:$0xff]
        %v450 = vld [vmem:[%s186 + $0x3a] sm:$0xff]
        %v451 = vld [vmem:[%s186 + $0x4a] sm:$0xff]
        %v452 = vld [vmem:[%s186 + $0x52] sm:$0xff]
        %v453 = vld [vmem:[%s186 + $0x62] sm:$0xff]
        %v454 = vld [vmem:[%s186 + $0x6a] sm:$0xff]
        %v455 = vld [vmem:[%s186 + $0x7a] sm:$0xff]
        %v456 = vld [vmem:[%s186 + $0x82] sm:$0xff]
        %v457 = vld [vmem:[%s186 + $0x92] sm:$0xff]
        %v458 = vld [vmem:[%s186 + $0x9a] sm:$0xff]
        %v459 = vld [vmem:[%s186 + $0xaa] sm:$0xff]
        %v460 = vld [vmem:[%s186 + $0xb2] sm:$0xff]
        %v461 = vld [vmem:[%s186 + $0xc2] sm:$0xff]
        %v462 = vld [vmem:[%s186 + $0xca] sm:$0xff]
        %v463 = vld [vmem:[%s186 + $0xda] sm:$0xff]
        %v464 = vld [vmem:[%s186 + $0xe2] sm:$0xff]
        %v465 = vld [vmem:[%s186 + $0xf2] sm:$0xff]
        %v466 = vld [vmem:[%s186 + $0xfa] sm:$0xff]
        %v467 = vld [vmem:[%s186 + $0x10a] sm:$0xff]
        %v468 = vld [vmem:[%s186 + $0x112] sm:$0xff]
        %v469 = vld [vmem:[%s186 + $0x122] sm:$0xff]
        %v470 = vld [vmem:[%s186 + $0x12a] sm:$0xff]
        %v471 = vld [vmem:[%s186 + $0x13a] sm:$0xff]
        %v472 = vld [vmem:[%s186 + $0x142] sm:$0xff]
        %v473 = vld [vmem:[%s186 + $0x152] sm:$0xff]
        %v474 = vld [vmem:[%s186 + $0x15a] sm:$0xff]
        %v475 = vld [vmem:[%s186 + $0x16a] sm:$0xff]
        %v476 = vld [vmem:[%s186 + $0x172] sm:$0xff]
        %509 = vrot.lane.b32.xlu0 %v445, 8
        %v510 = vpop.permute.xlu0 %509
        %511 = vrot.lane.b32.xlu0 %v446, 8
        %v512 = vpop.permute.xlu0 %511
        %513 = vrot.lane.b32.xlu0 %v447, 8
        %v514 = vpop.permute.xlu0 %513
        %515 = vrot.lane.b32.xlu0 %v448, 8
        %v516 = vpop.permute.xlu0 %515
        %517 = vrot.lane.b32.xlu0 %v449, 8
        %v518 = vpop.permute.xlu0 %517
        %519 = vrot.lane.b32.xlu0 %v450, 8
        %v520 = vpop.permute.xlu0 %519
        %521 = vrot.lane.b32.xlu0 %v451, 8
        %v522 = vpop.permute.xlu0 %521
        %523 = vrot.lane.b32.xlu0 %v452, 8
        %v524 = vpop.permute.xlu0 %523
        %525 = vrot.lane.b32.xlu0 %v453, 8
        %v526 = vpop.permute.xlu0 %525
        %527 = vrot.lane.b32.xlu0 %v454, 8
        %v528 = vpop.permute.xlu0 %527
        %529 = vrot.lane.b32.xlu0 %v455, 8
        %v530 = vpop.permute.xlu0 %529
        %531 = vrot.lane.b32.xlu0 %v456, 8
        %v532 = vpop.permute.xlu0 %531
        %533 = vrot.lane.b32.xlu0 %v457, 8
        %v534 = vpop.permute.xlu0 %533
        %535 = vrot.lane.b32.xlu0 %v458, 8
        %v536 = vpop.permute.xlu0 %535
        %537 = vrot.lane.b32.xlu0 %v459, 8
        %v538 = vpop.permute.xlu0 %537
        %539 = vrot.lane.b32.xlu0 %v460, 8
        %v540 = vpop.permute.xlu0 %539
        %541 = vrot.lane.b32.xlu0 %v461, 8
        %v542 = vpop.permute.xlu0 %541
        %543 = vrot.lane.b32.xlu0 %v462, 8
        %v544 = vpop.permute.xlu0 %543
        %545 = vrot.lane.b32.xlu0 %v463, 8
        %v546 = vpop.permute.xlu0 %545
        %547 = vrot.lane.b32.xlu0 %v464, 8
        %v548 = vpop.permute.xlu0 %547
        %549 = vrot.lane.b32.xlu0 %v465, 8
        %v550 = vpop.permute.xlu0 %549
        %551 = vrot.lane.b32.xlu0 %v466, 8
        %v552 = vpop.permute.xlu0 %551
        %553 = vrot.lane.b32.xlu0 %v467, 8
        %v554 = vpop.permute.xlu0 %553
        %555 = vrot.lane.b32.xlu0 %v468, 8
        %v556 = vpop.permute.xlu0 %555
        %557 = vrot.lane.b32.xlu0 %v469, 8
        %v558 = vpop.permute.xlu0 %557
        %559 = vrot.lane.b32.xlu0 %v470, 8
        %v560 = vpop.permute.xlu0 %559
        %561 = vrot.lane.b32.xlu0 %v471, 8
        %v562 = vpop.permute.xlu0 %561
        %563 = vrot.lane.b32.xlu0 %v472, 8
        %v564 = vpop.permute.xlu0 %563
        %565 = vrot.lane.b32.xlu0 %v473, 8
        %v566 = vpop.permute.xlu0 %565
        %567 = vrot.lane.b32.xlu0 %v474, 8
        %v568 = vpop.permute.xlu0 %567
        %569 = vrot.lane.b32.xlu0 %v475, 8
        %v570 = vpop.permute.xlu0 %569
        %571 = vrot.lane.b32.xlu0 %v476, 8
        %v572 = vpop.permute.xlu0 %571
        %vm605 = vcmask 97344
        %606 = vst.msk [vmem:[#allocation2] sm:$0xff] %vm605, %v510
        %607 = vst.msk [vmem:[#allocation2 + $0x8] sm:$0xff] %vm605, %v512
        %608 = vst.msk [vmem:[#allocation2 + $0x10] sm:$0xff] %vm605, %v514
        %609 = vst.msk [vmem:[#allocation2 + $0x18] sm:$0xff] %vm605, %v516
        %610 = vst.msk [vmem:[#allocation2 + $0x20] sm:$0xff] %vm605, %v518
        %611 = vst.msk [vmem:[#allocation2 + $0x28] sm:$0xff] %vm605, %v520
        %612 = vst.msk [vmem:[#allocation2 + $0x30] sm:$0xff] %vm605, %v522
        %613 = vst.msk [vmem:[#allocation2 + $0x38] sm:$0xff] %vm605, %v524
        %614 = vst.msk [vmem:[#allocation2 + $0x40] sm:$0xff] %vm605, %v526
        %615 = vst.msk [vmem:[#allocation2 + $0x48] sm:$0xff] %vm605, %v528
        %616 = vst.msk [vmem:[#allocation2 + $0x50] sm:$0xff] %vm605, %v530
        %617 = vst.msk [vmem:[#allocation2 + $0x58] sm:$0xff] %vm605, %v532
        %618 = vst.msk [vmem:[#allocation2 + $0x60] sm:$0xff] %vm605, %v534
        %619 = vst.msk [vmem:[#allocation2 + $0x68] sm:$0xff] %vm605, %v536
        %620 = vst.msk [vmem:[#allocation2 + $0x70] sm:$0xff] %vm605, %v538
        %621 = vst.msk [vmem:[#allocation2 + $0x78] sm:$0xff] %vm605, %v540
        %622 = vst.msk [vmem:[#allocation2 + $0x80] sm:$0xff] %vm605, %v542
        %623 = vst.msk [vmem:[#allocation2 + $0x88] sm:$0xff] %vm605, %v544
        %624 = vst.msk [vmem:[#allocation2 + $0x90] sm:$0xff] %vm605, %v546
        %625 = vst.msk [vmem:[#allocation2 + $0x98] sm:$0xff] %vm605, %v548
        %626 = vst.msk [vmem:[#allocation2 + $0xa0] sm:$0xff] %vm605, %v550
        %627 = vst.msk [vmem:[#allocation2 + $0xa8] sm:$0xff] %vm605, %v552
        %628 = vst.msk [vmem:[#allocation2 + $0xb0] sm:$0xff] %vm605, %v554
        %629 = vst.msk [vmem:[#allocation2 + $0xb8] sm:$0xff] %vm605, %v556
        %630 = vst.msk [vmem:[#allocation2 + $0xc0] sm:$0xff] %vm605, %v558
        %631 = vst.msk [vmem:[#allocation2 + $0xc8] sm:$0xff] %vm605, %v560
        %632 = vst.msk [vmem:[#allocation2 + $0xd0] sm:$0xff] %vm605, %v562
        %633 = vst.msk [vmem:[#allocation2 + $0xd8] sm:$0xff] %vm605, %v564
        %634 = vst.msk [vmem:[#allocation2 + $0xe0] sm:$0xff] %vm605, %v566
        %635 = vst.msk [vmem:[#allocation2 + $0xe8] sm:$0xff] %vm605, %v568
        %636 = vst.msk [vmem:[#allocation2 + $0xf0] sm:$0xff] %vm605, %v570
        %637 = vst.msk [vmem:[#allocation2 + $0xf8] sm:$0xff] %vm605, %v572
        %s638 = sadd.s32 %s184, 1
        %s639 = smul.u32 %s638, 24
        %s640 = scalar_lea.vmem %s182, %s639
        %v641 = vld [vmem:[%s640] sm:$0xff]
        %v642 = vld [vmem:[%s640 + $0x8] sm:$0xff]
        %v643 = vld [vmem:[%s640 + $0x18] sm:$0xff]
        %v644 = vld [vmem:[%s640 + $0x20] sm:$0xff]
        %v645 = vld [vmem:[%s640 + $0x30] sm:$0xff]
        %v646 = vld [vmem:[%s640 + $0x38] sm:$0xff]
        %v647 = vld [vmem:[%s640 + $0x48] sm:$0xff]
        %v648 = vld [vmem:[%s640 + $0x50] sm:$0xff]
        %v649 = vld [vmem:[%s640 + $0x60] sm:$0xff]
        %v650 = vld [vmem:[%s640 + $0x68] sm:$0xff]
        %v651 = vld [vmem:[%s640 + $0x78] sm:$0xff]
        %v652 = vld [vmem:[%s640 + $0x80] sm:$0xff]
        %v653 = vld [vmem:[%s640 + $0x90] sm:$0xff]
        %v654 = vld [vmem:[%s640 + $0x98] sm:$0xff]
        %v655 = vld [vmem:[%s640 + $0xa8] sm:$0xff]
        %v656 = vld [vmem:[%s640 + $0xb0] sm:$0xff]
        %v657 = vld [vmem:[%s640 + $0xc0] sm:$0xff]
        %v658 = vld [vmem:[%s640 + $0xc8] sm:$0xff]
        %v659 = vld [vmem:[%s640 + $0xd8] sm:$0xff]
        %v660 = vld [vmem:[%s640 + $0xe0] sm:$0xff]
        %v661 = vld [vmem:[%s640 + $0xf0] sm:$0xff]
        %v662 = vld [vmem:[%s640 + $0xf8] sm:$0xff]
        %v663 = vld [vmem:[%s640 + $0x108] sm:$0xff]
        %v664 = vld [vmem:[%s640 + $0x110] sm:$0xff]
        %v665 = vld [vmem:[%s640 + $0x120] sm:$0xff]
        %v666 = vld [vmem:[%s640 + $0x128] sm:$0xff]
        %v667 = vld [vmem:[%s640 + $0x138] sm:$0xff]
        %v668 = vld [vmem:[%s640 + $0x140] sm:$0xff]
        %v669 = vld [vmem:[%s640 + $0x150] sm:$0xff]
        %v670 = vld [vmem:[%s640 + $0x158] sm:$0xff]
        %v671 = vld [vmem:[%s640 + $0x168] sm:$0xff]
        %v672 = vld [vmem:[%s640 + $0x170] sm:$0xff]
        %705 = vrot.lane.b32.xlu0 %v641, 12
        %v706 = vpop.permute.xlu0 %705
        %707 = vrot.lane.b32.xlu0 %v642, 12
        %v708 = vpop.permute.xlu0 %707
        %709 = vrot.lane.b32.xlu0 %v643, 12
        %v710 = vpop.permute.xlu0 %709
        %711 = vrot.lane.b32.xlu0 %v644, 12
        %v712 = vpop.permute.xlu0 %711
        %713 = vrot.lane.b32.xlu0 %v645, 12
        %v714 = vpop.permute.xlu0 %713
        %715 = vrot.lane.b32.xlu0 %v646, 12
        %v716 = vpop.permute.xlu0 %715
        %717 = vrot.lane.b32.xlu0 %v647, 12
        %v718 = vpop.permute.xlu0 %717
        %719 = vrot.lane.b32.xlu0 %v648, 12
        %v720 = vpop.permute.xlu0 %719
        %721 = vrot.lane.b32.xlu0 %v649, 12
        %v722 = vpop.permute.xlu0 %721
        %723 = vrot.lane.b32.xlu0 %v650, 12
        %v724 = vpop.permute.xlu0 %723
        %725 = vrot.lane.b32.xlu0 %v651, 12
        %v726 = vpop.permute.xlu0 %725
        %727 = vrot.lane.b32.xlu0 %v652, 12
        %v728 = vpop.permute.xlu0 %727
        %729 = vrot.lane.b32.xlu0 %v653, 12
        %v730 = vpop.permute.xlu0 %729
        %731 = vrot.lane.b32.xlu0 %v654, 12
        %v732 = vpop.permute.xlu0 %731
        %733 = vrot.lane.b32.xlu0 %v655, 12
        %v734 = vpop.permute.xlu0 %733
        %735 = vrot.lane.b32.xlu0 %v656, 12
        %v736 = vpop.permute.xlu0 %735
        %737 = vrot.lane.b32.xlu0 %v657, 12
        %v738 = vpop.permute.xlu0 %737
        %739 = vrot.lane.b32.xlu0 %v658, 12
        %v740 = vpop.permute.xlu0 %739
        %741 = vrot.lane.b32.xlu0 %v659, 12
        %v742 = vpop.permute.xlu0 %741
        %743 = vrot.lane.b32.xlu0 %v660, 12
        %v744 = vpop.permute.xlu0 %743
        %745 = vrot.lane.b32.xlu0 %v661, 12
        %v746 = vpop.permute.xlu0 %745
        %747 = vrot.lane.b32.xlu0 %v662, 12
        %v748 = vpop.permute.xlu0 %747
        %749 = vrot.lane.b32.xlu0 %v663, 12
        %v750 = vpop.permute.xlu0 %749
        %751 = vrot.lane.b32.xlu0 %v664, 12
        %v752 = vpop.permute.xlu0 %751
        %753 = vrot.lane.b32.xlu0 %v665, 12
        %v754 = vpop.permute.xlu0 %753
        %755 = vrot.lane.b32.xlu0 %v666, 12
        %v756 = vpop.permute.xlu0 %755
        %757 = vrot.lane.b32.xlu0 %v667, 12
        %v758 = vpop.permute.xlu0 %757
        %759 = vrot.lane.b32.xlu0 %v668, 12
        %v760 = vpop.permute.xlu0 %759
        %761 = vrot.lane.b32.xlu0 %v669, 12
        %v762 = vpop.permute.xlu0 %761
        %763 = vrot.lane.b32.xlu0 %v670, 12
        %v764 = vpop.permute.xlu0 %763
        %765 = vrot.lane.b32.xlu0 %v671, 12
        %v766 = vpop.permute.xlu0 %765
        %767 = vrot.lane.b32.xlu0 %v672, 12
        %v768 = vpop.permute.xlu0 %767
        %vm801 = vcmask 130144
        %802 = vst.msk [vmem:[#allocation2] sm:$0xff] %vm801, %v706
        %803 = vst.msk [vmem:[#allocation2 + $0x8] sm:$0xff] %vm801, %v708
        %804 = vst.msk [vmem:[#allocation2 + $0x10] sm:$0xff] %vm801, %v710
        %805 = vst.msk [vmem:[#allocation2 + $0x18] sm:$0xff] %vm801, %v712
        %806 = vst.msk [vmem:[#allocation2 + $0x20] sm:$0xff] %vm801, %v714
        %807 = vst.msk [vmem:[#allocation2 + $0x28] sm:$0xff] %vm801, %v716
        %808 = vst.msk [vmem:[#allocation2 + $0x30] sm:$0xff] %vm801, %v718
        %809 = vst.msk [vmem:[#allocation2 + $0x38] sm:$0xff] %vm801, %v720
        %810 = vst.msk [vmem:[#allocation2 + $0x40] sm:$0xff] %vm801, %v722
        %811 = vst.msk [vmem:[#allocation2 + $0x48] sm:$0xff] %vm801, %v724
        %812 = vst.msk [vmem:[#allocation2 + $0x50] sm:$0xff] %vm801, %v726
        %813 = vst.msk [vmem:[#allocation2 + $0x58] sm:$0xff] %vm801, %v728
        %814 = vst.msk [vmem:[#allocation2 + $0x60] sm:$0xff] %vm801, %v730
        %815 = vst.msk [vmem:[#allocation2 + $0x68] sm:$0xff] %vm801, %v732
        %816 = vst.msk [vmem:[#allocation2 + $0x70] sm:$0xff] %vm801, %v734
        %817 = vst.msk [vmem:[#allocation2 + $0x78] sm:$0xff] %vm801, %v736
        %818 = vst.msk [vmem:[#allocation2 + $0x80] sm:$0xff] %vm801, %v738
        %819 = vst.msk [vmem:[#allocation2 + $0x88] sm:$0xff] %vm801, %v740
        %820 = vst.msk [vmem:[#allocation2 + $0x90] sm:$0xff] %vm801, %v742
        %821 = vst.msk [vmem:[#allocation2 + $0x98] sm:$0xff] %vm801, %v744
        %822 = vst.msk [vmem:[#allocation2 + $0xa0] sm:$0xff] %vm801, %v746
        %823 = vst.msk [vmem:[#allocation2 + $0xa8] sm:$0xff] %vm801, %v748
        %824 = vst.msk [vmem:[#allocation2 + $0xb0] sm:$0xff] %vm801, %v750
        %825 = vst.msk [vmem:[#allocation2 + $0xb8] sm:$0xff] %vm801, %v752
        %826 = vst.msk [vmem:[#allocation2 + $0xc0] sm:$0xff] %vm801, %v754
        %827 = vst.msk [vmem:[#allocation2 + $0xc8] sm:$0xff] %vm801, %v756
        %828 = vst.msk [vmem:[#allocation2 + $0xd0] sm:$0xff] %vm801, %v758
        %829 = vst.msk [vmem:[#allocation2 + $0xd8] sm:$0xff] %vm801, %v760
        %830 = vst.msk [vmem:[#allocation2 + $0xe0] sm:$0xff] %vm801, %v762
        %831 = vst.msk [vmem:[#allocation2 + $0xe8] sm:$0xff] %vm801, %v764
        %832 = vst.msk [vmem:[#allocation2 + $0xf0] sm:$0xff] %vm801, %v766
        %833 = vst.msk [vmem:[#allocation2 + $0xf8] sm:$0xff] %vm801, %v768
        %v834 = vld [vmem:[%s640 + $0x1] sm:$0xff]
        %v835 = vld [vmem:[%s640 + $0x9] sm:$0xff]
        %v836 = vld [vmem:[%s640 + $0x19] sm:$0xff]
        %v837 = vld [vmem:[%s640 + $0x21] sm:$0xff]
        %v838 = vld [vmem:[%s640 + $0x31] sm:$0xff]
        %v839 = vld [vmem:[%s640 + $0x39] sm:$0xff]
        %v840 = vld [vmem:[%s640 + $0x49] sm:$0xff]
        %v841 = vld [vmem:[%s640 + $0x51] sm:$0xff]
        %v842 = vld [vmem:[%s640 + $0x61] sm:$0xff]
        %v843 = vld [vmem:[%s640 + $0x69] sm:$0xff]
        %v844 = vld [vmem:[%s640 + $0x79] sm:$0xff]
        %v845 = vld [vmem:[%s640 + $0x81] sm:$0xff]
        %v846 = vld [vmem:[%s640 + $0x91] sm:$0xff]
        %v847 = vld [vmem:[%s640 + $0x99] sm:$0xff]
        %v848 = vld [vmem:[%s640 + $0xa9] sm:$0xff]
        %v849 = vld [vmem:[%s640 + $0xb1] sm:$0xff]
        %v850 = vld [vmem:[%s640 + $0xc1] sm:$0xff]
        %v851 = vld [vmem:[%s640 + $0xc9] sm:$0xff]
        %v852 = vld [vmem:[%s640 + $0xd9] sm:$0xff]
        %v853 = vld [vmem:[%s640 + $0xe1] sm:$0xff]
        %v854 = vld [vmem:[%s640 + $0xf1] sm:$0xff]
        %v855 = vld [vmem:[%s640 + $0xf9] sm:$0xff]
        %v856 = vld [vmem:[%s640 + $0x109] sm:$0xff]
        %v857 = vld [vmem:[%s640 + $0x111] sm:$0xff]
        %v858 = vld [vmem:[%s640 + $0x121] sm:$0xff]
        %v859 = vld [vmem:[%s640 + $0x129] sm:$0xff]
        %v860 = vld [vmem:[%s640 + $0x139] sm:$0xff]
        %v861 = vld [vmem:[%s640 + $0x141] sm:$0xff]
        %v862 = vld [vmem:[%s640 + $0x151] sm:$0xff]
        %v863 = vld [vmem:[%s640 + $0x159] sm:$0xff]
        %v864 = vld [vmem:[%s640 + $0x169] sm:$0xff]
        %v865 = vld [vmem:[%s640 + $0x171] sm:$0xff]
        %898 = vrot.lane.b32.xlu0 %v834, 16
        %v899 = vpop.permute.xlu0 %898
        %900 = vrot.lane.b32.xlu0 %v835, 16
        %v901 = vpop.permute.xlu0 %900
        %902 = vrot.lane.b32.xlu0 %v836, 16
        %v903 = vpop.permute.xlu0 %902
        %904 = vrot.lane.b32.xlu0 %v837, 16
        %v905 = vpop.permute.xlu0 %904
        %906 = vrot.lane.b32.xlu0 %v838, 16
        %v907 = vpop.permute.xlu0 %906
        %908 = vrot.lane.b32.xlu0 %v839, 16
        %v909 = vpop.permute.xlu0 %908
        %910 = vrot.lane.b32.xlu0 %v840, 16
        %v911 = vpop.permute.xlu0 %910
        %912 = vrot.lane.b32.xlu0 %v841, 16
        %v913 = vpop.permute.xlu0 %912
        %914 = vrot.lane.b32.xlu0 %v842, 16
        %v915 = vpop.permute.xlu0 %914
        %916 = vrot.lane.b32.xlu0 %v843, 16
        %v917 = vpop.permute.xlu0 %916
        %918 = vrot.lane.b32.xlu0 %v844, 16
        %v919 = vpop.permute.xlu0 %918
        %920 = vrot.lane.b32.xlu0 %v845, 16
        %v921 = vpop.permute.xlu0 %920
        %922 = vrot.lane.b32.xlu0 %v846, 16
        %v923 = vpop.permute.xlu0 %922
        %924 = vrot.lane.b32.xlu0 %v847, 16
        %v925 = vpop.permute.xlu0 %924
        %926 = vrot.lane.b32.xlu0 %v848, 16
        %v927 = vpop.permute.xlu0 %926
        %928 = vrot.lane.b32.xlu0 %v849, 16
        %v929 = vpop.permute.xlu0 %928
        %930 = vrot.lane.b32.xlu0 %v850, 16
        %v931 = vpop.permute.xlu0 %930
        %932 = vrot.lane.b32.xlu0 %v851, 16
        %v933 = vpop.permute.xlu0 %932
        %934 = vrot.lane.b32.xlu0 %v852, 16
        %v935 = vpop.permute.xlu0 %934
        %936 = vrot.lane.b32.xlu0 %v853, 16
        %v937 = vpop.permute.xlu0 %936
        %938 = vrot.lane.b32.xlu0 %v854, 16
        %v939 = vpop.permute.xlu0 %938
        %940 = vrot.lane.b32.xlu0 %v855, 16
        %v941 = vpop.permute.xlu0 %940
        %942 = vrot.lane.b32.xlu0 %v856, 16
        %v943 = vpop.permute.xlu0 %942
        %944 = vrot.lane.b32.xlu0 %v857, 16
        %v945 = vpop.permute.xlu0 %944
        %946 = vrot.lane.b32.xlu0 %v858, 16
        %v947 = vpop.permute.xlu0 %946
        %948 = vrot.lane.b32.xlu0 %v859, 16
        %v949 = vpop.permute.xlu0 %948
        %950 = vrot.lane.b32.xlu0 %v860, 16
        %v951 = vpop.permute.xlu0 %950
        %952 = vrot.lane.b32.xlu0 %v861, 16
        %v953 = vpop.permute.xlu0 %952
        %954 = vrot.lane.b32.xlu0 %v862, 16
        %v955 = vpop.permute.xlu0 %954
        %956 = vrot.lane.b32.xlu0 %v863, 16
        %v957 = vpop.permute.xlu0 %956
        %958 = vrot.lane.b32.xlu0 %v864, 16
        %v959 = vpop.permute.xlu0 %958
        %960 = vrot.lane.b32.xlu0 %v865, 16
        %v961 = vpop.permute.xlu0 %960
        %vm994 = vcmask 162944
        %995 = vst.msk [vmem:[#allocation2] sm:$0xff] %vm994, %v899
        %996 = vst.msk [vmem:[#allocation2 + $0x8] sm:$0xff] %vm994, %v901
        %997 = vst.msk [vmem:[#allocation2 + $0x10] sm:$0xff] %vm994, %v903
        %998 = vst.msk [vmem:[#allocation2 + $0x18] sm:$0xff] %vm994, %v905
        %999 = vst.msk [vmem:[#allocation2 + $0x20] sm:$0xff] %vm994, %v907
        %1000 = vst.msk [vmem:[#allocation2 + $0x28] sm:$0xff] %vm994, %v909
        %1001 = vst.msk [vmem:[#allocation2 + $0x30] sm:$0xff] %vm994, %v911
        %1002 = vst.msk [vmem:[#allocation2 + $0x38] sm:$0xff] %vm994, %v913
        %1003 = vst.msk [vmem:[#allocation2 + $0x40] sm:$0xff] %vm994, %v915
        %1004 = vst.msk [vmem:[#allocation2 + $0x48] sm:$0xff] %vm994, %v917
        %1005 = vst.msk [vmem:[#allocation2 + $0x50] sm:$0xff] %vm994, %v919
        %1006 = vst.msk [vmem:[#allocation2 + $0x58] sm:$0xff] %vm994, %v921
        %1007 = vst.msk [vmem:[#allocation2 + $0x60] sm:$0xff] %vm994, %v923
        %1008 = vst.msk [vmem:[#allocation2 + $0x68] sm:$0xff] %vm994, %v925
        %1009 = vst.msk [vmem:[#allocation2 + $0x70] sm:$0xff] %vm994, %v927
        %1010 = vst.msk [vmem:[#allocation2 + $0x78] sm:$0xff] %vm994, %v929
        %1011 = vst.msk [vmem:[#allocation2 + $0x80] sm:$0xff] %vm994, %v931
        %1012 = vst.msk [vmem:[#allocation2 + $0x88] sm:$0xff] %vm994, %v933
        %1013 = vst.msk [vmem:[#allocation2 + $0x90] sm:$0xff] %vm994, %v935
        %1014 = vst.msk [vmem:[#allocation2 + $0x98] sm:$0xff] %vm994, %v937
        %1015 = vst.msk [vmem:[#allocation2 + $0xa0] sm:$0xff] %vm994, %v939
        %1016 = vst.msk [vmem:[#allocation2 + $0xa8] sm:$0xff] %vm994, %v941
        %1017 = vst.msk [vmem:[#allocation2 + $0xb0] sm:$0xff] %vm994, %v943
        %1018 = vst.msk [vmem:[#allocation2 + $0xb8] sm:$0xff] %vm994, %v945
        %1019 = vst.msk [vmem:[#allocation2 + $0xc0] sm:$0xff] %vm994, %v947
        %1020 = vst.msk [vmem:[#allocation2 + $0xc8] sm:$0xff] %vm994, %v949
        %1021 = vst.msk [vmem:[#allocation2 + $0xd0] sm:$0xff] %vm994, %v951
        %1022 = vst.msk [vmem:[#allocation2 + $0xd8] sm:$0xff] %vm994, %v953
        %1023 = vst.msk [vmem:[#allocation2 + $0xe0] sm:$0xff] %vm994, %v955
        %1024 = vst.msk [vmem:[#allocation2 + $0xe8] sm:$0xff] %vm994, %v957
        %1025 = vst.msk [vmem:[#allocation2 + $0xf0] sm:$0xff] %vm994, %v959
        %1026 = vst.msk [vmem:[#allocation2 + $0xf8] sm:$0xff] %vm994, %v961
        %v1027 = vld [vmem:[%s640 + $0x2] sm:$0xff]
        %v1028 = vld [vmem:[%s640 + $0xa] sm:$0xff]
        %v1029 = vld [vmem:[%s640 + $0x1a] sm:$0xff]
        %v1030 = vld [vmem:[%s640 + $0x22] sm:$0xff]
        %v1031 = vld [vmem:[%s640 + $0x32] sm:$0xff]
        %v1032 = vld [vmem:[%s640 + $0x3a] sm:$0xff]
        %v1033 = vld [vmem:[%s640 + $0x4a] sm:$0xff]
        %v1034 = vld [vmem:[%s640 + $0x52] sm:$0xff]
        %v1035 = vld [vmem:[%s640 + $0x62] sm:$0xff]
        %v1036 = vld [vmem:[%s640 + $0x6a] sm:$0xff]
        %v1037 = vld [vmem:[%s640 + $0x7a] sm:$0xff]
        %v1038 = vld [vmem:[%s640 + $0x82] sm:$0xff]
        %v1039 = vld [vmem:[%s640 + $0x92] sm:$0xff]
        %v1040 = vld [vmem:[%s640 + $0x9a] sm:$0xff]
        %v1041 = vld [vmem:[%s640 + $0xaa] sm:$0xff]
        %v1042 = vld [vmem:[%s640 + $0xb2] sm:$0xff]
        %v1043 = vld [vmem:[%s640 + $0xc2] sm:$0xff]
        %v1044 = vld [vmem:[%s640 + $0xca] sm:$0xff]
        %v1045 = vld [vmem:[%s640 + $0xda] sm:$0xff]
        %v1046 = vld [vmem:[%s640 + $0xe2] sm:$0xff]
        %v1047 = vld [vmem:[%s640 + $0xf2] sm:$0xff]
        %v1048 = vld [vmem:[%s640 + $0xfa] sm:$0xff]
        %v1049 = vld [vmem:[%s640 + $0x10a] sm:$0xff]
        %v1050 = vld [vmem:[%s640 + $0x112] sm:$0xff]
        %v1051 = vld [vmem:[%s640 + $0x122] sm:$0xff]
        %v1052 = vld [vmem:[%s640 + $0x12a] sm:$0xff]
        %v1053 = vld [vmem:[%s640 + $0x13a] sm:$0xff]
        %v1054 = vld [vmem:[%s640 + $0x142] sm:$0xff]
        %v1055 = vld [vmem:[%s640 + $0x152] sm:$0xff]
        %v1056 = vld [vmem:[%s640 + $0x15a] sm:$0xff]
        %v1057 = vld [vmem:[%s640 + $0x16a] sm:$0xff]
        %v1058 = vld [vmem:[%s640 + $0x172] sm:$0xff]
        %1091 = vrot.lane.b32.xlu0 %v1027, 20
        %v1092 = vpop.permute.xlu0 %1091
        %1093 = vrot.lane.b32.xlu0 %v1028, 20
        %v1094 = vpop.permute.xlu0 %1093
        %1095 = vrot.lane.b32.xlu0 %v1029, 20
        %v1096 = vpop.permute.xlu0 %1095
        %1097 = vrot.lane.b32.xlu0 %v1030, 20
        %v1098 = vpop.permute.xlu0 %1097
        %1099 = vrot.lane.b32.xlu0 %v1031, 20
        %v1100 = vpop.permute.xlu0 %1099
        %1101 = vrot.lane.b32.xlu0 %v1032, 20
        %v1102 = vpop.permute.xlu0 %1101
        %1103 = vrot.lane.b32.xlu0 %v1033, 20
        %v1104 = vpop.permute.xlu0 %1103
        %1105 = vrot.lane.b32.xlu0 %v1034, 20
        %v1106 = vpop.permute.xlu0 %1105
        %1107 = vrot.lane.b32.xlu0 %v1035, 20
        %v1108 = vpop.permute.xlu0 %1107
        %1109 = vrot.lane.b32.xlu0 %v1036, 20
        %v1110 = vpop.permute.xlu0 %1109
        %1111 = vrot.lane.b32.xlu0 %v1037, 20
        %v1112 = vpop.permute.xlu0 %1111
        %1113 = vrot.lane.b32.xlu0 %v1038, 20
        %v1114 = vpop.permute.xlu0 %1113
        %1115 = vrot.lane.b32.xlu0 %v1039, 20
        %v1116 = vpop.permute.xlu0 %1115
        %1117 = vrot.lane.b32.xlu0 %v1040, 20
        %v1118 = vpop.permute.xlu0 %1117
        %1119 = vrot.lane.b32.xlu0 %v1041, 20
        %v1120 = vpop.permute.xlu0 %1119
        %1121 = vrot.lane.b32.xlu0 %v1042, 20
        %v1122 = vpop.permute.xlu0 %1121
        %1123 = vrot.lane.b32.xlu0 %v1043, 20
        %v1124 = vpop.permute.xlu0 %1123
        %1125 = vrot.lane.b32.xlu0 %v1044, 20
        %v1126 = vpop.permute.xlu0 %1125
        %1127 = vrot.lane.b32.xlu0 %v1045, 20
        %v1128 = vpop.permute.xlu0 %1127
        %1129 = vrot.lane.b32.xlu0 %v1046, 20
        %v1130 = vpop.permute.xlu0 %1129
        %1131 = vrot.lane.b32.xlu0 %v1047, 20
        %v1132 = vpop.permute.xlu0 %1131
        %1133 = vrot.lane.b32.xlu0 %v1048, 20
        %v1134 = vpop.permute.xlu0 %1133
        %1135 = vrot.lane.b32.xlu0 %v1049, 20
        %v1136 = vpop.permute.xlu0 %1135
        %1137 = vrot.lane.b32.xlu0 %v1050, 20
        %v1138 = vpop.permute.xlu0 %1137
        %1139 = vrot.lane.b32.xlu0 %v1051, 20
        %v1140 = vpop.permute.xlu0 %1139
        %1141 = vrot.lane.b32.xlu0 %v1052, 20
        %v1142 = vpop.permute.xlu0 %1141
        %1143 = vrot.lane.b32.xlu0 %v1053, 20
        %v1144 = vpop.permute.xlu0 %1143
        %1145 = vrot.lane.b32.xlu0 %v1054, 20
        %v1146 = vpop.permute.xlu0 %1145
        %1147 = vrot.lane.b32.xlu0 %v1055, 20
        %v1148 = vpop.permute.xlu0 %1147
        %1149 = vrot.lane.b32.xlu0 %v1056, 20
        %v1150 = vpop.permute.xlu0 %1149
        %1151 = vrot.lane.b32.xlu0 %v1057, 20
        %v1152 = vpop.permute.xlu0 %1151
        %1153 = vrot.lane.b32.xlu0 %v1058, 20
        %v1154 = vpop.permute.xlu0 %1153
        %vm1187 = vcmask 195744
        %1188 = vst.msk [vmem:[#allocation2] sm:$0xff] %vm1187, %v1092
        %1189 = vst.msk [vmem:[#allocation2 + $0x8] sm:$0xff] %vm1187, %v1094
        %1190 = vst.msk [vmem:[#allocation2 + $0x10] sm:$0xff] %vm1187, %v1096
        %1191 = vst.msk [vmem:[#allocation2 + $0x18] sm:$0xff] %vm1187, %v1098
        %1192 = vst.msk [vmem:[#allocation2 + $0x20] sm:$0xff] %vm1187, %v1100
        %1193 = vst.msk [vmem:[#allocation2 + $0x28] sm:$0xff] %vm1187, %v1102
        %1194 = vst.msk [vmem:[#allocation2 + $0x30] sm:$0xff] %vm1187, %v1104
        %1195 = vst.msk [vmem:[#allocation2 + $0x38] sm:$0xff] %vm1187, %v1106
        %1196 = vst.msk [vmem:[#allocation2 + $0x40] sm:$0xff] %vm1187, %v1108
        %1197 = vst.msk [vmem:[#allocation2 + $0x48] sm:$0xff] %vm1187, %v1110
        %1198 = vst.msk [vmem:[#allocation2 + $0x50] sm:$0xff] %vm1187, %v1112
        %1199 = vst.msk [vmem:[#allocation2 + $0x58] sm:$0xff] %vm1187, %v1114
        %1200 = vst.msk [vmem:[#allocation2 + $0x60] sm:$0xff] %vm1187, %v1116
        %1201 = vst.msk [vmem:[#allocation2 + $0x68] sm:$0xff] %vm1187, %v1118
        %1202 = vst.msk [vmem:[#allocation2 + $0x70] sm:$0xff] %vm1187, %v1120
        %1203 = vst.msk [vmem:[#allocation2 + $0x78] sm:$0xff] %vm1187, %v1122
        %1204 = vst.msk [vmem:[#allocation2 + $0x80] sm:$0xff] %vm1187, %v1124
        %1205 = vst.msk [vmem:[#allocation2 + $0x88] sm:$0xff] %vm1187, %v1126
        %1206 = vst.msk [vmem:[#allocation2 + $0x90] sm:$0xff] %vm1187, %v1128
        %1207 = vst.msk [vmem:[#allocation2 + $0x98] sm:$0xff] %vm1187, %v1130
        %1208 = vst.msk [vmem:[#allocation2 + $0xa0] sm:$0xff] %vm1187, %v1132
        %1209 = vst.msk [vmem:[#allocation2 + $0xa8] sm:$0xff] %vm1187, %v1134
        %1210 = vst.msk [vmem:[#allocation2 + $0xb0] sm:$0xff] %vm1187, %v1136
        %1211 = vst.msk [vmem:[#allocation2 + $0xb8] sm:$0xff] %vm1187, %v1138
        %1212 = vst.msk [vmem:[#allocation2 + $0xc0] sm:$0xff] %vm1187, %v1140
        %1213 = vst.msk [vmem:[#allocation2 + $0xc8] sm:$0xff] %vm1187, %v1142
        %1214 = vst.msk [vmem:[#allocation2 + $0xd0] sm:$0xff] %vm1187, %v1144
        %1215 = vst.msk [vmem:[#allocation2 + $0xd8] sm:$0xff] %vm1187, %v1146
        %1216 = vst.msk [vmem:[#allocation2 + $0xe0] sm:$0xff] %vm1187, %v1148
        %1217 = vst.msk [vmem:[#allocation2 + $0xe8] sm:$0xff] %vm1187, %v1150
        %1218 = vst.msk [vmem:[#allocation2 + $0xf0] sm:$0xff] %vm1187, %v1152
        %1219 = vst.msk [vmem:[#allocation2 + $0xf8] sm:$0xff] %vm1187, %v1154
        %s1220 = sadd.s32 %s184, 2
        %s1221 = smul.u32 %s1220, 24
        %s1222 = scalar_lea.vmem %s182, %s1221
        %v1223 = vld [vmem:[%s1222] sm:$0xff]
        %v1224 = vld [vmem:[%s1222 + $0x8] sm:$0xff]
        %v1225 = vld [vmem:[%s1222 + $0x18] sm:$0xff]
        %v1226 = vld [vmem:[%s1222 + $0x20] sm:$0xff]
        %v1227 = vld [vmem:[%s1222 + $0x30] sm:$0xff]
        %v1228 = vld [vmem:[%s1222 + $0x38] sm:$0xff]
        %v1229 = vld [vmem:[%s1222 + $0x48] sm:$0xff]
        %v1230 = vld [vmem:[%s1222 + $0x50] sm:$0xff]
        %v1231 = vld [vmem:[%s1222 + $0x60] sm:$0xff]
        %v1232 = vld [vmem:[%s1222 + $0x68] sm:$0xff]
        %v1233 = vld [vmem:[%s1222 + $0x78] sm:$0xff]
        %v1234 = vld [vmem:[%s1222 + $0x80] sm:$0xff]
        %v1235 = vld [vmem:[%s1222 + $0x90] sm:$0xff]
        %v1236 = vld [vmem:[%s1222 + $0x98] sm:$0xff]
        %v1237 = vld [vmem:[%s1222 + $0xa8] sm:$0xff]
        %v1238 = vld [vmem:[%s1222 + $0xb0] sm:$0xff]
        %v1239 = vld [vmem:[%s1222 + $0xc0] sm:$0xff]
        %v1240 = vld [vmem:[%s1222 + $0xc8] sm:$0xff]
        %v1241 = vld [vmem:[%s1222 + $0xd8] sm:$0xff]
        %v1242 = vld [vmem:[%s1222 + $0xe0] sm:$0xff]
        %v1243 = vld [vmem:[%s1222 + $0xf0] sm:$0xff]
        %v1244 = vld [vmem:[%s1222 + $0xf8] sm:$0xff]
        %v1245 = vld [vmem:[%s1222 + $0x108] sm:$0xff]
        %v1246 = vld [vmem:[%s1222 + $0x110] sm:$0xff]
        %v1247 = vld [vmem:[%s1222 + $0x120] sm:$0xff]
        %v1248 = vld [vmem:[%s1222 + $0x128] sm:$0xff]
        %v1249 = vld [vmem:[%s1222 + $0x138] sm:$0xff]
        %v1250 = vld [vmem:[%s1222 + $0x140] sm:$0xff]
        %v1251 = vld [vmem:[%s1222 + $0x150] sm:$0xff]
        %v1252 = vld [vmem:[%s1222 + $0x158] sm:$0xff]
        %v1253 = vld [vmem:[%s1222 + $0x168] sm:$0xff]
        %v1254 = vld [vmem:[%s1222 + $0x170] sm:$0xff]
        %1287 = vrot.lane.b32.xlu0 %v1223, 24
        %v1288 = vpop.permute.xlu0 %1287
        %1289 = vrot.lane.b32.xlu0 %v1224, 24
        %v1290 = vpop.permute.xlu0 %1289
        %1291 = vrot.lane.b32.xlu0 %v1225, 24
        %v1292 = vpop.permute.xlu0 %1291
        %1293 = vrot.lane.b32.xlu0 %v1226, 24
        %v1294 = vpop.permute.xlu0 %1293
        %1295 = vrot.lane.b32.xlu0 %v1227, 24
        %v1296 = vpop.permute.xlu0 %1295
        %1297 = vrot.lane.b32.xlu0 %v1228, 24
        %v1298 = vpop.permute.xlu0 %1297
        %1299 = vrot.lane.b32.xlu0 %v1229, 24
        %v1300 = vpop.permute.xlu0 %1299
        %1301 = vrot.lane.b32.xlu0 %v1230, 24
        %v1302 = vpop.permute.xlu0 %1301
        %1303 = vrot.lane.b32.xlu0 %v1231, 24
        %v1304 = vpop.permute.xlu0 %1303
        %1305 = vrot.lane.b32.xlu0 %v1232, 24
        %v1306 = vpop.permute.xlu0 %1305
        %1307 = vrot.lane.b32.xlu0 %v1233, 24
        %v1308 = vpop.permute.xlu0 %1307
        %1309 = vrot.lane.b32.xlu0 %v1234, 24
        %v1310 = vpop.permute.xlu0 %1309
        %1311 = vrot.lane.b32.xlu0 %v1235, 24
        %v1312 = vpop.permute.xlu0 %1311
        %1313 = vrot.lane.b32.xlu0 %v1236, 24
        %v1314 = vpop.permute.xlu0 %1313
        %1315 = vrot.lane.b32.xlu0 %v1237, 24
        %v1316 = vpop.permute.xlu0 %1315
        %1317 = vrot.lane.b32.xlu0 %v1238, 24
        %v1318 = vpop.permute.xlu0 %1317
        %1319 = vrot.lane.b32.xlu0 %v1239, 24
        %v1320 = vpop.permute.xlu0 %1319
        %1321 = vrot.lane.b32.xlu0 %v1240, 24
        %v1322 = vpop.permute.xlu0 %1321
        %1323 = vrot.lane.b32.xlu0 %v1241, 24
        %v1324 = vpop.permute.xlu0 %1323
        %1325 = vrot.lane.b32.xlu0 %v1242, 24
        %v1326 = vpop.permute.xlu0 %1325
        %1327 = vrot.lane.b32.xlu0 %v1243, 24
        %v1328 = vpop.permute.xlu0 %1327
        %1329 = vrot.lane.b32.xlu0 %v1244, 24
        %v1330 = vpop.permute.xlu0 %1329
        %1331 = vrot.lane.b32.xlu0 %v1245, 24
        %v1332 = vpop.permute.xlu0 %1331
        %1333 = vrot.lane.b32.xlu0 %v1246, 24
        %v1334 = vpop.permute.xlu0 %1333
        %1335 = vrot.lane.b32.xlu0 %v1247, 24
        %v1336 = vpop.permute.xlu0 %1335
        %1337 = vrot.lane.b32.xlu0 %v1248, 24
        %v1338 = vpop.permute.xlu0 %1337
        %1339 = vrot.lane.b32.xlu0 %v1249, 24
        %v1340 = vpop.permute.xlu0 %1339
        %1341 = vrot.lane.b32.xlu0 %v1250, 24
        %v1342 = vpop.permute.xlu0 %1341
        %1343 = vrot.lane.b32.xlu0 %v1251, 24
        %v1344 = vpop.permute.xlu0 %1343
        %1345 = vrot.lane.b32.xlu0 %v1252, 24
        %v1346 = vpop.permute.xlu0 %1345
        %1347 = vrot.lane.b32.xlu0 %v1253, 24
        %v1348 = vpop.permute.xlu0 %1347
        %1349 = vrot.lane.b32.xlu0 %v1254, 24
        %v1350 = vpop.permute.xlu0 %1349
        %vm1383 = vcmask 228544
        %1384 = vst.msk [vmem:[#allocation2] sm:$0xff] %vm1383, %v1288
        %1385 = vst.msk [vmem:[#allocation2 + $0x8] sm:$0xff] %vm1383, %v1290
        %1386 = vst.msk [vmem:[#allocation2 + $0x10] sm:$0xff] %vm1383, %v1292
        %1387 = vst.msk [vmem:[#allocation2 + $0x18] sm:$0xff] %vm1383, %v1294
        %1388 = vst.msk [vmem:[#allocation2 + $0x20] sm:$0xff] %vm1383, %v1296
        %1389 = vst.msk [vmem:[#allocation2 + $0x28] sm:$0xff] %vm1383, %v1298
        %1390 = vst.msk [vmem:[#allocation2 + $0x30] sm:$0xff] %vm1383, %v1300
        %1391 = vst.msk [vmem:[#allocation2 + $0x38] sm:$0xff] %vm1383, %v1302
        %1392 = vst.msk [vmem:[#allocation2 + $0x40] sm:$0xff] %vm1383, %v1304
        %1393 = vst.msk [vmem:[#allocation2 + $0x48] sm:$0xff] %vm1383, %v1306
        %1394 = vst.msk [vmem:[#allocation2 + $0x50] sm:$0xff] %vm1383, %v1308
        %1395 = vst.msk [vmem:[#allocation2 + $0x58] sm:$0xff] %vm1383, %v1310
        %1396 = vst.msk [vmem:[#allocation2 + $0x60] sm:$0xff] %vm1383, %v1312
        %1397 = vst.msk [vmem:[#allocation2 + $0x68] sm:$0xff] %vm1383, %v1314
        %1398 = vst.msk [vmem:[#allocation2 + $0x70] sm:$0xff] %vm1383, %v1316
        %1399 = vst.msk [vmem:[#allocation2 + $0x78] sm:$0xff] %vm1383, %v1318
        %1400 = vst.msk [vmem:[#allocation2 + $0x80] sm:$0xff] %vm1383, %v1320
        %1401 = vst.msk [vmem:[#allocation2 + $0x88] sm:$0xff] %vm1383, %v1322
        %1402 = vst.msk [vmem:[#allocation2 + $0x90] sm:$0xff] %vm1383, %v1324
        %1403 = vst.msk [vmem:[#allocation2 + $0x98] sm:$0xff] %vm1383, %v1326
        %1404 = vst.msk [vmem:[#allocation2 + $0xa0] sm:$0xff] %vm1383, %v1328
        %1405 = vst.msk [vmem:[#allocation2 + $0xa8] sm:$0xff] %vm1383, %v1330
        %1406 = vst.msk [vmem:[#allocation2 + $0xb0] sm:$0xff] %vm1383, %v1332
        %1407 = vst.msk [vmem:[#allocation2 + $0xb8] sm:$0xff] %vm1383, %v1334
        %1408 = vst.msk [vmem:[#allocation2 + $0xc0] sm:$0xff] %vm1383, %v1336
        %1409 = vst.msk [vmem:[#allocation2 + $0xc8] sm:$0xff] %vm1383, %v1338
        %1410 = vst.msk [vmem:[#allocation2 + $0xd0] sm:$0xff] %vm1383, %v1340
        %1411 = vst.msk [vmem:[#allocation2 + $0xd8] sm:$0xff] %vm1383, %v1342
        %1412 = vst.msk [vmem:[#allocation2 + $0xe0] sm:$0xff] %vm1383, %v1344
        %1413 = vst.msk [vmem:[#allocation2 + $0xe8] sm:$0xff] %vm1383, %v1346
        %1414 = vst.msk [vmem:[#allocation2 + $0xf0] sm:$0xff] %vm1383, %v1348
        %1415 = vst.msk [vmem:[#allocation2 + $0xf8] sm:$0xff] %vm1383, %v1350
        %v1416 = vld [vmem:[%s1222 + $0x1] sm:$0xff]
        %v1417 = vld [vmem:[%s1222 + $0x9] sm:$0xff]
        %v1418 = vld [vmem:[%s1222 + $0x19] sm:$0xff]
        %v1419 = vld [vmem:[%s1222 + $0x21] sm:$0xff]
        %v1420 = vld [vmem:[%s1222 + $0x31] sm:$0xff]
        %v1421 = vld [vmem:[%s1222 + $0x39] sm:$0xff]
        %v1422 = vld [vmem:[%s1222 + $0x49] sm:$0xff]
        %v1423 = vld [vmem:[%s1222 + $0x51] sm:$0xff]
        %v1424 = vld [vmem:[%s1222 + $0x61] sm:$0xff]
        %v1425 = vld [vmem:[%s1222 + $0x69] sm:$0xff]
        %v1426 = vld [vmem:[%s1222 + $0x79] sm:$0xff]
        %v1427 = vld [vmem:[%s1222 + $0x81] sm:$0xff]
        %v1428 = vld [vmem:[%s1222 + $0x91] sm:$0xff]
        %v1429 = vld [vmem:[%s1222 + $0x99] sm:$0xff]
        %v1430 = vld [vmem:[%s1222 + $0xa9] sm:$0xff]
        %v1431 = vld [vmem:[%s1222 + $0xb1] sm:$0xff]
        %v1432 = vld [vmem:[%s1222 + $0xc1] sm:$0xff]
        %v1433 = vld [vmem:[%s1222 + $0xc9] sm:$0xff]
        %v1434 = vld [vmem:[%s1222 + $0xd9] sm:$0xff]
        %v1435 = vld [vmem:[%s1222 + $0xe1] sm:$0xff]
        %v1436 = vld [vmem:[%s1222 + $0xf1] sm:$0xff]
        %v1437 = vld [vmem:[%s1222 + $0xf9] sm:$0xff]
        %v1438 = vld [vmem:[%s1222 + $0x109] sm:$0xff]
        %v1439 = vld [vmem:[%s1222 + $0x111] sm:$0xff]
        %v1440 = vld [vmem:[%s1222 + $0x121] sm:$0xff]
        %v1441 = vld [vmem:[%s1222 + $0x129] sm:$0xff]
        %v1442 = vld [vmem:[%s1222 + $0x139] sm:$0xff]
        %v1443 = vld [vmem:[%s1222 + $0x141] sm:$0xff]
        %v1444 = vld [vmem:[%s1222 + $0x151] sm:$0xff]
        %v1445 = vld [vmem:[%s1222 + $0x159] sm:$0xff]
        %v1446 = vld [vmem:[%s1222 + $0x169] sm:$0xff]
        %v1447 = vld [vmem:[%s1222 + $0x171] sm:$0xff]
        %1480 = vrot.lane.b32.xlu0 %v1416, 28
        %v1481 = vpop.permute.xlu0 %1480
        %1482 = vrot.lane.b32.xlu0 %v1417, 28
        %v1483 = vpop.permute.xlu0 %1482
        %1484 = vrot.lane.b32.xlu0 %v1418, 28
        %v1485 = vpop.permute.xlu0 %1484
        %1486 = vrot.lane.b32.xlu0 %v1419, 28
        %v1487 = vpop.permute.xlu0 %1486
        %1488 = vrot.lane.b32.xlu0 %v1420, 28
        %v1489 = vpop.permute.xlu0 %1488
        %1490 = vrot.lane.b32.xlu0 %v1421, 28
        %v1491 = vpop.permute.xlu0 %1490
        %1492 = vrot.lane.b32.xlu0 %v1422, 28
        %v1493 = vpop.permute.xlu0 %1492
        %1494 = vrot.lane.b32.xlu0 %v1423, 28
        %v1495 = vpop.permute.xlu0 %1494
        %1496 = vrot.lane.b32.xlu0 %v1424, 28
        %v1497 = vpop.permute.xlu0 %1496
        %1498 = vrot.lane.b32.xlu0 %v1425, 28
        %v1499 = vpop.permute.xlu0 %1498
        %1500 = vrot.lane.b32.xlu0 %v1426, 28
        %v1501 = vpop.permute.xlu0 %1500
        %1502 = vrot.lane.b32.xlu0 %v1427, 28
        %v1503 = vpop.permute.xlu0 %1502
        %1504 = vrot.lane.b32.xlu0 %v1428, 28
        %v1505 = vpop.permute.xlu0 %1504
        %1506 = vrot.lane.b32.xlu0 %v1429, 28
        %v1507 = vpop.permute.xlu0 %1506
        %1508 = vrot.lane.b32.xlu0 %v1430, 28
        %v1509 = vpop.permute.xlu0 %1508
        %1510 = vrot.lane.b32.xlu0 %v1431, 28
        %v1511 = vpop.permute.xlu0 %1510
        %1512 = vrot.lane.b32.xlu0 %v1432, 28
        %v1513 = vpop.permute.xlu0 %1512
        %1514 = vrot.lane.b32.xlu0 %v1433, 28
        %v1515 = vpop.permute.xlu0 %1514
        %1516 = vrot.lane.b32.xlu0 %v1434, 28
        %v1517 = vpop.permute.xlu0 %1516
        %1518 = vrot.lane.b32.xlu0 %v1435, 28
        %v1519 = vpop.permute.xlu0 %1518
        %1520 = vrot.lane.b32.xlu0 %v1436, 28
        %v1521 = vpop.permute.xlu0 %1520
        %1522 = vrot.lane.b32.xlu0 %v1437, 28
        %v1523 = vpop.permute.xlu0 %1522
        %1524 = vrot.lane.b32.xlu0 %v1438, 28
        %v1525 = vpop.permute.xlu0 %1524
        %1526 = vrot.lane.b32.xlu0 %v1439, 28
        %v1527 = vpop.permute.xlu0 %1526
        %1528 = vrot.lane.b32.xlu0 %v1440, 28
        %v1529 = vpop.permute.xlu0 %1528
        %1530 = vrot.lane.b32.xlu0 %v1441, 28
        %v1531 = vpop.permute.xlu0 %1530
        %1532 = vrot.lane.b32.xlu0 %v1442, 28
        %v1533 = vpop.permute.xlu0 %1532
        %1534 = vrot.lane.b32.xlu0 %v1443, 28
        %v1535 = vpop.permute.xlu0 %1534
        %1536 = vrot.lane.b32.xlu0 %v1444, 28
        %v1537 = vpop.permute.xlu0 %1536
        %1538 = vrot.lane.b32.xlu0 %v1445, 28
        %v1539 = vpop.permute.xlu0 %1538
        %1540 = vrot.lane.b32.xlu0 %v1446, 28
        %v1541 = vpop.permute.xlu0 %1540
        %1542 = vrot.lane.b32.xlu0 %v1447, 28
        %v1543 = vpop.permute.xlu0 %1542
        %vm1576 = vcmask 261344
        %1577 = vst.msk [vmem:[#allocation2] sm:$0xff] %vm1576, %v1481
        %1578 = vst.msk [vmem:[#allocation2 + $0x8] sm:$0xff] %vm1576, %v1483
        %1579 = vst.msk [vmem:[#allocation2 + $0x10] sm:$0xff] %vm1576, %v1485
        %1580 = vst.msk [vmem:[#allocation2 + $0x18] sm:$0xff] %vm1576, %v1487
        %1581 = vst.msk [vmem:[#allocation2 + $0x20] sm:$0xff] %vm1576, %v1489
        %1582 = vst.msk [vmem:[#allocation2 + $0x28] sm:$0xff] %vm1576, %v1491
        %1583 = vst.msk [vmem:[#allocation2 + $0x30] sm:$0xff] %vm1576, %v1493
        %1584 = vst.msk [vmem:[#allocation2 + $0x38] sm:$0xff] %vm1576, %v1495
        %1585 = vst.msk [vmem:[#allocation2 + $0x40] sm:$0xff] %vm1576, %v1497
        %1586 = vst.msk [vmem:[#allocation2 + $0x48] sm:$0xff] %vm1576, %v1499
        %1587 = vst.msk [vmem:[#allocation2 + $0x50] sm:$0xff] %vm1576, %v1501
        %1588 = vst.msk [vmem:[#allocation2 + $0x58] sm:$0xff] %vm1576, %v1503
        %1589 = vst.msk [vmem:[#allocation2 + $0x60] sm:$0xff] %vm1576, %v1505
        %1590 = vst.msk [vmem:[#allocation2 + $0x68] sm:$0xff] %vm1576, %v1507
        %1591 = vst.msk [vmem:[#allocation2 + $0x70] sm:$0xff] %vm1576, %v1509
        %1592 = vst.msk [vmem:[#allocation2 + $0x78] sm:$0xff] %vm1576, %v1511
        %1593 = vst.msk [vmem:[#allocation2 + $0x80] sm:$0xff] %vm1576, %v1513
        %1594 = vst.msk [vmem:[#allocation2 + $0x88] sm:$0xff] %vm1576, %v1515
        %1595 = vst.msk [vmem:[#allocation2 + $0x90] sm:$0xff] %vm1576, %v1517
        %1596 = vst.msk [vmem:[#allocation2 + $0x98] sm:$0xff] %vm1576, %v1519
        %1597 = vst.msk [vmem:[#allocation2 + $0xa0] sm:$0xff] %vm1576, %v1521
        %1598 = vst.msk [vmem:[#allocation2 + $0xa8] sm:$0xff] %vm1576, %v1523
        %1599 = vst.msk [vmem:[#allocation2 + $0xb0] sm:$0xff] %vm1576, %v1525
        %1600 = vst.msk [vmem:[#allocation2 + $0xb8] sm:$0xff] %vm1576, %v1527
        %1601 = vst.msk [vmem:[#allocation2 + $0xc0] sm:$0xff] %vm1576, %v1529
        %1602 = vst.msk [vmem:[#allocation2 + $0xc8] sm:$0xff] %vm1576, %v1531
        %1603 = vst.msk [vmem:[#allocation2 + $0xd0] sm:$0xff] %vm1576, %v1533
        %1604 = vst.msk [vmem:[#allocation2 + $0xd8] sm:$0xff] %vm1576, %v1535
        %1605 = vst.msk [vmem:[#allocation2 + $0xe0] sm:$0xff] %vm1576, %v1537
        %1606 = vst.msk [vmem:[#allocation2 + $0xe8] sm:$0xff] %vm1576, %v1539
        %1607 = vst.msk [vmem:[#allocation2 + $0xf0] sm:$0xff] %vm1576, %v1541
        %1608 = vst.msk [vmem:[#allocation2 + $0xf8] sm:$0xff] %vm1576, %v1543
        %v1609 = vld [vmem:[%s1222 + $0x2] sm:$0xff]
        %v1610 = vld [vmem:[%s1222 + $0xa] sm:$0xff]
        %v1611 = vld [vmem:[%s1222 + $0x1a] sm:$0xff]
        %v1612 = vld [vmem:[%s1222 + $0x22] sm:$0xff]
        %v1613 = vld [vmem:[%s1222 + $0x32] sm:$0xff]
        %v1614 = vld [vmem:[%s1222 + $0x3a] sm:$0xff]
        %v1615 = vld [vmem:[%s1222 + $0x4a] sm:$0xff]
        %v1616 = vld [vmem:[%s1222 + $0x52] sm:$0xff]
        %v1617 = vld [vmem:[%s1222 + $0x62] sm:$0xff]
        %v1618 = vld [vmem:[%s1222 + $0x6a] sm:$0xff]
        %v1619 = vld [vmem:[%s1222 + $0x7a] sm:$0xff]
        %v1620 = vld [vmem:[%s1222 + $0x82] sm:$0xff]
        %v1621 = vld [vmem:[%s1222 + $0x92] sm:$0xff]
        %v1622 = vld [vmem:[%s1222 + $0x9a] sm:$0xff]
        %v1623 = vld [vmem:[%s1222 + $0xaa] sm:$0xff]
        %v1624 = vld [vmem:[%s1222 + $0xb2] sm:$0xff]
        %v1625 = vld [vmem:[%s1222 + $0xc2] sm:$0xff]
        %v1626 = vld [vmem:[%s1222 + $0xca] sm:$0xff]
        %v1627 = vld [vmem:[%s1222 + $0xda] sm:$0xff]
        %v1628 = vld [vmem:[%s1222 + $0xe2] sm:$0xff]
        %v1629 = vld [vmem:[%s1222 + $0xf2] sm:$0xff]
        %v1630 = vld [vmem:[%s1222 + $0xfa] sm:$0xff]
        %v1631 = vld [vmem:[%s1222 + $0x10a] sm:$0xff]
        %v1632 = vld [vmem:[%s1222 + $0x112] sm:$0xff]
        %v1633 = vld [vmem:[%s1222 + $0x122] sm:$0xff]
        %v1634 = vld [vmem:[%s1222 + $0x12a] sm:$0xff]
        %v1635 = vld [vmem:[%s1222 + $0x13a] sm:$0xff]
        %v1636 = vld [vmem:[%s1222 + $0x142] sm:$0xff]
        %v1637 = vld [vmem:[%s1222 + $0x152] sm:$0xff]
        %v1638 = vld [vmem:[%s1222 + $0x15a] sm:$0xff]
        %v1639 = vld [vmem:[%s1222 + $0x16a] sm:$0xff]
        %v1640 = vld [vmem:[%s1222 + $0x172] sm:$0xff]
        %1673 = vrot.lane.b32.xlu0 %v1609, 32
        %v1674 = vpop.permute.xlu0 %1673
        %1675 = vrot.lane.b32.xlu0 %v1610, 32
        %v1676 = vpop.permute.xlu0 %1675
        %1677 = vrot.lane.b32.xlu0 %v1611, 32
        %v1678 = vpop.permute.xlu0 %1677
        %1679 = vrot.lane.b32.xlu0 %v1612, 32
        %v1680 = vpop.permute.xlu0 %1679
        %1681 = vrot.lane.b32.xlu0 %v1613, 32
        %v1682 = vpop.permute.xlu0 %1681
        %1683 = vrot.lane.b32.xlu0 %v1614, 32
        %v1684 = vpop.permute.xlu0 %1683
        %1685 = vrot.lane.b32.xlu0 %v1615, 32
        %v1686 = vpop.permute.xlu0 %1685
        %1687 = vrot.lane.b32.xlu0 %v1616, 32
        %v1688 = vpop.permute.xlu0 %1687
        %1689 = vrot.lane.b32.xlu0 %v1617, 32
        %v1690 = vpop.permute.xlu0 %1689
        %1691 = vrot.lane.b32.xlu0 %v1618, 32
        %v1692 = vpop.permute.xlu0 %1691
        %1693 = vrot.lane.b32.xlu0 %v1619, 32
        %v1694 = vpop.permute.xlu0 %1693
        %1695 = vrot.lane.b32.xlu0 %v1620, 32
        %v1696 = vpop.permute.xlu0 %1695
        %1697 = vrot.lane.b32.xlu0 %v1621, 32
        %v1698 = vpop.permute.xlu0 %1697
        %1699 = vrot.lane.b32.xlu0 %v1622, 32
        %v1700 = vpop.permute.xlu0 %1699
        %1701 = vrot.lane.b32.xlu0 %v1623, 32
        %v1702 = vpop.permute.xlu0 %1701
        %1703 = vrot.lane.b32.xlu0 %v1624, 32
        %v1704 = vpop.permute.xlu0 %1703
        %1705 = vrot.lane.b32.xlu0 %v1625, 32
        %v1706 = vpop.permute.xlu0 %1705
        %1707 = vrot.lane.b32.xlu0 %v1626, 32
        %v1708 = vpop.permute.xlu0 %1707
        %1709 = vrot.lane.b32.xlu0 %v1627, 32
        %v1710 = vpop.permute.xlu0 %1709
        %1711 = vrot.lane.b32.xlu0 %v1628, 32
        %v1712 = vpop.permute.xlu0 %1711
        %1713 = vrot.lane.b32.xlu0 %v1629, 32
        %v1714 = vpop.permute.xlu0 %1713
        %1715 = vrot.lane.b32.xlu0 %v1630, 32
        %v1716 = vpop.permute.xlu0 %1715
        %1717 = vrot.lane.b32.xlu0 %v1631, 32
        %v1718 = vpop.permute.xlu0 %1717
        %1719 = vrot.lane.b32.xlu0 %v1632, 32
        %v1720 = vpop.permute.xlu0 %1719
        %1721 = vrot.lane.b32.xlu0 %v1633, 32
        %v1722 = vpop.permute.xlu0 %1721
        %1723 = vrot.lane.b32.xlu0 %v1634, 32
        %v1724 = vpop.permute.xlu0 %1723
        %1725 = vrot.lane.b32.xlu0 %v1635, 32
        %v1726 = vpop.permute.xlu0 %1725
        %1727 = vrot.lane.b32.xlu0 %v1636, 32
        %v1728 = vpop.permute.xlu0 %1727
        %1729 = vrot.lane.b32.xlu0 %v1637, 32
        %v1730 = vpop.permute.xlu0 %1729
        %1731 = vrot.lane.b32.xlu0 %v1638, 32
        %v1732 = vpop.permute.xlu0 %1731
        %1733 = vrot.lane.b32.xlu0 %v1639, 32
        %v1734 = vpop.permute.xlu0 %1733
        %1735 = vrot.lane.b32.xlu0 %v1640, 32
        %v1736 = vpop.permute.xlu0 %1735
        %vm1769 = vcmask 294144
        %1770 = vst.msk [vmem:[#allocation2] sm:$0xff] %vm1769, %v1674
        %1771 = vst.msk [vmem:[#allocation2 + $0x8] sm:$0xff] %vm1769, %v1676
        %1772 = vst.msk [vmem:[#allocation2 + $0x10] sm:$0xff] %vm1769, %v1678
        %1773 = vst.msk [vmem:[#allocation2 + $0x18] sm:$0xff] %vm1769, %v1680
        %1774 = vst.msk [vmem:[#allocation2 + $0x20] sm:$0xff] %vm1769, %v1682
        %1775 = vst.msk [vmem:[#allocation2 + $0x28] sm:$0xff] %vm1769, %v1684
        %1776 = vst.msk [vmem:[#allocation2 + $0x30] sm:$0xff] %vm1769, %v1686
        %1777 = vst.msk [vmem:[#allocation2 + $0x38] sm:$0xff] %vm1769, %v1688
        %1778 = vst.msk [vmem:[#allocation2 + $0x40] sm:$0xff] %vm1769, %v1690
        %1779 = vst.msk [vmem:[#allocation2 + $0x48] sm:$0xff] %vm1769, %v1692
        %1780 = vst.msk [vmem:[#allocation2 + $0x50] sm:$0xff] %vm1769, %v1694
        %1781 = vst.msk [vmem:[#allocation2 + $0x58] sm:$0xff] %vm1769, %v1696
        %1782 = vst.msk [vmem:[#allocation2 + $0x60] sm:$0xff] %vm1769, %v1698
        %1783 = vst.msk [vmem:[#allocation2 + $0x68] sm:$0xff] %vm1769, %v1700
        %1784 = vst.msk [vmem:[#allocation2 + $0x70] sm:$0xff] %vm1769, %v1702
        %1785 = vst.msk [vmem:[#allocation2 + $0x78] sm:$0xff] %vm1769, %v1704
        %1786 = vst.msk [vmem:[#allocation2 + $0x80] sm:$0xff] %vm1769, %v1706
        %1787 = vst.msk [vmem:[#allocation2 + $0x88] sm:$0xff] %vm1769, %v1708
        %1788 = vst.msk [vmem:[#allocation2 + $0x90] sm:$0xff] %vm1769, %v1710
        %1789 = vst.msk [vmem:[#allocation2 + $0x98] sm:$0xff] %vm1769, %v1712
        %1790 = vst.msk [vmem:[#allocation2 + $0xa0] sm:$0xff] %vm1769, %v1714
        %1791 = vst.msk [vmem:[#allocation2 + $0xa8] sm:$0xff] %vm1769, %v1716
        %1792 = vst.msk [vmem:[#allocation2 + $0xb0] sm:$0xff] %vm1769, %v1718
        %1793 = vst.msk [vmem:[#allocation2 + $0xb8] sm:$0xff] %vm1769, %v1720
        %1794 = vst.msk [vmem:[#allocation2 + $0xc0] sm:$0xff] %vm1769, %v1722
        %1795 = vst.msk [vmem:[#allocation2 + $0xc8] sm:$0xff] %vm1769, %v1724
        %1796 = vst.msk [vmem:[#allocation2 + $0xd0] sm:$0xff] %vm1769, %v1726
        %1797 = vst.msk [vmem:[#allocation2 + $0xd8] sm:$0xff] %vm1769, %v1728
        %1798 = vst.msk [vmem:[#allocation2 + $0xe0] sm:$0xff] %vm1769, %v1730
        %1799 = vst.msk [vmem:[#allocation2 + $0xe8] sm:$0xff] %vm1769, %v1732
        %1800 = vst.msk [vmem:[#allocation2 + $0xf0] sm:$0xff] %vm1769, %v1734
        %1801 = vst.msk [vmem:[#allocation2 + $0xf8] sm:$0xff] %vm1769, %v1736
        %v1802 = vld [vmem:[#allocation2] sm:$0xff]
        %v1803 = vld [vmem:[#allocation2 + $0x8] sm:$0xff]
        %v1804 = vld [vmem:[#allocation2 + $0x10] sm:$0xff]
        %v1805 = vld [vmem:[#allocation2 + $0x18] sm:$0xff]
        %v1806 = vld [vmem:[#allocation2 + $0x20] sm:$0xff]
        %v1807 = vld [vmem:[#allocation2 + $0x28] sm:$0xff]
        %v1808 = vld [vmem:[#allocation2 + $0x30] sm:$0xff]
        %v1809 = vld [vmem:[#allocation2 + $0x38] sm:$0xff]
        %v1810 = vld [vmem:[#allocation2 + $0x40] sm:$0xff]
        %v1811 = vld [vmem:[#allocation2 + $0x48] sm:$0xff]
        %v1812 = vld [vmem:[#allocation2 + $0x50] sm:$0xff]
        %v1813 = vld [vmem:[#allocation2 + $0x58] sm:$0xff]
        %v1814 = vld [vmem:[#allocation2 + $0x60] sm:$0xff]
        %v1815 = vld [vmem:[#allocation2 + $0x68] sm:$0xff]
        %v1816 = vld [vmem:[#allocation2 + $0x70] sm:$0xff]
        %v1817 = vld [vmem:[#allocation2 + $0x78] sm:$0xff]
        %v1818 = vld [vmem:[#allocation2 + $0x80] sm:$0xff]
        %v1819 = vld [vmem:[#allocation2 + $0x88] sm:$0xff]
        %v1820 = vld [vmem:[#allocation2 + $0x90] sm:$0xff]
        %v1821 = vld [vmem:[#allocation2 + $0x98] sm:$0xff]
        %v1822 = vld [vmem:[#allocation2 + $0xa0] sm:$0xff]
        %v1823 = vld [vmem:[#allocation2 + $0xa8] sm:$0xff]
        %v1824 = vld [vmem:[#allocation2 + $0xb0] sm:$0xff]
        %v1825 = vld [vmem:[#allocation2 + $0xb8] sm:$0xff]
        %v1826 = vld [vmem:[#allocation2 + $0xc0] sm:$0xff]
        %v1827 = vld [vmem:[#allocation2 + $0xc8] sm:$0xff]
        %v1828 = vld [vmem:[#allocation2 + $0xd0] sm:$0xff]
        %v1829 = vld [vmem:[#allocation2 + $0xd8] sm:$0xff]
        %v1830 = vld [vmem:[#allocation2 + $0xe0] sm:$0xff]
        %v1831 = vld [vmem:[#allocation2 + $0xe8] sm:$0xff]
        %v1832 = vld [vmem:[#allocation2 + $0xf0] sm:$0xff]
        %v1833 = vld [vmem:[#allocation2 + $0xf8] sm:$0xff]
        %v1834 = vld [vmem:[%s1] sm:$0xff]
        %v1835 = vld [vmem:[%s1 + $0x8] sm:$0xff]
        %v1836 = vld [vmem:[%s1 + $0x10] sm:$0xff]
        %v1837 = vld [vmem:[%s1 + $0x18] sm:$0xff]
        %v1838 = vld [vmem:[%s1 + $0x20] sm:$0xf]
        %v1839 = vld [vmem:[%s2] sm:$0x1]
        %v1841 = vlaneseq
        %v1842 = vshrl.u32 %v1841, 7
        %v1843 = vsub.s32 0, %v1842
        %v1844 = vrot.slane %v1839, %v1843
        %vm1846 = vcmask 293888
        %v1848 = vsel %vm1846, %v1802, 0
        %v1851 = vsel %vm1846, %v1803, 0
        %v1854 = vsel %vm1846, %v1804, 0
        %v1857 = vsel %vm1846, %v1805, 0
        %v1860 = vsel %vm1846, %v1806, 0
        %v1863 = vsel %vm1846, %v1807, 0
        %v1866 = vsel %vm1846, %v1808, 0
        %v1869 = vsel %vm1846, %v1809, 0
        %v1872 = vsel %vm1846, %v1810, 0
        %v1875 = vsel %vm1846, %v1811, 0
        %v1878 = vsel %vm1846, %v1812, 0
        %v1881 = vsel %vm1846, %v1813, 0
        %v1884 = vsel %vm1846, %v1814, 0
        %v1887 = vsel %vm1846, %v1815, 0
        %v1890 = vsel %vm1846, %v1816, 0
        %v1893 = vsel %vm1846, %v1817, 0
        %v1896 = vsel %vm1846, %v1818, 0
        %v1899 = vsel %vm1846, %v1819, 0
        %v1902 = vsel %vm1846, %v1820, 0
        %v1905 = vsel %vm1846, %v1821, 0
        %v1908 = vsel %vm1846, %v1822, 0
        %v1911 = vsel %vm1846, %v1823, 0
        %v1914 = vsel %vm1846, %v1824, 0
        %v1917 = vsel %vm1846, %v1825, 0
        %v1920 = vsel %vm1846, %v1826, 0
        %v1923 = vsel %vm1846, %v1827, 0
        %v1926 = vsel %vm1846, %v1828, 0
        %v1929 = vsel %vm1846, %v1829, 0
        %v1932 = vsel %vm1846, %v1830, 0
        %v1935 = vsel %vm1846, %v1831, 0
        %v1938 = vsel %vm1846, %v1832, 0
        %v1941 = vsel %vm1846, %v1833, 0
        %vm1943 = vcmask 1043456
        %v1945 = vsel %vm1943, %v1838, 0
        %1947 = vmatprep.subr.mxu0 0.0
        %1948 = vmatpush1.msra.mxu0 %v1834
        %1949 = vmatprep.subr.mxu0 0.0
        %1950 = vmatpush1.msra.mxu0 %v1835
        %1951 = vmatprep.subr.mxu0 0.0
        %1952 = vmatpush1.msra.mxu0 %v1836
        %1953 = vmatprep.subr.mxu0 0.0
        %1954 = vmatpush1.msra.mxu0 %v1837
        %1955 = vmatprep.subr.mxu0 0.0
        %1956 = vmatpush1.msra.mxu0 %v1945
        %1957 = vmatprep.subr.mxu0 0.0
        %1958 = vmatpush1.msra.mxu0 0.0
        %1959 = vmatprep.subr.mxu0 0.0
        %1960 = vmatpush1.msra.mxu0 0.0
        %1961 = vmatprep.subr.mxu0 0.0
        %1962 = vmatpush1.msra.mxu0 0.0
        %1963 = vmatprep.subr.mxu0 0.0
        %1964 = vmatpush1.msra.mxu0 0.0
        %1965 = vmatprep.subr.mxu0 0.0
        %1966 = vmatpush1.msra.mxu0 0.0
        %1967 = vmatprep.subr.mxu0 0.0
        %1968 = vmatpush1.msra.mxu0 0.0
        %1969 = vmatprep.subr.mxu0 0.0
        %1970 = vmatpush1.msra.mxu0 0.0
        %1971 = vmatprep.subr.mxu0 0.0
        %1972 = vmatpush1.msra.mxu0 0.0
        %1973 = vmatprep.subr.mxu0 0.0
        %1974 = vmatpush1.msra.mxu0 0.0
        %1975 = vmatprep.subr.mxu0 0.0
        %1976 = vmatpush1.msra.mxu0 0.0
        %1977 = vmatprep.subr.mxu0 0.0
        %1978 = vmatpush1.msra.mxu0 0.0
        %1979 = vmatprep.subr.mxu0 0.0
        %1980 = vmatpush1.msra.mxu0 0.0
        %1981 = vmatprep.subr.mxu0 0.0
        %1982 = vmatpush1.msra.mxu0 0.0
        %1983 = vmatprep.subr.mxu0 0.0
        %1984 = vmatpush1.msra.mxu0 0.0
        %1985 = vmatprep.subr.mxu0 0.0
        %1986 = vmatpush1.msra.mxu0 0.0
        %1987 = vmatprep.subr.mxu0 0.0
        %1988 = vmatpush1.msra.mxu0 0.0
        %1989 = vmatprep.subr.mxu0 0.0
        %1990 = vmatpush1.msra.mxu0 0.0
        %1991 = vmatprep.subr.mxu0 0.0
        %1992 = vmatpush1.msra.mxu0 0.0
        %1993 = vmatprep.subr.mxu0 0.0
        %1994 = vmatpush1.msra.mxu0 0.0
        %1995 = vmatprep.subr.mxu0 0.0
        %1996 = vmatpush1.msra.mxu0 0.0
        %1997 = vmatprep.subr.mxu0 0.0
        %1998 = vmatpush1.msra.mxu0 0.0
        %1999 = vmatprep.subr.mxu0 0.0
        %2000 = vmatpush1.msra.mxu0 0.0
        %2001 = vmatprep.subr.mxu0 0.0
        %2002 = vmatpush1.msra.mxu0 0.0
        %2003 = vmatprep.subr.mxu0 0.0
        %2004 = vmatpush1.msra.mxu0 0.0
        %2005 = vmatprep.subr.mxu0 0.0
        %2006 = vmatpush1.msra.mxu0 0.0
        %2007 = vmatprep.subr.mxu0 0.0
        %2008 = vmatpush1.msra.mxu0 0.0
        %2009 = vmatprep.subr.mxu0 0.0
        %2010 = vmatpush1.msra.mxu0 0.0
        %2011 = vmatprep.mubr.f32.mxu0 0.0
        %2012 = vmatmul.mubr.f32.gmra.mrb[0].mxu0 %v1848
        %v2013 = vpop.f32.mrb[0].mxu0
        %v2014 = vadd.f32 %v1844, %v2013
        %v2015 = vpop.f32.mrb[0].mxu0
        %2016 = vmatprep.mubr.f32.mxu0 0.0
        %2017 = vmatmul.mubr.f32.gmra.mrb[0].mxu0 %v1851
        %v2018 = vpop.f32.mrb[0].mxu0
        %v2019 = vadd.f32 %v1844, %v2018
        %v2020 = vpop.f32.mrb[0].mxu0
        %2021 = vmatprep.mubr.f32.mxu0 0.0
        %2022 = vmatmul.mubr.f32.gmra.mrb[0].mxu0 %v1854
        %v2023 = vpop.f32.mrb[0].mxu0
        %v2024 = vadd.f32 %v1844, %v2023
        %v2025 = vpop.f32.mrb[0].mxu0
        %2026 = vmatprep.mubr.f32.mxu0 0.0
        %2027 = vmatmul.mubr.f32.gmra.mrb[0].mxu0 %v1857
        %v2028 = vpop.f32.mrb[0].mxu0
        %v2029 = vadd.f32 %v1844, %v2028
        %v2030 = vpop.f32.mrb[0].mxu0
        %2031 = vmatprep.mubr.f32.mxu0 0.0
        %2032 = vmatmul.mubr.f32.gmra.mrb[0].mxu0 %v1860
        %v2033 = vpop.f32.mrb[0].mxu0
        %v2034 = vadd.f32 %v1844, %v2033
        %v2035 = vpop.f32.mrb[0].mxu0
        %2036 = vmatprep.mubr.f32.mxu0 0.0
        %2037 = vmatmul.mubr.f32.gmra.mrb[0].mxu0 %v1863
        %v2038 = vpop.f32.mrb[0].mxu0
        %v2039 = vadd.f32 %v1844, %v2038
        %v2040 = vpop.f32.mrb[0].mxu0
        %2041 = vmatprep.mubr.f32.mxu0 0.0
        %2042 = vmatmul.mubr.f32.gmra.mrb[0].mxu0 %v1866
        %v2043 = vpop.f32.mrb[0].mxu0
        %v2044 = vadd.f32 %v1844, %v2043
        %v2045 = vpop.f32.mrb[0].mxu0
        %2046 = vmatprep.mubr.f32.mxu0 0.0
        %2047 = vmatmul.mubr.f32.gmra.mrb[0].mxu0 %v1869
        %v2048 = vpop.f32.mrb[0].mxu0
        %v2049 = vadd.f32 %v1844, %v2048
        %v2050 = vpop.f32.mrb[0].mxu0
        %2051 = vmatprep.mubr.f32.mxu0 0.0
        %2052 = vmatmul.mubr.f32.gmra.mrb[0].mxu0 %v1872
        %v2053 = vpop.f32.mrb[0].mxu0
        %v2054 = vadd.f32 %v1844, %v2053
        %v2055 = vpop.f32.mrb[0].mxu0
        %2056 = vmatprep.mubr.f32.mxu0 0.0
        %2057 = vmatmul.mubr.f32.gmra.mrb[0].mxu0 %v1875
        %v2058 = vpop.f32.mrb[0].mxu0
        %v2059 = vadd.f32 %v1844, %v2058
        %v2060 = vpop.f32.mrb[0].mxu0
        %2061 = vmatprep.mubr.f32.mxu0 0.0
        %2062 = vmatmul.mubr.f32.gmra.mrb[0].mxu0 %v1878
        %v2063 = vpop.f32.mrb[0].mxu0
        %v2064 = vadd.f32 %v1844, %v2063
        %v2065 = vpop.f32.mrb[0].mxu0
        %2066 = vmatprep.mubr.f32.mxu0 0.0
        %2067 = vmatmul.mubr.f32.gmra.mrb[0].mxu0 %v1881
        %v2068 = vpop.f32.mrb[0].mxu0
        %v2069 = vadd.f32 %v1844, %v2068
        %v2070 = vpop.f32.mrb[0].mxu0
        %2071 = vmatprep.mubr.f32.mxu0 0.0
        %2072 = vmatmul.mubr.f32.gmra.mrb[0].mxu0 %v1884
        %v2073 = vpop.f32.mrb[0].mxu0
        %v2074 = vadd.f32 %v1844, %v2073
        %v2075 = vpop.f32.mrb[0].mxu0
        %2076 = vmatprep.mubr.f32.mxu0 0.0
        %2077 = vmatmul.mubr.f32.gmra.mrb[0].mxu0 %v1887
        %v2078 = vpop.f32.mrb[0].mxu0
        %v2079 = vadd.f32 %v1844, %v2078
        %v2080 = vpop.f32.mrb[0].mxu0
        %2081 = vmatprep.mubr.f32.mxu0 0.0
        %2082 = vmatmul.mubr.f32.gmra.mrb[0].mxu0 %v1890
        %v2083 = vpop.f32.mrb[0].mxu0
        %v2084 = vadd.f32 %v1844, %v2083
        %v2085 = vpop.f32.mrb[0].mxu0
        %2086 = vmatprep.mubr.f32.mxu0 0.0
        %2087 = vmatmul.mubr.f32.gmra.mrb[0].mxu0 %v1893
        %v2088 = vpop.f32.mrb[0].mxu0
        %v2089 = vadd.f32 %v1844, %v2088
        %v2090 = vpop.f32.mrb[0].mxu0
        %2091 = vmatprep.mubr.f32.mxu0 0.0
        %2092 = vmatmul.mubr.f32.gmra.mrb[0].mxu0 %v1896
        %v2093 = vpop.f32.mrb[0].mxu0
        %v2094 = vadd.f32 %v1844, %v2093
        %v2095 = vpop.f32.mrb[0].mxu0
        %2096 = vmatprep.mubr.f32.mxu0 0.0
        %2097 = vmatmul.mubr.f32.gmra.mrb[0].mxu0 %v1899
        %v2098 = vpop.f32.mrb[0].mxu0
        %v2099 = vadd.f32 %v1844, %v2098
        %v2100 = vpop.f32.mrb[0].mxu0
        %2101 = vmatprep.mubr.f32.mxu0 0.0
        %2102 = vmatmul.mubr.f32.gmra.mrb[0].mxu0 %v1902
        %v2103 = vpop.f32.mrb[0].mxu0
        %v2104 = vadd.f32 %v1844, %v2103
        %v2105 = vpop.f32.mrb[0].mxu0
        %2106 = vmatprep.mubr.f32.mxu0 0.0
        %2107 = vmatmul.mubr.f32.gmra.mrb[0].mxu0 %v1905
        %v2108 = vpop.f32.mrb[0].mxu0
        %v2109 = vadd.f32 %v1844, %v2108
        %v2110 = vpop.f32.mrb[0].mxu0
        %2111 = vmatprep.mubr.f32.mxu0 0.0
        %2112 = vmatmul.mubr.f32.gmra.mrb[0].mxu0 %v1908
        %v2113 = vpop.f32.mrb[0].mxu0
        %v2114 = vadd.f32 %v1844, %v2113
        %v2115 = vpop.f32.mrb[0].mxu0
        %2116 = vmatprep.mubr.f32.mxu0 0.0
        %2117 = vmatmul.mubr.f32.gmra.mrb[0].mxu0 %v1911
        %v2118 = vpop.f32.mrb[0].mxu0
        %v2119 = vadd.f32 %v1844, %v2118
        %v2120 = vpop.f32.mrb[0].mxu0
        %2121 = vmatprep.mubr.f32.mxu0 0.0
        %2122 = vmatmul.mubr.f32.gmra.mrb[0].mxu0 %v1914
        %v2123 = vpop.f32.mrb[0].mxu0
        %v2124 = vadd.f32 %v1844, %v2123
        %v2125 = vpop.f32.mrb[0].mxu0
        %2126 = vmatprep.mubr.f32.mxu0 0.0
        %2127 = vmatmul.mubr.f32.gmra.mrb[0].mxu0 %v1917
        %v2128 = vpop.f32.mrb[0].mxu0
        %v2129 = vadd.f32 %v1844, %v2128
        %v2130 = vpop.f32.mrb[0].mxu0
        %2131 = vmatprep.mubr.f32.mxu0 0.0
        %2132 = vmatmul.mubr.f32.gmra.mrb[0].mxu0 %v1920
        %v2133 = vpop.f32.mrb[0].mxu0
        %v2134 = vadd.f32 %v1844, %v2133
        %v2135 = vpop.f32.mrb[0].mxu0
        %2136 = vmatprep.mubr.f32.mxu0 0.0
        %2137 = vmatmul.mubr.f32.gmra.mrb[0].mxu0 %v1923
        %v2138 = vpop.f32.mrb[0].mxu0
        %v2139 = vadd.f32 %v1844, %v2138
        %v2140 = vpop.f32.mrb[0].mxu0
        %2141 = vmatprep.mubr.f32.mxu0 0.0
        %2142 = vmatmul.mubr.f32.gmra.mrb[0].mxu0 %v1926
        %v2143 = vpop.f32.mrb[0].mxu0
        %v2144 = vadd.f32 %v1844, %v2143
        %v2145 = vpop.f32.mrb[0].mxu0
        %2146 = vmatprep.mubr.f32.mxu0 0.0
        %2147 = vmatmul.mubr.f32.gmra.mrb[0].mxu0 %v1929
        %v2148 = vpop.f32.mrb[0].mxu0
        %v2149 = vadd.f32 %v1844, %v2148
        %v2150 = vpop.f32.mrb[0].mxu0
        %2151 = vmatprep.mubr.f32.mxu0 0.0
        %2152 = vmatmul.mubr.f32.gmra.mrb[0].mxu0 %v1932
        %v2153 = vpop.f32.mrb[0].mxu0
        %v2154 = vadd.f32 %v1844, %v2153
        %v2155 = vpop.f32.mrb[0].mxu0
        %2156 = vmatprep.mubr.f32.mxu0 0.0
        %2157 = vmatmul.mubr.f32.gmra.mrb[0].mxu0 %v1935
        %v2158 = vpop.f32.mrb[0].mxu0
        %v2159 = vadd.f32 %v1844, %v2158
        %v2160 = vpop.f32.mrb[0].mxu0
        %2161 = vmatprep.mubr.f32.mxu0 0.0
        %2162 = vmatmul.mubr.f32.gmra.mrb[0].mxu0 %v1938
        %v2163 = vpop.f32.mrb[0].mxu0
        %v2164 = vadd.f32 %v1844, %v2163
        %v2165 = vpop.f32.mrb[0].mxu0
        %2166 = vmatprep.mubr.f32.mxu0 0.0
        %2167 = vmatmul.mubr.f32.gmra.mrb[0].mxu0 %v1941
        %v2168 = vpop.f32.mrb[0].mxu0
        %v2169 = vadd.f32 %v1844, %v2168
        %v2170 = vpop.f32.mrb[0].mxu0
        %2171 = vdwg.mxu0
        %v2172 = vmul.f32 %v2014, 0.2
        %v2173 = vmul.f32 %v2019, 0.2
        %v2174 = vmul.f32 %v2024, 0.2
        %v2175 = vmul.f32 %v2029, 0.2
        %v2176 = vmul.f32 %v2034, 0.2
        %v2177 = vmul.f32 %v2039, 0.2
        %v2178 = vmul.f32 %v2044, 0.2
        %v2179 = vmul.f32 %v2049, 0.2
        %v2180 = vmul.f32 %v2054, 0.2
        %v2181 = vmul.f32 %v2059, 0.2
        %v2182 = vmul.f32 %v2064, 0.2
        %v2183 = vmul.f32 %v2069, 0.2
        %v2184 = vmul.f32 %v2074, 0.2
        %v2185 = vmul.f32 %v2079, 0.2
        %v2186 = vmul.f32 %v2084, 0.2
        %v2187 = vmul.f32 %v2089, 0.2
        %v2188 = vmul.f32 %v2094, 0.2
        %v2189 = vmul.f32 %v2099, 0.2
        %v2190 = vmul.f32 %v2104, 0.2
        %v2191 = vmul.f32 %v2109, 0.2
        %v2192 = vmul.f32 %v2114, 0.2
        %v2193 = vmul.f32 %v2119, 0.2
        %v2194 = vmul.f32 %v2124, 0.2
        %v2195 = vmul.f32 %v2129, 0.2
        %v2196 = vmul.f32 %v2134, 0.2
        %v2197 = vmul.f32 %v2139, 0.2
        %v2198 = vmul.f32 %v2144, 0.2
        %v2199 = vmul.f32 %v2149, 0.2
        %v2200 = vmul.f32 %v2154, 0.2
        %v2201 = vmul.f32 %v2159, 0.2
        %v2202 = vmul.f32 %v2164, 0.2
        %v2203 = vmul.f32 %v2169, 0.2
        %v2204 = vmax.f32 %v2014, %v2172
        %v2205 = vmax.f32 %v2019, %v2173
        %v2206 = vmax.f32 %v2024, %v2174
        %v2207 = vmax.f32 %v2029, %v2175
        %v2208 = vmax.f32 %v2034, %v2176
        %v2209 = vmax.f32 %v2039, %v2177
        %v2210 = vmax.f32 %v2044, %v2178
        %v2211 = vmax.f32 %v2049, %v2179
        %v2212 = vmax.f32 %v2054, %v2180
        %v2213 = vmax.f32 %v2059, %v2181
        %v2214 = vmax.f32 %v2064, %v2182
        %v2215 = vmax.f32 %v2069, %v2183
        %v2216 = vmax.f32 %v2074, %v2184
        %v2217 = vmax.f32 %v2079, %v2185
        %v2218 = vmax.f32 %v2084, %v2186
        %v2219 = vmax.f32 %v2089, %v2187
        %v2220 = vmax.f32 %v2094, %v2188
        %v2221 = vmax.f32 %v2099, %v2189
        %v2222 = vmax.f32 %v2104, %v2190
        %v2223 = vmax.f32 %v2109, %v2191
        %v2224 = vmax.f32 %v2114, %v2192
        %v2225 = vmax.f32 %v2119, %v2193
        %v2226 = vmax.f32 %v2124, %v2194
        %v2227 = vmax.f32 %v2129, %v2195
        %v2228 = vmax.f32 %v2134, %v2196
        %v2229 = vmax.f32 %v2139, %v2197
        %v2230 = vmax.f32 %v2144, %v2198
        %v2231 = vmax.f32 %v2149, %v2199
        %v2232 = vmax.f32 %v2154, %v2200
        %v2233 = vmax.f32 %v2159, %v2201
        %v2234 = vmax.f32 %v2164, %v2202
        %v2235 = vmax.f32 %v2169, %v2203
        %2236 = vst [vmem:[%s177] sm:$0xff] %v2204
        %2237 = vst [vmem:[%s177 + $0x8] sm:$0xff] %v2205
        %2238 = vst [vmem:[%s177 + $0x10] sm:$0xff] %v2206
        %2239 = vst [vmem:[%s177 + $0x18] sm:$0xff] %v2207
        %2240 = vst [vmem:[%s177 + $0x20] sm:$0xff] %v2208
        %2241 = vst [vmem:[%s177 + $0x28] sm:$0xff] %v2209
        %2242 = vst [vmem:[%s177 + $0x30] sm:$0xff] %v2210
        %2243 = vst [vmem:[%s177 + $0x38] sm:$0xff] %v2211
        %2244 = vst [vmem:[%s177 + $0x40] sm:$0xff] %v2212
        %2245 = vst [vmem:[%s177 + $0x48] sm:$0xff] %v2213
        %2246 = vst [vmem:[%s177 + $0x50] sm:$0xff] %v2214
        %2247 = vst [vmem:[%s177 + $0x58] sm:$0xff] %v2215
        %2248 = vst [vmem:[%s177 + $0x60] sm:$0xff] %v2216
        %2249 = vst [vmem:[%s177 + $0x68] sm:$0xff] %v2217
        %2250 = vst [vmem:[%s177 + $0x70] sm:$0xff] %v2218
        %2251 = vst [vmem:[%s177 + $0x78] sm:$0xff] %v2219
        %2252 = vst [vmem:[%s177 + $0x80] sm:$0xff] %v2220
        %2253 = vst [vmem:[%s177 + $0x88] sm:$0xff] %v2221
        %2254 = vst [vmem:[%s177 + $0x90] sm:$0xff] %v2222
        %2255 = vst [vmem:[%s177 + $0x98] sm:$0xff] %v2223
        %2256 = vst [vmem:[%s177 + $0xa0] sm:$0xff] %v2224
        %2257 = vst [vmem:[%s177 + $0xa8] sm:$0xff] %v2225
        %2258 = vst [vmem:[%s177 + $0xb0] sm:$0xff] %v2226
        %2259 = vst [vmem:[%s177 + $0xb8] sm:$0xff] %v2227
        %2260 = vst [vmem:[%s177 + $0xc0] sm:$0xff] %v2228
        %2261 = vst [vmem:[%s177 + $0xc8] sm:$0xff] %v2229
        %2262 = vst [vmem:[%s177 + $0xd0] sm:$0xff] %v2230
        %2263 = vst [vmem:[%s177 + $0xd8] sm:$0xff] %v2231
        %2264 = vst [vmem:[%s177 + $0xe0] sm:$0xff] %v2232
        %2265 = vst [vmem:[%s177 + $0xe8] sm:$0xff] %v2233
        %2266 = vst [vmem:[%s177 + $0xf0] sm:$0xff] %v2234
        %2267 = vst [vmem:[%s177 + $0xf8] sm:$0xff] %v2235
        %s2268 = sand.u32 %s107, 1
        %s2269 = scalar_lea.sflag [#allocation4], %s2268
        %s2270 = sand.u32 %s107, 1
        %s2271 = smul.addr %s2270, 256
        %s2272 = scalar_lea.vmem [#allocation3], %s2271
        // Predicated region
        $region33: #{tpu_custom_call.1} parent=31 // pred_check
          %p2273 = pneg %p117
        $region34: #{tpu_custom_call.1} parent=31 // pred_check_branch
          %2275 = sbr.rel (%p2273) target = $region36
        $region35: #{tpu_custom_call.1} parent=31 // pred_region
          %s2276 = smul.u32 16, %s22
          %s2278 = ssub.s32 4096, 4096
          %2279 = vsyncadd %s2269, %s2278
          %s2280 = smul.addr %s2276, 2
          %s2281 = smul.addr %s21, 32
          %s2282 = sadd.s32 %s2280, %s2281
          %s2283 = smul.addr %s2282, 128
          %s2284 = scalar_lea.hbm %s3, %s2283
          %s2285 = sshll.u32 %s2272, 4
          %s2286 = int_to_ptr.vmem [resolvable:$true] %s2285
          %2291 = dma.vmem_to_hbm [thread:$0]  %s2286, 4096, %s2284, %s2269, 128, 128, 8
        $region36: #{tpu_custom_call.1} parent=31 // pred_fallthru
          _
      $region32: #{tpu_custom_call.1} parent=5 // pred_fallthru
        _
      %p2292 = scmp.le.s32.totalorder 2, %s12
      // Predicated region
      $region37: #{tpu_custom_call.1} parent=5 // pred_check
        %p2293 = pneg %p2292
      $region38: #{tpu_custom_call.1} parent=5 // pred_check_branch
        %2295 = sbr.rel (%p2293) target = $region40
      $region39: #{tpu_custom_call.1} parent=5 // pred_region
        %s2296 = ssub.s32 %s12, 2
        // Predicated region
        $region41: #{tpu_custom_call.1} parent=39 // pred_check
          %p2297 = pneg %p123
        $region42: #{tpu_custom_call.1} parent=39 // pred_check_branch
          %2299 = sbr.rel (%p2297) target = $region44
        $region43: #{tpu_custom_call.1} parent=39 // pred_region
          %s2300 = sand.u32 %s108, 1
          %s2301 = scalar_lea.sflag [#allocation4], %s2300
          %s2302 = sand.u32 %s108, 1
          %s2303 = smul.addr %s2302, 256
          %s2304 = scalar_lea.vmem [#allocation3], %s2303
          %2305 = dma.done %s2301, 4096
        $region44: #{tpu_custom_call.1} parent=39 // pred_fallthru
          _
      $region40: #{tpu_custom_call.1} parent=5 // pred_fallthru
        _
    $region6: #{tpu_custom_call.1} parent=1 // loop_footer
      %s16 = sadd.s32 1, %s12
    $region7: #{tpu_custom_call.1} parent=1 // loop_footer_branch
      %11 = sbr.rel target = $region3
    $region8: #{tpu_custom_call.1} parent=1 // loop_exit
      _
    %2306 = vsyncpa [#allocation4], 1
    %s2307 = scalar_lea.sflag [#allocation4], 1
    %2308 = vsyncpa %s2307, 1

</llo_original>
